<compile_context>
chip_gen: v7x
topology: tpu7x:2x2x1
jax: 0.10.0
libtpu: 0.0.40
codegen_flags: <defaults>
</compile_context>

<pallas_src>
import functools

import jax
import jax.numpy as jnp
from jax import lax
from jax.experimental import pallas as pl
from jax.experimental.pallas import tpu as pltpu


def _round_up(x, m):
    return (x + m - 1) // m * m


def _vmem_limit_bytes():
    # ~75% of physical VMEM per generation (v5e/v6e: 96 MiB, v7x: 48 MiB),
    # leaving headroom for compiler-internal scratch.
    try:
        cap = pltpu.get_tpu_info().vmem_capacity_bytes
    except Exception:
        cap = 64 * 1024 * 1024
    return int(min(cap * 3 // 4, 100 * 1024 * 1024))


# ----------------------------------------------------------------------------
# Fused kernel: one image per grid step, flattened (H*(W+2), C) layout.
# ----------------------------------------------------------------------------
def _bottleneck_kernel(x_ref, mask_ref, w1_ref, w2_ref, w3_ref,
                       s1_ref, b1_ref, s2_ref, b2_ref, s3_ref, b3_ref,
                       o_ref, slab_ref, acc_ref, *, H, W2, OFF):
    R = acc_ref.shape[0]                 # = H * W2 rows (padded-width layout)
    Pp = acc_ref.shape[1]
    slab_rows = slab_ref.shape[0]
    top = OFF + W2                       # [0, top): leading pad + top halo row
    bot = OFF + (H + 1) * W2             # [bot, end): bottom halo row + tail pad

    # ---- zero only the halo border (cheap, ~2 image rows); interior is fully
    #      overwritten below so nothing leaks across grid steps / images -------
    slab_ref[pl.ds(0, top), :] = jnp.zeros((top, Pp), slab_ref.dtype)
    slab_ref[pl.ds(bot, slab_rows - bot), :] = jnp.zeros(
        (slab_rows - bot, Pp), slab_ref.dtype)

    # ---- conv1 (1x1) + bn1 + relu -> bf16 into the slab interior --------------
    y1 = jnp.dot(x_ref[...], w1_ref[...], preferred_element_type=jnp.float32)
    y1 = jnp.maximum(y1 * s1_ref[...] + b1_ref[...], 0.0)
    y1 = y1 * mask_ref[...]              # zero the width-halo columns
    # single contiguous, 8-sublane-aligned store of the whole conv1 output
    slab_ref[pl.ds(top, R), :] = y1.astype(slab_ref.dtype)

    # ---- conv2 (3x3, stride 1, pad 1): 9 contiguous row-shifted taps of the
    #      flattened slab (pure address offsets, no relayout); 3 dots summed
    #      per accumulator write (3 acc writes instead of 9 RMWs). -------------
    for dy in range(3):
        base = OFF - 1 + dy * W2
        t = jnp.dot(slab_ref[pl.ds(base + 0, R), :], w2_ref[3 * dy + 0],
                    preferred_element_type=jnp.float32)
        t = t + jnp.dot(slab_ref[pl.ds(base + 1, R), :], w2_ref[3 * dy + 1],
                        preferred_element_type=jnp.float32)
        t = t + jnp.dot(slab_ref[pl.ds(base + 2, R), :], w2_ref[3 * dy + 2],
                        preferred_element_type=jnp.float32)
        if dy == 0:
            acc_ref[...] = t
        else:
            acc_ref[...] += t
    y2 = jnp.maximum(acc_ref[...] * s2_ref[...] + b2_ref[...], 0.0)

    # ---- conv3 (1x1) + bn3 + residual add + relu ------------------------------
    y3 = jnp.dot(y2.astype(w3_ref.dtype), w3_ref[...],
                 preferred_element_type=jnp.float32)
    # residual is re-read from the VMEM-resident input block (not kept live)
    y3 = y3 * s3_ref[...] + b3_ref[...] + x_ref[...].astype(jnp.float32)
    o_ref[...] = jnp.maximum(y3, 0.0).astype(o_ref.dtype)


# ----------------------------------------------------------------------------
# BN folding (eval mode) + channel padding
# ----------------------------------------------------------------------------
def _fold_bn(gamma, beta, mean, var, pad_to, eps=1e-5):
    scale = gamma / jnp.sqrt(var + eps)
    bias = beta - mean * scale
    pad = pad_to - gamma.shape[0]
    scale = jnp.pad(scale, (0, pad))
    bias = jnp.pad(bias, (0, pad))
    return (scale.reshape(1, -1).astype(jnp.float32),
            bias.reshape(1, -1).astype(jnp.float32))


# ----------------------------------------------------------------------------
# Core forward (NHWC, bf16 activations in HBM)
# ----------------------------------------------------------------------------
@functools.partial(jax.jit, static_argnames=("compute_dtype",))
def bottleneck_forward_nhwc(x_nhwc, params, compute_dtype=jnp.bfloat16):
    N, H, W, Cin = x_nhwc.shape
    planes = params["w1"].shape[1]
    Cout = params["w3"].shape[1]
    if Cin != Cout:
        # downsample=None implies inplanes == planes * expansion.
        raise ValueError("downsample=None requires inplanes == planes * 4")

    Cp = _round_up(Cin, 128)         # lane-dense channel counts
    Pp = _round_up(planes, 128)
    W2 = W + 2                       # width incl. 1-pixel zero halo
    R = H * W2                       # rows per image in padded-width layout
    OFF = 8 + ((-W2) % 8)            # slab lead pad: interior store is 8-aligned
    slab_rows = _round_up(OFF + (H + 2) * W2 + 1, 8)

    # ---- fold BN, pad channel dims, cast weights to bf16 ----------------------
    s1, b1 = _fold_bn(params["g1"], params["be1"], params["m1"], params["v1"], Pp)
    s2, b2 = _fold_bn(params["g2"], params["be2"], params["m2"], params["v2"], Pp)
    s3, b3 = _fold_bn(params["g3"], params["be3"], params["m3"], params["v3"], Cp)

    w1 = jnp.pad(params["w1"], ((0, Cp - Cin), (0, Pp - planes))).astype(compute_dtype)
    w2 = jnp.pad(params["w2"],
                 ((0, 0), (0, 0), (0, Pp - planes), (0, Pp - planes)))
    w2 = w2.reshape(9, Pp, Pp).astype(compute_dtype)          # 9 taps, HWIO order
    w3 = jnp.pad(params["w3"], ((0, Pp - planes), (0, Cp - Cout))).astype(compute_dtype)

    # ---- activations: bf16 in HBM, zero width-halo cols, padded channels,
    #      flattened to the (H*(W+2), Cp) layout the kernel computes in ---------
    x_p = jnp.pad(x_nhwc.astype(compute_dtype),
                  ((0, 0), (0, 0), (1, 1), (0, Cp - Cin)))
    x_flat = x_p.reshape(N, R, Cp)

    col = jnp.arange(W2, dtype=jnp.int32)
    colmask = jnp.tile(((col > 0) & (col < W2 - 1)).astype(jnp.float32), (H,))
    colmask = colmask.reshape(R, 1)

    kernel = functools.partial(_bottleneck_kernel, H=H, W2=W2, OFF=OFF)
    bcast2 = lambda n: (0, 0)
    bcast3 = lambda n: (0, 0, 0)

    out_flat = pl.pallas_call(
        kernel,
        out_shape=jax.ShapeDtypeStruct((N, R, Cp), compute_dtype),
        grid=(N,),
        in_specs=[
            pl.BlockSpec((pl.Squeezed(), R, Cp), lambda n: (n, 0, 0)),   # x / residual
            pl.BlockSpec((R, 1), bcast2),                                # width-halo mask
            pl.BlockSpec((Cp, Pp), bcast2),                              # w1
            pl.BlockSpec((9, Pp, Pp), bcast3),                           # w2 (3x3 taps)
            pl.BlockSpec((Pp, Cp), bcast2),                              # w3
            pl.BlockSpec((1, Pp), bcast2),                               # s1
            pl.BlockSpec((1, Pp), bcast2),                               # b1
            pl.BlockSpec((1, Pp), bcast2),                               # s2
            pl.BlockSpec((1, Pp), bcast2),                               # b2
            pl.BlockSpec((1, Cp), bcast2),                               # s3
            pl.BlockSpec((1, Cp), bcast2),                               # b3
        ],
        out_specs=pl.BlockSpec((pl.Squeezed(), R, Cp), lambda n: (n, 0, 0)),
        scratch_shapes=[
            pltpu.VMEM((slab_rows, Pp), compute_dtype),    # padded conv1 output (bf16)
            pltpu.VMEM((R, Pp), jnp.float32),              # conv2 f32 accumulator
        ],
        # Output aliases the residual input buffer.  Safe: x_flat is a temporary
        # produced by the pad/cast above, and per-step blocks don't overlap.
        input_output_aliases={0: 0},
        compiler_params=pltpu.CompilerParams(
            dimension_semantics=("parallel",),
            vmem_limit_bytes=_vmem_limit_bytes(),
        ),
    )(x_flat, colmask, w1, w2, w3, s1, b1, s2, b2, s3, b3)

    # drop width halo + padded channels
    out = out_flat.reshape(N, H, W2, Cp)[:, :, 1:W + 1, :Cout]
    return out                                           # NHWC, bf16


# ----------------------------------------------------------------------------
# NCHW adapter (parity with the PyTorch module).  Production code should keep
# activations NHWC end-to-end and call bottleneck_forward_nhwc directly.
# ----------------------------------------------------------------------------
@functools.partial(jax.jit, static_argnames=("compute_dtype",))
def bottleneck_forward(x_nchw, params, compute_dtype=jnp.bfloat16):
    x = jnp.transpose(x_nchw, (0, 2, 3, 1))
    y = bottleneck_forward_nhwc(x, params, compute_dtype=compute_dtype)
    return jnp.transpose(y, (0, 3, 1, 2))


# ----------------------------------------------------------------------------
# Pure-JAX reference with matching precision (bf16 operands, f32 accumulation)
# ----------------------------------------------------------------------------
def bottleneck_reference(x_nchw, params, eps=1e-5, compute_dtype=jnp.bfloat16):
    x = jnp.transpose(x_nchw, (0, 2, 3, 1))
    xb = x.astype(compute_dtype)                  # matches bf16 HBM activations
    Cin = x.shape[-1]
    planes = params["w1"].shape[1]
    Cout = params["w3"].shape[1]
    dn = ("NHWC", "HWIO", "NHWC")

    def conv(inp, w_hwio, padding):
        return lax.conv_general_dilated(
            inp.astype(compute_dtype), w_hwio.astype(compute_dtype),
            (1, 1), padding, dimension_numbers=dn,
            preferred_element_type=jnp.float32)

    def fold(g, be, m, v):
        s = g / jnp.sqrt(v + eps)
        return s, be - m * s

    s1, b1 = fold(params["g1"], params["be1"], params["m1"], params["v1"])
    s2, b2 = fold(params["g2"], params["be2"], params["m2"], params["v2"])
    s3, b3 = fold(params["g3"], params["be3"], params["m3"], params["v3"])

    y = conv(xb, params["w1"].reshape(1, 1, Cin, planes), "VALID")
    y = jnp.maximum(y * s1 + b1, 0.0)
    y = conv(y, params["w2"], "SAME")
    y = jnp.maximum(y * s2 + b2, 0.0)
    y = conv(y, params["w3"].reshape(1, 1, planes, Cout), "VALID")
    y = jnp.maximum(y * s3 + b3 + xb.astype(jnp.float32), 0.0)
    return jnp.transpose(y, (0, 3, 1, 2))


# ----------------------------------------------------------------------------
# Deterministic parameter init + test
# ----------------------------------------------------------------------------
def make_params(key, inplanes, planes, expansion=4):
    cout = planes * expansion
    ks = jax.random.split(key, 12)
    return {
        # conv weights in matmul-friendly layouts:
        #   w1: [Cin, planes]   w2 (HWIO): [3,3,planes,planes]   w3: [planes, Cout]
        "w1": jax.random.normal(ks[0], (inplanes, planes), jnp.float32) * 0.1,
        "w2": jax.random.normal(ks[1], (3, 3, planes, planes), jnp.float32) * 0.1,
        "w3": jax.random.normal(ks[2], (planes, cout), jnp.float32) * 0.1,
        # BN params (eval mode: running stats)
        "g1": 1.0 + 0.1 * jax.random.normal(ks[3], (planes,), jnp.float32),
        "be1": 0.1 * jax.random.normal(ks[4], (planes,), jnp.float32),
        "m1": 0.1 * jax.random.normal(ks[5], (planes,), jnp.float32),
        "v1": 1.0 + 0.1 * jax.random.uniform(ks[6], (planes,), jnp.float32),
        "g2": 1.0 + 0.1 * jax.random.normal(ks[7], (planes,), jnp.float32),
        "be2": 0.1 * jax.random.normal(ks[8], (planes,), jnp.float32),
        "m2": 0.1 * jax.random.normal(ks[9], (planes,), jnp.float32),
        "v2": 1.0 + 0.1 * jax.random.uniform(ks[10], (planes,), jnp.float32),
        "g3": 1.0 + 0.1 * jax.random.normal(ks[11], (cout,), jnp.float32),
        "be3": jnp.linspace(-0.1, 0.1, cout, dtype=jnp.float32),
        "m3": jnp.linspace(-0.05, 0.05, cout, dtype=jnp.float32),
        "v3": jnp.linspace(0.9, 1.1, cout, dtype=jnp.float32),
    }


if __name__ == "__main__":
    key = jax.random.PRNGKey(0)
    k_x, k_p = jax.random.split(key)

    # Small shapes: batch=2, inplanes=16, planes=4 (expansion 4 -> out=16), 16x16.
    N, inplanes, planes, H, W = 2, 16, 4, 16, 16
    x = jax.random.normal(k_x, (N, inplanes, H, W), jnp.float32)  # NCHW
    params = make_params(k_p, inplanes, planes)

    out = bottleneck_forward(x, params)
    out = jax.block_until_ready(out)

    ref = bottleneck_reference(x, params)
    assert out.shape == (N, planes * 4, H, W)
    out_f32 = out.astype(jnp.float32)
    max_err = float(jnp.max(jnp.abs(out_f32 - ref)))
    assert jnp.allclose(out_f32, ref, rtol=2e-2, atol=2e-2), max_err

    print("KERNEL_OK")
</pallas_src>

<mosaic_0001>
module attributes {stable_mosaic.version = 11 : i64} {
  func.func @_bottleneck_kernel(%arg0: i32, %arg1: memref<1x288x128xbf16, #tpu.memory_space<vmem>>, %arg2: memref<288x1xf32, #tpu.memory_space<vmem>>, %arg3: memref<128x128xbf16, #tpu.memory_space<vmem>>, %arg4: memref<9x128x128xbf16, #tpu.memory_space<vmem>>, %arg5: memref<128x128xbf16, #tpu.memory_space<vmem>>, %arg6: memref<1x128xf32, #tpu.memory_space<vmem>>, %arg7: memref<1x128xf32, #tpu.memory_space<vmem>>, %arg8: memref<1x128xf32, #tpu.memory_space<vmem>>, %arg9: memref<1x128xf32, #tpu.memory_space<vmem>>, %arg10: memref<1x128xf32, #tpu.memory_space<vmem>>, %arg11: memref<1x128xf32, #tpu.memory_space<vmem>>, %arg12: memref<1x288x128xbf16, #tpu.memory_space<vmem>>, %arg13: memref<344x128xbf16, #tpu.memory_space<vmem>>, %arg14: memref<288x128xf32, #tpu.memory_space<vmem>>) attributes {dimension_semantics = [#tpu.dimension_semantics<parallel>], iteration_bounds = array<i64: 2>, scalar_prefetch = 0 : i64, scratch_operands = 2 : i64, tpu.core_type = #tpu.core_type<tc>, window_params = [{transform_indices = @transform_0, window_bounds = array<i64: 1, 288, 128>}, {pipeline_mode = #tpu.pipeline_mode<synchronous>, transform_indices = @transform_1, window_bounds = array<i64: 288, 1>}, {pipeline_mode = #tpu.pipeline_mode<synchronous>, transform_indices = @transform_2, window_bounds = array<i64: 128, 128>}, {pipeline_mode = #tpu.pipeline_mode<synchronous>, transform_indices = @transform_3, window_bounds = array<i64: 9, 128, 128>}, {pipeline_mode = #tpu.pipeline_mode<synchronous>, transform_indices = @transform_4, window_bounds = array<i64: 128, 128>}, {pipeline_mode = #tpu.pipeline_mode<synchronous>, transform_indices = @transform_5, window_bounds = array<i64: 1, 128>}, {pipeline_mode = #tpu.pipeline_mode<synchronous>, transform_indices = @transform_6, window_bounds = array<i64: 1, 128>}, {pipeline_mode = #tpu.pipeline_mode<synchronous>, transform_indices = @transform_7, window_bounds = array<i64: 1, 128>}, {pipeline_mode = #tpu.pipeline_mode<synchronous>, transform_indices = @transform_8, window_bounds = array<i64: 1, 128>}, {pipeline_mode = #tpu.pipeline_mode<synchronous>, transform_indices = @transform_9, window_bounds = array<i64: 1, 128>}, {pipeline_mode = #tpu.pipeline_mode<synchronous>, transform_indices = @transform_10, window_bounds = array<i64: 1, 128>}, {transform_indices = @transform_11, window_bounds = array<i64: 1, 288, 128>}]} {
    %cst = arith.constant 0.000000e+00 : bf16
    %0 = vector.broadcast %cst : bf16 to vector<32x128xbf16>
    %c0 = arith.constant 0 : index
    %c0_0 = arith.constant 0 : index
    %1 = vector.load %arg13[%c0, %c0_0] : memref<344x128xbf16, #tpu.memory_space<vmem>>, vector<32x128xbf16>
    tpu.vector_store %arg13[%c0, %c0_0], %0 {strides = array<i32>} : memref<344x128xbf16, #tpu.memory_space<vmem>>, vector<32x128xbf16>,
    %cst_1 = arith.constant 0.000000e+00 : bf16
    %2 = vector.broadcast %cst_1 : bf16 to vector<24x128xbf16>
    %c320 = arith.constant 320 : index
    %c0_2 = arith.constant 0 : index
    %3 = vector.load %arg13[%c320, %c0_2] : memref<344x128xbf16, #tpu.memory_space<vmem>>, vector<24x128xbf16>
    tpu.vector_store %arg13[%c320, %c0_2], %2 {strides = array<i32>} : memref<344x128xbf16, #tpu.memory_space<vmem>>, vector<24x128xbf16>,
    %c0_3 = arith.constant 0 : index
    %c0_4 = arith.constant 0 : index
    %c0_5 = arith.constant 0 : index
    %4 = vector.load %arg1[%c0_3, %c0_4, %c0_5] : memref<1x288x128xbf16, #tpu.memory_space<vmem>>, vector<1x288x128xbf16>
    %5 = vector.shape_cast %4 : vector<1x288x128xbf16> to vector<288x128xbf16>
    %c0_6 = arith.constant 0 : index
    %c0_7 = arith.constant 0 : index
    %6 = vector.load %arg3[%c0_6, %c0_7] : memref<128x128xbf16, #tpu.memory_space<vmem>>, vector<128x128xbf16>
    %cst_8 = arith.constant dense<0.000000e+00> : vector<288x128xf32>
    %7 = tpu.matmul %5, %6, %cst_8 {dimension_numbers = #tpu.dot_dimension_numbers<[1], [0], [0], [1], [0, 0, 1, 1], [], []>} : vector<288x128xbf16>, vector<128x128xbf16>, vector<288x128xf32> -> vector<288x128xf32>
    %c0_9 = arith.constant 0 : index
    %c0_10 = arith.constant 0 : index
    %8 = vector.load %arg6[%c0_9, %c0_10] : memref<1x128xf32, #tpu.memory_space<vmem>>, vector<1x128xf32>
    %9 = vector.broadcast %8 : vector<1x128xf32> to vector<288x128xf32>
    %10 = arith.mulf %7, %9 : vector<288x128xf32>
    %c0_11 = arith.constant 0 : index
    %c0_12 = arith.constant 0 : index
    %11 = vector.load %arg7[%c0_11, %c0_12] : memref<1x128xf32, #tpu.memory_space<vmem>>, vector<1x128xf32>
    %12 = vector.broadcast %11 : vector<1x128xf32> to vector<288x128xf32>
    %13 = arith.addf %10, %12 : vector<288x128xf32>
    %cst_13 = arith.constant 0.000000e+00 : f32
    %14 = vector.broadcast %cst_13 : f32 to vector<288x128xf32>
    %15 = arith.maximumf %13, %14 : vector<288x128xf32>
    %c0_14 = arith.constant 0 : index
    %c0_15 = arith.constant 0 : index
    %16 = vector.load %arg2[%c0_14, %c0_15] : memref<288x1xf32, #tpu.memory_space<vmem>>, vector<288x1xf32>
    %17 = vector.broadcast %16 : vector<288x1xf32> to vector<288x128xf32>
    %18 = arith.mulf %15, %17 : vector<288x128xf32>
    %19 = arith.truncf %18 : vector<288x128xf32> to vector<288x128xbf16>
    %c32 = arith.constant 32 : index
    %c0_16 = arith.constant 0 : index
    %20 = vector.load %arg13[%c32, %c0_16] : memref<344x128xbf16, #tpu.memory_space<vmem>>, vector<288x128xbf16>
    tpu.vector_store %arg13[%c32, %c0_16], %19 {strides = array<i32>} : memref<344x128xbf16, #tpu.memory_space<vmem>>, vector<288x128xbf16>,
    %c13 = arith.constant 13 : index
    %c0_17 = arith.constant 0 : index
    %21 = vector.load %arg13[%c13, %c0_17] : memref<344x128xbf16, #tpu.memory_space<vmem>>, vector<288x128xbf16>
    %c0_18 = arith.constant 0 : index
    %c0_19 = arith.constant 0 : index
    %c0_20 = arith.constant 0 : index
    %22 = vector.load %arg4[%c0_18, %c0_19, %c0_20] : memref<9x128x128xbf16, #tpu.memory_space<vmem>>, vector<1x128x128xbf16>
    %23 = vector.shape_cast %22 : vector<1x128x128xbf16> to vector<128x128xbf16>
    %cst_21 = arith.constant dense<0.000000e+00> : vector<288x128xf32>
    %24 = tpu.matmul %21, %23, %cst_21 {dimension_numbers = #tpu.dot_dimension_numbers<[1], [0], [0], [1], [0, 0, 1, 1], [], []>} : vector<288x128xbf16>, vector<128x128xbf16>, vector<288x128xf32> -> vector<288x128xf32>
    %c14 = arith.constant 14 : index
    %c0_22 = arith.constant 0 : index
    %25 = vector.load %arg13[%c14, %c0_22] : memref<344x128xbf16, #tpu.memory_space<vmem>>, vector<288x128xbf16>
    %c1 = arith.constant 1 : index
    %c0_23 = arith.constant 0 : index
    %c0_24 = arith.constant 0 : index
    %26 = vector.load %arg4[%c1, %c0_23, %c0_24] : memref<9x128x128xbf16, #tpu.memory_space<vmem>>, vector<1x128x128xbf16>
    %27 = vector.shape_cast %26 : vector<1x128x128xbf16> to vector<128x128xbf16>
    %cst_25 = arith.constant dense<0.000000e+00> : vector<288x128xf32>
    %28 = tpu.matmul %25, %27, %cst_25 {dimension_numbers = #tpu.dot_dimension_numbers<[1], [0], [0], [1], [0, 0, 1, 1], [], []>} : vector<288x128xbf16>, vector<128x128xbf16>, vector<288x128xf32> -> vector<288x128xf32>
    %29 = arith.addf %24, %28 : vector<288x128xf32>
    %c15 = arith.constant 15 : index
    %c0_26 = arith.constant 0 : index
    %30 = vector.load %arg13[%c15, %c0_26] : memref<344x128xbf16, #tpu.memory_space<vmem>>, vector<288x128xbf16>
    %c2 = arith.constant 2 : index
    %c0_27 = arith.constant 0 : index
    %c0_28 = arith.constant 0 : index
    %31 = vector.load %arg4[%c2, %c0_27, %c0_28] : memref<9x128x128xbf16, #tpu.memory_space<vmem>>, vector<1x128x128xbf16>
    %32 = vector.shape_cast %31 : vector<1x128x128xbf16> to vector<128x128xbf16>
    %cst_29 = arith.constant dense<0.000000e+00> : vector<288x128xf32>
    %33 = tpu.matmul %30, %32, %cst_29 {dimension_numbers = #tpu.dot_dimension_numbers<[1], [0], [0], [1], [0, 0, 1, 1], [], []>} : vector<288x128xbf16>, vector<128x128xbf16>, vector<288x128xf32> -> vector<288x128xf32>
    %34 = arith.addf %29, %33 : vector<288x128xf32>
    %c0_30 = arith.constant 0 : index
    %c0_31 = arith.constant 0 : index
    %35 = vector.load %arg14[%c0_30, %c0_31] : memref<288x128xf32, #tpu.memory_space<vmem>>, vector<288x128xf32>
    tpu.vector_store %arg14[%c0_30, %c0_31], %34 {strides = array<i32>} : memref<288x128xf32, #tpu.memory_space<vmem>>, vector<288x128xf32>,
    %c31 = arith.constant 31 : index
    %c0_32 = arith.constant 0 : index
    %36 = vector.load %arg13[%c31, %c0_32] : memref<344x128xbf16, #tpu.memory_space<vmem>>, vector<288x128xbf16>
    %c3 = arith.constant 3 : index
    %c0_33 = arith.constant 0 : index
    %c0_34 = arith.constant 0 : index
    %37 = vector.load %arg4[%c3, %c0_33, %c0_34] : memref<9x128x128xbf16, #tpu.memory_space<vmem>>, vector<1x128x128xbf16>
    %38 = vector.shape_cast %37 : vector<1x128x128xbf16> to vector<128x128xbf16>
    %cst_35 = arith.constant dense<0.000000e+00> : vector<288x128xf32>
    %39 = tpu.matmul %36, %38, %cst_35 {dimension_numbers = #tpu.dot_dimension_numbers<[1], [0], [0], [1], [0, 0, 1, 1], [], []>} : vector<288x128xbf16>, vector<128x128xbf16>, vector<288x128xf32> -> vector<288x128xf32>
    %c32_36 = arith.constant 32 : index
    %c0_37 = arith.constant 0 : index
    %40 = vector.load %arg13[%c32_36, %c0_37] : memref<344x128xbf16, #tpu.memory_space<vmem>>, vector<288x128xbf16>
    %c4 = arith.constant 4 : index
    %c0_38 = arith.constant 0 : index
    %c0_39 = arith.constant 0 : index
    %41 = vector.load %arg4[%c4, %c0_38, %c0_39] : memref<9x128x128xbf16, #tpu.memory_space<vmem>>, vector<1x128x128xbf16>
    %42 = vector.shape_cast %41 : vector<1x128x128xbf16> to vector<128x128xbf16>
    %cst_40 = arith.constant dense<0.000000e+00> : vector<288x128xf32>
    %43 = tpu.matmul %40, %42, %cst_40 {dimension_numbers = #tpu.dot_dimension_numbers<[1], [0], [0], [1], [0, 0, 1, 1], [], []>} : vector<288x128xbf16>, vector<128x128xbf16>, vector<288x128xf32> -> vector<288x128xf32>
    %44 = arith.addf %39, %43 : vector<288x128xf32>
    %c33 = arith.constant 33 : index
    %c0_41 = arith.constant 0 : index
    %45 = vector.load %arg13[%c33, %c0_41] : memref<344x128xbf16, #tpu.memory_space<vmem>>, vector<288x128xbf16>
    %c5 = arith.constant 5 : index
    %c0_42 = arith.constant 0 : index
    %c0_43 = arith.constant 0 : index
    %46 = vector.load %arg4[%c5, %c0_42, %c0_43] : memref<9x128x128xbf16, #tpu.memory_space<vmem>>, vector<1x128x128xbf16>
    %47 = vector.shape_cast %46 : vector<1x128x128xbf16> to vector<128x128xbf16>
    %cst_44 = arith.constant dense<0.000000e+00> : vector<288x128xf32>
    %48 = tpu.matmul %45, %47, %cst_44 {dimension_numbers = #tpu.dot_dimension_numbers<[1], [0], [0], [1], [0, 0, 1, 1], [], []>} : vector<288x128xbf16>, vector<128x128xbf16>, vector<288x128xf32> -> vector<288x128xf32>
    %49 = arith.addf %44, %48 : vector<288x128xf32>
    %c0_45 = arith.constant 0 : index
    %c0_46 = arith.constant 0 : index
    %50 = vector.load %arg14[%c0_45, %c0_46] : memref<288x128xf32, #tpu.memory_space<vmem>>, vector<288x128xf32>
    %51 = arith.addf %50, %49 : vector<288x128xf32>
    %c0_47 = arith.constant 0 : index
    %c0_48 = arith.constant 0 : index
    %52 = vector.load %arg14[%c0_47, %c0_48] : memref<288x128xf32, #tpu.memory_space<vmem>>, vector<288x128xf32>
    tpu.vector_store %arg14[%c0_47, %c0_48], %51 {strides = array<i32>} : memref<288x128xf32, #tpu.memory_space<vmem>>, vector<288x128xf32>,
    %c49 = arith.constant 49 : index
    %c0_49 = arith.constant 0 : index
    %53 = vector.load %arg13[%c49, %c0_49] : memref<344x128xbf16, #tpu.memory_space<vmem>>, vector<288x128xbf16>
    %c6 = arith.constant 6 : index
    %c0_50 = arith.constant 0 : index
    %c0_51 = arith.constant 0 : index
    %54 = vector.load %arg4[%c6, %c0_50, %c0_51] : memref<9x128x128xbf16, #tpu.memory_space<vmem>>, vector<1x128x128xbf16>
    %55 = vector.shape_cast %54 : vector<1x128x128xbf16> to vector<128x128xbf16>
    %cst_52 = arith.constant dense<0.000000e+00> : vector<288x128xf32>
    %56 = tpu.matmul %53, %55, %cst_52 {dimension_numbers = #tpu.dot_dimension_numbers<[1], [0], [0], [1], [0, 0, 1, 1], [], []>} : vector<288x128xbf16>, vector<128x128xbf16>, vector<288x128xf32> -> vector<288x128xf32>
    %c50 = arith.constant 50 : index
    %c0_53 = arith.constant 0 : index
    %57 = vector.load %arg13[%c50, %c0_53] : memref<344x128xbf16, #tpu.memory_space<vmem>>, vector<288x128xbf16>
    %c7 = arith.constant 7 : index
    %c0_54 = arith.constant 0 : index
    %c0_55 = arith.constant 0 : index
    %58 = vector.load %arg4[%c7, %c0_54, %c0_55] : memref<9x128x128xbf16, #tpu.memory_space<vmem>>, vector<1x128x128xbf16>
    %59 = vector.shape_cast %58 : vector<1x128x128xbf16> to vector<128x128xbf16>
    %cst_56 = arith.constant dense<0.000000e+00> : vector<288x128xf32>
    %60 = tpu.matmul %57, %59, %cst_56 {dimension_numbers = #tpu.dot_dimension_numbers<[1], [0], [0], [1], [0, 0, 1, 1], [], []>} : vector<288x128xbf16>, vector<128x128xbf16>, vector<288x128xf32> -> vector<288x128xf32>
    %61 = arith.addf %56, %60 : vector<288x128xf32>
    %c51 = arith.constant 51 : index
    %c0_57 = arith.constant 0 : index
    %62 = vector.load %arg13[%c51, %c0_57] : memref<344x128xbf16, #tpu.memory_space<vmem>>, vector<288x128xbf16>
    %c8 = arith.constant 8 : index
    %c0_58 = arith.constant 0 : index
    %c0_59 = arith.constant 0 : index
    %63 = vector.load %arg4[%c8, %c0_58, %c0_59] : memref<9x128x128xbf16, #tpu.memory_space<vmem>>, vector<1x128x128xbf16>
    %64 = vector.shape_cast %63 : vector<1x128x128xbf16> to vector<128x128xbf16>
    %cst_60 = arith.constant dense<0.000000e+00> : vector<288x128xf32>
    %65 = tpu.matmul %62, %64, %cst_60 {dimension_numbers = #tpu.dot_dimension_numbers<[1], [0], [0], [1], [0, 0, 1, 1], [], []>} : vector<288x128xbf16>, vector<128x128xbf16>, vector<288x128xf32> -> vector<288x128xf32>
    %66 = arith.addf %61, %65 : vector<288x128xf32>
    %c0_61 = arith.constant 0 : index
    %c0_62 = arith.constant 0 : index
    %67 = vector.load %arg14[%c0_61, %c0_62] : memref<288x128xf32, #tpu.memory_space<vmem>>, vector<288x128xf32>
    %68 = arith.addf %67, %66 : vector<288x128xf32>
    %c0_63 = arith.constant 0 : index
    %c0_64 = arith.constant 0 : index
    %69 = vector.load %arg14[%c0_63, %c0_64] : memref<288x128xf32, #tpu.memory_space<vmem>>, vector<288x128xf32>
    tpu.vector_store %arg14[%c0_63, %c0_64], %68 {strides = array<i32>} : memref<288x128xf32, #tpu.memory_space<vmem>>, vector<288x128xf32>,
    %c0_65 = arith.constant 0 : index
    %c0_66 = arith.constant 0 : index
    %70 = vector.load %arg14[%c0_65, %c0_66] : memref<288x128xf32, #tpu.memory_space<vmem>>, vector<288x128xf32>
    %c0_67 = arith.constant 0 : index
    %c0_68 = arith.constant 0 : index
    %71 = vector.load %arg8[%c0_67, %c0_68] : memref<1x128xf32, #tpu.memory_space<vmem>>, vector<1x128xf32>
    %72 = vector.broadcast %71 : vector<1x128xf32> to vector<288x128xf32>
    %73 = arith.mulf %70, %72 : vector<288x128xf32>
    %c0_69 = arith.constant 0 : index
    %c0_70 = arith.constant 0 : index
    %74 = vector.load %arg9[%c0_69, %c0_70] : memref<1x128xf32, #tpu.memory_space<vmem>>, vector<1x128xf32>
    %75 = vector.broadcast %74 : vector<1x128xf32> to vector<288x128xf32>
    %76 = arith.addf %73, %75 : vector<288x128xf32>
    %cst_71 = arith.constant 0.000000e+00 : f32
    %77 = vector.broadcast %cst_71 : f32 to vector<288x128xf32>
    %78 = arith.maximumf %76, %77 : vector<288x128xf32>
    %79 = arith.truncf %78 : vector<288x128xf32> to vector<288x128xbf16>
    %c0_72 = arith.constant 0 : index
    %c0_73 = arith.constant 0 : index
    %80 = vector.load %arg5[%c0_72, %c0_73] : memref<128x128xbf16, #tpu.memory_space<vmem>>, vector<128x128xbf16>
    %cst_74 = arith.constant dense<0.000000e+00> : vector<288x128xf32>
    %81 = tpu.matmul %79, %80, %cst_74 {dimension_numbers = #tpu.dot_dimension_numbers<[1], [0], [0], [1], [0, 0, 1, 1], [], []>} : vector<288x128xbf16>, vector<128x128xbf16>, vector<288x128xf32> -> vector<288x128xf32>
    %c0_75 = arith.constant 0 : index
    %c0_76 = arith.constant 0 : index
    %82 = vector.load %arg10[%c0_75, %c0_76] : memref<1x128xf32, #tpu.memory_space<vmem>>, vector<1x128xf32>
    %83 = vector.broadcast %82 : vector<1x128xf32> to vector<288x128xf32>
    %84 = arith.mulf %81, %83 : vector<288x128xf32>
    %c0_77 = arith.constant 0 : index
    %c0_78 = arith.constant 0 : index
    %85 = vector.load %arg11[%c0_77, %c0_78] : memref<1x128xf32, #tpu.memory_space<vmem>>, vector<1x128xf32>
    %86 = vector.broadcast %85 : vector<1x128xf32> to vector<288x128xf32>
    %87 = arith.addf %84, %86 : vector<288x128xf32>
    %c0_79 = arith.constant 0 : index
    %c0_80 = arith.constant 0 : index
    %c0_81 = arith.constant 0 : index
    %88 = vector.load %arg1[%c0_79, %c0_80, %c0_81] : memref<1x288x128xbf16, #tpu.memory_space<vmem>>, vector<1x288x128xbf16>
    %89 = vector.shape_cast %88 : vector<1x288x128xbf16> to vector<288x128xbf16>
    %90 = arith.extf %89 : vector<288x128xbf16> to vector<288x128xf32>
    %91 = arith.addf %87, %90 : vector<288x128xf32>
    %cst_82 = arith.constant 0.000000e+00 : f32
    %92 = vector.broadcast %cst_82 : f32 to vector<288x128xf32>
    %93 = arith.maximumf %91, %92 : vector<288x128xf32>
    %94 = arith.truncf %93 : vector<288x128xf32> to vector<288x128xbf16>
    %c0_83 = arith.constant 0 : index
    %c0_84 = arith.constant 0 : index
    %c0_85 = arith.constant 0 : index
    %95 = vector.load %arg12[%c0_83, %c0_84, %c0_85] : memref<1x288x128xbf16, #tpu.memory_space<vmem>>, vector<1x288x128xbf16>
    %96 = vector.shape_cast %95 : vector<1x288x128xbf16> to vector<288x128xbf16>
    %97 = vector.shape_cast %94 : vector<288x128xbf16> to vector<1x288x128xbf16>
    tpu.vector_store %arg12[%c0_83, %c0_84, %c0_85], %97 {strides = array<i32>} : memref<1x288x128xbf16, #tpu.memory_space<vmem>>, vector<1x288x128xbf16>,
    return
  }
  func.func @transform_0(%arg0: i32) -> (i32, i32, i32) {
    %c0_i32 = arith.constant 0 : i32
    %c0_i32_0 = arith.constant 0 : i32
    %c0_i32_1 = arith.constant 0 : i32
    return %arg0, %c0_i32, %c0_i32_0 : i32, i32, i32
  }
  func.func @transform_1(%arg0: i32) -> (i32, i32) {
    %c0_i32 = arith.constant 0 : i32
    %c0_i32_0 = arith.constant 0 : i32
    %c0_i32_1 = arith.constant 0 : i32
    return %c0_i32, %c0_i32_0 : i32, i32
  }
  func.func @transform_2(%arg0: i32) -> (i32, i32) {
    %c0_i32 = arith.constant 0 : i32
    %c0_i32_0 = arith.constant 0 : i32
    %c0_i32_1 = arith.constant 0 : i32
    return %c0_i32, %c0_i32_0 : i32, i32
  }
  func.func @transform_3(%arg0: i32) -> (i32, i32, i32) {
    %c0_i32 = arith.constant 0 : i32
    %c0_i32_0 = arith.constant 0 : i32
    %c0_i32_1 = arith.constant 0 : i32
    %c0_i32_2 = arith.constant 0 : i32
    return %c0_i32, %c0_i32_0, %c0_i32_1 : i32, i32, i32
  }
  func.func @transform_4(%arg0: i32) -> (i32, i32) {
    %c0_i32 = arith.constant 0 : i32
    %c0_i32_0 = arith.constant 0 : i32
    %c0_i32_1 = arith.constant 0 : i32
    return %c0_i32, %c0_i32_0 : i32, i32
  }
  func.func @transform_5(%arg0: i32) -> (i32, i32) {
    %c0_i32 = arith.constant 0 : i32
    %c0_i32_0 = arith.constant 0 : i32
    %c0_i32_1 = arith.constant 0 : i32
    return %c0_i32, %c0_i32_0 : i32, i32
  }
  func.func @transform_6(%arg0: i32) -> (i32, i32) {
    %c0_i32 = arith.constant 0 : i32
    %c0_i32_0 = arith.constant 0 : i32
    %c0_i32_1 = arith.constant 0 : i32
    return %c0_i32, %c0_i32_0 : i32, i32
  }
  func.func @transform_7(%arg0: i32) -> (i32, i32) {
    %c0_i32 = arith.constant 0 : i32
    %c0_i32_0 = arith.constant 0 : i32
    %c0_i32_1 = arith.constant 0 : i32
    return %c0_i32, %c0_i32_0 : i32, i32
  }
  func.func @transform_8(%arg0: i32) -> (i32, i32) {
    %c0_i32 = arith.constant 0 : i32
    %c0_i32_0 = arith.constant 0 : i32
    %c0_i32_1 = arith.constant 0 : i32
    return %c0_i32, %c0_i32_0 : i32, i32
  }
  func.func @transform_9(%arg0: i32) -> (i32, i32) {
    %c0_i32 = arith.constant 0 : i32
    %c0_i32_0 = arith.constant 0 : i32
    %c0_i32_1 = arith.constant 0 : i32
    return %c0_i32, %c0_i32_0 : i32, i32
  }
  func.func @transform_10(%arg0: i32) -> (i32, i32) {
    %c0_i32 = arith.constant 0 : i32
    %c0_i32_0 = arith.constant 0 : i32
    %c0_i32_1 = arith.constant 0 : i32
    return %c0_i32, %c0_i32_0 : i32, i32
  }
  func.func @transform_11(%arg0: i32) -> (i32, i32, i32) {
    %c0_i32 = arith.constant 0 : i32
    %c0_i32_0 = arith.constant 0 : i32
    %c0_i32_1 = arith.constant 0 : i32
    return %arg0, %c0_i32, %c0_i32_0 : i32, i32, i32
  }
}

</mosaic_0001>

<llo_original>
// kernel: tile.8
$region0: #{tile.8}
  #allocation0 [shape = 's32[1]{0}', space=sflag, size = 0x4, scoped, tag = 'scoped memory for tile.8']
  %s0 = inlined_call_operand.vmem [shape: f32[18], index: 0, kind: input, shape index: {}]
  %s1 = inlined_call_operand.vmem [shape: f32[16,18], index: 1, kind: output, shape index: {}]
  // Predicated region
  $region2: #{tile.8} parent=0 // pred_check
    _
  $region3: #{tile.8} parent=0 // pred_check_branch
    %3 = sbr.rel (0) target = $region5
  $region4: #{tile.8} parent=0 // pred_region
    _
  $region5: #{tile.8} parent=0 // pred_fallthru
    _
  %v4 = vld [vmem:[%s0] ss:$0 sm:$0xff]
  %5 = vst [vmem:[%s1] sm:$0xff] %v4
  %s6 = scalar_lea.vmem %s1, 8
  %7 = vst [vmem:[%s6] sm:$0xff] %v4

// kernel: tile.0
$region0: #{tile.0}
  %s0 = inlined_call_operand.vmem [shape: f32[16,18], index: 0, kind: input, shape index: {}]
  %s1 = inlined_call_operand.vmem [shape: f32[288,1], index: 1, kind: output, shape index: {}]
  %v2 = vld [vmem:[%s0] sm:$0xff]
  %vm3 = vcmask 7168
  %4 = vst.msk [vmem:[%s1] ss:$18 sm:$0xff] %vm3, %v2
  %s5 = scalar_lea.vmem %s0, 8
  %v6 = vld [vmem:[%s5] sm:$0xff]
  %vm7 = vcmask 7168
  %s8 = scalar_lea.vmem %s1, 144
  %9 = vst.msk [vmem:[%s8] ss:$18 sm:$0xff] %vm7, %v6
  %v10 = vld.sshfl [vmem:[%s0] sm:$0xff pattern:$0xf6d4b290]
  %11 = vrot.lane.b32.xlu0 %v10, 127
  %v12 = vpop.permute.xlu0 %11
  %vm13 = vcmask 7168
  %s14 = scalar_lea.vmem %s1, 1
  %15 = vst.msk [vmem:[%s14] ss:$162 sm:$0x3] %vm13, %v12
  %s16 = scalar_lea.vmem %s1, 4294967009
  %17 = vst.msk [vmem:[%s16] ss:$162 sm:$0xc] %vm13, %v12
  %s18 = scalar_lea.vmem %s1, 4294966721
  %19 = vst.msk [vmem:[%s18] ss:$162 sm:$0x30] %vm13, %v12
  %s20 = scalar_lea.vmem %s1, 4294966433
  %21 = vst.msk [vmem:[%s20] ss:$162 sm:$0xc0] %vm13, %v12
  %s22 = scalar_lea.vmem %s0, 1
  %v23 = vld.sshfl [vmem:[%s22] sm:$0xff pattern:$0x6d4b2907]
  %24 = vrot.lane.b32.xlu0 %v23, 127
  %v25 = vpop.permute.xlu0 %24
  %vm26 = vcmask 7168
  %s27 = scalar_lea.vmem %s1, 145
  %28 = vst.msk [vmem:[%s27] ss:$-126 sm:$0x3] %vm26, %v25
  %s29 = scalar_lea.vmem %s1, 433
  %30 = vst.msk [vmem:[%s29] ss:$-126 sm:$0xc] %vm26, %v25
  %s31 = scalar_lea.vmem %s1, 721
  %32 = vst.msk [vmem:[%s31] ss:$-126 sm:$0x30] %vm26, %v25
  %s33 = scalar_lea.vmem %s1, 1009
  %34 = vst.msk [vmem:[%s33] ss:$-126 sm:$0xc0] %vm26, %v25
  %v35 = vld.sshfl [vmem:[%s0] sm:$0xff pattern:$0x6d4b2907]
  %36 = vrot.lane.b32.xlu0 %v35, 126
  %v37 = vpop.permute.xlu0 %36
  %vm38 = vcmask 7168
  %s39 = scalar_lea.vmem %s1, 128
  %40 = vst.msk [vmem:[%s39] ss:$-126 sm:$0x3] %vm38, %v37
  %s41 = scalar_lea.vmem %s1, 416
  %42 = vst.msk [vmem:[%s41] ss:$-126 sm:$0xc] %vm38, %v37
  %s43 = scalar_lea.vmem %s1, 704
  %44 = vst.msk [vmem:[%s43] ss:$-126 sm:$0x30] %vm38, %v37
  %s45 = scalar_lea.vmem %s1, 992
  %46 = vst.msk [vmem:[%s45] ss:$-126 sm:$0xc0] %vm38, %v37
  %s47 = scalar_lea.vmem %s0, 1
  %v48 = vld.sshfl [vmem:[%s47] sm:$0xff pattern:$0xd4b2907e]
  %49 = vrot.lane.b32.xlu0 %v48, 126
  %v50 = vpop.permute.xlu0 %49
  %vm51 = vcmask 7168
  %s52 = scalar_lea.vmem %s1, 272
  %53 = vst.msk [vmem:[%s52] ss:$-126 sm:$0x7] %vm51, %v50
  %s54 = scalar_lea.vmem %s1, 560
  %55 = vst.msk [vmem:[%s54] ss:$-126 sm:$0x18] %vm51, %v50
  %s56 = scalar_lea.vmem %s1, 848
  %57 = vst.msk [vmem:[%s56] ss:$-126 sm:$0x60] %vm51, %v50
  %s58 = scalar_lea.vmem %s1, 247
  %59 = vst.msk [vmem:[%s58] sm:$0x80] %vm51, %v50
  %v60 = vld.sshfl [vmem:[%s0] sm:$0xff pattern:$0x6d4b2907]
  %61 = vrot.lane.b32.xlu0 %v60, 125
  %v62 = vpop.permute.xlu0 %61
  %vm63 = vcmask 7168
  %s64 = scalar_lea.vmem %s1, 129
  %65 = vst.msk [vmem:[%s64] ss:$-126 sm:$0x3] %vm63, %v62
  %s66 = scalar_lea.vmem %s1, 417
  %67 = vst.msk [vmem:[%s66] ss:$-126 sm:$0xc] %vm63, %v62
  %s68 = scalar_lea.vmem %s1, 705
  %69 = vst.msk [vmem:[%s68] ss:$-126 sm:$0x30] %vm63, %v62
  %s70 = scalar_lea.vmem %s1, 993
  %71 = vst.msk [vmem:[%s70] ss:$-126 sm:$0xc0] %vm63, %v62
  %s72 = scalar_lea.vmem %s0, 1
  %v73 = vld.sshfl [vmem:[%s72] sm:$0xff pattern:$0xd4b2907e]
  %74 = vrot.lane.b32.xlu0 %v73, 125
  %v75 = vpop.permute.xlu0 %74
  %vm76 = vcmask 7168
  %s77 = scalar_lea.vmem %s1, 273
  %78 = vst.msk [vmem:[%s77] ss:$-126 sm:$0x7] %vm76, %v75
  %s79 = scalar_lea.vmem %s1, 561
  %80 = vst.msk [vmem:[%s79] ss:$-126 sm:$0x18] %vm76, %v75
  %s81 = scalar_lea.vmem %s1, 849
  %82 = vst.msk [vmem:[%s81] ss:$-126 sm:$0x60] %vm76, %v75
  %s83 = scalar_lea.vmem %s1, 248
  %84 = vst.msk [vmem:[%s83] sm:$0x80] %vm76, %v75
  %v85 = vld.sshfl [vmem:[%s0] sm:$0xff pattern:$0xd4b2907e]
  %86 = vrot.lane.b32.xlu0 %v85, 124
  %v87 = vpop.permute.xlu0 %86
  %vm88 = vcmask 7168
  %s89 = scalar_lea.vmem %s1, 256
  %90 = vst.msk [vmem:[%s89] ss:$-126 sm:$0x7] %vm88, %v87
  %s91 = scalar_lea.vmem %s1, 544
  %92 = vst.msk [vmem:[%s91] ss:$-126 sm:$0x18] %vm88, %v87
  %s93 = scalar_lea.vmem %s1, 832
  %94 = vst.msk [vmem:[%s93] ss:$-126 sm:$0x60] %vm88, %v87
  %s95 = scalar_lea.vmem %s1, 231
  %96 = vst.msk [vmem:[%s95] sm:$0x80] %vm88, %v87
  %s97 = scalar_lea.vmem %s0, 1
  %v98 = vld.sshfl [vmem:[%s97] sm:$0xff pattern:$0x4b2907e5]
  %99 = vrot.lane.b32.xlu0 %v98, 124
  %v100 = vpop.permute.xlu0 %99
  %vm101 = vcmask 7168
  %s102 = scalar_lea.vmem %s1, 112
  %103 = vst.msk [vmem:[%s102] ss:$162 sm:$0x3] %vm101, %v100
  %s104 = scalar_lea.vmem %s1, 400
  %105 = vst.msk [vmem:[%s104] ss:$-126 sm:$0xc] %vm101, %v100
  %s106 = scalar_lea.vmem %s1, 688
  %107 = vst.msk [vmem:[%s106] ss:$-126 sm:$0x30] %vm101, %v100
  %s108 = scalar_lea.vmem %s1, 976
  %109 = vst.msk [vmem:[%s108] ss:$-126 sm:$0xc0] %vm101, %v100
  %v110 = vld.sshfl [vmem:[%s0] sm:$0xff pattern:$0xd4b2907e]
  %111 = vrot.lane.b32.xlu0 %v110, 123
  %v112 = vpop.permute.xlu0 %111
  %vm113 = vcmask 7168
  %s114 = scalar_lea.vmem %s1, 257
  %115 = vst.msk [vmem:[%s114] ss:$-126 sm:$0x7] %vm113, %v112
  %s116 = scalar_lea.vmem %s1, 545
  %117 = vst.msk [vmem:[%s116] ss:$-126 sm:$0x18] %vm113, %v112
  %s118 = scalar_lea.vmem %s1, 833
  %119 = vst.msk [vmem:[%s118] ss:$-126 sm:$0x60] %vm113, %v112
  %s120 = scalar_lea.vmem %s1, 232
  %121 = vst.msk [vmem:[%s120] sm:$0x80] %vm113, %v112
  %s122 = scalar_lea.vmem %s0, 1
  %v123 = vld.sshfl [vmem:[%s122] sm:$0xff pattern:$0x4b2907e5]
  %124 = vrot.lane.b32.xlu0 %v123, 123
  %v125 = vpop.permute.xlu0 %124
  %vm126 = vcmask 7168
  %s127 = scalar_lea.vmem %s1, 113
  %128 = vst.msk [vmem:[%s127] ss:$162 sm:$0x3] %vm126, %v125
  %s129 = scalar_lea.vmem %s1, 401
  %130 = vst.msk [vmem:[%s129] ss:$-126 sm:$0xc] %vm126, %v125
  %s131 = scalar_lea.vmem %s1, 689
  %132 = vst.msk [vmem:[%s131] ss:$-126 sm:$0x30] %vm126, %v125
  %s133 = scalar_lea.vmem %s1, 977
  %134 = vst.msk [vmem:[%s133] ss:$-126 sm:$0xc0] %vm126, %v125
  %v135 = vld.sshfl [vmem:[%s0] sm:$0xff pattern:$0x4b2907e5]
  %136 = vrot.lane.b32.xlu0 %v135, 122
  %v137 = vpop.permute.xlu0 %136
  %vm138 = vcmask 7168
  %s139 = scalar_lea.vmem %s1, 96
  %140 = vst.msk [vmem:[%s139] ss:$162 sm:$0x3] %vm138, %v137
  %s141 = scalar_lea.vmem %s1, 384
  %142 = vst.msk [vmem:[%s141] ss:$-126 sm:$0xc] %vm138, %v137
  %s143 = scalar_lea.vmem %s1, 672
  %144 = vst.msk [vmem:[%s143] ss:$-126 sm:$0x30] %vm138, %v137
  %s145 = scalar_lea.vmem %s1, 960
  %146 = vst.msk [vmem:[%s145] ss:$-126 sm:$0xc0] %vm138, %v137
  %s147 = scalar_lea.vmem %s0, 1
  %v148 = vld.sshfl [vmem:[%s147] sm:$0xff pattern:$0xb2907e5c]
  %149 = vrot.lane.b32.xlu0 %v148, 122
  %v150 = vpop.permute.xlu0 %149
  %vm151 = vcmask 7168
  %s152 = scalar_lea.vmem %s1, 240
  %153 = vst.msk [vmem:[%s152] ss:$-126 sm:$0x3] %vm151, %v150
  %s154 = scalar_lea.vmem %s1, 528
  %155 = vst.msk [vmem:[%s154] ss:$-126 sm:$0x1c] %vm151, %v150
  %s156 = scalar_lea.vmem %s1, 816
  %157 = vst.msk [vmem:[%s156] ss:$-126 sm:$0x60] %vm151, %v150
  %s158 = scalar_lea.vmem %s1, 215
  %159 = vst.msk [vmem:[%s158] sm:$0x80] %vm151, %v150
  %v160 = vld.sshfl [vmem:[%s0] sm:$0xff pattern:$0x4b2907e5]
  %161 = vrot.lane.b32.xlu0 %v160, 121
  %v162 = vpop.permute.xlu0 %161
  %vm163 = vcmask 7168
  %s164 = scalar_lea.vmem %s1, 97
  %165 = vst.msk [vmem:[%s164] ss:$162 sm:$0x3] %vm163, %v162
  %s166 = scalar_lea.vmem %s1, 385
  %167 = vst.msk [vmem:[%s166] ss:$-126 sm:$0xc] %vm163, %v162
  %s168 = scalar_lea.vmem %s1, 673
  %169 = vst.msk [vmem:[%s168] ss:$-126 sm:$0x30] %vm163, %v162
  %s170 = scalar_lea.vmem %s1, 961
  %171 = vst.msk [vmem:[%s170] ss:$-126 sm:$0xc0] %vm163, %v162
  %s172 = scalar_lea.vmem %s0, 1
  %v173 = vld.sshfl [vmem:[%s172] sm:$0xff pattern:$0xb2907e5c]
  %174 = vrot.lane.b32.xlu0 %v173, 121
  %v175 = vpop.permute.xlu0 %174
  %vm176 = vcmask 7168
  %s177 = scalar_lea.vmem %s1, 241
  %178 = vst.msk [vmem:[%s177] ss:$-126 sm:$0x3] %vm176, %v175
  %s179 = scalar_lea.vmem %s1, 529
  %180 = vst.msk [vmem:[%s179] ss:$-126 sm:$0x1c] %vm176, %v175
  %s181 = scalar_lea.vmem %s1, 817
  %182 = vst.msk [vmem:[%s181] ss:$-126 sm:$0x60] %vm176, %v175
  %s183 = scalar_lea.vmem %s1, 216
  %184 = vst.msk [vmem:[%s183] sm:$0x80] %vm176, %v175
  %v185 = vld.sshfl [vmem:[%s0] sm:$0xff pattern:$0xb2907e5c]
  %186 = vrot.lane.b32.xlu0 %v185, 120
  %v187 = vpop.permute.xlu0 %186
  %vm188 = vcmask 7168
  %s189 = scalar_lea.vmem %s1, 224
  %190 = vst.msk [vmem:[%s189] ss:$-126 sm:$0x3] %vm188, %v187
  %s191 = scalar_lea.vmem %s1, 512
  %192 = vst.msk [vmem:[%s191] ss:$-126 sm:$0x1c] %vm188, %v187
  %s193 = scalar_lea.vmem %s1, 800
  %194 = vst.msk [vmem:[%s193] ss:$-126 sm:$0x60] %vm188, %v187
  %s195 = scalar_lea.vmem %s1, 199
  %196 = vst.msk [vmem:[%s195] sm:$0x80] %vm188, %v187
  %s197 = scalar_lea.vmem %s0, 1
  %v198 = vld.sshfl [vmem:[%s197] sm:$0xff pattern:$0x2907e5c3]
  %199 = vrot.lane.b32.xlu0 %v198, 120
  %v200 = vpop.permute.xlu0 %199
  %vm201 = vcmask 7168
  %s202 = scalar_lea.vmem %s1, 80
  %203 = vst.msk [vmem:[%s202] ss:$162 sm:$0x3] %vm201, %v200
  %s204 = scalar_lea.vmem %s1, 4294967088
  %205 = vst.msk [vmem:[%s204] ss:$162 sm:$0xc] %vm201, %v200
  %s206 = scalar_lea.vmem %s1, 656
  %207 = vst.msk [vmem:[%s206] ss:$-126 sm:$0x30] %vm201, %v200
  %s208 = scalar_lea.vmem %s1, 944
  %209 = vst.msk [vmem:[%s208] ss:$-126 sm:$0xc0] %vm201, %v200
  %v210 = vld.sshfl [vmem:[%s0] sm:$0xff pattern:$0xb2907e5c]
  %211 = vrot.lane.b32.xlu0 %v210, 119
  %v212 = vpop.permute.xlu0 %211
  %vm213 = vcmask 7168
  %s214 = scalar_lea.vmem %s1, 225
  %215 = vst.msk [vmem:[%s214] ss:$-126 sm:$0x3] %vm213, %v212
  %s216 = scalar_lea.vmem %s1, 513
  %217 = vst.msk [vmem:[%s216] ss:$-126 sm:$0x1c] %vm213, %v212
  %s218 = scalar_lea.vmem %s1, 801
  %219 = vst.msk [vmem:[%s218] ss:$-126 sm:$0x60] %vm213, %v212
  %s220 = scalar_lea.vmem %s1, 200
  %221 = vst.msk [vmem:[%s220] sm:$0x80] %vm213, %v212
  %s222 = scalar_lea.vmem %s0, 1
  %v223 = vld.sshfl [vmem:[%s222] sm:$0xff pattern:$0x2907e5c3]
  %224 = vrot.lane.b32.xlu0 %v223, 119
  %v225 = vpop.permute.xlu0 %224
  %vm226 = vcmask 7168
  %s227 = scalar_lea.vmem %s1, 81
  %228 = vst.msk [vmem:[%s227] ss:$162 sm:$0x3] %vm226, %v225
  %s229 = scalar_lea.vmem %s1, 4294967089
  %230 = vst.msk [vmem:[%s229] ss:$162 sm:$0xc] %vm226, %v225
  %s231 = scalar_lea.vmem %s1, 657
  %232 = vst.msk [vmem:[%s231] ss:$-126 sm:$0x30] %vm226, %v225
  %s233 = scalar_lea.vmem %s1, 945
  %234 = vst.msk [vmem:[%s233] ss:$-126 sm:$0xc0] %vm226, %v225
  %v235 = vld.sshfl [vmem:[%s0] sm:$0xff pattern:$0x2907e5c3]
  %236 = vrot.lane.b32.xlu0 %v235, 118
  %v237 = vpop.permute.xlu0 %236
  %vm238 = vcmask 7168
  %s239 = scalar_lea.vmem %s1, 64
  %240 = vst.msk [vmem:[%s239] ss:$162 sm:$0x3] %vm238, %v237
  %s241 = scalar_lea.vmem %s1, 4294967072
  %242 = vst.msk [vmem:[%s241] ss:$162 sm:$0xc] %vm238, %v237
  %s243 = scalar_lea.vmem %s1, 640
  %244 = vst.msk [vmem:[%s243] ss:$-126 sm:$0x30] %vm238, %v237
  %s245 = scalar_lea.vmem %s1, 928
  %246 = vst.msk [vmem:[%s245] ss:$-126 sm:$0xc0] %vm238, %v237
  %s247 = scalar_lea.vmem %s0, 1
  %v248 = vld.sshfl [vmem:[%s247] sm:$0xff pattern:$0x907e5c3a]
  %249 = vrot.lane.b32.xlu0 %v248, 118
  %v250 = vpop.permute.xlu0 %249
  %vm251 = vcmask 7168
  %s252 = scalar_lea.vmem %s1, 208
  %253 = vst.msk [vmem:[%s252] ss:$-126 sm:$0x3] %vm251, %v250
  %s254 = scalar_lea.vmem %s1, 496
  %255 = vst.msk [vmem:[%s254] ss:$-126 sm:$0xc] %vm251, %v250
  %s256 = scalar_lea.vmem %s1, 784
  %257 = vst.msk [vmem:[%s256] ss:$-126 sm:$0x70] %vm251, %v250
  %s258 = scalar_lea.vmem %s1, 183
  %259 = vst.msk [vmem:[%s258] sm:$0x80] %vm251, %v250
  %v260 = vld.sshfl [vmem:[%s0] sm:$0xff pattern:$0x2907e5c3]
  %261 = vrot.lane.b32.xlu0 %v260, 117
  %v262 = vpop.permute.xlu0 %261
  %vm263 = vcmask 7168
  %s264 = scalar_lea.vmem %s1, 65
  %265 = vst.msk [vmem:[%s264] ss:$162 sm:$0x3] %vm263, %v262
  %s266 = scalar_lea.vmem %s1, 4294967073
  %267 = vst.msk [vmem:[%s266] ss:$162 sm:$0xc] %vm263, %v262
  %s268 = scalar_lea.vmem %s1, 641
  %269 = vst.msk [vmem:[%s268] ss:$-126 sm:$0x30] %vm263, %v262
  %s270 = scalar_lea.vmem %s1, 929
  %271 = vst.msk [vmem:[%s270] ss:$-126 sm:$0xc0] %vm263, %v262
  %s272 = scalar_lea.vmem %s0, 1
  %v273 = vld.sshfl [vmem:[%s272] sm:$0xff pattern:$0x907e5c3a]
  %274 = vrot.lane.b32.xlu0 %v273, 117
  %v275 = vpop.permute.xlu0 %274
  %vm276 = vcmask 7168
  %s277 = scalar_lea.vmem %s1, 209
  %278 = vst.msk [vmem:[%s277] ss:$-126 sm:$0x3] %vm276, %v275
  %s279 = scalar_lea.vmem %s1, 497
  %280 = vst.msk [vmem:[%s279] ss:$-126 sm:$0xc] %vm276, %v275
  %s281 = scalar_lea.vmem %s1, 785
  %282 = vst.msk [vmem:[%s281] ss:$-126 sm:$0x70] %vm276, %v275
  %s283 = scalar_lea.vmem %s1, 184
  %284 = vst.msk [vmem:[%s283] sm:$0x80] %vm276, %v275
  %v285 = vld.sshfl [vmem:[%s0] sm:$0xff pattern:$0x907e5c3a]
  %286 = vrot.lane.b32.xlu0 %v285, 116
  %v287 = vpop.permute.xlu0 %286
  %vm288 = vcmask 7168
  %s289 = scalar_lea.vmem %s1, 192
  %290 = vst.msk [vmem:[%s289] ss:$-126 sm:$0x3] %vm288, %v287
  %s291 = scalar_lea.vmem %s1, 480
  %292 = vst.msk [vmem:[%s291] ss:$-126 sm:$0xc] %vm288, %v287
  %s293 = scalar_lea.vmem %s1, 768
  %294 = vst.msk [vmem:[%s293] ss:$-126 sm:$0x70] %vm288, %v287
  %s295 = scalar_lea.vmem %s1, 167
  %296 = vst.msk [vmem:[%s295] sm:$0x80] %vm288, %v287
  %s297 = scalar_lea.vmem %s0, 1
  %v298 = vld.sshfl [vmem:[%s297] sm:$0xff pattern:$0x7e5c3a1]
  %299 = vrot.lane.b32.xlu0 %v298, 116
  %v300 = vpop.permute.xlu0 %299
  %vm301 = vcmask 7168
  %s302 = scalar_lea.vmem %s1, 48
  %303 = vst.msk [vmem:[%s302] ss:$162 sm:$0x3] %vm301, %v300
  %s304 = scalar_lea.vmem %s1, 4294967056
  %305 = vst.msk [vmem:[%s304] ss:$162 sm:$0xc] %vm301, %v300
  %s306 = scalar_lea.vmem %s1, 4294966768
  %307 = vst.msk [vmem:[%s306] ss:$162 sm:$0x30] %vm301, %v300
  %s308 = scalar_lea.vmem %s1, 912
  %309 = vst.msk [vmem:[%s308] ss:$-126 sm:$0xc0] %vm301, %v300
  %v310 = vld.sshfl [vmem:[%s0] sm:$0xff pattern:$0x907e5c3a]
  %311 = vrot.lane.b32.xlu0 %v310, 115
  %v312 = vpop.permute.xlu0 %311
  %vm313 = vcmask 7168
  %s314 = scalar_lea.vmem %s1, 193
  %315 = vst.msk [vmem:[%s314] ss:$-126 sm:$0x3] %vm313, %v312
  %s316 = scalar_lea.vmem %s1, 481
  %317 = vst.msk [vmem:[%s316] ss:$-126 sm:$0xc] %vm313, %v312
  %s318 = scalar_lea.vmem %s1, 769
  %319 = vst.msk [vmem:[%s318] ss:$-126 sm:$0x70] %vm313, %v312
  %s320 = scalar_lea.vmem %s1, 168
  %321 = vst.msk [vmem:[%s320] sm:$0x80] %vm313, %v312
  %s322 = scalar_lea.vmem %s0, 1
  %v323 = vld.sshfl [vmem:[%s322] sm:$0xff pattern:$0x7e5c3a1]
  %324 = vrot.lane.b32.xlu0 %v323, 115
  %v325 = vpop.permute.xlu0 %324
  %vm326 = vcmask 7168
  %s327 = scalar_lea.vmem %s1, 49
  %328 = vst.msk [vmem:[%s327] ss:$162 sm:$0x3] %vm326, %v325
  %s329 = scalar_lea.vmem %s1, 4294967057
  %330 = vst.msk [vmem:[%s329] ss:$162 sm:$0xc] %vm326, %v325
  %s331 = scalar_lea.vmem %s1, 4294966769
  %332 = vst.msk [vmem:[%s331] ss:$162 sm:$0x30] %vm326, %v325
  %s333 = scalar_lea.vmem %s1, 913
  %334 = vst.msk [vmem:[%s333] ss:$-126 sm:$0xc0] %vm326, %v325
  %v335 = vld.sshfl [vmem:[%s0] sm:$0xff pattern:$0x7e5c3a1]
  %336 = vrot.lane.b32.xlu0 %v335, 114
  %v337 = vpop.permute.xlu0 %336
  %vm338 = vcmask 7168
  %s339 = scalar_lea.vmem %s1, 32
  %340 = vst.msk [vmem:[%s339] ss:$162 sm:$0x3] %vm338, %v337
  %s341 = scalar_lea.vmem %s1, 4294967040
  %342 = vst.msk [vmem:[%s341] ss:$162 sm:$0xc] %vm338, %v337
  %s343 = scalar_lea.vmem %s1, 4294966752
  %344 = vst.msk [vmem:[%s343] ss:$162 sm:$0x30] %vm338, %v337
  %s345 = scalar_lea.vmem %s1, 896
  %346 = vst.msk [vmem:[%s345] ss:$-126 sm:$0xc0] %vm338, %v337
  %s347 = scalar_lea.vmem %s0, 2
  %v348 = vld.sshfl [vmem:[%s347] sm:$0xff pattern:$0x6d4b2907]
  %349 = vrot.lane.b32.xlu0 %v348, 114
  %v350 = vpop.permute.xlu0 %349
  %vm351 = vcmask 7168
  %s352 = scalar_lea.vmem %s1, 176
  %353 = vst.msk [vmem:[%s352] ss:$-126 sm:$0x3] %vm351, %v350
  %s354 = scalar_lea.vmem %s1, 464
  %355 = vst.msk [vmem:[%s354] ss:$-126 sm:$0xc] %vm351, %v350
  %s356 = scalar_lea.vmem %s1, 752
  %357 = vst.msk [vmem:[%s356] ss:$-126 sm:$0x30] %vm351, %v350
  %s358 = scalar_lea.vmem %s1, 1040
  %359 = vst.msk [vmem:[%s358] ss:$-126 sm:$0xc0] %vm351, %v350
  %v360 = vld.sshfl [vmem:[%s0] sm:$0xff pattern:$0x7e5c3a1]
  %361 = vrot.lane.b32.xlu0 %v360, 113
  %v362 = vpop.permute.xlu0 %361
  %vm363 = vcmask 7168
  %s364 = scalar_lea.vmem %s1, 33
  %365 = vst.msk [vmem:[%s364] ss:$162 sm:$0x3] %vm363, %v362
  %s366 = scalar_lea.vmem %s1, 4294967041
  %367 = vst.msk [vmem:[%s366] ss:$162 sm:$0xc] %vm363, %v362
  %s368 = scalar_lea.vmem %s1, 4294966753
  %369 = vst.msk [vmem:[%s368] ss:$162 sm:$0x30] %vm363, %v362
  %s370 = scalar_lea.vmem %s1, 897
  %371 = vst.msk [vmem:[%s370] ss:$-126 sm:$0xc0] %vm363, %v362
  %s372 = scalar_lea.vmem %s0, 2
  %v373 = vld.sshfl [vmem:[%s372] sm:$0xff pattern:$0x6d4b2907]
  %374 = vrot.lane.b32.xlu0 %v373, 113
  %v375 = vpop.permute.xlu0 %374
  %vm376 = vcmask 7168
  %s377 = scalar_lea.vmem %s1, 177
  %378 = vst.msk [vmem:[%s377] ss:$-126 sm:$0x3] %vm376, %v375
  %s379 = scalar_lea.vmem %s1, 465
  %380 = vst.msk [vmem:[%s379] ss:$-126 sm:$0xc] %vm376, %v375
  %s381 = scalar_lea.vmem %s1, 753
  %382 = vst.msk [vmem:[%s381] ss:$-126 sm:$0x30] %vm376, %v375
  %s383 = scalar_lea.vmem %s1, 1041
  %384 = vst.msk [vmem:[%s383] ss:$-126 sm:$0xc0] %vm376, %v375
  %s385 = scalar_lea.vmem %s0, 1
  %v386 = vld.sshfl [vmem:[%s385] sm:$0xff pattern:$0x6d4b2907]
  %387 = vrot.lane.b32.xlu0 %v386, 112
  %v388 = vpop.permute.xlu0 %387
  %vm389 = vcmask 7168
  %s390 = scalar_lea.vmem %s1, 160
  %391 = vst.msk [vmem:[%s390] ss:$-126 sm:$0x3] %vm389, %v388
  %s392 = scalar_lea.vmem %s1, 448
  %393 = vst.msk [vmem:[%s392] ss:$-126 sm:$0xc] %vm389, %v388
  %s394 = scalar_lea.vmem %s1, 736
  %395 = vst.msk [vmem:[%s394] ss:$-126 sm:$0x30] %vm389, %v388
  %s396 = scalar_lea.vmem %s1, 1024
  %397 = vst.msk [vmem:[%s396] ss:$-126 sm:$0xc0] %vm389, %v388
  %v398 = vld.sshfl [vmem:[%s0] sm:$0xff pattern:$0xf6d4b290]
  %399 = vrot.lane.b32.xlu0 %v398, 112
  %v400 = vpop.permute.xlu0 %399
  %vm401 = vcmask 7168
  %s402 = scalar_lea.vmem %s1, 16
  %403 = vst.msk [vmem:[%s402] ss:$162 sm:$0x3] %vm401, %v400
  %s404 = scalar_lea.vmem %s1, 4294967024
  %405 = vst.msk [vmem:[%s404] ss:$162 sm:$0xc] %vm401, %v400
  %s406 = scalar_lea.vmem %s1, 4294966736
  %407 = vst.msk [vmem:[%s406] ss:$162 sm:$0x30] %vm401, %v400
  %s408 = scalar_lea.vmem %s1, 4294966448
  %409 = vst.msk [vmem:[%s408] ss:$162 sm:$0xc0] %vm401, %v400
  %s410 = scalar_lea.vmem %s0, 1
  %v411 = vld.sshfl [vmem:[%s410] sm:$0xff pattern:$0x6d4b2907]
  %412 = vrot.lane.b32.xlu0 %v411, 111
  %v413 = vpop.permute.xlu0 %412
  %vm414 = vcmask 7168
  %s415 = scalar_lea.vmem %s1, 161
  %416 = vst.msk [vmem:[%s415] ss:$-126 sm:$0x3] %vm414, %v413
  %s417 = scalar_lea.vmem %s1, 449
  %418 = vst.msk [vmem:[%s417] ss:$-126 sm:$0xc] %vm414, %v413
  %s419 = scalar_lea.vmem %s1, 737
  %420 = vst.msk [vmem:[%s419] ss:$-126 sm:$0x30] %vm414, %v413
  %s421 = scalar_lea.vmem %s1, 1025
  %422 = vst.msk [vmem:[%s421] ss:$-126 sm:$0xc0] %vm414, %v413
  %v423 = vld.sshfl [vmem:[%s0] sm:$0xff pattern:$0xf6d4b290]
  %424 = vrot.lane.b32.xlu0 %v423, 111
  %v425 = vpop.permute.xlu0 %424
  %vm426 = vcmask 7168
  %s427 = scalar_lea.vmem %s1, 17
  %428 = vst.msk [vmem:[%s427] ss:$162 sm:$0x3] %vm426, %v425
  %s429 = scalar_lea.vmem %s1, 4294967025
  %430 = vst.msk [vmem:[%s429] ss:$162 sm:$0xc] %vm426, %v425
  %s431 = scalar_lea.vmem %s1, 4294966737
  %432 = vst.msk [vmem:[%s431] ss:$162 sm:$0x30] %vm426, %v425
  %s433 = scalar_lea.vmem %s1, 4294966449
  %434 = vst.msk [vmem:[%s433] ss:$162 sm:$0xc0] %vm426, %v425

// kernel: bottleneck_forward_nhwc.1
$region0: #{bottleneck_forward_nhwc.1}
  #allocation0 [shape = 'u32[]', space=smem, size = 0x4, offset = 0x4, fixed_abs, tag = 'smem constant byte address 0x4 - core index']
  #allocation1 [shape = 'u32[144,128]{1,0:T(1,128)}', space=vmem, size = 0x12000, scoped, tag = 'internal scratch']
  #allocation2 [shape = 'bf16[344,128]{1,0:T(8,128)(2,1)}', space=vmem, size = 0x15800, scoped, tag = 'scratch operand']
  #allocation3 [shape = 'f32[288,128]{1,0:T(8,128)}', space=vmem, size = 0x24000, scoped, tag = 'scratch operand']
  %s0 = inlined_call_operand.vmem [shape: bf16[2,288,128], index: 0, kind: input, shape index: {}, may-alias: {0,11}]
  %s1 = inlined_call_operand.vmem [shape: f32[288,1], index: 1, kind: input, shape index: {}]
  %s2 = inlined_call_operand.vmem [shape: bf16[128,128], index: 2, kind: input, shape index: {}]
  %s3 = inlined_call_operand.vmem [shape: bf16[9,128,128], index: 3, kind: input, shape index: {}]
  %s4 = inlined_call_operand.vmem [shape: bf16[128,128], index: 4, kind: input, shape index: {}]
  %s5 = inlined_call_operand.vmem [shape: f32[1,128], index: 5, kind: input, shape index: {}]
  %s6 = inlined_call_operand.vmem [shape: f32[1,128], index: 6, kind: input, shape index: {}]
  %s7 = inlined_call_operand.vmem [shape: f32[1,128], index: 7, kind: input, shape index: {}]
  %s8 = inlined_call_operand.vmem [shape: f32[1,128], index: 8, kind: input, shape index: {}]
  %s9 = inlined_call_operand.vmem [shape: f32[1,128], index: 9, kind: input, shape index: {}]
  %s10 = inlined_call_operand.vmem [shape: f32[1,128], index: 10, kind: input, shape index: {}]
  %s11 = inlined_call_operand.vmem [shape: bf16[2,288,128], index: 11, kind: output, shape index: {}, may-alias: {0,11}]
  %s12 = sld [smem:[#allocation0]]
  $region77: #{bottleneck_forward_nhwc.1} parent=0
    _
  %s14 = ssub.s32 1, %s12
  %s15 = scalar_select 0, %s14, %s12
  loop: start=0, step=1, limit=4
  $region2: #{bottleneck_forward_nhwc.1} parent=0 // loop_pre_header
    _
  $region3: #{bottleneck_forward_nhwc.1} parent=0 // loop_header
    %s17 = sphi 0, %s21
    %p18 = scmp.ge.s32.totalorder %s17, 4
    %s27 = sphi 0, %s29
    %s30 = sphi 0, %s27
    %s31 = sphi 0, %s30
    %s47 = sphi 0, %s31
    %s51 = sphi 0, %s51
    %s53 = sphi 0, %s51
    %s54 = sphi 0, %s53
    %s68 = sphi 0, %s54
    %s72 = sphi 0, %s72
    %s74 = sphi 0, %s72
    %s75 = sphi 0, %s74
    %s89 = sphi 0, %s75
    %s93 = sphi 0, %s93
    %s95 = sphi 0, %s93
    %s96 = sphi 0, %s95
    %s110 = sphi 0, %s96
    %s114 = sphi 0, %s114
    %s116 = sphi 0, %s114
    %s117 = sphi 0, %s116
    %s131 = sphi 0, %s117
    %s135 = sphi 0, %s135
    %s137 = sphi 0, %s135
    %s138 = sphi 0, %s137
    %s152 = sphi 0, %s138
    %s156 = sphi 0, %s156
    %s158 = sphi 0, %s156
    %s159 = sphi 0, %s158
    %s173 = sphi 0, %s159
    %s177 = sphi 0, %s177
    %s179 = sphi 0, %s177
    %s180 = sphi 0, %s179
    %s194 = sphi 0, %s180
    %s198 = sphi 0, %s198
    %s200 = sphi 0, %s198
    %s201 = sphi 0, %s200
    %s215 = sphi 0, %s201
    %s219 = sphi 0, %s219
    %s221 = sphi 0, %s219
    %s222 = sphi 0, %s221
    %s236 = sphi 0, %s222
    %s240 = sphi 0, %s240
    %s242 = sphi 0, %s240
    %s243 = sphi 0, %s242
    %s257 = sphi 0, %s243
    %s263 = sphi 0, %s265
    %s266 = sphi 0, %s263
    %s267 = sphi 0, %s266
    %s283 = sphi 0, %s267
  $region4: #{bottleneck_forward_nhwc.1} parent=0 // loop_header_branch
    %20 = sbr.rel (%p18) target = $region8
  $region5: #{bottleneck_forward_nhwc.1} parent=0 // loop_body
    %s22 = ssub.s32 %s17, 1
    %s23 = ssub.s32 %s17, 2
    %s24 = sadd.s32 %s17, 1
    %s25 = ssub.s32 %s17, %s24
    %p26 = scmp.eq.s32.totalorder %s25, 0
    %s28 = sadd.s32 %s27, 1
    %s29 = scalar_select %p26, %s27, %s28
    %p32 = pneg %p26
    %p33 = scmp.eq.s32.totalorder %s17, 1
    %p34 = por %p32, %p33
    %p35 = scmp.ne.s32.totalorder %s27, %s30
    %p36 = scmp.eq.s32.totalorder %s17, 0
    %p37 = por %p35, %p36
    %p38 = scmp.ne.s32.totalorder %s27, %s30
    %p39 = scmp.eq.s32.totalorder %s22, 1
    %p40 = por %p38, %p39
    %p41 = scmp.ne.s32.totalorder %s30, %s31
    %p42 = scmp.eq.s32.totalorder %s22, 0
    %p43 = por %p41, %p42
    %p44 = scmp.ne.s32.totalorder %s30, %s31
    %p45 = scmp.eq.s32.totalorder %s23, 1
    %p46 = por %p44, %p45
    %p48 = scmp.ne.s32.totalorder %s31, %s47
    %p49 = scmp.eq.s32.totalorder %s23, 0
    %p50 = por %p48, %p49
    %s52 = sadd.s32 %s51, 1
    %p55 = scmp.eq.s32.totalorder %s17, 1
    %p56 = scmp.ne.s32.totalorder %s51, %s53
    %p57 = scmp.eq.s32.totalorder %s17, 0
    %p58 = por %p56, %p57
    %p59 = scmp.ne.s32.totalorder %s51, %s53
    %p60 = scmp.eq.s32.totalorder %s22, 1
    %p61 = por %p59, %p60
    %p62 = scmp.ne.s32.totalorder %s53, %s54
    %p63 = scmp.eq.s32.totalorder %s22, 0
    %p64 = por %p62, %p63
    %p65 = scmp.ne.s32.totalorder %s53, %s54
    %p66 = scmp.eq.s32.totalorder %s23, 1
    %p67 = por %p65, %p66
    %p69 = scmp.ne.s32.totalorder %s54, %s68
    %p70 = scmp.eq.s32.totalorder %s23, 0
    %p71 = por %p69, %p70
    %s73 = sadd.s32 %s72, 1
    %p76 = scmp.eq.s32.totalorder %s17, 1
    %p77 = scmp.ne.s32.totalorder %s72, %s74
    %p78 = scmp.eq.s32.totalorder %s17, 0
    %p79 = por %p77, %p78
    %p80 = scmp.ne.s32.totalorder %s72, %s74
    %p81 = scmp.eq.s32.totalorder %s22, 1
    %p82 = por %p80, %p81
    %p83 = scmp.ne.s32.totalorder %s74, %s75
    %p84 = scmp.eq.s32.totalorder %s22, 0
    %p85 = por %p83, %p84
    %p86 = scmp.ne.s32.totalorder %s74, %s75
    %p87 = scmp.eq.s32.totalorder %s23, 1
    %p88 = por %p86, %p87
    %p90 = scmp.ne.s32.totalorder %s75, %s89
    %p91 = scmp.eq.s32.totalorder %s23, 0
    %p92 = por %p90, %p91
    %s94 = sadd.s32 %s93, 1
    %p97 = scmp.eq.s32.totalorder %s17, 1
    %p98 = scmp.ne.s32.totalorder %s93, %s95
    %p99 = scmp.eq.s32.totalorder %s17, 0
    %p100 = por %p98, %p99
    %p101 = scmp.ne.s32.totalorder %s93, %s95
    %p102 = scmp.eq.s32.totalorder %s22, 1
    %p103 = por %p101, %p102
    %p104 = scmp.ne.s32.totalorder %s95, %s96
    %p105 = scmp.eq.s32.totalorder %s22, 0
    %p106 = por %p104, %p105
    %p107 = scmp.ne.s32.totalorder %s95, %s96
    %p108 = scmp.eq.s32.totalorder %s23, 1
    %p109 = por %p107, %p108
    %p111 = scmp.ne.s32.totalorder %s96, %s110
    %p112 = scmp.eq.s32.totalorder %s23, 0
    %p113 = por %p111, %p112
    %s115 = sadd.s32 %s114, 1
    %p118 = scmp.eq.s32.totalorder %s17, 1
    %p119 = scmp.ne.s32.totalorder %s114, %s116
    %p120 = scmp.eq.s32.totalorder %s17, 0
    %p121 = por %p119, %p120
    %p122 = scmp.ne.s32.totalorder %s114, %s116
    %p123 = scmp.eq.s32.totalorder %s22, 1
    %p124 = por %p122, %p123
    %p125 = scmp.ne.s32.totalorder %s116, %s117
    %p126 = scmp.eq.s32.totalorder %s22, 0
    %p127 = por %p125, %p126
    %p128 = scmp.ne.s32.totalorder %s116, %s117
    %p129 = scmp.eq.s32.totalorder %s23, 1
    %p130 = por %p128, %p129
    %p132 = scmp.ne.s32.totalorder %s117, %s131
    %p133 = scmp.eq.s32.totalorder %s23, 0
    %p134 = por %p132, %p133
    %s136 = sadd.s32 %s135, 1
    %p139 = scmp.eq.s32.totalorder %s17, 1
    %p140 = scmp.ne.s32.totalorder %s135, %s137
    %p141 = scmp.eq.s32.totalorder %s17, 0
    %p142 = por %p140, %p141
    %p143 = scmp.ne.s32.totalorder %s135, %s137
    %p144 = scmp.eq.s32.totalorder %s22, 1
    %p145 = por %p143, %p144
    %p146 = scmp.ne.s32.totalorder %s137, %s138
    %p147 = scmp.eq.s32.totalorder %s22, 0
    %p148 = por %p146, %p147
    %p149 = scmp.ne.s32.totalorder %s137, %s138
    %p150 = scmp.eq.s32.totalorder %s23, 1
    %p151 = por %p149, %p150
    %p153 = scmp.ne.s32.totalorder %s138, %s152
    %p154 = scmp.eq.s32.totalorder %s23, 0
    %p155 = por %p153, %p154
    %s157 = sadd.s32 %s156, 1
    %p160 = scmp.eq.s32.totalorder %s17, 1
    %p161 = scmp.ne.s32.totalorder %s156, %s158
    %p162 = scmp.eq.s32.totalorder %s17, 0
    %p163 = por %p161, %p162
    %p164 = scmp.ne.s32.totalorder %s156, %s158
    %p165 = scmp.eq.s32.totalorder %s22, 1
    %p166 = por %p164, %p165
    %p167 = scmp.ne.s32.totalorder %s158, %s159
    %p168 = scmp.eq.s32.totalorder %s22, 0
    %p169 = por %p167, %p168
    %p170 = scmp.ne.s32.totalorder %s158, %s159
    %p171 = scmp.eq.s32.totalorder %s23, 1
    %p172 = por %p170, %p171
    %p174 = scmp.ne.s32.totalorder %s159, %s173
    %p175 = scmp.eq.s32.totalorder %s23, 0
    %p176 = por %p174, %p175
    %s178 = sadd.s32 %s177, 1
    %p181 = scmp.eq.s32.totalorder %s17, 1
    %p182 = scmp.ne.s32.totalorder %s177, %s179
    %p183 = scmp.eq.s32.totalorder %s17, 0
    %p184 = por %p182, %p183
    %p185 = scmp.ne.s32.totalorder %s177, %s179
    %p186 = scmp.eq.s32.totalorder %s22, 1
    %p187 = por %p185, %p186
    %p188 = scmp.ne.s32.totalorder %s179, %s180
    %p189 = scmp.eq.s32.totalorder %s22, 0
    %p190 = por %p188, %p189
    %p191 = scmp.ne.s32.totalorder %s179, %s180
    %p192 = scmp.eq.s32.totalorder %s23, 1
    %p193 = por %p191, %p192
    %p195 = scmp.ne.s32.totalorder %s180, %s194
    %p196 = scmp.eq.s32.totalorder %s23, 0
    %p197 = por %p195, %p196
    %s199 = sadd.s32 %s198, 1
    %p202 = scmp.eq.s32.totalorder %s17, 1
    %p203 = scmp.ne.s32.totalorder %s198, %s200
    %p204 = scmp.eq.s32.totalorder %s17, 0
    %p205 = por %p203, %p204
    %p206 = scmp.ne.s32.totalorder %s198, %s200
    %p207 = scmp.eq.s32.totalorder %s22, 1
    %p208 = por %p206, %p207
    %p209 = scmp.ne.s32.totalorder %s200, %s201
    %p210 = scmp.eq.s32.totalorder %s22, 0
    %p211 = por %p209, %p210
    %p212 = scmp.ne.s32.totalorder %s200, %s201
    %p213 = scmp.eq.s32.totalorder %s23, 1
    %p214 = por %p212, %p213
    %p216 = scmp.ne.s32.totalorder %s201, %s215
    %p217 = scmp.eq.s32.totalorder %s23, 0
    %p218 = por %p216, %p217
    %s220 = sadd.s32 %s219, 1
    %p223 = scmp.eq.s32.totalorder %s17, 1
    %p224 = scmp.ne.s32.totalorder %s219, %s221
    %p225 = scmp.eq.s32.totalorder %s17, 0
    %p226 = por %p224, %p225
    %p227 = scmp.ne.s32.totalorder %s219, %s221
    %p228 = scmp.eq.s32.totalorder %s22, 1
    %p229 = por %p227, %p228
    %p230 = scmp.ne.s32.totalorder %s221, %s222
    %p231 = scmp.eq.s32.totalorder %s22, 0
    %p232 = por %p230, %p231
    %p233 = scmp.ne.s32.totalorder %s221, %s222
    %p234 = scmp.eq.s32.totalorder %s23, 1
    %p235 = por %p233, %p234
    %p237 = scmp.ne.s32.totalorder %s222, %s236
    %p238 = scmp.eq.s32.totalorder %s23, 0
    %p239 = por %p237, %p238
    %s241 = sadd.s32 %s240, 1
    %p244 = scmp.eq.s32.totalorder %s17, 1
    %p245 = scmp.ne.s32.totalorder %s240, %s242
    %p246 = scmp.eq.s32.totalorder %s17, 0
    %p247 = por %p245, %p246
    %p248 = scmp.ne.s32.totalorder %s240, %s242
    %p249 = scmp.eq.s32.totalorder %s22, 1
    %p250 = por %p248, %p249
    %p251 = scmp.ne.s32.totalorder %s242, %s243
    %p252 = scmp.eq.s32.totalorder %s22, 0
    %p253 = por %p251, %p252
    %p254 = scmp.ne.s32.totalorder %s242, %s243
    %p255 = scmp.eq.s32.totalorder %s23, 1
    %p256 = por %p254, %p255
    %p258 = scmp.ne.s32.totalorder %s243, %s257
    %p259 = scmp.eq.s32.totalorder %s23, 0
    %p260 = por %p258, %p259
    %s261 = ssub.s32 %s17, %s24
    %p262 = scmp.eq.s32.totalorder %s261, 0
    %s264 = sadd.s32 %s263, 1
    %s265 = scalar_select %p262, %s263, %s264
    %p268 = pneg %p262
    %p269 = scmp.eq.s32.totalorder %s17, 1
    %p270 = por %p268, %p269
    %p271 = scmp.ne.s32.totalorder %s263, %s266
    %p272 = scmp.eq.s32.totalorder %s17, 0
    %p273 = por %p271, %p272
    %p274 = scmp.ne.s32.totalorder %s263, %s266
    %p275 = scmp.eq.s32.totalorder %s22, 1
    %p276 = por %p274, %p275
    %p277 = scmp.ne.s32.totalorder %s266, %s267
    %p278 = scmp.eq.s32.totalorder %s22, 0
    %p279 = por %p277, %p278
    %p280 = scmp.ne.s32.totalorder %s266, %s267
    %p281 = scmp.eq.s32.totalorder %s23, 1
    %p282 = por %p280, %p281
    %p284 = scmp.ne.s32.totalorder %s267, %s283
    %p285 = scmp.eq.s32.totalorder %s23, 0
    %p286 = por %p284, %p285
    %p287 = scmp.le.s32.totalorder 1, %s17
    %p288 = scmp.lt.s32.totalorder %s17, 3
    %p289 = pnand %p287, %p288
    %p290 = pneg %p289
    // Predicated region
    $region9: #{bottleneck_forward_nhwc.1} parent=5 // pred_check
      _
    $region10: #{bottleneck_forward_nhwc.1} parent=5 // pred_check_branch
      %292 = sbr.rel (%p289) target = $region12
    $region11: #{bottleneck_forward_nhwc.1} parent=5 // pred_region
      %s293 = ssub.s32 %s17, 1
      // Predicated region
      $region13: #{bottleneck_forward_nhwc.1} parent=11 // pred_check
        %p294 = pneg %p64
      $region14: #{bottleneck_forward_nhwc.1} parent=11 // pred_check_branch
        %296 = sbr.rel (%p294) target = $region16
      $region15: #{bottleneck_forward_nhwc.1} parent=11 // pred_region
        _
      $region16: #{bottleneck_forward_nhwc.1} parent=11 // pred_fallthru
        _
      // Predicated region
      $region17: #{bottleneck_forward_nhwc.1} parent=11 // pred_check
        %p297 = pneg %p85
      $region18: #{bottleneck_forward_nhwc.1} parent=11 // pred_check_branch
        %299 = sbr.rel (%p297) target = $region20
      $region19: #{bottleneck_forward_nhwc.1} parent=11 // pred_region
        _
      $region20: #{bottleneck_forward_nhwc.1} parent=11 // pred_fallthru
        _
      // Predicated region
      $region21: #{bottleneck_forward_nhwc.1} parent=11 // pred_check
        %p300 = pneg %p106
      $region22: #{bottleneck_forward_nhwc.1} parent=11 // pred_check_branch
        %302 = sbr.rel (%p300) target = $region24
      $region23: #{bottleneck_forward_nhwc.1} parent=11 // pred_region
        _
      $region24: #{bottleneck_forward_nhwc.1} parent=11 // pred_fallthru
        _
      // Predicated region
      $region25: #{bottleneck_forward_nhwc.1} parent=11 // pred_check
        %p303 = pneg %p127
      $region26: #{bottleneck_forward_nhwc.1} parent=11 // pred_check_branch
        %305 = sbr.rel (%p303) target = $region28
      $region27: #{bottleneck_forward_nhwc.1} parent=11 // pred_region
        _
      $region28: #{bottleneck_forward_nhwc.1} parent=11 // pred_fallthru
        _
      // Predicated region
      $region29: #{bottleneck_forward_nhwc.1} parent=11 // pred_check
        %p306 = pneg %p148
      $region30: #{bottleneck_forward_nhwc.1} parent=11 // pred_check_branch
        %308 = sbr.rel (%p306) target = $region32
      $region31: #{bottleneck_forward_nhwc.1} parent=11 // pred_region
        _
      $region32: #{bottleneck_forward_nhwc.1} parent=11 // pred_fallthru
        _
      // Predicated region
      $region33: #{bottleneck_forward_nhwc.1} parent=11 // pred_check
        %p309 = pneg %p169
      $region34: #{bottleneck_forward_nhwc.1} parent=11 // pred_check_branch
        %311 = sbr.rel (%p309) target = $region36
      $region35: #{bottleneck_forward_nhwc.1} parent=11 // pred_region
        _
      $region36: #{bottleneck_forward_nhwc.1} parent=11 // pred_fallthru
        _
      // Predicated region
      $region37: #{bottleneck_forward_nhwc.1} parent=11 // pred_check
        %p312 = pneg %p190
      $region38: #{bottleneck_forward_nhwc.1} parent=11 // pred_check_branch
        %314 = sbr.rel (%p312) target = $region40
      $region39: #{bottleneck_forward_nhwc.1} parent=11 // pred_region
        _
      $region40: #{bottleneck_forward_nhwc.1} parent=11 // pred_fallthru
        _
      // Predicated region
      $region41: #{bottleneck_forward_nhwc.1} parent=11 // pred_check
        %p315 = pneg %p211
      $region42: #{bottleneck_forward_nhwc.1} parent=11 // pred_check_branch
        %317 = sbr.rel (%p315) target = $region44
      $region43: #{bottleneck_forward_nhwc.1} parent=11 // pred_region
        _
      $region44: #{bottleneck_forward_nhwc.1} parent=11 // pred_fallthru
        _
      // Predicated region
      $region45: #{bottleneck_forward_nhwc.1} parent=11 // pred_check
        %p318 = pneg %p232
      $region46: #{bottleneck_forward_nhwc.1} parent=11 // pred_check_branch
        %320 = sbr.rel (%p318) target = $region48
      $region47: #{bottleneck_forward_nhwc.1} parent=11 // pred_region
        _
      $region48: #{bottleneck_forward_nhwc.1} parent=11 // pred_fallthru
        _
      // Predicated region
      $region49: #{bottleneck_forward_nhwc.1} parent=11 // pred_check
        %p321 = pneg %p253
      $region50: #{bottleneck_forward_nhwc.1} parent=11 // pred_check_branch
        %323 = sbr.rel (%p321) target = $region52
      $region51: #{bottleneck_forward_nhwc.1} parent=11 // pred_region
        _
      $region52: #{bottleneck_forward_nhwc.1} parent=11 // pred_fallthru
        _
    $region12: #{bottleneck_forward_nhwc.1} parent=5 // pred_fallthru
      _
    %p324 = scmp.lt.s32.totalorder %s17, 2
    // Predicated region
    $region53: #{bottleneck_forward_nhwc.1} parent=5 // pred_check
      %p325 = pneg %p324
    $region54: #{bottleneck_forward_nhwc.1} parent=5 // pred_check_branch
      %327 = sbr.rel (%p325) target = $region56
    $region55: #{bottleneck_forward_nhwc.1} parent=5 // pred_region
      // Predicated region
      $region57: #{bottleneck_forward_nhwc.1} parent=55 // pred_check
        %p328 = pneg %p37
      $region58: #{bottleneck_forward_nhwc.1} parent=55 // pred_check_branch
        %330 = sbr.rel (%p328) target = $region60
      $region59: #{bottleneck_forward_nhwc.1} parent=55 // pred_region
        %p331 = scmp.lt.s32.totalorder %s17, 1
        %s332 = scalar_select %p331, %s17, 1
        %s333 = smul.addr %s332, 36
        %s334 = smul.addr %s333, 4
        %s335 = scalar_lea.vmem %s0, %s334
      $region60: #{bottleneck_forward_nhwc.1} parent=55 // pred_fallthru
        _
    $region56: #{bottleneck_forward_nhwc.1} parent=5 // pred_fallthru
      _
    %p336 = scmp.le.s32.totalorder 1, %s17
    %p337 = scmp.lt.s32.totalorder %s17, 3
    %p338 = pnand %p336, %p337
    %p339 = pneg %p338
    // Predicated region
    $region61: #{bottleneck_forward_nhwc.1} parent=5 // pred_check
      _
    $region62: #{bottleneck_forward_nhwc.1} parent=5 // pred_check_branch
      %341 = sbr.rel (%p338) target = $region64
    $region63: #{bottleneck_forward_nhwc.1} parent=5 // pred_region
      %s342 = ssub.s32 %s17, 1
      %p343 = scmp.lt.s32.totalorder %s22, 1
      %s344 = scalar_select %p343, %s22, 1
      %s345 = smul.addr %s344, 36
      %s346 = smul.addr %s345, 4
      %s347 = scalar_lea.vmem %s0, %s346
      %p348 = pneg %p43
      %p349 = pneg %p40
      %p350 = pneg %p64
      %p351 = pneg %p61
      %p352 = pneg %p85
      %p353 = pneg %p82
      %p354 = pneg %p106
      %p355 = pneg %p103
      %p356 = pneg %p127
      %p357 = pneg %p124
      %p358 = pneg %p148
      %p359 = pneg %p145
      %p360 = pneg %p169
      %p361 = pneg %p166
      %p362 = pneg %p190
      %p363 = pneg %p187
      %p364 = pneg %p211
      %p365 = pneg %p208
      %p366 = pneg %p232
      %p367 = pneg %p229
      %p368 = pneg %p253
      %p369 = pneg %p250
      %p370 = pneg %p279
      %p371 = pneg %p276
      %p372 = scmp.lt.s32.totalorder %s22, 1
      %s373 = scalar_select %p372, %s22, 1
      %s374 = smul.addr %s373, 36
      %s375 = smul.addr %s374, 4
      %s376 = scalar_lea.vmem %s11, %s375
      %p377 = scmp.lt.s32.totalorder %s22, 1
      %s378 = scalar_select %p377, %s22, 1
      %s379 = smul.addr %s378, 36
      %s380 = smul.addr %s379, 4
      %s381 = scalar_lea.vmem %s0, %s380
      %p382 = scmp.lt.s32.totalorder %s22, 1
      %s383 = scalar_select %p382, %s22, 1
      %s384 = smul.addr %s383, 36
      %s385 = smul.addr %s384, 4
      %s386 = scalar_lea.vmem %s11, %s385
      %388 = vst [vmem:[#allocation2] sm:$0xf] 0
      %389 = vst [vmem:[#allocation2 + $0x4] sm:$0xf] 0
      %390 = vst [vmem:[#allocation2 + $0x8] sm:$0xf] 0
      %391 = vst [vmem:[#allocation2 + $0xc] sm:$0xf] 0
      %392 = vst [vmem:[#allocation2 + $0xa0] sm:$0xf] 0
      %393 = vst [vmem:[#allocation2 + $0xa4] sm:$0xf] 0
      %394 = vst [vmem:[#allocation2 + $0xa8] sm:$0xf] 0
      %v395 = vld [vmem:[%s381] sm:$0xf]
      %v396 = vld [vmem:[%s381 + $0x4] sm:$0xf]
      %v397 = vld [vmem:[%s381 + $0x8] sm:$0xf]
      %v398 = vld [vmem:[%s381 + $0xc] sm:$0xf]
      %v399 = vld [vmem:[%s381 + $0x10] sm:$0xf]
      %v400 = vld [vmem:[%s381 + $0x14] sm:$0xf]
      %v401 = vld [vmem:[%s381 + $0x18] sm:$0xf]
      %v402 = vld [vmem:[%s381 + $0x1c] sm:$0xf]
      %v403 = vld [vmem:[%s381 + $0x20] sm:$0xf]
      %v404 = vld [vmem:[%s381 + $0x24] sm:$0xf]
      %v405 = vld [vmem:[%s381 + $0x28] sm:$0xf]
      %v406 = vld [vmem:[%s381 + $0x2c] sm:$0xf]
      %v407 = vld [vmem:[%s381 + $0x30] sm:$0xf]
      %v408 = vld [vmem:[%s381 + $0x34] sm:$0xf]
      %v409 = vld [vmem:[%s381 + $0x38] sm:$0xf]
      %v410 = vld [vmem:[%s381 + $0x3c] sm:$0xf]
      %v411 = vld [vmem:[%s381 + $0x40] sm:$0xf]
      %v412 = vld [vmem:[%s381 + $0x44] sm:$0xf]
      %v413 = vld [vmem:[%s381 + $0x48] sm:$0xf]
      %v414 = vld [vmem:[%s381 + $0x4c] sm:$0xf]
      %v415 = vld [vmem:[%s381 + $0x50] sm:$0xf]
      %v416 = vld [vmem:[%s381 + $0x54] sm:$0xf]
      %v417 = vld [vmem:[%s381 + $0x58] sm:$0xf]
      %v418 = vld [vmem:[%s381 + $0x5c] sm:$0xf]
      %v419 = vld [vmem:[%s381 + $0x60] sm:$0xf]
      %v420 = vld [vmem:[%s381 + $0x64] sm:$0xf]
      %v421 = vld [vmem:[%s381 + $0x68] sm:$0xf]
      %v422 = vld [vmem:[%s381 + $0x6c] sm:$0xf]
      %v423 = vld [vmem:[%s381 + $0x70] sm:$0xf]
      %v424 = vld [vmem:[%s381 + $0x74] sm:$0xf]
      %v425 = vld [vmem:[%s381 + $0x78] sm:$0xf]
      %v426 = vld [vmem:[%s381 + $0x7c] sm:$0xf]
      %v427 = vld [vmem:[%s381 + $0x80] sm:$0xf]
      %v428 = vld [vmem:[%s381 + $0x84] sm:$0xf]
      %v429 = vld [vmem:[%s381 + $0x88] sm:$0xf]
      %v430 = vld [vmem:[%s381 + $0x8c] sm:$0xf]
      %v431 = vld [vmem:[%s2] sm:$0xf]
      %v432 = vld [vmem:[%s2 + $0x4] sm:$0xf]
      %v433 = vld [vmem:[%s2 + $0x8] sm:$0xf]
      %v434 = vld [vmem:[%s2 + $0xc] sm:$0xf]
      %v435 = vld [vmem:[%s2 + $0x10] sm:$0xf]
      %v436 = vld [vmem:[%s2 + $0x14] sm:$0xf]
      %v437 = vld [vmem:[%s2 + $0x18] sm:$0xf]
      %v438 = vld [vmem:[%s2 + $0x1c] sm:$0xf]
      %v439 = vld [vmem:[%s2 + $0x20] sm:$0xf]
      %v440 = vld [vmem:[%s2 + $0x24] sm:$0xf]
      %v441 = vld [vmem:[%s2 + $0x28] sm:$0xf]
      %v442 = vld [vmem:[%s2 + $0x2c] sm:$0xf]
      %v443 = vld [vmem:[%s2 + $0x30] sm:$0xf]
      %v444 = vld [vmem:[%s2 + $0x34] sm:$0xf]
      %v445 = vld [vmem:[%s2 + $0x38] sm:$0xf]
      %v446 = vld [vmem:[%s2 + $0x3c] sm:$0xf]
      %v483 = vunpack.c.l.b16 %v395
      %v484 = vunpack.c.l.b16 %v396
      %v485 = vunpack.c.l.b16 %v397
      %v486 = vunpack.c.l.b16 %v398
      %v487 = vunpack.c.l.b16 %v399
      %v488 = vunpack.c.l.b16 %v400
      %v489 = vunpack.c.l.b16 %v401
      %v490 = vunpack.c.l.b16 %v402
      %v491 = vunpack.c.l.b16 %v403
      %v492 = vunpack.c.l.b16 %v404
      %v493 = vunpack.c.l.b16 %v405
      %v494 = vunpack.c.l.b16 %v406
      %v495 = vunpack.c.l.b16 %v407
      %v496 = vunpack.c.l.b16 %v408
      %v497 = vunpack.c.l.b16 %v409
      %v498 = vunpack.c.l.b16 %v410
      %v499 = vunpack.c.l.b16 %v411
      %v500 = vunpack.c.l.b16 %v412
      %v501 = vunpack.c.l.b16 %v413
      %v502 = vunpack.c.l.b16 %v414
      %v503 = vunpack.c.l.b16 %v415
      %v504 = vunpack.c.l.b16 %v416
      %v505 = vunpack.c.l.b16 %v417
      %v506 = vunpack.c.l.b16 %v418
      %v507 = vunpack.c.l.b16 %v419
      %v508 = vunpack.c.l.b16 %v420
      %v509 = vunpack.c.l.b16 %v421
      %v510 = vunpack.c.l.b16 %v422
      %v511 = vunpack.c.l.b16 %v423
      %v512 = vunpack.c.l.b16 %v424
      %v513 = vunpack.c.l.b16 %v425
      %v514 = vunpack.c.l.b16 %v426
      %v515 = vunpack.c.l.b16 %v427
      %v516 = vunpack.c.l.b16 %v428
      %v517 = vunpack.c.l.b16 %v429
      %v518 = vunpack.c.l.b16 %v430
      %v519 = vpack.c.b16 %v484, %v483
      %v520 = vpack.c.b16 %v486, %v485
      %v521 = vpack.c.b16 %v488, %v487
      %v522 = vpack.c.b16 %v490, %v489
      %v523 = vpack.c.b16 %v492, %v491
      %v524 = vpack.c.b16 %v494, %v493
      %v525 = vpack.c.b16 %v496, %v495
      %v526 = vpack.c.b16 %v498, %v497
      %v527 = vpack.c.b16 %v500, %v499
      %v528 = vpack.c.b16 %v502, %v501
      %v529 = vpack.c.b16 %v504, %v503
      %v530 = vpack.c.b16 %v506, %v505
      %v531 = vpack.c.b16 %v508, %v507
      %v532 = vpack.c.b16 %v510, %v509
      %v533 = vpack.c.b16 %v512, %v511
      %v534 = vpack.c.b16 %v514, %v513
      %v535 = vpack.c.b16 %v516, %v515
      %v536 = vpack.c.b16 %v518, %v517
      %v571 = vunpack.c.l.b16 %v431
      %v572 = vunpack.c.l.b16 %v432
      %v573 = vunpack.c.l.b16 %v433
      %v574 = vunpack.c.l.b16 %v434
      %v575 = vunpack.c.l.b16 %v435
      %v576 = vunpack.c.l.b16 %v436
      %v577 = vunpack.c.l.b16 %v437
      %v578 = vunpack.c.l.b16 %v438
      %v579 = vunpack.c.l.b16 %v439
      %v580 = vunpack.c.l.b16 %v440
      %v581 = vunpack.c.l.b16 %v441
      %v582 = vunpack.c.l.b16 %v442
      %v583 = vunpack.c.l.b16 %v443
      %v584 = vunpack.c.l.b16 %v444
      %v585 = vunpack.c.l.b16 %v445
      %v586 = vunpack.c.l.b16 %v446
      %v587 = vpack.c.b16 %v572, %v571
      %v588 = vpack.c.b16 %v574, %v573
      %v589 = vpack.c.b16 %v576, %v575
      %v590 = vpack.c.b16 %v578, %v577
      %v591 = vpack.c.b16 %v580, %v579
      %v592 = vpack.c.b16 %v582, %v581
      %v593 = vpack.c.b16 %v584, %v583
      %v594 = vpack.c.b16 %v586, %v585
      %603 = vmatprep.subr.bf16.mxu0 0
      %604 = vmatpush1.bf16.msra.mxu0 %v587
      %605 = vmatprep.subr.bf16.mxu0 0
      %606 = vmatpush1.bf16.msra.mxu0 %v588
      %607 = vmatprep.subr.bf16.mxu0 0
      %608 = vmatpush1.bf16.msra.mxu0 %v589
      %609 = vmatprep.subr.bf16.mxu0 0
      %610 = vmatpush1.bf16.msra.mxu0 %v590
      %611 = vmatprep.subr.bf16.mxu0 0
      %612 = vmatpush1.bf16.msra.mxu0 %v591
      %613 = vmatprep.subr.bf16.mxu0 0
      %614 = vmatpush1.bf16.msra.mxu0 %v592
      %615 = vmatprep.subr.bf16.mxu0 0
      %616 = vmatpush1.bf16.msra.mxu0 %v593
      %617 = vmatprep.subr.bf16.mxu0 0
      %618 = vmatpush1.bf16.msra.mxu0 %v594
      %619 = vmatprep.subr.bf16.mxu0 0
      %620 = vmatpush1.bf16.msra.mxu0 0
      %621 = vmatprep.subr.bf16.mxu0 0
      %622 = vmatpush1.bf16.msra.mxu0 0
      %623 = vmatprep.subr.bf16.mxu0 0
      %624 = vmatpush1.bf16.msra.mxu0 0
      %625 = vmatprep.subr.bf16.mxu0 0
      %626 = vmatpush1.bf16.msra.mxu0 0
      %627 = vmatprep.subr.bf16.mxu0 0
      %628 = vmatpush1.bf16.msra.mxu0 0
      %629 = vmatprep.subr.bf16.mxu0 0
      %630 = vmatpush1.bf16.msra.mxu0 0
      %631 = vmatprep.subr.bf16.mxu0 0
      %632 = vmatpush1.bf16.msra.mxu0 0
      %633 = vmatprep.subr.bf16.mxu0 0
      %634 = vmatpush1.bf16.msra.mxu0 0
      %635 = vmatprep.mubr.bf16.mxu0 0
      %636 = vmatmul.mubr.bf16.gmra.mrb[0].mxu0 %v519
      %v637 = vpop.f32.mrb[0].mxu0
      %v638 = vadd.f32 0.0, %v637
      %v639 = vpop.f32.mrb[0].mxu0
      %v640 = vpop.f32.mrb[0].mxu0
      %v641 = vadd.f32 0.0, %v640
      %v642 = vpop.f32.mrb[0].mxu0
      %643 = vmatprep.mubr.bf16.mxu0 0
      %644 = vmatmul.mubr.bf16.gmra.mrb[0].mxu0 %v520
      %v645 = vpop.f32.mrb[0].mxu0
      %v646 = vadd.f32 0.0, %v645
      %v647 = vpop.f32.mrb[0].mxu0
      %v648 = vpop.f32.mrb[0].mxu0
      %v649 = vadd.f32 0.0, %v648
      %v650 = vpop.f32.mrb[0].mxu0
      %651 = vmatprep.mubr.bf16.mxu0 0
      %652 = vmatmul.mubr.bf16.gmra.mrb[0].mxu0 %v521
      %v653 = vpop.f32.mrb[0].mxu0
      %v654 = vadd.f32 0.0, %v653
      %v655 = vpop.f32.mrb[0].mxu0
      %v656 = vpop.f32.mrb[0].mxu0
      %v657 = vadd.f32 0.0, %v656
      %v658 = vpop.f32.mrb[0].mxu0
      %659 = vmatprep.mubr.bf16.mxu0 0
      %660 = vmatmul.mubr.bf16.gmra.mrb[0].mxu0 %v522
      %v661 = vpop.f32.mrb[0].mxu0
      %v662 = vadd.f32 0.0, %v661
      %v663 = vpop.f32.mrb[0].mxu0
      %v664 = vpop.f32.mrb[0].mxu0
      %v665 = vadd.f32 0.0, %v664
      %v666 = vpop.f32.mrb[0].mxu0
      %667 = vmatprep.mubr.bf16.mxu0 0
      %668 = vmatmul.mubr.bf16.gmra.mrb[0].mxu0 %v523
      %v669 = vpop.f32.mrb[0].mxu0
      %v670 = vadd.f32 0.0, %v669
      %v671 = vpop.f32.mrb[0].mxu0
      %v672 = vpop.f32.mrb[0].mxu0
      %v673 = vadd.f32 0.0, %v672
      %v674 = vpop.f32.mrb[0].mxu0
      %675 = vmatprep.mubr.bf16.mxu0 0
      %676 = vmatmul.mubr.bf16.gmra.mrb[0].mxu0 %v524
      %v677 = vpop.f32.mrb[0].mxu0
      %v678 = vadd.f32 0.0, %v677
      %v679 = vpop.f32.mrb[0].mxu0
      %v680 = vpop.f32.mrb[0].mxu0
      %v681 = vadd.f32 0.0, %v680
      %v682 = vpop.f32.mrb[0].mxu0
      %683 = vmatprep.mubr.bf16.mxu0 0
      %684 = vmatmul.mubr.bf16.gmra.mrb[0].mxu0 %v525
      %v685 = vpop.f32.mrb[0].mxu0
      %v686 = vadd.f32 0.0, %v685
      %v687 = vpop.f32.mrb[0].mxu0
      %v688 = vpop.f32.mrb[0].mxu0
      %v689 = vadd.f32 0.0, %v688
      %v690 = vpop.f32.mrb[0].mxu0
      %691 = vmatprep.mubr.bf16.mxu0 0
      %692 = vmatmul.mubr.bf16.gmra.mrb[0].mxu0 %v526
      %v693 = vpop.f32.mrb[0].mxu0
      %v694 = vadd.f32 0.0, %v693
      %v695 = vpop.f32.mrb[0].mxu0
      %v696 = vpop.f32.mrb[0].mxu0
      %v697 = vadd.f32 0.0, %v696
      %v698 = vpop.f32.mrb[0].mxu0
      %699 = vmatprep.mubr.bf16.mxu0 0
      %700 = vmatmul.mubr.bf16.gmra.mrb[0].mxu0 %v527
      %v701 = vpop.f32.mrb[0].mxu0
      %v702 = vadd.f32 0.0, %v701
      %v703 = vpop.f32.mrb[0].mxu0
      %v704 = vpop.f32.mrb[0].mxu0
      %v705 = vadd.f32 0.0, %v704
      %v706 = vpop.f32.mrb[0].mxu0
      %707 = vmatprep.mubr.bf16.mxu0 0
      %708 = vmatmul.mubr.bf16.gmra.mrb[0].mxu0 %v528
      %v709 = vpop.f32.mrb[0].mxu0
      %v710 = vadd.f32 0.0, %v709
      %v711 = vpop.f32.mrb[0].mxu0
      %v712 = vpop.f32.mrb[0].mxu0
      %v713 = vadd.f32 0.0, %v712
      %v714 = vpop.f32.mrb[0].mxu0
      %715 = vmatprep.mubr.bf16.mxu0 0
      %716 = vmatmul.mubr.bf16.gmra.mrb[0].mxu0 %v529
      %v717 = vpop.f32.mrb[0].mxu0
      %v718 = vadd.f32 0.0, %v717
      %v719 = vpop.f32.mrb[0].mxu0
      %v720 = vpop.f32.mrb[0].mxu0
      %v721 = vadd.f32 0.0, %v720
      %v722 = vpop.f32.mrb[0].mxu0
      %723 = vmatprep.mubr.bf16.mxu0 0
      %724 = vmatmul.mubr.bf16.gmra.mrb[0].mxu0 %v530
      %v725 = vpop.f32.mrb[0].mxu0
      %v726 = vadd.f32 0.0, %v725
      %v727 = vpop.f32.mrb[0].mxu0
      %v728 = vpop.f32.mrb[0].mxu0
      %v729 = vadd.f32 0.0, %v728
      %v730 = vpop.f32.mrb[0].mxu0
      %731 = vmatprep.mubr.bf16.mxu0 0
      %732 = vmatmul.mubr.bf16.gmra.mrb[0].mxu0 %v531
      %v733 = vpop.f32.mrb[0].mxu0
      %v734 = vadd.f32 0.0, %v733
      %v735 = vpop.f32.mrb[0].mxu0
      %v736 = vpop.f32.mrb[0].mxu0
      %v737 = vadd.f32 0.0, %v736
      %v738 = vpop.f32.mrb[0].mxu0
      %739 = vmatprep.mubr.bf16.mxu0 0
      %740 = vmatmul.mubr.bf16.gmra.mrb[0].mxu0 %v532
      %v741 = vpop.f32.mrb[0].mxu0
      %v742 = vadd.f32 0.0, %v741
      %v743 = vpop.f32.mrb[0].mxu0
      %v744 = vpop.f32.mrb[0].mxu0
      %v745 = vadd.f32 0.0, %v744
      %v746 = vpop.f32.mrb[0].mxu0
      %747 = vmatprep.mubr.bf16.mxu0 0
      %748 = vmatmul.mubr.bf16.gmra.mrb[0].mxu0 %v533
      %v749 = vpop.f32.mrb[0].mxu0
      %v750 = vadd.f32 0.0, %v749
      %v751 = vpop.f32.mrb[0].mxu0
      %v752 = vpop.f32.mrb[0].mxu0
      %v753 = vadd.f32 0.0, %v752
      %v754 = vpop.f32.mrb[0].mxu0
      %755 = vmatprep.mubr.bf16.mxu0 0
      %756 = vmatmul.mubr.bf16.gmra.mrb[0].mxu0 %v534
      %v757 = vpop.f32.mrb[0].mxu0
      %v758 = vadd.f32 0.0, %v757
      %v759 = vpop.f32.mrb[0].mxu0
      %v760 = vpop.f32.mrb[0].mxu0
      %v761 = vadd.f32 0.0, %v760
      %v762 = vpop.f32.mrb[0].mxu0
      %763 = vmatprep.mubr.bf16.mxu0 0
      %764 = vmatmul.mubr.bf16.gmra.mrb[0].mxu0 %v535
      %v765 = vpop.f32.mrb[0].mxu0
      %v766 = vadd.f32 0.0, %v765
      %v767 = vpop.f32.mrb[0].mxu0
      %v768 = vpop.f32.mrb[0].mxu0
      %v769 = vadd.f32 0.0, %v768
      %v770 = vpop.f32.mrb[0].mxu0
      %771 = vmatprep.mubr.bf16.mxu0 0
      %772 = vmatmul.mubr.bf16.gmra.mrb[0].mxu0 %v536
      %v773 = vpop.f32.mrb[0].mxu0
      %v774 = vadd.f32 0.0, %v773
      %v775 = vpop.f32.mrb[0].mxu0
      %v776 = vpop.f32.mrb[0].mxu0
      %v777 = vadd.f32 0.0, %v776
      %v778 = vpop.f32.mrb[0].mxu0
      %779 = vdwg.mxu0
      %v780 = vld [vmem:[%s5] sm:$0x1]
      %v782 = vlaneseq
      %v783 = vshrl.u32 %v782, 7
      %v784 = vsub.s32 0, %v783
      %v785 = vrot.slane %v780, %v784
      %v787 = vmul.f32 %v638, %v785
      %v788 = vmul.f32 %v641, %v785
      %v789 = vmul.f32 %v646, %v785
      %v790 = vmul.f32 %v649, %v785
      %v791 = vmul.f32 %v654, %v785
      %v792 = vmul.f32 %v657, %v785
      %v793 = vmul.f32 %v662, %v785
      %v794 = vmul.f32 %v665, %v785
      %v795 = vmul.f32 %v670, %v785
      %v796 = vmul.f32 %v673, %v785
      %v797 = vmul.f32 %v678, %v785
      %v798 = vmul.f32 %v681, %v785
      %v799 = vmul.f32 %v686, %v785
      %v800 = vmul.f32 %v689, %v785
      %v801 = vmul.f32 %v694, %v785
      %v802 = vmul.f32 %v697, %v785
      %v803 = vmul.f32 %v702, %v785
      %v804 = vmul.f32 %v705, %v785
      %v805 = vmul.f32 %v710, %v785
      %v806 = vmul.f32 %v713, %v785
      %v807 = vmul.f32 %v718, %v785
      %v808 = vmul.f32 %v721, %v785
      %v809 = vmul.f32 %v726, %v785
      %v810 = vmul.f32 %v729, %v785
      %v811 = vmul.f32 %v734, %v785
      %v812 = vmul.f32 %v737, %v785
      %v813 = vmul.f32 %v742, %v785
      %v814 = vmul.f32 %v745, %v785
      %v815 = vmul.f32 %v750, %v785
      %v816 = vmul.f32 %v753, %v785
      %v817 = vmul.f32 %v758, %v785
      %v818 = vmul.f32 %v761, %v785
      %v819 = vmul.f32 %v766, %v785
      %v820 = vmul.f32 %v769, %v785
      %v821 = vmul.f32 %v774, %v785
      %v822 = vmul.f32 %v777, %v785
      %v823 = vld [vmem:[%s6] sm:$0x1]
      %v825 = vlaneseq
      %v826 = vshrl.u32 %v825, 7
      %v827 = vsub.s32 0, %v826
      %v828 = vrot.slane %v823, %v827
      %v830 = vadd.f32 %v787, %v828
      %v831 = vadd.f32 %v788, %v828
      %v832 = vadd.f32 %v789, %v828
      %v833 = vadd.f32 %v790, %v828
      %v834 = vadd.f32 %v791, %v828
      %v835 = vadd.f32 %v792, %v828
      %v836 = vadd.f32 %v793, %v828
      %v837 = vadd.f32 %v794, %v828
      %v838 = vadd.f32 %v795, %v828
      %v839 = vadd.f32 %v796, %v828
      %v840 = vadd.f32 %v797, %v828
      %v841 = vadd.f32 %v798, %v828
      %v842 = vadd.f32 %v799, %v828
      %v843 = vadd.f32 %v800, %v828
      %v844 = vadd.f32 %v801, %v828
      %v845 = vadd.f32 %v802, %v828
      %v846 = vadd.f32 %v803, %v828
      %v847 = vadd.f32 %v804, %v828
      %v848 = vadd.f32 %v805, %v828
      %v849 = vadd.f32 %v806, %v828
      %v850 = vadd.f32 %v807, %v828
      %v851 = vadd.f32 %v808, %v828
      %v852 = vadd.f32 %v809, %v828
      %v853 = vadd.f32 %v810, %v828
      %v854 = vadd.f32 %v811, %v828
      %v855 = vadd.f32 %v812, %v828
      %v856 = vadd.f32 %v813, %v828
      %v857 = vadd.f32 %v814, %v828
      %v858 = vadd.f32 %v815, %v828
      %v859 = vadd.f32 %v816, %v828
      %v860 = vadd.f32 %v817, %v828
      %v861 = vadd.f32 %v818, %v828
      %v862 = vadd.f32 %v819, %v828
      %v863 = vadd.f32 %v820, %v828
      %v864 = vadd.f32 %v821, %v828
      %v865 = vadd.f32 %v822, %v828
      %v866 = vmax.f32 %v830, 0.0
      %v867 = vmax.f32 %v831, 0.0
      %v868 = vmax.f32 %v832, 0.0
      %v869 = vmax.f32 %v833, 0.0
      %v870 = vmax.f32 %v834, 0.0
      %v871 = vmax.f32 %v835, 0.0
      %v872 = vmax.f32 %v836, 0.0
      %v873 = vmax.f32 %v837, 0.0
      %v874 = vmax.f32 %v838, 0.0
      %v875 = vmax.f32 %v839, 0.0
      %v876 = vmax.f32 %v840, 0.0
      %v877 = vmax.f32 %v841, 0.0
      %v878 = vmax.f32 %v842, 0.0
      %v879 = vmax.f32 %v843, 0.0
      %v880 = vmax.f32 %v844, 0.0
      %v881 = vmax.f32 %v845, 0.0
      %v882 = vmax.f32 %v846, 0.0
      %v883 = vmax.f32 %v847, 0.0
      %v884 = vmax.f32 %v848, 0.0
      %v885 = vmax.f32 %v849, 0.0
      %v886 = vmax.f32 %v850, 0.0
      %v887 = vmax.f32 %v851, 0.0
      %v888 = vmax.f32 %v852, 0.0
      %v889 = vmax.f32 %v853, 0.0
      %v890 = vmax.f32 %v854, 0.0
      %v891 = vmax.f32 %v855, 0.0
      %v892 = vmax.f32 %v856, 0.0
      %v893 = vmax.f32 %v857, 0.0
      %v894 = vmax.f32 %v858, 0.0
      %v895 = vmax.f32 %v859, 0.0
      %v896 = vmax.f32 %v860, 0.0
      %v897 = vmax.f32 %v861, 0.0
      %v898 = vmax.f32 %v862, 0.0
      %v899 = vmax.f32 %v863, 0.0
      %v900 = vmax.f32 %v864, 0.0
      %v901 = vmax.f32 %v865, 0.0
      %v902 = vld [vmem:[%s1] sm:$0xff]
      %v903 = vld [vmem:[%s1 + $0x8] sm:$0xff]
      %v904 = vld [vmem:[%s1 + $0x10] sm:$0xff]
      %v905 = vld [vmem:[%s1 + $0x18] sm:$0xff]
      %v906 = vld [vmem:[%s1 + $0x20] sm:$0xff]
      %v907 = vld [vmem:[%s1 + $0x28] sm:$0xff]
      %v908 = vld [vmem:[%s1 + $0x30] sm:$0xff]
      %v909 = vld [vmem:[%s1 + $0x38] sm:$0xff]
      %v910 = vld [vmem:[%s1 + $0x40] sm:$0xff]
      %v911 = vld [vmem:[%s1 + $0x48] sm:$0xff]
      %v912 = vld [vmem:[%s1 + $0x50] sm:$0xff]
      %v913 = vld [vmem:[%s1 + $0x58] sm:$0xff]
      %v914 = vld [vmem:[%s1 + $0x60] sm:$0xff]
      %v915 = vld [vmem:[%s1 + $0x68] sm:$0xff]
      %v916 = vld [vmem:[%s1 + $0x70] sm:$0xff]
      %v917 = vld [vmem:[%s1 + $0x78] sm:$0xff]
      %v918 = vld [vmem:[%s1 + $0x80] sm:$0xff]
      %v919 = vld [vmem:[%s1 + $0x88] sm:$0xff]
      %v920 = vld [vmem:[%s1 + $0x90] sm:$0xff]
      %v921 = vld [vmem:[%s1 + $0x98] sm:$0xff]
      %v922 = vld [vmem:[%s1 + $0xa0] sm:$0xff]
      %v923 = vld [vmem:[%s1 + $0xa8] sm:$0xff]
      %v924 = vld [vmem:[%s1 + $0xb0] sm:$0xff]
      %v925 = vld [vmem:[%s1 + $0xb8] sm:$0xff]
      %v926 = vld [vmem:[%s1 + $0xc0] sm:$0xff]
      %v927 = vld [vmem:[%s1 + $0xc8] sm:$0xff]
      %v928 = vld [vmem:[%s1 + $0xd0] sm:$0xff]
      %v929 = vld [vmem:[%s1 + $0xd8] sm:$0xff]
      %v930 = vld [vmem:[%s1 + $0xe0] sm:$0xff]
      %v931 = vld [vmem:[%s1 + $0xe8] sm:$0xff]
      %v932 = vld [vmem:[%s1 + $0xf0] sm:$0xff]
      %v933 = vld [vmem:[%s1 + $0xf8] sm:$0xff]
      %v934 = vld [vmem:[%s1 + $0x100] sm:$0xff]
      %v935 = vld [vmem:[%s1 + $0x108] sm:$0xff]
      %v936 = vld [vmem:[%s1 + $0x110] sm:$0xff]
      %v937 = vld [vmem:[%s1 + $0x118] sm:$0xff]
      %939 = vset.pattern.permute.xlu0 0
      %940 = vperm.xlu0 %939, %v902
      %v941 = vpop.permute.xlu0 %940
      %944 = vset.pattern.permute.xlu0 0
      %945 = vperm.xlu0 %944, %v903
      %v946 = vpop.permute.xlu0 %945
      %949 = vset.pattern.permute.xlu0 0
      %950 = vperm.xlu0 %949, %v904
      %v951 = vpop.permute.xlu0 %950
      %954 = vset.pattern.permute.xlu0 0
      %955 = vperm.xlu0 %954, %v905
      %v956 = vpop.permute.xlu0 %955
      %959 = vset.pattern.permute.xlu0 0
      %960 = vperm.xlu0 %959, %v906
      %v961 = vpop.permute.xlu0 %960
      %964 = vset.pattern.permute.xlu0 0
      %965 = vperm.xlu0 %964, %v907
      %v966 = vpop.permute.xlu0 %965
      %969 = vset.pattern.permute.xlu0 0
      %970 = vperm.xlu0 %969, %v908
      %v971 = vpop.permute.xlu0 %970
      %974 = vset.pattern.permute.xlu0 0
      %975 = vperm.xlu0 %974, %v909
      %v976 = vpop.permute.xlu0 %975
      %979 = vset.pattern.permute.xlu0 0
      %980 = vperm.xlu0 %979, %v910
      %v981 = vpop.permute.xlu0 %980
      %984 = vset.pattern.permute.xlu0 0
      %985 = vperm.xlu0 %984, %v911
      %v986 = vpop.permute.xlu0 %985
      %989 = vset.pattern.permute.xlu0 0
      %990 = vperm.xlu0 %989, %v912
      %v991 = vpop.permute.xlu0 %990
      %994 = vset.pattern.permute.xlu0 0
      %995 = vperm.xlu0 %994, %v913
      %v996 = vpop.permute.xlu0 %995
      %999 = vset.pattern.permute.xlu0 0
      %1000 = vperm.xlu0 %999, %v914
      %v1001 = vpop.permute.xlu0 %1000
      %1004 = vset.pattern.permute.xlu0 0
      %1005 = vperm.xlu0 %1004, %v915
      %v1006 = vpop.permute.xlu0 %1005
      %1009 = vset.pattern.permute.xlu0 0
      %1010 = vperm.xlu0 %1009, %v916
      %v1011 = vpop.permute.xlu0 %1010
      %1014 = vset.pattern.permute.xlu0 0
      %1015 = vperm.xlu0 %1014, %v917
      %v1016 = vpop.permute.xlu0 %1015
      %1019 = vset.pattern.permute.xlu0 0
      %1020 = vperm.xlu0 %1019, %v918
      %v1021 = vpop.permute.xlu0 %1020
      %1024 = vset.pattern.permute.xlu0 0
      %1025 = vperm.xlu0 %1024, %v919
      %v1026 = vpop.permute.xlu0 %1025
      %1029 = vset.pattern.permute.xlu0 0
      %1030 = vperm.xlu0 %1029, %v920
      %v1031 = vpop.permute.xlu0 %1030
      %1034 = vset.pattern.permute.xlu0 0
      %1035 = vperm.xlu0 %1034, %v921
      %v1036 = vpop.permute.xlu0 %1035
      %1039 = vset.pattern.permute.xlu0 0
      %1040 = vperm.xlu0 %1039, %v922
      %v1041 = vpop.permute.xlu0 %1040
      %1044 = vset.pattern.permute.xlu0 0
      %1045 = vperm.xlu0 %1044, %v923
      %v1046 = vpop.permute.xlu0 %1045
      %1049 = vset.pattern.permute.xlu0 0
      %1050 = vperm.xlu0 %1049, %v924
      %v1051 = vpop.permute.xlu0 %1050
      %1054 = vset.pattern.permute.xlu0 0
      %1055 = vperm.xlu0 %1054, %v925
      %v1056 = vpop.permute.xlu0 %1055
      %1059 = vset.pattern.permute.xlu0 0
      %1060 = vperm.xlu0 %1059, %v926
      %v1061 = vpop.permute.xlu0 %1060
      %1064 = vset.pattern.permute.xlu0 0
      %1065 = vperm.xlu0 %1064, %v927
      %v1066 = vpop.permute.xlu0 %1065
      %1069 = vset.pattern.permute.xlu0 0
      %1070 = vperm.xlu0 %1069, %v928
      %v1071 = vpop.permute.xlu0 %1070
      %1074 = vset.pattern.permute.xlu0 0
      %1075 = vperm.xlu0 %1074, %v929
      %v1076 = vpop.permute.xlu0 %1075
      %1079 = vset.pattern.permute.xlu0 0
      %1080 = vperm.xlu0 %1079, %v930
      %v1081 = vpop.permute.xlu0 %1080
      %1084 = vset.pattern.permute.xlu0 0
      %1085 = vperm.xlu0 %1084, %v931
      %v1086 = vpop.permute.xlu0 %1085
      %1089 = vset.pattern.permute.xlu0 0
      %1090 = vperm.xlu0 %1089, %v932
      %v1091 = vpop.permute.xlu0 %1090
      %1094 = vset.pattern.permute.xlu0 0
      %1095 = vperm.xlu0 %1094, %v933
      %v1096 = vpop.permute.xlu0 %1095
      %1099 = vset.pattern.permute.xlu0 0
      %1100 = vperm.xlu0 %1099, %v934
      %v1101 = vpop.permute.xlu0 %1100
      %1104 = vset.pattern.permute.xlu0 0
      %1105 = vperm.xlu0 %1104, %v935
      %v1106 = vpop.permute.xlu0 %1105
      %1109 = vset.pattern.permute.xlu0 0
      %1110 = vperm.xlu0 %1109, %v936
      %v1111 = vpop.permute.xlu0 %1110
      %1114 = vset.pattern.permute.xlu0 0
      %1115 = vperm.xlu0 %1114, %v937
      %v1116 = vpop.permute.xlu0 %1115
      %v1118 = vmul.f32 %v866, %v941
      %v1119 = vmul.f32 %v867, %v946
      %v1120 = vmul.f32 %v868, %v951
      %v1121 = vmul.f32 %v869, %v956
      %v1122 = vmul.f32 %v870, %v961
      %v1123 = vmul.f32 %v871, %v966
      %v1124 = vmul.f32 %v872, %v971
      %v1125 = vmul.f32 %v873, %v976
      %v1126 = vmul.f32 %v874, %v981
      %v1127 = vmul.f32 %v875, %v986
      %v1128 = vmul.f32 %v876, %v991
      %v1129 = vmul.f32 %v877, %v996
      %v1130 = vmul.f32 %v878, %v1001
      %v1131 = vmul.f32 %v879, %v1006
      %v1132 = vmul.f32 %v880, %v1011
      %v1133 = vmul.f32 %v881, %v1016
      %v1134 = vmul.f32 %v882, %v1021
      %v1135 = vmul.f32 %v883, %v1026
      %v1136 = vmul.f32 %v884, %v1031
      %v1137 = vmul.f32 %v885, %v1036
      %v1138 = vmul.f32 %v886, %v1041
      %v1139 = vmul.f32 %v887, %v1046
      %v1140 = vmul.f32 %v888, %v1051
      %v1141 = vmul.f32 %v889, %v1056
      %v1142 = vmul.f32 %v890, %v1061
      %v1143 = vmul.f32 %v891, %v1066
      %v1144 = vmul.f32 %v892, %v1071
      %v1145 = vmul.f32 %v893, %v1076
      %v1146 = vmul.f32 %v894, %v1081
      %v1147 = vmul.f32 %v895, %v1086
      %v1148 = vmul.f32 %v896, %v1091
      %v1149 = vmul.f32 %v897, %v1096
      %v1150 = vmul.f32 %v898, %v1101
      %v1151 = vmul.f32 %v899, %v1106
      %v1152 = vmul.f32 %v900, %v1111
      %v1153 = vmul.f32 %v901, %v1116
      %v1154 = vpack.c.bf16 %v1119, %v1118
      %v1155 = vpack.c.bf16 %v1121, %v1120
      %v1156 = vpack.c.bf16 %v1123, %v1122
      %v1157 = vpack.c.bf16 %v1125, %v1124
      %v1158 = vpack.c.bf16 %v1127, %v1126
      %v1159 = vpack.c.bf16 %v1129, %v1128
      %v1160 = vpack.c.bf16 %v1131, %v1130
      %v1161 = vpack.c.bf16 %v1133, %v1132
      %v1162 = vpack.c.bf16 %v1135, %v1134
      %v1163 = vpack.c.bf16 %v1137, %v1136
      %v1164 = vpack.c.bf16 %v1139, %v1138
      %v1165 = vpack.c.bf16 %v1141, %v1140
      %v1166 = vpack.c.bf16 %v1143, %v1142
      %v1167 = vpack.c.bf16 %v1145, %v1144
      %v1168 = vpack.c.bf16 %v1147, %v1146
      %v1169 = vpack.c.bf16 %v1149, %v1148
      %v1170 = vpack.c.bf16 %v1151, %v1150
      %v1171 = vpack.c.bf16 %v1153, %v1152
      %v1190 = vunpack.c.l.b16 %v1154
      %v1191 = vunpack.c.h.b16 %v1154
      %v1192 = vunpack.c.l.b16 %v1155
      %v1193 = vunpack.c.h.b16 %v1155
      %v1194 = vunpack.c.l.b16 %v1156
      %v1195 = vunpack.c.h.b16 %v1156
      %v1196 = vunpack.c.l.b16 %v1157
      %v1197 = vunpack.c.h.b16 %v1157
      %v1198 = vunpack.c.l.b16 %v1158
      %v1199 = vunpack.c.h.b16 %v1158
      %v1200 = vunpack.c.l.b16 %v1159
      %v1201 = vunpack.c.h.b16 %v1159
      %v1202 = vunpack.c.l.b16 %v1160
      %v1203 = vunpack.c.h.b16 %v1160
      %v1204 = vunpack.c.l.b16 %v1161
      %v1205 = vunpack.c.h.b16 %v1161
      %v1206 = vunpack.c.l.b16 %v1162
      %v1207 = vunpack.c.h.b16 %v1162
      %v1208 = vunpack.c.l.b16 %v1163
      %v1209 = vunpack.c.h.b16 %v1163
      %v1210 = vunpack.c.l.b16 %v1164
      %v1211 = vunpack.c.h.b16 %v1164
      %v1212 = vunpack.c.l.b16 %v1165
      %v1213 = vunpack.c.h.b16 %v1165
      %v1214 = vunpack.c.l.b16 %v1166
      %v1215 = vunpack.c.h.b16 %v1166
      %v1216 = vunpack.c.l.b16 %v1167
      %v1217 = vunpack.c.h.b16 %v1167
      %v1218 = vunpack.c.l.b16 %v1168
      %v1219 = vunpack.c.h.b16 %v1168
      %v1220 = vunpack.c.l.b16 %v1169
      %v1221 = vunpack.c.h.b16 %v1169
      %v1222 = vunpack.c.l.b16 %v1170
      %v1223 = vunpack.c.h.b16 %v1170
      %v1224 = vunpack.c.l.b16 %v1171
      %v1225 = vunpack.c.h.b16 %v1171
      %v1226 = vpack.c.b16 %v1190, %v1190
      %v1227 = vpack.c.b16 %v1191, %v1191
      %v1228 = vpack.c.b16 %v1192, %v1192
      %v1229 = vpack.c.b16 %v1193, %v1193
      %v1230 = vpack.c.b16 %v1194, %v1194
      %v1231 = vpack.c.b16 %v1195, %v1195
      %v1232 = vpack.c.b16 %v1196, %v1196
      %v1233 = vpack.c.b16 %v1197, %v1197
      %v1234 = vpack.c.b16 %v1198, %v1198
      %v1235 = vpack.c.b16 %v1199, %v1199
      %v1236 = vpack.c.b16 %v1200, %v1200
      %v1237 = vpack.c.b16 %v1201, %v1201
      %v1238 = vpack.c.b16 %v1202, %v1202
      %v1239 = vpack.c.b16 %v1203, %v1203
      %v1240 = vpack.c.b16 %v1204, %v1204
      %v1241 = vpack.c.b16 %v1205, %v1205
      %v1242 = vpack.c.b16 %v1206, %v1206
      %v1243 = vpack.c.b16 %v1207, %v1207
      %v1244 = vpack.c.b16 %v1208, %v1208
      %v1245 = vpack.c.b16 %v1209, %v1209
      %v1246 = vpack.c.b16 %v1210, %v1210
      %v1247 = vpack.c.b16 %v1211, %v1211
      %v1248 = vpack.c.b16 %v1212, %v1212
      %v1249 = vpack.c.b16 %v1213, %v1213
      %v1250 = vpack.c.b16 %v1214, %v1214
      %v1251 = vpack.c.b16 %v1215, %v1215
      %v1252 = vpack.c.b16 %v1216, %v1216
      %v1253 = vpack.c.b16 %v1217, %v1217
      %v1254 = vpack.c.b16 %v1218, %v1218
      %v1255 = vpack.c.b16 %v1219, %v1219
      %v1256 = vpack.c.b16 %v1220, %v1220
      %v1257 = vpack.c.b16 %v1221, %v1221
      %v1258 = vpack.c.b16 %v1222, %v1222
      %v1259 = vpack.c.b16 %v1223, %v1223
      %v1260 = vpack.c.b16 %v1224, %v1224
      %v1261 = vpack.c.b16 %v1225, %v1225
      %1298 = vst [vmem:[#allocation2 + $0x10] sm:$0xf] %v1226
      %1299 = vst [vmem:[#allocation2 + $0x14] sm:$0xf] %v1227
      %1300 = vst [vmem:[#allocation2 + $0x18] sm:$0xf] %v1228
      %1301 = vst [vmem:[#allocation2 + $0x1c] sm:$0xf] %v1229
      %1302 = vst [vmem:[#allocation2 + $0x20] sm:$0xf] %v1230
      %1303 = vst [vmem:[#allocation2 + $0x24] sm:$0xf] %v1231
      %1304 = vst [vmem:[#allocation2 + $0x28] sm:$0xf] %v1232
      %1305 = vst [vmem:[#allocation2 + $0x2c] sm:$0xf] %v1233
      %1306 = vst [vmem:[#allocation2 + $0x30] sm:$0xf] %v1234
      %1307 = vst [vmem:[#allocation2 + $0x34] sm:$0xf] %v1235
      %1308 = vst [vmem:[#allocation2 + $0x38] sm:$0xf] %v1236
      %1309 = vst [vmem:[#allocation2 + $0x3c] sm:$0xf] %v1237
      %1310 = vst [vmem:[#allocation2 + $0x40] sm:$0xf] %v1238
      %1311 = vst [vmem:[#allocation2 + $0x44] sm:$0xf] %v1239
      %1312 = vst [vmem:[#allocation2 + $0x48] sm:$0xf] %v1240
      %1313 = vst [vmem:[#allocation2 + $0x4c] sm:$0xf] %v1241
      %1314 = vst [vmem:[#allocation2 + $0x50] sm:$0xf] %v1242
      %1315 = vst [vmem:[#allocation2 + $0x54] sm:$0xf] %v1243
      %1316 = vst [vmem:[#allocation2 + $0x58] sm:$0xf] %v1244
      %1317 = vst [vmem:[#allocation2 + $0x5c] sm:$0xf] %v1245
      %1318 = vst [vmem:[#allocation2 + $0x60] sm:$0xf] %v1246
      %1319 = vst [vmem:[#allocation2 + $0x64] sm:$0xf] %v1247
      %1320 = vst [vmem:[#allocation2 + $0x68] sm:$0xf] %v1248
      %1321 = vst [vmem:[#allocation2 + $0x6c] sm:$0xf] %v1249
      %1322 = vst [vmem:[#allocation2 + $0x70] sm:$0xf] %v1250
      %1323 = vst [vmem:[#allocation2 + $0x74] sm:$0xf] %v1251
      %1324 = vst [vmem:[#allocation2 + $0x78] sm:$0xf] %v1252
      %1325 = vst [vmem:[#allocation2 + $0x7c] sm:$0xf] %v1253
      %1326 = vst [vmem:[#allocation2 + $0x80] sm:$0xf] %v1254
      %1327 = vst [vmem:[#allocation2 + $0x84] sm:$0xf] %v1255
      %1328 = vst [vmem:[#allocation2 + $0x88] sm:$0xf] %v1256
      %1329 = vst [vmem:[#allocation2 + $0x8c] sm:$0xf] %v1257
      %1330 = vst [vmem:[#allocation2 + $0x90] sm:$0xf] %v1258
      %1331 = vst [vmem:[#allocation2 + $0x94] sm:$0xf] %v1259
      %1332 = vst [vmem:[#allocation2 + $0x98] sm:$0xf] %v1260
      %1333 = vst [vmem:[#allocation2 + $0x9c] sm:$0xf] %v1261
      %v1334 = vld [vmem:[#allocation2 + $0x4] sm:$0xc]
      %v1335 = vld [vmem:[#allocation2 + $0x8] sm:$0xf]
      %v1336 = vld [vmem:[#allocation2 + $0xc] sm:$0xf]
      %v1337 = vld [vmem:[#allocation2 + $0x10] sm:$0xf]
      %v1338 = vld [vmem:[#allocation2 + $0x14] sm:$0xf]
      %v1339 = vld [vmem:[#allocation2 + $0x18] sm:$0xf]
      %v1340 = vld [vmem:[#allocation2 + $0x1c] sm:$0xf]
      %v1341 = vld [vmem:[#allocation2 + $0x20] sm:$0xf]
      %v1342 = vld [vmem:[#allocation2 + $0x24] sm:$0xf]
      %v1343 = vld [vmem:[#allocation2 + $0x28] sm:$0xf]
      %v1344 = vld [vmem:[#allocation2 + $0x2c] sm:$0xf]
      %v1345 = vld [vmem:[#allocation2 + $0x30] sm:$0xf]
      %v1346 = vld [vmem:[#allocation2 + $0x34] sm:$0xf]
      %v1347 = vld [vmem:[#allocation2 + $0x38] sm:$0xf]
      %v1348 = vld [vmem:[#allocation2 + $0x3c] sm:$0xf]
      %v1349 = vld [vmem:[#allocation2 + $0x40] sm:$0xf]
      %v1350 = vld [vmem:[#allocation2 + $0x44] sm:$0xf]
      %v1351 = vld [vmem:[#allocation2 + $0x48] sm:$0xf]
      %v1352 = vld [vmem:[#allocation2 + $0x4c] sm:$0xf]
      %v1353 = vld [vmem:[#allocation2 + $0x50] sm:$0xf]
      %v1354 = vld [vmem:[#allocation2 + $0x54] sm:$0xf]
      %v1355 = vld [vmem:[#allocation2 + $0x58] sm:$0xf]
      %v1356 = vld [vmem:[#allocation2 + $0x5c] sm:$0xf]
      %v1357 = vld [vmem:[#allocation2 + $0x60] sm:$0xf]
      %v1358 = vld [vmem:[#allocation2 + $0x64] sm:$0xf]
      %v1359 = vld [vmem:[#allocation2 + $0x68] sm:$0xf]
      %v1360 = vld [vmem:[#allocation2 + $0x6c] sm:$0xf]
      %v1361 = vld [vmem:[#allocation2 + $0x70] sm:$0xf]
      %v1362 = vld [vmem:[#allocation2 + $0x74] sm:$0xf]
      %v1363 = vld [vmem:[#allocation2 + $0x78] sm:$0xf]
      %v1364 = vld [vmem:[#allocation2 + $0x7c] sm:$0xf]
      %v1365 = vld [vmem:[#allocation2 + $0x80] sm:$0xf]
      %v1366 = vld [vmem:[#allocation2 + $0x84] sm:$0xf]
      %v1367 = vld [vmem:[#allocation2 + $0x88] sm:$0xf]
      %v1368 = vld [vmem:[#allocation2 + $0x8c] sm:$0xf]
      %v1369 = vld [vmem:[#allocation2 + $0x90] sm:$0xf]
      %v1370 = vld [vmem:[#allocation2 + $0x94] sm:$0x7]
      %v1371 = vld [vmem:[%s3] sm:$0xf]
      %v1372 = vld [vmem:[%s3 + $0x4] sm:$0xf]
      %v1373 = vld [vmem:[%s3 + $0x8] sm:$0xf]
      %v1374 = vld [vmem:[%s3 + $0xc] sm:$0xf]
      %v1375 = vld [vmem:[%s3 + $0x10] sm:$0xf]
      %v1376 = vld [vmem:[%s3 + $0x14] sm:$0xf]
      %v1377 = vld [vmem:[%s3 + $0x18] sm:$0xf]
      %v1378 = vld [vmem:[%s3 + $0x1c] sm:$0xf]
      %v1379 = vld [vmem:[%s3 + $0x20] sm:$0xf]
      %v1380 = vld [vmem:[%s3 + $0x24] sm:$0xf]
      %v1381 = vld [vmem:[%s3 + $0x28] sm:$0xf]
      %v1382 = vld [vmem:[%s3 + $0x2c] sm:$0xf]
      %v1383 = vld [vmem:[%s3 + $0x30] sm:$0xf]
      %v1384 = vld [vmem:[%s3 + $0x34] sm:$0xf]
      %v1385 = vld [vmem:[%s3 + $0x38] sm:$0xf]
      %v1386 = vld [vmem:[%s3 + $0x3c] sm:$0xf]
      %v1387 = vld [vmem:[#allocation2 + $0x4] sm:$0x8]
      %s1388 = scalar_lea.vmem %s3, 64
      %v1389 = vld [vmem:[%s1388] sm:$0xf]
      %v1390 = vld [vmem:[%s1388 + $0x4] sm:$0xf]
      %v1391 = vld [vmem:[%s1388 + $0x8] sm:$0xf]
      %v1392 = vld [vmem:[%s1388 + $0xc] sm:$0xf]
      %v1393 = vld [vmem:[%s1388 + $0x10] sm:$0xf]
      %v1394 = vld [vmem:[%s1388 + $0x14] sm:$0xf]
      %v1395 = vld [vmem:[%s1388 + $0x18] sm:$0xf]
      %v1396 = vld [vmem:[%s1388 + $0x1c] sm:$0xf]
      %v1397 = vld [vmem:[%s1388 + $0x20] sm:$0xf]
      %v1398 = vld [vmem:[%s1388 + $0x24] sm:$0xf]
      %v1399 = vld [vmem:[%s1388 + $0x28] sm:$0xf]
      %v1400 = vld [vmem:[%s1388 + $0x2c] sm:$0xf]
      %v1401 = vld [vmem:[%s1388 + $0x30] sm:$0xf]
      %v1402 = vld [vmem:[%s1388 + $0x34] sm:$0xf]
      %v1403 = vld [vmem:[%s1388 + $0x38] sm:$0xf]
      %v1404 = vld [vmem:[%s1388 + $0x3c] sm:$0xf]
      %v1442 = vunpack.c.l.b16 %v1387
      %v1443 = vunpack.c.l.b16 %v1335
      %v1444 = vunpack.c.l.b16 %v1336
      %v1445 = vunpack.c.l.b16 %v1337
      %v1446 = vunpack.c.l.b16 %v1338
      %v1447 = vunpack.c.l.b16 %v1339
      %v1448 = vunpack.c.l.b16 %v1340
      %v1449 = vunpack.c.l.b16 %v1341
      %v1450 = vunpack.c.l.b16 %v1342
      %v1451 = vunpack.c.l.b16 %v1343
      %v1452 = vunpack.c.l.b16 %v1344
      %v1453 = vunpack.c.l.b16 %v1345
      %v1454 = vunpack.c.l.b16 %v1346
      %v1455 = vunpack.c.l.b16 %v1347
      %v1456 = vunpack.c.l.b16 %v1348
      %v1457 = vunpack.c.l.b16 %v1349
      %v1458 = vunpack.c.l.b16 %v1350
      %v1459 = vunpack.c.l.b16 %v1351
      %v1460 = vunpack.c.l.b16 %v1352
      %v1461 = vunpack.c.l.b16 %v1353
      %v1462 = vunpack.c.l.b16 %v1354
      %v1463 = vunpack.c.l.b16 %v1355
      %v1464 = vunpack.c.l.b16 %v1356
      %v1465 = vunpack.c.l.b16 %v1357
      %v1466 = vunpack.c.l.b16 %v1358
      %v1467 = vunpack.c.l.b16 %v1359
      %v1468 = vunpack.c.l.b16 %v1360
      %v1469 = vunpack.c.l.b16 %v1361
      %v1470 = vunpack.c.l.b16 %v1362
      %v1471 = vunpack.c.l.b16 %v1363
      %v1472 = vunpack.c.l.b16 %v1364
      %v1473 = vunpack.c.l.b16 %v1365
      %v1474 = vunpack.c.l.b16 %v1366
      %v1475 = vunpack.c.l.b16 %v1367
      %v1476 = vunpack.c.l.b16 %v1368
      %v1477 = vunpack.c.l.b16 %v1369
      %v1478 = vunpack.c.l.b16 %v1370
      %v1479 = vpack.c.b16 %v1443, %v1442
      %v1480 = vpack.c.b16 %v1445, %v1444
      %v1481 = vpack.c.b16 %v1447, %v1446
      %v1482 = vpack.c.b16 %v1449, %v1448
      %v1483 = vpack.c.b16 %v1451, %v1450
      %v1484 = vpack.c.b16 %v1453, %v1452
      %v1485 = vpack.c.b16 %v1455, %v1454
      %v1486 = vpack.c.b16 %v1457, %v1456
      %v1487 = vpack.c.b16 %v1459, %v1458
      %v1488 = vpack.c.b16 %v1461, %v1460
      %v1489 = vpack.c.b16 %v1463, %v1462
      %v1490 = vpack.c.b16 %v1465, %v1464
      %v1491 = vpack.c.b16 %v1467, %v1466
      %v1492 = vpack.c.b16 %v1469, %v1468
      %v1493 = vpack.c.b16 %v1471, %v1470
      %v1494 = vpack.c.b16 %v1473, %v1472
      %v1495 = vpack.c.b16 %v1475, %v1474
      %v1496 = vpack.c.b16 %v1477, %v1476
      %v1497 = vpack.c.b16 %v1478, %v1478
      %vm1498 = vcmask 1044480
      %v1499 = vrot.slane %v1479, 3
      %v1500 = vrot.slane %v1480, 3
      %v1501 = vsel %vm1498, %v1499, %v1500
      %v1502 = vrot.slane %v1481, 3
      %v1503 = vsel %vm1498, %v1500, %v1502
      %v1504 = vrot.slane %v1482, 3
      %v1505 = vsel %vm1498, %v1502, %v1504
      %v1506 = vrot.slane %v1483, 3
      %v1507 = vsel %vm1498, %v1504, %v1506
      %v1508 = vrot.slane %v1484, 3
      %v1509 = vsel %vm1498, %v1506, %v1508
      %v1510 = vrot.slane %v1485, 3
      %v1511 = vsel %vm1498, %v1508, %v1510
      %v1512 = vrot.slane %v1486, 3
      %v1513 = vsel %vm1498, %v1510, %v1512
      %v1514 = vrot.slane %v1487, 3
      %v1515 = vsel %vm1498, %v1512, %v1514
      %v1516 = vrot.slane %v1488, 3
      %v1517 = vsel %vm1498, %v1514, %v1516
      %v1518 = vrot.slane %v1489, 3
      %v1519 = vsel %vm1498, %v1516, %v1518
      %v1520 = vrot.slane %v1490, 3
      %v1521 = vsel %vm1498, %v1518, %v1520
      %v1522 = vrot.slane %v1491, 3
      %v1523 = vsel %vm1498, %v1520, %v1522
      %v1524 = vrot.slane %v1492, 3
      %v1525 = vsel %vm1498, %v1522, %v1524
      %v1526 = vrot.slane %v1493, 3
      %v1527 = vsel %vm1498, %v1524, %v1526
      %v1528 = vrot.slane %v1494, 3
      %v1529 = vsel %vm1498, %v1526, %v1528
      %v1530 = vrot.slane %v1495, 3
      %v1531 = vsel %vm1498, %v1528, %v1530
      %v1532 = vrot.slane %v1496, 3
      %v1533 = vsel %vm1498, %v1530, %v1532
      %v1534 = vrot.slane %v1497, 3
      %v1535 = vsel %vm1498, %v1532, %v1534
      %v1570 = vunpack.c.l.b16 %v1389
      %v1571 = vunpack.c.l.b16 %v1390
      %v1572 = vunpack.c.l.b16 %v1391
      %v1573 = vunpack.c.l.b16 %v1392
      %v1574 = vunpack.c.l.b16 %v1393
      %v1575 = vunpack.c.l.b16 %v1394
      %v1576 = vunpack.c.l.b16 %v1395
      %v1577 = vunpack.c.l.b16 %v1396
      %v1578 = vunpack.c.l.b16 %v1397
      %v1579 = vunpack.c.l.b16 %v1398
      %v1580 = vunpack.c.l.b16 %v1399
      %v1581 = vunpack.c.l.b16 %v1400
      %v1582 = vunpack.c.l.b16 %v1401
      %v1583 = vunpack.c.l.b16 %v1402
      %v1584 = vunpack.c.l.b16 %v1403
      %v1585 = vunpack.c.l.b16 %v1404
      %v1586 = vpack.c.b16 %v1571, %v1570
      %v1587 = vpack.c.b16 %v1573, %v1572
      %v1588 = vpack.c.b16 %v1575, %v1574
      %v1589 = vpack.c.b16 %v1577, %v1576
      %v1590 = vpack.c.b16 %v1579, %v1578
      %v1591 = vpack.c.b16 %v1581, %v1580
      %v1592 = vpack.c.b16 %v1583, %v1582
      %v1593 = vpack.c.b16 %v1585, %v1584
      %1602 = vmatprep.subr.bf16.mxu0 0
      %1603 = vmatpush1.bf16.msra.mxu0 %v1586
      %1604 = vmatprep.subr.bf16.mxu0 0
      %1605 = vmatpush1.bf16.msra.mxu0 %v1587
      %1606 = vmatprep.subr.bf16.mxu0 0
      %1607 = vmatpush1.bf16.msra.mxu0 %v1588
      %1608 = vmatprep.subr.bf16.mxu0 0
      %1609 = vmatpush1.bf16.msra.mxu0 %v1589
      %1610 = vmatprep.subr.bf16.mxu0 0
      %1611 = vmatpush1.bf16.msra.mxu0 %v1590
      %1612 = vmatprep.subr.bf16.mxu0 0
      %1613 = vmatpush1.bf16.msra.mxu0 %v1591
      %1614 = vmatprep.subr.bf16.mxu0 0
      %1615 = vmatpush1.bf16.msra.mxu0 %v1592
      %1616 = vmatprep.subr.bf16.mxu0 0
      %1617 = vmatpush1.bf16.msra.mxu0 %v1593
      %1618 = vmatprep.subr.bf16.mxu0 0
      %1619 = vmatpush1.bf16.msra.mxu0 0
      %1620 = vmatprep.subr.bf16.mxu0 0
      %1621 = vmatpush1.bf16.msra.mxu0 0
      %1622 = vmatprep.subr.bf16.mxu0 0
      %1623 = vmatpush1.bf16.msra.mxu0 0
      %1624 = vmatprep.subr.bf16.mxu0 0
      %1625 = vmatpush1.bf16.msra.mxu0 0
      %1626 = vmatprep.subr.bf16.mxu0 0
      %1627 = vmatpush1.bf16.msra.mxu0 0
      %1628 = vmatprep.subr.bf16.mxu0 0
      %1629 = vmatpush1.bf16.msra.mxu0 0
      %1630 = vmatprep.subr.bf16.mxu0 0
      %1631 = vmatpush1.bf16.msra.mxu0 0
      %1632 = vmatprep.subr.bf16.mxu0 0
      %1633 = vmatpush1.bf16.msra.mxu0 0
      %1634 = vmatprep.mubr.bf16.mxu0 0
      %1635 = vmatmul.mubr.bf16.gmra.mrb[0].mxu0 %v1501
      %v1636 = vpop.f32.mrb[0].mxu0
      %v1637 = vadd.f32 0.0, %v1636
      %v1638 = vpop.f32.mrb[0].mxu0
      %v1639 = vpop.f32.mrb[0].mxu0
      %v1640 = vadd.f32 0.0, %v1639
      %v1641 = vpop.f32.mrb[0].mxu0
      %1642 = vmatprep.mubr.bf16.mxu0 0
      %1643 = vmatmul.mubr.bf16.gmra.mrb[0].mxu0 %v1503
      %v1644 = vpop.f32.mrb[0].mxu0
      %v1645 = vadd.f32 0.0, %v1644
      %v1646 = vpop.f32.mrb[0].mxu0
      %v1647 = vpop.f32.mrb[0].mxu0
      %v1648 = vadd.f32 0.0, %v1647
      %v1649 = vpop.f32.mrb[0].mxu0
      %1650 = vmatprep.mubr.bf16.mxu0 0
      %1651 = vmatmul.mubr.bf16.gmra.mrb[0].mxu0 %v1505
      %v1652 = vpop.f32.mrb[0].mxu0
      %v1653 = vadd.f32 0.0, %v1652
      %v1654 = vpop.f32.mrb[0].mxu0
      %v1655 = vpop.f32.mrb[0].mxu0
      %v1656 = vadd.f32 0.0, %v1655
      %v1657 = vpop.f32.mrb[0].mxu0
      %1658 = vmatprep.mubr.bf16.mxu0 0
      %1659 = vmatmul.mubr.bf16.gmra.mrb[0].mxu0 %v1507
      %v1660 = vpop.f32.mrb[0].mxu0
      %v1661 = vadd.f32 0.0, %v1660
      %v1662 = vpop.f32.mrb[0].mxu0
      %v1663 = vpop.f32.mrb[0].mxu0
      %v1664 = vadd.f32 0.0, %v1663
      %v1665 = vpop.f32.mrb[0].mxu0
      %1666 = vmatprep.mubr.bf16.mxu0 0
      %1667 = vmatmul.mubr.bf16.gmra.mrb[0].mxu0 %v1509
      %v1668 = vpop.f32.mrb[0].mxu0
      %v1669 = vadd.f32 0.0, %v1668
      %v1670 = vpop.f32.mrb[0].mxu0
      %v1671 = vpop.f32.mrb[0].mxu0
      %v1672 = vadd.f32 0.0, %v1671
      %v1673 = vpop.f32.mrb[0].mxu0
      %1674 = vmatprep.mubr.bf16.mxu0 0
      %1675 = vmatmul.mubr.bf16.gmra.mrb[0].mxu0 %v1511
      %v1676 = vpop.f32.mrb[0].mxu0
      %v1677 = vadd.f32 0.0, %v1676
      %v1678 = vpop.f32.mrb[0].mxu0
      %v1679 = vpop.f32.mrb[0].mxu0
      %v1680 = vadd.f32 0.0, %v1679
      %v1681 = vpop.f32.mrb[0].mxu0
      %1682 = vmatprep.mubr.bf16.mxu0 0
      %1683 = vmatmul.mubr.bf16.gmra.mrb[0].mxu0 %v1513
      %v1684 = vpop.f32.mrb[0].mxu0
      %v1685 = vadd.f32 0.0, %v1684
      %v1686 = vpop.f32.mrb[0].mxu0
      %v1687 = vpop.f32.mrb[0].mxu0
      %v1688 = vadd.f32 0.0, %v1687
      %v1689 = vpop.f32.mrb[0].mxu0
      %1690 = vmatprep.mubr.bf16.mxu0 0
      %1691 = vmatmul.mubr.bf16.gmra.mrb[0].mxu0 %v1515
      %v1692 = vpop.f32.mrb[0].mxu0
      %v1693 = vadd.f32 0.0, %v1692
      %v1694 = vpop.f32.mrb[0].mxu0
      %v1695 = vpop.f32.mrb[0].mxu0
      %v1696 = vadd.f32 0.0, %v1695
      %v1697 = vpop.f32.mrb[0].mxu0
      %1698 = vmatprep.mubr.bf16.mxu0 0
      %1699 = vmatmul.mubr.bf16.gmra.mrb[0].mxu0 %v1517
      %v1700 = vpop.f32.mrb[0].mxu0
      %v1701 = vadd.f32 0.0, %v1700
      %v1702 = vpop.f32.mrb[0].mxu0
      %v1703 = vpop.f32.mrb[0].mxu0
      %v1704 = vadd.f32 0.0, %v1703
      %v1705 = vpop.f32.mrb[0].mxu0
      %1706 = vmatprep.mubr.bf16.mxu0 0
      %1707 = vmatmul.mubr.bf16.gmra.mrb[0].mxu0 %v1519
      %v1708 = vpop.f32.mrb[0].mxu0
      %v1709 = vadd.f32 0.0, %v1708
      %v1710 = vpop.f32.mrb[0].mxu0
      %v1711 = vpop.f32.mrb[0].mxu0
      %v1712 = vadd.f32 0.0, %v1711
      %v1713 = vpop.f32.mrb[0].mxu0
      %1714 = vmatprep.mubr.bf16.mxu0 0
      %1715 = vmatmul.mubr.bf16.gmra.mrb[0].mxu0 %v1521
      %v1716 = vpop.f32.mrb[0].mxu0
      %v1717 = vadd.f32 0.0, %v1716
      %v1718 = vpop.f32.mrb[0].mxu0
      %v1719 = vpop.f32.mrb[0].mxu0
      %v1720 = vadd.f32 0.0, %v1719
      %v1721 = vpop.f32.mrb[0].mxu0
      %1722 = vmatprep.mubr.bf16.mxu0 0
      %1723 = vmatmul.mubr.bf16.gmra.mrb[0].mxu0 %v1523
      %v1724 = vpop.f32.mrb[0].mxu0
      %v1725 = vadd.f32 0.0, %v1724
      %v1726 = vpop.f32.mrb[0].mxu0
      %v1727 = vpop.f32.mrb[0].mxu0
      %v1728 = vadd.f32 0.0, %v1727
      %v1729 = vpop.f32.mrb[0].mxu0
      %1730 = vmatprep.mubr.bf16.mxu0 0
      %1731 = vmatmul.mubr.bf16.gmra.mrb[0].mxu0 %v1525
      %v1732 = vpop.f32.mrb[0].mxu0
      %v1733 = vadd.f32 0.0, %v1732
      %v1734 = vpop.f32.mrb[0].mxu0
      %v1735 = vpop.f32.mrb[0].mxu0
      %v1736 = vadd.f32 0.0, %v1735
      %v1737 = vpop.f32.mrb[0].mxu0
      %1738 = vmatprep.mubr.bf16.mxu0 0
      %1739 = vmatmul.mubr.bf16.gmra.mrb[0].mxu0 %v1527
      %v1740 = vpop.f32.mrb[0].mxu0
      %v1741 = vadd.f32 0.0, %v1740
      %v1742 = vpop.f32.mrb[0].mxu0
      %v1743 = vpop.f32.mrb[0].mxu0
      %v1744 = vadd.f32 0.0, %v1743
      %v1745 = vpop.f32.mrb[0].mxu0
      %1746 = vmatprep.mubr.bf16.mxu0 0
      %1747 = vmatmul.mubr.bf16.gmra.mrb[0].mxu0 %v1529
      %v1748 = vpop.f32.mrb[0].mxu0
      %v1749 = vadd.f32 0.0, %v1748
      %v1750 = vpop.f32.mrb[0].mxu0
      %v1751 = vpop.f32.mrb[0].mxu0
      %v1752 = vadd.f32 0.0, %v1751
      %v1753 = vpop.f32.mrb[0].mxu0
      %1754 = vmatprep.mubr.bf16.mxu0 0
      %1755 = vmatmul.mubr.bf16.gmra.mrb[0].mxu0 %v1531
      %v1756 = vpop.f32.mrb[0].mxu0
      %v1757 = vadd.f32 0.0, %v1756
      %v1758 = vpop.f32.mrb[0].mxu0
      %v1759 = vpop.f32.mrb[0].mxu0
      %v1760 = vadd.f32 0.0, %v1759
      %v1761 = vpop.f32.mrb[0].mxu0
      %1762 = vmatprep.mubr.bf16.mxu0 0
      %1763 = vmatmul.mubr.bf16.gmra.mrb[0].mxu0 %v1533
      %v1764 = vpop.f32.mrb[0].mxu0
      %v1765 = vadd.f32 0.0, %v1764
      %v1766 = vpop.f32.mrb[0].mxu0
      %v1767 = vpop.f32.mrb[0].mxu0
      %v1768 = vadd.f32 0.0, %v1767
      %v1769 = vpop.f32.mrb[0].mxu0
      %1770 = vmatprep.mubr.bf16.mxu0 0
      %1771 = vmatmul.mubr.bf16.gmra.mrb[0].mxu0 %v1535
      %v1772 = vpop.f32.mrb[0].mxu0
      %v1773 = vadd.f32 0.0, %v1772
      %v1774 = vpop.f32.mrb[0].mxu0
      %v1775 = vpop.f32.mrb[0].mxu0
      %v1776 = vadd.f32 0.0, %v1775
      %v1777 = vpop.f32.mrb[0].mxu0
      %1778 = vdwg.mxu0
      %v1780 = vunpack.c.l.b16 %v1334
      %v1781 = vpack.c.b16 %v1443, %v1780
      %vm1782 = vsmask.f32 5376
      %v1784 = vshrl.u32 %v1781, 16
      %v1786 = vrot.slane %v1784, 2
      %v1787 = vshll.u32 %v1781, 16
      %v1789 = vrot.slane %v1787, 3
      %v1790 = vor.u32 %v1786, %v1789
      %v1792 = vshrl.u32 %v1480, 16
      %v1794 = vrot.slane %v1792, 2
      %v1795 = vshll.u32 %v1480, 16
      %v1797 = vrot.slane %v1795, 3
      %v1798 = vor.u32 %v1794, %v1797
      %v1799 = vsel %vm1782, %v1790, %v1798
      %v1801 = vshrl.u32 %v1481, 16
      %v1803 = vrot.slane %v1801, 2
      %v1804 = vshll.u32 %v1481, 16
      %v1806 = vrot.slane %v1804, 3
      %v1807 = vor.u32 %v1803, %v1806
      %v1808 = vsel %vm1782, %v1798, %v1807
      %v1810 = vshrl.u32 %v1482, 16
      %v1812 = vrot.slane %v1810, 2
      %v1813 = vshll.u32 %v1482, 16
      %v1815 = vrot.slane %v1813, 3
      %v1816 = vor.u32 %v1812, %v1815
      %v1817 = vsel %vm1782, %v1807, %v1816
      %v1819 = vshrl.u32 %v1483, 16
      %v1821 = vrot.slane %v1819, 2
      %v1822 = vshll.u32 %v1483, 16
      %v1824 = vrot.slane %v1822, 3
      %v1825 = vor.u32 %v1821, %v1824
      %v1826 = vsel %vm1782, %v1816, %v1825
      %v1828 = vshrl.u32 %v1484, 16
      %v1830 = vrot.slane %v1828, 2
      %v1831 = vshll.u32 %v1484, 16
      %v1833 = vrot.slane %v1831, 3
      %v1834 = vor.u32 %v1830, %v1833
      %v1835 = vsel %vm1782, %v1825, %v1834
      %v1837 = vshrl.u32 %v1485, 16
      %v1839 = vrot.slane %v1837, 2
      %v1840 = vshll.u32 %v1485, 16
      %v1842 = vrot.slane %v1840, 3
      %v1843 = vor.u32 %v1839, %v1842
      %v1844 = vsel %vm1782, %v1834, %v1843
      %v1846 = vshrl.u32 %v1486, 16
      %v1848 = vrot.slane %v1846, 2
      %v1849 = vshll.u32 %v1486, 16
      %v1851 = vrot.slane %v1849, 3
      %v1852 = vor.u32 %v1848, %v1851
      %v1853 = vsel %vm1782, %v1843, %v1852
      %v1855 = vshrl.u32 %v1487, 16
      %v1857 = vrot.slane %v1855, 2
      %v1858 = vshll.u32 %v1487, 16
      %v1860 = vrot.slane %v1858, 3
      %v1861 = vor.u32 %v1857, %v1860
      %v1862 = vsel %vm1782, %v1852, %v1861
      %v1864 = vshrl.u32 %v1488, 16
      %v1866 = vrot.slane %v1864, 2
      %v1867 = vshll.u32 %v1488, 16
      %v1869 = vrot.slane %v1867, 3
      %v1870 = vor.u32 %v1866, %v1869
      %v1871 = vsel %vm1782, %v1861, %v1870
      %v1873 = vshrl.u32 %v1489, 16
      %v1875 = vrot.slane %v1873, 2
      %v1876 = vshll.u32 %v1489, 16
      %v1878 = vrot.slane %v1876, 3
      %v1879 = vor.u32 %v1875, %v1878
      %v1880 = vsel %vm1782, %v1870, %v1879
      %v1882 = vshrl.u32 %v1490, 16
      %v1884 = vrot.slane %v1882, 2
      %v1885 = vshll.u32 %v1490, 16
      %v1887 = vrot.slane %v1885, 3
      %v1888 = vor.u32 %v1884, %v1887
      %v1889 = vsel %vm1782, %v1879, %v1888
      %v1891 = vshrl.u32 %v1491, 16
      %v1893 = vrot.slane %v1891, 2
      %v1894 = vshll.u32 %v1491, 16
      %v1896 = vrot.slane %v1894, 3
      %v1897 = vor.u32 %v1893, %v1896
      %v1898 = vsel %vm1782, %v1888, %v1897
      %v1900 = vshrl.u32 %v1492, 16
      %v1902 = vrot.slane %v1900, 2
      %v1903 = vshll.u32 %v1492, 16
      %v1905 = vrot.slane %v1903, 3
      %v1906 = vor.u32 %v1902, %v1905
      %v1907 = vsel %vm1782, %v1897, %v1906
      %v1909 = vshrl.u32 %v1493, 16
      %v1911 = vrot.slane %v1909, 2
      %v1912 = vshll.u32 %v1493, 16
      %v1914 = vrot.slane %v1912, 3
      %v1915 = vor.u32 %v1911, %v1914
      %v1916 = vsel %vm1782, %v1906, %v1915
      %v1918 = vshrl.u32 %v1494, 16
      %v1920 = vrot.slane %v1918, 2
      %v1921 = vshll.u32 %v1494, 16
      %v1923 = vrot.slane %v1921, 3
      %v1924 = vor.u32 %v1920, %v1923
      %v1925 = vsel %vm1782, %v1915, %v1924
      %v1927 = vshrl.u32 %v1495, 16
      %v1929 = vrot.slane %v1927, 2
      %v1930 = vshll.u32 %v1495, 16
      %v1932 = vrot.slane %v1930, 3
      %v1933 = vor.u32 %v1929, %v1932
      %v1934 = vsel %vm1782, %v1924, %v1933
      %v1936 = vshrl.u32 %v1496, 16
      %v1938 = vrot.slane %v1936, 2
      %v1939 = vshll.u32 %v1496, 16
      %v1941 = vrot.slane %v1939, 3
      %v1942 = vor.u32 %v1938, %v1941
      %v1943 = vsel %vm1782, %v1933, %v1942
      %v1945 = vshrl.u32 %v1497, 16
      %v1947 = vrot.slane %v1945, 2
      %v1948 = vshll.u32 %v1497, 16
      %v1950 = vrot.slane %v1948, 3
      %v1951 = vor.u32 %v1947, %v1950
      %v1952 = vsel %vm1782, %v1942, %v1951
      %v1987 = vunpack.c.l.b16 %v1371
      %v1988 = vunpack.c.l.b16 %v1372
      %v1989 = vunpack.c.l.b16 %v1373
      %v1990 = vunpack.c.l.b16 %v1374
      %v1991 = vunpack.c.l.b16 %v1375
      %v1992 = vunpack.c.l.b16 %v1376
      %v1993 = vunpack.c.l.b16 %v1377
      %v1994 = vunpack.c.l.b16 %v1378
      %v1995 = vunpack.c.l.b16 %v1379
      %v1996 = vunpack.c.l.b16 %v1380
      %v1997 = vunpack.c.l.b16 %v1381
      %v1998 = vunpack.c.l.b16 %v1382
      %v1999 = vunpack.c.l.b16 %v1383
      %v2000 = vunpack.c.l.b16 %v1384
      %v2001 = vunpack.c.l.b16 %v1385
      %v2002 = vunpack.c.l.b16 %v1386
      %v2003 = vpack.c.b16 %v1988, %v1987
      %v2004 = vpack.c.b16 %v1990, %v1989
      %v2005 = vpack.c.b16 %v1992, %v1991
      %v2006 = vpack.c.b16 %v1994, %v1993
      %v2007 = vpack.c.b16 %v1996, %v1995
      %v2008 = vpack.c.b16 %v1998, %v1997
      %v2009 = vpack.c.b16 %v2000, %v1999
      %v2010 = vpack.c.b16 %v2002, %v2001
      %2019 = vmatprep.subr.bf16.mxu0 0
      %2020 = vmatpush1.bf16.msra.mxu0 %v2003
      %2021 = vmatprep.subr.bf16.mxu0 0
      %2022 = vmatpush1.bf16.msra.mxu0 %v2004
      %2023 = vmatprep.subr.bf16.mxu0 0
      %2024 = vmatpush1.bf16.msra.mxu0 %v2005
      %2025 = vmatprep.subr.bf16.mxu0 0
      %2026 = vmatpush1.bf16.msra.mxu0 %v2006
      %2027 = vmatprep.subr.bf16.mxu0 0
      %2028 = vmatpush1.bf16.msra.mxu0 %v2007
      %2029 = vmatprep.subr.bf16.mxu0 0
      %2030 = vmatpush1.bf16.msra.mxu0 %v2008
      %2031 = vmatprep.subr.bf16.mxu0 0
      %2032 = vmatpush1.bf16.msra.mxu0 %v2009
      %2033 = vmatprep.subr.bf16.mxu0 0
      %2034 = vmatpush1.bf16.msra.mxu0 %v2010
      %2035 = vmatprep.subr.bf16.mxu0 0
      %2036 = vmatpush1.bf16.msra.mxu0 0
      %2037 = vmatprep.subr.bf16.mxu0 0
      %2038 = vmatpush1.bf16.msra.mxu0 0
      %2039 = vmatprep.subr.bf16.mxu0 0
      %2040 = vmatpush1.bf16.msra.mxu0 0
      %2041 = vmatprep.subr.bf16.mxu0 0
      %2042 = vmatpush1.bf16.msra.mxu0 0
      %2043 = vmatprep.subr.bf16.mxu0 0
      %2044 = vmatpush1.bf16.msra.mxu0 0
      %2045 = vmatprep.subr.bf16.mxu0 0
      %2046 = vmatpush1.bf16.msra.mxu0 0
      %2047 = vmatprep.subr.bf16.mxu0 0
      %2048 = vmatpush1.bf16.msra.mxu0 0
      %2049 = vmatprep.subr.bf16.mxu0 0
      %2050 = vmatpush1.bf16.msra.mxu0 0
      %2051 = vmatprep.mubr.bf16.mxu0 0
      %2052 = vmatmul.mubr.bf16.gmra.mrb[0].mxu0 %v1799
      %v2053 = vpop.f32.mrb[0].mxu0
      %v2054 = vadd.f32 %v1637, %v2053
      %v2055 = vpop.f32.mrb[0].mxu0
      %v2056 = vpop.f32.mrb[0].mxu0
      %v2057 = vadd.f32 %v1640, %v2056
      %v2058 = vpop.f32.mrb[0].mxu0
      %2059 = vmatprep.mubr.bf16.mxu0 0
      %2060 = vmatmul.mubr.bf16.gmra.mrb[0].mxu0 %v1808
      %v2061 = vpop.f32.mrb[0].mxu0
      %v2062 = vadd.f32 %v1645, %v2061
      %v2063 = vpop.f32.mrb[0].mxu0
      %v2064 = vpop.f32.mrb[0].mxu0
      %v2065 = vadd.f32 %v1648, %v2064
      %v2066 = vpop.f32.mrb[0].mxu0
      %2067 = vmatprep.mubr.bf16.mxu0 0
      %2068 = vmatmul.mubr.bf16.gmra.mrb[0].mxu0 %v1817
      %v2069 = vpop.f32.mrb[0].mxu0
      %v2070 = vadd.f32 %v1653, %v2069
      %v2071 = vpop.f32.mrb[0].mxu0
      %v2072 = vpop.f32.mrb[0].mxu0
      %v2073 = vadd.f32 %v1656, %v2072
      %v2074 = vpop.f32.mrb[0].mxu0
      %2075 = vmatprep.mubr.bf16.mxu0 0
      %2076 = vmatmul.mubr.bf16.gmra.mrb[0].mxu0 %v1826
      %v2077 = vpop.f32.mrb[0].mxu0
      %v2078 = vadd.f32 %v1661, %v2077
      %v2079 = vpop.f32.mrb[0].mxu0
      %v2080 = vpop.f32.mrb[0].mxu0
      %v2081 = vadd.f32 %v1664, %v2080
      %v2082 = vpop.f32.mrb[0].mxu0
      %2083 = vmatprep.mubr.bf16.mxu0 0
      %2084 = vmatmul.mubr.bf16.gmra.mrb[0].mxu0 %v1835
      %v2085 = vpop.f32.mrb[0].mxu0
      %v2086 = vadd.f32 %v1669, %v2085
      %v2087 = vpop.f32.mrb[0].mxu0
      %v2088 = vpop.f32.mrb[0].mxu0
      %v2089 = vadd.f32 %v1672, %v2088
      %v2090 = vpop.f32.mrb[0].mxu0
      %2091 = vmatprep.mubr.bf16.mxu0 0
      %2092 = vmatmul.mubr.bf16.gmra.mrb[0].mxu0 %v1844
      %v2093 = vpop.f32.mrb[0].mxu0
      %v2094 = vadd.f32 %v1677, %v2093
      %v2095 = vpop.f32.mrb[0].mxu0
      %v2096 = vpop.f32.mrb[0].mxu0
      %v2097 = vadd.f32 %v1680, %v2096
      %v2098 = vpop.f32.mrb[0].mxu0
      %2099 = vmatprep.mubr.bf16.mxu0 0
      %2100 = vmatmul.mubr.bf16.gmra.mrb[0].mxu0 %v1853
      %v2101 = vpop.f32.mrb[0].mxu0
      %v2102 = vadd.f32 %v1685, %v2101
      %v2103 = vpop.f32.mrb[0].mxu0
      %v2104 = vpop.f32.mrb[0].mxu0
      %v2105 = vadd.f32 %v1688, %v2104
      %v2106 = vpop.f32.mrb[0].mxu0
      %2107 = vmatprep.mubr.bf16.mxu0 0
      %2108 = vmatmul.mubr.bf16.gmra.mrb[0].mxu0 %v1862
      %v2109 = vpop.f32.mrb[0].mxu0
      %v2110 = vadd.f32 %v1693, %v2109
      %v2111 = vpop.f32.mrb[0].mxu0
      %v2112 = vpop.f32.mrb[0].mxu0
      %v2113 = vadd.f32 %v1696, %v2112
      %v2114 = vpop.f32.mrb[0].mxu0
      %2115 = vmatprep.mubr.bf16.mxu0 0
      %2116 = vmatmul.mubr.bf16.gmra.mrb[0].mxu0 %v1871
      %v2117 = vpop.f32.mrb[0].mxu0
      %v2118 = vadd.f32 %v1701, %v2117
      %v2119 = vpop.f32.mrb[0].mxu0
      %v2120 = vpop.f32.mrb[0].mxu0
      %v2121 = vadd.f32 %v1704, %v2120
      %v2122 = vpop.f32.mrb[0].mxu0
      %2123 = vmatprep.mubr.bf16.mxu0 0
      %2124 = vmatmul.mubr.bf16.gmra.mrb[0].mxu0 %v1880
      %v2125 = vpop.f32.mrb[0].mxu0
      %v2126 = vadd.f32 %v1709, %v2125
      %v2127 = vpop.f32.mrb[0].mxu0
      %v2128 = vpop.f32.mrb[0].mxu0
      %v2129 = vadd.f32 %v1712, %v2128
      %v2130 = vpop.f32.mrb[0].mxu0
      %2131 = vmatprep.mubr.bf16.mxu0 0
      %2132 = vmatmul.mubr.bf16.gmra.mrb[0].mxu0 %v1889
      %v2133 = vpop.f32.mrb[0].mxu0
      %v2134 = vadd.f32 %v1717, %v2133
      %v2135 = vpop.f32.mrb[0].mxu0
      %v2136 = vpop.f32.mrb[0].mxu0
      %v2137 = vadd.f32 %v1720, %v2136
      %v2138 = vpop.f32.mrb[0].mxu0
      %2139 = vmatprep.mubr.bf16.mxu0 0
      %2140 = vmatmul.mubr.bf16.gmra.mrb[0].mxu0 %v1898
      %v2141 = vpop.f32.mrb[0].mxu0
      %v2142 = vadd.f32 %v1725, %v2141
      %v2143 = vpop.f32.mrb[0].mxu0
      %v2144 = vpop.f32.mrb[0].mxu0
      %v2145 = vadd.f32 %v1728, %v2144
      %v2146 = vpop.f32.mrb[0].mxu0
      %2147 = vmatprep.mubr.bf16.mxu0 0
      %2148 = vmatmul.mubr.bf16.gmra.mrb[0].mxu0 %v1907
      %v2149 = vpop.f32.mrb[0].mxu0
      %v2150 = vadd.f32 %v1733, %v2149
      %v2151 = vpop.f32.mrb[0].mxu0
      %v2152 = vpop.f32.mrb[0].mxu0
      %v2153 = vadd.f32 %v1736, %v2152
      %v2154 = vpop.f32.mrb[0].mxu0
      %2155 = vmatprep.mubr.bf16.mxu0 0
      %2156 = vmatmul.mubr.bf16.gmra.mrb[0].mxu0 %v1916
      %v2157 = vpop.f32.mrb[0].mxu0
      %v2158 = vadd.f32 %v1741, %v2157
      %v2159 = vpop.f32.mrb[0].mxu0
      %v2160 = vpop.f32.mrb[0].mxu0
      %v2161 = vadd.f32 %v1744, %v2160
      %v2162 = vpop.f32.mrb[0].mxu0
      %2163 = vmatprep.mubr.bf16.mxu0 0
      %2164 = vmatmul.mubr.bf16.gmra.mrb[0].mxu0 %v1925
      %v2165 = vpop.f32.mrb[0].mxu0
      %v2166 = vadd.f32 %v1749, %v2165
      %v2167 = vpop.f32.mrb[0].mxu0
      %v2168 = vpop.f32.mrb[0].mxu0
      %v2169 = vadd.f32 %v1752, %v2168
      %v2170 = vpop.f32.mrb[0].mxu0
      %2171 = vmatprep.mubr.bf16.mxu0 0
      %2172 = vmatmul.mubr.bf16.gmra.mrb[0].mxu0 %v1934
      %v2173 = vpop.f32.mrb[0].mxu0
      %v2174 = vadd.f32 %v1757, %v2173
      %v2175 = vpop.f32.mrb[0].mxu0
      %v2176 = vpop.f32.mrb[0].mxu0
      %v2177 = vadd.f32 %v1760, %v2176
      %v2178 = vpop.f32.mrb[0].mxu0
      %2179 = vmatprep.mubr.bf16.mxu0 0
      %2180 = vmatmul.mubr.bf16.gmra.mrb[0].mxu0 %v1943
      %v2181 = vpop.f32.mrb[0].mxu0
      %v2182 = vadd.f32 %v1765, %v2181
      %v2183 = vpop.f32.mrb[0].mxu0
      %v2184 = vpop.f32.mrb[0].mxu0
      %v2185 = vadd.f32 %v1768, %v2184
      %v2186 = vpop.f32.mrb[0].mxu0
      %2187 = vmatprep.mubr.bf16.mxu0 0
      %2188 = vmatmul.mubr.bf16.gmra.mrb[0].mxu0 %v1952
      %v2189 = vpop.f32.mrb[0].mxu0
      %v2190 = vadd.f32 %v1773, %v2189
      %v2191 = vpop.f32.mrb[0].mxu0
      %v2192 = vpop.f32.mrb[0].mxu0
      %v2193 = vadd.f32 %v1776, %v2192
      %v2194 = vpop.f32.mrb[0].mxu0
      %2195 = vdwg.mxu0
      %v2196 = vld [vmem:[#allocation2 + $0x94] sm:$0xf]
      %s2197 = scalar_lea.vmem %s3, 128
      %v2198 = vld [vmem:[%s2197] sm:$0xf]
      %v2199 = vld [vmem:[%s2197 + $0x4] sm:$0xf]
      %v2200 = vld [vmem:[%s2197 + $0x8] sm:$0xf]
      %v2201 = vld [vmem:[%s2197 + $0xc] sm:$0xf]
      %v2202 = vld [vmem:[%s2197 + $0x10] sm:$0xf]
      %v2203 = vld [vmem:[%s2197 + $0x14] sm:$0xf]
      %v2204 = vld [vmem:[%s2197 + $0x18] sm:$0xf]
      %v2205 = vld [vmem:[%s2197 + $0x1c] sm:$0xf]
      %v2206 = vld [vmem:[%s2197 + $0x20] sm:$0xf]
      %v2207 = vld [vmem:[%s2197 + $0x24] sm:$0xf]
      %v2208 = vld [vmem:[%s2197 + $0x28] sm:$0xf]
      %v2209 = vld [vmem:[%s2197 + $0x2c] sm:$0xf]
      %v2210 = vld [vmem:[%s2197 + $0x30] sm:$0xf]
      %v2211 = vld [vmem:[%s2197 + $0x34] sm:$0xf]
      %v2212 = vld [vmem:[%s2197 + $0x38] sm:$0xf]
      %v2213 = vld [vmem:[%s2197 + $0x3c] sm:$0xf]
      %v2215 = vunpack.c.l.b16 %v2196
      %v2216 = vpack.c.b16 %v2215, %v2215
      %vm2217 = vsmask.f32 4352
      %v2219 = vshrl.u32 %v1479, 16
      %v2221 = vrot.slane %v2219, 3
      %v2222 = vshll.u32 %v1479, 16
      %v2224 = vrot.slane %v2222, 4
      %v2225 = vor.u32 %v2221, %v2224
      %v2226 = vrot.slane %v1792, 3
      %v2227 = vrot.slane %v1795, 4
      %v2228 = vor.u32 %v2226, %v2227
      %v2229 = vsel %vm2217, %v2225, %v2228
      %v2230 = vrot.slane %v1801, 3
      %v2231 = vrot.slane %v1804, 4
      %v2232 = vor.u32 %v2230, %v2231
      %v2233 = vsel %vm2217, %v2228, %v2232
      %v2234 = vrot.slane %v1810, 3
      %v2235 = vrot.slane %v1813, 4
      %v2236 = vor.u32 %v2234, %v2235
      %v2237 = vsel %vm2217, %v2232, %v2236
      %v2238 = vrot.slane %v1819, 3
      %v2239 = vrot.slane %v1822, 4
      %v2240 = vor.u32 %v2238, %v2239
      %v2241 = vsel %vm2217, %v2236, %v2240
      %v2242 = vrot.slane %v1828, 3
      %v2243 = vrot.slane %v1831, 4
      %v2244 = vor.u32 %v2242, %v2243
      %v2245 = vsel %vm2217, %v2240, %v2244
      %v2246 = vrot.slane %v1837, 3
      %v2247 = vrot.slane %v1840, 4
      %v2248 = vor.u32 %v2246, %v2247
      %v2249 = vsel %vm2217, %v2244, %v2248
      %v2250 = vrot.slane %v1846, 3
      %v2251 = vrot.slane %v1849, 4
      %v2252 = vor.u32 %v2250, %v2251
      %v2253 = vsel %vm2217, %v2248, %v2252
      %v2254 = vrot.slane %v1855, 3
      %v2255 = vrot.slane %v1858, 4
      %v2256 = vor.u32 %v2254, %v2255
      %v2257 = vsel %vm2217, %v2252, %v2256
      %v2258 = vrot.slane %v1864, 3
      %v2259 = vrot.slane %v1867, 4
      %v2260 = vor.u32 %v2258, %v2259
      %v2261 = vsel %vm2217, %v2256, %v2260
      %v2262 = vrot.slane %v1873, 3
      %v2263 = vrot.slane %v1876, 4
      %v2264 = vor.u32 %v2262, %v2263
      %v2265 = vsel %vm2217, %v2260, %v2264
      %v2266 = vrot.slane %v1882, 3
      %v2267 = vrot.slane %v1885, 4
      %v2268 = vor.u32 %v2266, %v2267
      %v2269 = vsel %vm2217, %v2264, %v2268
      %v2270 = vrot.slane %v1891, 3
      %v2271 = vrot.slane %v1894, 4
      %v2272 = vor.u32 %v2270, %v2271
      %v2273 = vsel %vm2217, %v2268, %v2272
      %v2274 = vrot.slane %v1900, 3
      %v2275 = vrot.slane %v1903, 4
      %v2276 = vor.u32 %v2274, %v2275
      %v2277 = vsel %vm2217, %v2272, %v2276
      %v2278 = vrot.slane %v1909, 3
      %v2279 = vrot.slane %v1912, 4
      %v2280 = vor.u32 %v2278, %v2279
      %v2281 = vsel %vm2217, %v2276, %v2280
      %v2282 = vrot.slane %v1918, 3
      %v2283 = vrot.slane %v1921, 4
      %v2284 = vor.u32 %v2282, %v2283
      %v2285 = vsel %vm2217, %v2280, %v2284
      %v2286 = vrot.slane %v1927, 3
      %v2287 = vrot.slane %v1930, 4
      %v2288 = vor.u32 %v2286, %v2287
      %v2289 = vsel %vm2217, %v2284, %v2288
      %v2290 = vrot.slane %v1936, 3
      %v2291 = vrot.slane %v1939, 4
      %v2292 = vor.u32 %v2290, %v2291
      %v2293 = vsel %vm2217, %v2288, %v2292
      %v2295 = vshrl.u32 %v2216, 16
      %v2297 = vrot.slane %v2295, 3
      %v2298 = vshll.u32 %v2216, 16
      %v2300 = vrot.slane %v2298, 4
      %v2301 = vor.u32 %v2297, %v2300
      %v2302 = vsel %vm2217, %v2292, %v2301
      %v2337 = vunpack.c.l.b16 %v2198
      %v2338 = vunpack.c.l.b16 %v2199
      %v2339 = vunpack.c.l.b16 %v2200
      %v2340 = vunpack.c.l.b16 %v2201
      %v2341 = vunpack.c.l.b16 %v2202
      %v2342 = vunpack.c.l.b16 %v2203
      %v2343 = vunpack.c.l.b16 %v2204
      %v2344 = vunpack.c.l.b16 %v2205
      %v2345 = vunpack.c.l.b16 %v2206
      %v2346 = vunpack.c.l.b16 %v2207
      %v2347 = vunpack.c.l.b16 %v2208
      %v2348 = vunpack.c.l.b16 %v2209
      %v2349 = vunpack.c.l.b16 %v2210
      %v2350 = vunpack.c.l.b16 %v2211
      %v2351 = vunpack.c.l.b16 %v2212
      %v2352 = vunpack.c.l.b16 %v2213
      %v2353 = vpack.c.b16 %v2338, %v2337
      %v2354 = vpack.c.b16 %v2340, %v2339
      %v2355 = vpack.c.b16 %v2342, %v2341
      %v2356 = vpack.c.b16 %v2344, %v2343
      %v2357 = vpack.c.b16 %v2346, %v2345
      %v2358 = vpack.c.b16 %v2348, %v2347
      %v2359 = vpack.c.b16 %v2350, %v2349
      %v2360 = vpack.c.b16 %v2352, %v2351
      %2369 = vmatprep.subr.bf16.mxu0 0
      %2370 = vmatpush1.bf16.msra.mxu0 %v2353
      %2371 = vmatprep.subr.bf16.mxu0 0
      %2372 = vmatpush1.bf16.msra.mxu0 %v2354
      %2373 = vmatprep.subr.bf16.mxu0 0
      %2374 = vmatpush1.bf16.msra.mxu0 %v2355
      %2375 = vmatprep.subr.bf16.mxu0 0
      %2376 = vmatpush1.bf16.msra.mxu0 %v2356
      %2377 = vmatprep.subr.bf16.mxu0 0
      %2378 = vmatpush1.bf16.msra.mxu0 %v2357
      %2379 = vmatprep.subr.bf16.mxu0 0
      %2380 = vmatpush1.bf16.msra.mxu0 %v2358
      %2381 = vmatprep.subr.bf16.mxu0 0
      %2382 = vmatpush1.bf16.msra.mxu0 %v2359
      %2383 = vmatprep.subr.bf16.mxu0 0
      %2384 = vmatpush1.bf16.msra.mxu0 %v2360
      %2385 = vmatprep.subr.bf16.mxu0 0
      %2386 = vmatpush1.bf16.msra.mxu0 0
      %2387 = vmatprep.subr.bf16.mxu0 0
      %2388 = vmatpush1.bf16.msra.mxu0 0
      %2389 = vmatprep.subr.bf16.mxu0 0
      %2390 = vmatpush1.bf16.msra.mxu0 0
      %2391 = vmatprep.subr.bf16.mxu0 0
      %2392 = vmatpush1.bf16.msra.mxu0 0
      %2393 = vmatprep.subr.bf16.mxu0 0
      %2394 = vmatpush1.bf16.msra.mxu0 0
      %2395 = vmatprep.subr.bf16.mxu0 0
      %2396 = vmatpush1.bf16.msra.mxu0 0
      %2397 = vmatprep.subr.bf16.mxu0 0
      %2398 = vmatpush1.bf16.msra.mxu0 0
      %2399 = vmatprep.subr.bf16.mxu0 0
      %2400 = vmatpush1.bf16.msra.mxu0 0
      %2401 = vmatprep.mubr.bf16.mxu0 0
      %2402 = vmatmul.mubr.bf16.gmra.mrb[0].mxu0 %v2229
      %v2403 = vpop.f32.mrb[0].mxu0
      %v2404 = vadd.f32 0.0, %v2403
      %v2405 = vpop.f32.mrb[0].mxu0
      %v2406 = vpop.f32.mrb[0].mxu0
      %v2407 = vadd.f32 0.0, %v2406
      %v2408 = vpop.f32.mrb[0].mxu0
      %2409 = vmatprep.mubr.bf16.mxu0 0
      %2410 = vmatmul.mubr.bf16.gmra.mrb[0].mxu0 %v2233
      %v2411 = vpop.f32.mrb[0].mxu0
      %v2412 = vadd.f32 0.0, %v2411
      %v2413 = vpop.f32.mrb[0].mxu0
      %v2414 = vpop.f32.mrb[0].mxu0
      %v2415 = vadd.f32 0.0, %v2414
      %v2416 = vpop.f32.mrb[0].mxu0
      %2417 = vmatprep.mubr.bf16.mxu0 0
      %2418 = vmatmul.mubr.bf16.gmra.mrb[0].mxu0 %v2237
      %v2419 = vpop.f32.mrb[0].mxu0
      %v2420 = vadd.f32 0.0, %v2419
      %v2421 = vpop.f32.mrb[0].mxu0
      %v2422 = vpop.f32.mrb[0].mxu0
      %v2423 = vadd.f32 0.0, %v2422
      %v2424 = vpop.f32.mrb[0].mxu0
      %2425 = vmatprep.mubr.bf16.mxu0 0
      %2426 = vmatmul.mubr.bf16.gmra.mrb[0].mxu0 %v2241
      %v2427 = vpop.f32.mrb[0].mxu0
      %v2428 = vadd.f32 0.0, %v2427
      %v2429 = vpop.f32.mrb[0].mxu0
      %v2430 = vpop.f32.mrb[0].mxu0
      %v2431 = vadd.f32 0.0, %v2430
      %v2432 = vpop.f32.mrb[0].mxu0
      %2433 = vmatprep.mubr.bf16.mxu0 0
      %2434 = vmatmul.mubr.bf16.gmra.mrb[0].mxu0 %v2245
      %v2435 = vpop.f32.mrb[0].mxu0
      %v2436 = vadd.f32 0.0, %v2435
      %v2437 = vpop.f32.mrb[0].mxu0
      %v2438 = vpop.f32.mrb[0].mxu0
      %v2439 = vadd.f32 0.0, %v2438
      %v2440 = vpop.f32.mrb[0].mxu0
      %2441 = vmatprep.mubr.bf16.mxu0 0
      %2442 = vmatmul.mubr.bf16.gmra.mrb[0].mxu0 %v2249
      %v2443 = vpop.f32.mrb[0].mxu0
      %v2444 = vadd.f32 0.0, %v2443
      %v2445 = vpop.f32.mrb[0].mxu0
      %v2446 = vpop.f32.mrb[0].mxu0
      %v2447 = vadd.f32 0.0, %v2446
      %v2448 = vpop.f32.mrb[0].mxu0
      %2449 = vmatprep.mubr.bf16.mxu0 0
      %2450 = vmatmul.mubr.bf16.gmra.mrb[0].mxu0 %v2253
      %v2451 = vpop.f32.mrb[0].mxu0
      %v2452 = vadd.f32 0.0, %v2451
      %v2453 = vpop.f32.mrb[0].mxu0
      %v2454 = vpop.f32.mrb[0].mxu0
      %v2455 = vadd.f32 0.0, %v2454
      %v2456 = vpop.f32.mrb[0].mxu0
      %2457 = vmatprep.mubr.bf16.mxu0 0
      %2458 = vmatmul.mubr.bf16.gmra.mrb[0].mxu0 %v2257
      %v2459 = vpop.f32.mrb[0].mxu0
      %v2460 = vadd.f32 0.0, %v2459
      %v2461 = vpop.f32.mrb[0].mxu0
      %v2462 = vpop.f32.mrb[0].mxu0
      %v2463 = vadd.f32 0.0, %v2462
      %v2464 = vpop.f32.mrb[0].mxu0
      %2465 = vmatprep.mubr.bf16.mxu0 0
      %2466 = vmatmul.mubr.bf16.gmra.mrb[0].mxu0 %v2261
      %v2467 = vpop.f32.mrb[0].mxu0
      %v2468 = vadd.f32 0.0, %v2467
      %v2469 = vpop.f32.mrb[0].mxu0
      %v2470 = vpop.f32.mrb[0].mxu0
      %v2471 = vadd.f32 0.0, %v2470
      %v2472 = vpop.f32.mrb[0].mxu0
      %2473 = vmatprep.mubr.bf16.mxu0 0
      %2474 = vmatmul.mubr.bf16.gmra.mrb[0].mxu0 %v2265
      %v2475 = vpop.f32.mrb[0].mxu0
      %v2476 = vadd.f32 0.0, %v2475
      %v2477 = vpop.f32.mrb[0].mxu0
      %v2478 = vpop.f32.mrb[0].mxu0
      %v2479 = vadd.f32 0.0, %v2478
      %v2480 = vpop.f32.mrb[0].mxu0
      %2481 = vmatprep.mubr.bf16.mxu0 0
      %2482 = vmatmul.mubr.bf16.gmra.mrb[0].mxu0 %v2269
      %v2483 = vpop.f32.mrb[0].mxu0
      %v2484 = vadd.f32 0.0, %v2483
      %v2485 = vpop.f32.mrb[0].mxu0
      %v2486 = vpop.f32.mrb[0].mxu0
      %v2487 = vadd.f32 0.0, %v2486
      %v2488 = vpop.f32.mrb[0].mxu0
      %2489 = vmatprep.mubr.bf16.mxu0 0
      %2490 = vmatmul.mubr.bf16.gmra.mrb[0].mxu0 %v2273
      %v2491 = vpop.f32.mrb[0].mxu0
      %v2492 = vadd.f32 0.0, %v2491
      %v2493 = vpop.f32.mrb[0].mxu0
      %v2494 = vpop.f32.mrb[0].mxu0
      %v2495 = vadd.f32 0.0, %v2494
      %v2496 = vpop.f32.mrb[0].mxu0
      %2497 = vmatprep.mubr.bf16.mxu0 0
      %2498 = vmatmul.mubr.bf16.gmra.mrb[0].mxu0 %v2277
      %v2499 = vpop.f32.mrb[0].mxu0
      %v2500 = vadd.f32 0.0, %v2499
      %v2501 = vpop.f32.mrb[0].mxu0
      %v2502 = vpop.f32.mrb[0].mxu0
      %v2503 = vadd.f32 0.0, %v2502
      %v2504 = vpop.f32.mrb[0].mxu0
      %2505 = vmatprep.mubr.bf16.mxu0 0
      %2506 = vmatmul.mubr.bf16.gmra.mrb[0].mxu0 %v2281
      %v2507 = vpop.f32.mrb[0].mxu0
      %v2508 = vadd.f32 0.0, %v2507
      %v2509 = vpop.f32.mrb[0].mxu0
      %v2510 = vpop.f32.mrb[0].mxu0
      %v2511 = vadd.f32 0.0, %v2510
      %v2512 = vpop.f32.mrb[0].mxu0
      %2513 = vmatprep.mubr.bf16.mxu0 0
      %2514 = vmatmul.mubr.bf16.gmra.mrb[0].mxu0 %v2285
      %v2515 = vpop.f32.mrb[0].mxu0
      %v2516 = vadd.f32 0.0, %v2515
      %v2517 = vpop.f32.mrb[0].mxu0
      %v2518 = vpop.f32.mrb[0].mxu0
      %v2519 = vadd.f32 0.0, %v2518
      %v2520 = vpop.f32.mrb[0].mxu0
      %2521 = vmatprep.mubr.bf16.mxu0 0
      %2522 = vmatmul.mubr.bf16.gmra.mrb[0].mxu0 %v2289
      %v2523 = vpop.f32.mrb[0].mxu0
      %v2524 = vadd.f32 0.0, %v2523
      %v2525 = vpop.f32.mrb[0].mxu0
      %v2526 = vpop.f32.mrb[0].mxu0
      %v2527 = vadd.f32 0.0, %v2526
      %v2528 = vpop.f32.mrb[0].mxu0
      %2529 = vmatprep.mubr.bf16.mxu0 0
      %2530 = vmatmul.mubr.bf16.gmra.mrb[0].mxu0 %v2293
      %v2531 = vpop.f32.mrb[0].mxu0
      %v2532 = vadd.f32 0.0, %v2531
      %v2533 = vpop.f32.mrb[0].mxu0
      %v2534 = vpop.f32.mrb[0].mxu0
      %v2535 = vadd.f32 0.0, %v2534
      %v2536 = vpop.f32.mrb[0].mxu0
      %2537 = vmatprep.mubr.bf16.mxu0 0
      %2538 = vmatmul.mubr.bf16.gmra.mrb[0].mxu0 %v2302
      %v2539 = vpop.f32.mrb[0].mxu0
      %v2540 = vadd.f32 0.0, %v2539
      %v2541 = vpop.f32.mrb[0].mxu0
      %v2542 = vpop.f32.mrb[0].mxu0
      %v2543 = vadd.f32 0.0, %v2542
      %v2544 = vpop.f32.mrb[0].mxu0
      %2545 = vdwg.mxu0
      %v2546 = vadd.f32 %v2054, %v2404
      %v2547 = vadd.f32 %v2057, %v2407
      %v2548 = vadd.f32 %v2062, %v2412
      %v2549 = vadd.f32 %v2065, %v2415
      %v2550 = vadd.f32 %v2070, %v2420
      %v2551 = vadd.f32 %v2073, %v2423
      %v2552 = vadd.f32 %v2078, %v2428
      %v2553 = vadd.f32 %v2081, %v2431
      %v2554 = vadd.f32 %v2086, %v2436
      %v2555 = vadd.f32 %v2089, %v2439
      %v2556 = vadd.f32 %v2094, %v2444
      %v2557 = vadd.f32 %v2097, %v2447
      %v2558 = vadd.f32 %v2102, %v2452
      %v2559 = vadd.f32 %v2105, %v2455
      %v2560 = vadd.f32 %v2110, %v2460
      %v2561 = vadd.f32 %v2113, %v2463
      %v2562 = vadd.f32 %v2118, %v2468
      %v2563 = vadd.f32 %v2121, %v2471
      %v2564 = vadd.f32 %v2126, %v2476
      %v2565 = vadd.f32 %v2129, %v2479
      %v2566 = vadd.f32 %v2134, %v2484
      %v2567 = vadd.f32 %v2137, %v2487
      %v2568 = vadd.f32 %v2142, %v2492
      %v2569 = vadd.f32 %v2145, %v2495
      %v2570 = vadd.f32 %v2150, %v2500
      %v2571 = vadd.f32 %v2153, %v2503
      %v2572 = vadd.f32 %v2158, %v2508
      %v2573 = vadd.f32 %v2161, %v2511
      %v2574 = vadd.f32 %v2166, %v2516
      %v2575 = vadd.f32 %v2169, %v2519
      %v2576 = vadd.f32 %v2174, %v2524
      %v2577 = vadd.f32 %v2177, %v2527
      %v2578 = vadd.f32 %v2182, %v2532
      %v2579 = vadd.f32 %v2185, %v2535
      %v2580 = vadd.f32 %v2190, %v2540
      %v2581 = vadd.f32 %v2193, %v2543
      %2582 = vst [vmem:[#allocation3] sm:$0xff] %v2546
      %2583 = vst [vmem:[#allocation3 + $0x8] sm:$0xff] %v2547
      %2584 = vst [vmem:[#allocation3 + $0x10] sm:$0xff] %v2548
      %2585 = vst [vmem:[#allocation3 + $0x18] sm:$0xff] %v2549
      %2586 = vst [vmem:[#allocation3 + $0x20] sm:$0xff] %v2550
      %2587 = vst [vmem:[#allocation3 + $0x28] sm:$0xff] %v2551
      %2588 = vst [vmem:[#allocation3 + $0x30] sm:$0xff] %v2552
      %2589 = vst [vmem:[#allocation3 + $0x38] sm:$0xff] %v2553
      %2590 = vst [vmem:[#allocation3 + $0x40] sm:$0xff] %v2554
      %2591 = vst [vmem:[#allocation3 + $0x48] sm:$0xff] %v2555
      %2592 = vst [vmem:[#allocation3 + $0x50] sm:$0xff] %v2556
      %2593 = vst [vmem:[#allocation3 + $0x58] sm:$0xff] %v2557
      %2594 = vst [vmem:[#allocation3 + $0x60] sm:$0xff] %v2558
      %2595 = vst [vmem:[#allocation3 + $0x68] sm:$0xff] %v2559
      %2596 = vst [vmem:[#allocation3 + $0x70] sm:$0xff] %v2560
      %2597 = vst [vmem:[#allocation3 + $0x78] sm:$0xff] %v2561
      %2598 = vst [vmem:[#allocation3 + $0x80] sm:$0xff] %v2562
      %2599 = vst [vmem:[#allocation3 + $0x88] sm:$0xff] %v2563
      %2600 = vst [vmem:[#allocation3 + $0x90] sm:$0xff] %v2564
      %2601 = vst [vmem:[#allocation3 + $0x98] sm:$0xff] %v2565
      %2602 = vst [vmem:[#allocation3 + $0xa0] sm:$0xff] %v2566
      %2603 = vst [vmem:[#allocation3 + $0xa8] sm:$0xff] %v2567
      %2604 = vst [vmem:[#allocation3 + $0xb0] sm:$0xff] %v2568
      %2605 = vst [vmem:[#allocation3 + $0xb8] sm:$0xff] %v2569
      %2606 = vst [vmem:[#allocation3 + $0xc0] sm:$0xff] %v2570
      %2607 = vst [vmem:[#allocation3 + $0xc8] sm:$0xff] %v2571
      %2608 = vst [vmem:[#allocation3 + $0xd0] sm:$0xff] %v2572
      %2609 = vst [vmem:[#allocation3 + $0xd8] sm:$0xff] %v2573
      %2610 = vst [vmem:[#allocation3 + $0xe0] sm:$0xff] %v2574
      %2611 = vst [vmem:[#allocation3 + $0xe8] sm:$0xff] %v2575
      %2612 = vst [vmem:[#allocation3 + $0xf0] sm:$0xff] %v2576
      %2613 = vst [vmem:[#allocation3 + $0xf8] sm:$0xff] %v2577
      %2614 = vst [vmem:[#allocation3 + $0x100] sm:$0xff] %v2578
      %2615 = vst [vmem:[#allocation3 + $0x108] sm:$0xff] %v2579
      %2616 = vst [vmem:[#allocation3 + $0x110] sm:$0xff] %v2580
      %2617 = vst [vmem:[#allocation3 + $0x118] sm:$0xff] %v2581
      %v2618 = vld [vmem:[#allocation2 + $0xc] sm:$0x8]
      %v2619 = vld [vmem:[#allocation2 + $0x10] sm:$0xf]
      %v2620 = vld [vmem:[#allocation2 + $0x14] sm:$0xf]
      %v2621 = vld [vmem:[#allocation2 + $0x18] sm:$0xf]
      %v2622 = vld [vmem:[#allocation2 + $0x1c] sm:$0xf]
      %v2623 = vld [vmem:[#allocation2 + $0x20] sm:$0xf]
      %v2624 = vld [vmem:[#allocation2 + $0x24] sm:$0xf]
      %v2625 = vld [vmem:[#allocation2 + $0x28] sm:$0xf]
      %v2626 = vld [vmem:[#allocation2 + $0x2c] sm:$0xf]
      %v2627 = vld [vmem:[#allocation2 + $0x30] sm:$0xf]
      %v2628 = vld [vmem:[#allocation2 + $0x34] sm:$0xf]
      %v2629 = vld [vmem:[#allocation2 + $0x38] sm:$0xf]
      %v2630 = vld [vmem:[#allocation2 + $0x3c] sm:$0xf]
      %v2631 = vld [vmem:[#allocation2 + $0x40] sm:$0xf]
      %v2632 = vld [vmem:[#allocation2 + $0x44] sm:$0xf]
      %v2633 = vld [vmem:[#allocation2 + $0x48] sm:$0xf]
      %v2634 = vld [vmem:[#allocation2 + $0x4c] sm:$0xf]
      %v2635 = vld [vmem:[#allocation2 + $0x50] sm:$0xf]
      %v2636 = vld [vmem:[#allocation2 + $0x54] sm:$0xf]
      %v2637 = vld [vmem:[#allocation2 + $0x58] sm:$0xf]
      %v2638 = vld [vmem:[#allocation2 + $0x5c] sm:$0xf]
      %v2639 = vld [vmem:[#allocation2 + $0x60] sm:$0xf]
      %v2640 = vld [vmem:[#allocation2 + $0x64] sm:$0xf]
      %v2641 = vld [vmem:[#allocation2 + $0x68] sm:$0xf]
      %v2642 = vld [vmem:[#allocation2 + $0x6c] sm:$0xf]
      %v2643 = vld [vmem:[#allocation2 + $0x70] sm:$0xf]
      %v2644 = vld [vmem:[#allocation2 + $0x74] sm:$0xf]
      %v2645 = vld [vmem:[#allocation2 + $0x78] sm:$0xf]
      %v2646 = vld [vmem:[#allocation2 + $0x7c] sm:$0xf]
      %v2647 = vld [vmem:[#allocation2 + $0x80] sm:$0xf]
      %v2648 = vld [vmem:[#allocation2 + $0x84] sm:$0xf]
      %v2649 = vld [vmem:[#allocation2 + $0x88] sm:$0xf]
      %v2650 = vld [vmem:[#allocation2 + $0x8c] sm:$0xf]
      %v2651 = vld [vmem:[#allocation2 + $0x90] sm:$0xf]
      %v2652 = vld [vmem:[#allocation2 + $0x94] sm:$0xf]
      %v2653 = vld [vmem:[#allocation2 + $0x98] sm:$0xf]
      %v2654 = vld [vmem:[#allocation2 + $0x9c] sm:$0xf]
      %s2655 = scalar_lea.vmem %s3, 192
      %v2656 = vld [vmem:[%s2655] sm:$0xf]
      %v2657 = vld [vmem:[%s2655 + $0x4] sm:$0xf]
      %v2658 = vld [vmem:[%s2655 + $0x8] sm:$0xf]
      %v2659 = vld [vmem:[%s2655 + $0xc] sm:$0xf]
      %v2660 = vld [vmem:[%s2655 + $0x10] sm:$0xf]
      %v2661 = vld [vmem:[%s2655 + $0x14] sm:$0xf]
      %v2662 = vld [vmem:[%s2655 + $0x18] sm:$0xf]
      %v2663 = vld [vmem:[%s2655 + $0x1c] sm:$0xf]
      %v2664 = vld [vmem:[%s2655 + $0x20] sm:$0xf]
      %v2665 = vld [vmem:[%s2655 + $0x24] sm:$0xf]
      %v2666 = vld [vmem:[%s2655 + $0x28] sm:$0xf]
      %v2667 = vld [vmem:[%s2655 + $0x2c] sm:$0xf]
      %v2668 = vld [vmem:[%s2655 + $0x30] sm:$0xf]
      %v2669 = vld [vmem:[%s2655 + $0x34] sm:$0xf]
      %v2670 = vld [vmem:[%s2655 + $0x38] sm:$0xf]
      %v2671 = vld [vmem:[%s2655 + $0x3c] sm:$0xf]
      %s2672 = scalar_lea.vmem %s3, 256
      %v2673 = vld [vmem:[%s2672] sm:$0xf]
      %v2674 = vld [vmem:[%s2672 + $0x4] sm:$0xf]
      %v2675 = vld [vmem:[%s2672 + $0x8] sm:$0xf]
      %v2676 = vld [vmem:[%s2672 + $0xc] sm:$0xf]
      %v2677 = vld [vmem:[%s2672 + $0x10] sm:$0xf]
      %v2678 = vld [vmem:[%s2672 + $0x14] sm:$0xf]
      %v2679 = vld [vmem:[%s2672 + $0x18] sm:$0xf]
      %v2680 = vld [vmem:[%s2672 + $0x1c] sm:$0xf]
      %v2681 = vld [vmem:[%s2672 + $0x20] sm:$0xf]
      %v2682 = vld [vmem:[%s2672 + $0x24] sm:$0xf]
      %v2683 = vld [vmem:[%s2672 + $0x28] sm:$0xf]
      %v2684 = vld [vmem:[%s2672 + $0x2c] sm:$0xf]
      %v2685 = vld [vmem:[%s2672 + $0x30] sm:$0xf]
      %v2686 = vld [vmem:[%s2672 + $0x34] sm:$0xf]
      %v2687 = vld [vmem:[%s2672 + $0x38] sm:$0xf]
      %v2688 = vld [vmem:[%s2672 + $0x3c] sm:$0xf]
      %v2725 = vunpack.c.l.b16 %v2619
      %v2726 = vunpack.c.l.b16 %v2620
      %v2727 = vunpack.c.l.b16 %v2621
      %v2728 = vunpack.c.l.b16 %v2622
      %v2729 = vunpack.c.l.b16 %v2623
      %v2730 = vunpack.c.l.b16 %v2624
      %v2731 = vunpack.c.l.b16 %v2625
      %v2732 = vunpack.c.l.b16 %v2626
      %v2733 = vunpack.c.l.b16 %v2627
      %v2734 = vunpack.c.l.b16 %v2628
      %v2735 = vunpack.c.l.b16 %v2629
      %v2736 = vunpack.c.l.b16 %v2630
      %v2737 = vunpack.c.l.b16 %v2631
      %v2738 = vunpack.c.l.b16 %v2632
      %v2739 = vunpack.c.l.b16 %v2633
      %v2740 = vunpack.c.l.b16 %v2634
      %v2741 = vunpack.c.l.b16 %v2635
      %v2742 = vunpack.c.l.b16 %v2636
      %v2743 = vunpack.c.l.b16 %v2637
      %v2744 = vunpack.c.l.b16 %v2638
      %v2745 = vunpack.c.l.b16 %v2639
      %v2746 = vunpack.c.l.b16 %v2640
      %v2747 = vunpack.c.l.b16 %v2641
      %v2748 = vunpack.c.l.b16 %v2642
      %v2749 = vunpack.c.l.b16 %v2643
      %v2750 = vunpack.c.l.b16 %v2644
      %v2751 = vunpack.c.l.b16 %v2645
      %v2752 = vunpack.c.l.b16 %v2646
      %v2753 = vunpack.c.l.b16 %v2647
      %v2754 = vunpack.c.l.b16 %v2648
      %v2755 = vunpack.c.l.b16 %v2649
      %v2756 = vunpack.c.l.b16 %v2650
      %v2757 = vunpack.c.l.b16 %v2651
      %v2758 = vunpack.c.l.b16 %v2652
      %v2759 = vunpack.c.l.b16 %v2653
      %v2760 = vunpack.c.l.b16 %v2654
      %v2761 = vpack.c.b16 %v2726, %v2725
      %v2762 = vpack.c.b16 %v2728, %v2727
      %v2763 = vpack.c.b16 %v2730, %v2729
      %v2764 = vpack.c.b16 %v2732, %v2731
      %v2765 = vpack.c.b16 %v2734, %v2733
      %v2766 = vpack.c.b16 %v2736, %v2735
      %v2767 = vpack.c.b16 %v2738, %v2737
      %v2768 = vpack.c.b16 %v2740, %v2739
      %v2769 = vpack.c.b16 %v2742, %v2741
      %v2770 = vpack.c.b16 %v2744, %v2743
      %v2771 = vpack.c.b16 %v2746, %v2745
      %v2772 = vpack.c.b16 %v2748, %v2747
      %v2773 = vpack.c.b16 %v2750, %v2749
      %v2774 = vpack.c.b16 %v2752, %v2751
      %v2775 = vpack.c.b16 %v2754, %v2753
      %v2776 = vpack.c.b16 %v2756, %v2755
      %v2777 = vpack.c.b16 %v2758, %v2757
      %v2778 = vpack.c.b16 %v2760, %v2759
      %v2813 = vunpack.c.l.b16 %v2673
      %v2814 = vunpack.c.l.b16 %v2674
      %v2815 = vunpack.c.l.b16 %v2675
      %v2816 = vunpack.c.l.b16 %v2676
      %v2817 = vunpack.c.l.b16 %v2677
      %v2818 = vunpack.c.l.b16 %v2678
      %v2819 = vunpack.c.l.b16 %v2679
      %v2820 = vunpack.c.l.b16 %v2680
      %v2821 = vunpack.c.l.b16 %v2681
      %v2822 = vunpack.c.l.b16 %v2682
      %v2823 = vunpack.c.l.b16 %v2683
      %v2824 = vunpack.c.l.b16 %v2684
      %v2825 = vunpack.c.l.b16 %v2685
      %v2826 = vunpack.c.l.b16 %v2686
      %v2827 = vunpack.c.l.b16 %v2687
      %v2828 = vunpack.c.l.b16 %v2688
      %v2829 = vpack.c.b16 %v2814, %v2813
      %v2830 = vpack.c.b16 %v2816, %v2815
      %v2831 = vpack.c.b16 %v2818, %v2817
      %v2832 = vpack.c.b16 %v2820, %v2819
      %v2833 = vpack.c.b16 %v2822, %v2821
      %v2834 = vpack.c.b16 %v2824, %v2823
      %v2835 = vpack.c.b16 %v2826, %v2825
      %v2836 = vpack.c.b16 %v2828, %v2827
      %2845 = vmatprep.subr.bf16.mxu0 0
      %2846 = vmatpush1.bf16.msra.mxu0 %v2829
      %2847 = vmatprep.subr.bf16.mxu0 0
      %2848 = vmatpush1.bf16.msra.mxu0 %v2830
      %2849 = vmatprep.subr.bf16.mxu0 0
      %2850 = vmatpush1.bf16.msra.mxu0 %v2831
      %2851 = vmatprep.subr.bf16.mxu0 0
      %2852 = vmatpush1.bf16.msra.mxu0 %v2832
      %2853 = vmatprep.subr.bf16.mxu0 0
      %2854 = vmatpush1.bf16.msra.mxu0 %v2833
      %2855 = vmatprep.subr.bf16.mxu0 0
      %2856 = vmatpush1.bf16.msra.mxu0 %v2834
      %2857 = vmatprep.subr.bf16.mxu0 0
      %2858 = vmatpush1.bf16.msra.mxu0 %v2835
      %2859 = vmatprep.subr.bf16.mxu0 0
      %2860 = vmatpush1.bf16.msra.mxu0 %v2836
      %2861 = vmatprep.subr.bf16.mxu0 0
      %2862 = vmatpush1.bf16.msra.mxu0 0
      %2863 = vmatprep.subr.bf16.mxu0 0
      %2864 = vmatpush1.bf16.msra.mxu0 0
      %2865 = vmatprep.subr.bf16.mxu0 0
      %2866 = vmatpush1.bf16.msra.mxu0 0
      %2867 = vmatprep.subr.bf16.mxu0 0
      %2868 = vmatpush1.bf16.msra.mxu0 0
      %2869 = vmatprep.subr.bf16.mxu0 0
      %2870 = vmatpush1.bf16.msra.mxu0 0
      %2871 = vmatprep.subr.bf16.mxu0 0
      %2872 = vmatpush1.bf16.msra.mxu0 0
      %2873 = vmatprep.subr.bf16.mxu0 0
      %2874 = vmatpush1.bf16.msra.mxu0 0
      %2875 = vmatprep.subr.bf16.mxu0 0
      %2876 = vmatpush1.bf16.msra.mxu0 0
      %2877 = vmatprep.mubr.bf16.mxu0 0
      %2878 = vmatmul.mubr.bf16.gmra.mrb[0].mxu0 %v2761
      %v2879 = vpop.f32.mrb[0].mxu0
      %v2880 = vadd.f32 0.0, %v2879
      %v2881 = vpop.f32.mrb[0].mxu0
      %v2882 = vpop.f32.mrb[0].mxu0
      %v2883 = vadd.f32 0.0, %v2882
      %v2884 = vpop.f32.mrb[0].mxu0
      %2885 = vmatprep.mubr.bf16.mxu0 0
      %2886 = vmatmul.mubr.bf16.gmra.mrb[0].mxu0 %v2762
      %v2887 = vpop.f32.mrb[0].mxu0
      %v2888 = vadd.f32 0.0, %v2887
      %v2889 = vpop.f32.mrb[0].mxu0
      %v2890 = vpop.f32.mrb[0].mxu0
      %v2891 = vadd.f32 0.0, %v2890
      %v2892 = vpop.f32.mrb[0].mxu0
      %2893 = vmatprep.mubr.bf16.mxu0 0
      %2894 = vmatmul.mubr.bf16.gmra.mrb[0].mxu0 %v2763
      %v2895 = vpop.f32.mrb[0].mxu0
      %v2896 = vadd.f32 0.0, %v2895
      %v2897 = vpop.f32.mrb[0].mxu0
      %v2898 = vpop.f32.mrb[0].mxu0
      %v2899 = vadd.f32 0.0, %v2898
      %v2900 = vpop.f32.mrb[0].mxu0
      %2901 = vmatprep.mubr.bf16.mxu0 0
      %2902 = vmatmul.mubr.bf16.gmra.mrb[0].mxu0 %v2764
      %v2903 = vpop.f32.mrb[0].mxu0
      %v2904 = vadd.f32 0.0, %v2903
      %v2905 = vpop.f32.mrb[0].mxu0
      %v2906 = vpop.f32.mrb[0].mxu0
      %v2907 = vadd.f32 0.0, %v2906
      %v2908 = vpop.f32.mrb[0].mxu0
      %2909 = vmatprep.mubr.bf16.mxu0 0
      %2910 = vmatmul.mubr.bf16.gmra.mrb[0].mxu0 %v2765
      %v2911 = vpop.f32.mrb[0].mxu0
      %v2912 = vadd.f32 0.0, %v2911
      %v2913 = vpop.f32.mrb[0].mxu0
      %v2914 = vpop.f32.mrb[0].mxu0
      %v2915 = vadd.f32 0.0, %v2914
      %v2916 = vpop.f32.mrb[0].mxu0
      %2917 = vmatprep.mubr.bf16.mxu0 0
      %2918 = vmatmul.mubr.bf16.gmra.mrb[0].mxu0 %v2766
      %v2919 = vpop.f32.mrb[0].mxu0
      %v2920 = vadd.f32 0.0, %v2919
      %v2921 = vpop.f32.mrb[0].mxu0
      %v2922 = vpop.f32.mrb[0].mxu0
      %v2923 = vadd.f32 0.0, %v2922
      %v2924 = vpop.f32.mrb[0].mxu0
      %2925 = vmatprep.mubr.bf16.mxu0 0
      %2926 = vmatmul.mubr.bf16.gmra.mrb[0].mxu0 %v2767
      %v2927 = vpop.f32.mrb[0].mxu0
      %v2928 = vadd.f32 0.0, %v2927
      %v2929 = vpop.f32.mrb[0].mxu0
      %v2930 = vpop.f32.mrb[0].mxu0
      %v2931 = vadd.f32 0.0, %v2930
      %v2932 = vpop.f32.mrb[0].mxu0
      %2933 = vmatprep.mubr.bf16.mxu0 0
      %2934 = vmatmul.mubr.bf16.gmra.mrb[0].mxu0 %v2768
      %v2935 = vpop.f32.mrb[0].mxu0
      %v2936 = vadd.f32 0.0, %v2935
      %v2937 = vpop.f32.mrb[0].mxu0
      %v2938 = vpop.f32.mrb[0].mxu0
      %v2939 = vadd.f32 0.0, %v2938
      %v2940 = vpop.f32.mrb[0].mxu0
      %2941 = vmatprep.mubr.bf16.mxu0 0
      %2942 = vmatmul.mubr.bf16.gmra.mrb[0].mxu0 %v2769
      %v2943 = vpop.f32.mrb[0].mxu0
      %v2944 = vadd.f32 0.0, %v2943
      %v2945 = vpop.f32.mrb[0].mxu0
      %v2946 = vpop.f32.mrb[0].mxu0
      %v2947 = vadd.f32 0.0, %v2946
      %v2948 = vpop.f32.mrb[0].mxu0
      %2949 = vmatprep.mubr.bf16.mxu0 0
      %2950 = vmatmul.mubr.bf16.gmra.mrb[0].mxu0 %v2770
      %v2951 = vpop.f32.mrb[0].mxu0
      %v2952 = vadd.f32 0.0, %v2951
      %v2953 = vpop.f32.mrb[0].mxu0
      %v2954 = vpop.f32.mrb[0].mxu0
      %v2955 = vadd.f32 0.0, %v2954
      %v2956 = vpop.f32.mrb[0].mxu0
      %2957 = vmatprep.mubr.bf16.mxu0 0
      %2958 = vmatmul.mubr.bf16.gmra.mrb[0].mxu0 %v2771
      %v2959 = vpop.f32.mrb[0].mxu0
      %v2960 = vadd.f32 0.0, %v2959
      %v2961 = vpop.f32.mrb[0].mxu0
      %v2962 = vpop.f32.mrb[0].mxu0
      %v2963 = vadd.f32 0.0, %v2962
      %v2964 = vpop.f32.mrb[0].mxu0
      %2965 = vmatprep.mubr.bf16.mxu0 0
      %2966 = vmatmul.mubr.bf16.gmra.mrb[0].mxu0 %v2772
      %v2967 = vpop.f32.mrb[0].mxu0
      %v2968 = vadd.f32 0.0, %v2967
      %v2969 = vpop.f32.mrb[0].mxu0
      %v2970 = vpop.f32.mrb[0].mxu0
      %v2971 = vadd.f32 0.0, %v2970
      %v2972 = vpop.f32.mrb[0].mxu0
      %2973 = vmatprep.mubr.bf16.mxu0 0
      %2974 = vmatmul.mubr.bf16.gmra.mrb[0].mxu0 %v2773
      %v2975 = vpop.f32.mrb[0].mxu0
      %v2976 = vadd.f32 0.0, %v2975
      %v2977 = vpop.f32.mrb[0].mxu0
      %v2978 = vpop.f32.mrb[0].mxu0
      %v2979 = vadd.f32 0.0, %v2978
      %v2980 = vpop.f32.mrb[0].mxu0
      %2981 = vmatprep.mubr.bf16.mxu0 0
      %2982 = vmatmul.mubr.bf16.gmra.mrb[0].mxu0 %v2774
      %v2983 = vpop.f32.mrb[0].mxu0
      %v2984 = vadd.f32 0.0, %v2983
      %v2985 = vpop.f32.mrb[0].mxu0
      %v2986 = vpop.f32.mrb[0].mxu0
      %v2987 = vadd.f32 0.0, %v2986
      %v2988 = vpop.f32.mrb[0].mxu0
      %2989 = vmatprep.mubr.bf16.mxu0 0
      %2990 = vmatmul.mubr.bf16.gmra.mrb[0].mxu0 %v2775
      %v2991 = vpop.f32.mrb[0].mxu0
      %v2992 = vadd.f32 0.0, %v2991
      %v2993 = vpop.f32.mrb[0].mxu0
      %v2994 = vpop.f32.mrb[0].mxu0
      %v2995 = vadd.f32 0.0, %v2994
      %v2996 = vpop.f32.mrb[0].mxu0
      %2997 = vmatprep.mubr.bf16.mxu0 0
      %2998 = vmatmul.mubr.bf16.gmra.mrb[0].mxu0 %v2776
      %v2999 = vpop.f32.mrb[0].mxu0
      %v3000 = vadd.f32 0.0, %v2999
      %v3001 = vpop.f32.mrb[0].mxu0
      %v3002 = vpop.f32.mrb[0].mxu0
      %v3003 = vadd.f32 0.0, %v3002
      %v3004 = vpop.f32.mrb[0].mxu0
      %3005 = vmatprep.mubr.bf16.mxu0 0
      %3006 = vmatmul.mubr.bf16.gmra.mrb[0].mxu0 %v2777
      %v3007 = vpop.f32.mrb[0].mxu0
      %v3008 = vadd.f32 0.0, %v3007
      %v3009 = vpop.f32.mrb[0].mxu0
      %v3010 = vpop.f32.mrb[0].mxu0
      %v3011 = vadd.f32 0.0, %v3010
      %v3012 = vpop.f32.mrb[0].mxu0
      %3013 = vmatprep.mubr.bf16.mxu0 0
      %3014 = vmatmul.mubr.bf16.gmra.mrb[0].mxu0 %v2778
      %v3015 = vpop.f32.mrb[0].mxu0
      %v3016 = vadd.f32 0.0, %v3015
      %v3017 = vpop.f32.mrb[0].mxu0
      %v3018 = vpop.f32.mrb[0].mxu0
      %v3019 = vadd.f32 0.0, %v3018
      %v3020 = vpop.f32.mrb[0].mxu0
      %3021 = vdwg.mxu0
      %v3023 = vunpack.c.l.b16 %v2618
      %v3024 = vpack.c.b16 %v2725, %v3023
      %v3025 = vpack.c.b16 %v2727, %v2726
      %v3026 = vpack.c.b16 %v2729, %v2728
      %v3027 = vpack.c.b16 %v2731, %v2730
      %v3028 = vpack.c.b16 %v2733, %v2732
      %v3029 = vpack.c.b16 %v2735, %v2734
      %v3030 = vpack.c.b16 %v2737, %v2736
      %v3031 = vpack.c.b16 %v2739, %v2738
      %v3032 = vpack.c.b16 %v2741, %v2740
      %v3033 = vpack.c.b16 %v2743, %v2742
      %v3034 = vpack.c.b16 %v2745, %v2744
      %v3035 = vpack.c.b16 %v2747, %v2746
      %v3036 = vpack.c.b16 %v2749, %v2748
      %v3037 = vpack.c.b16 %v2751, %v2750
      %v3038 = vpack.c.b16 %v2753, %v2752
      %v3039 = vpack.c.b16 %v2755, %v2754
      %v3040 = vpack.c.b16 %v2757, %v2756
      %v3041 = vpack.c.b16 %v2759, %v2758
      %v3042 = vpack.c.b16 %v2760, %v2760
      %v3044 = vshrl.u32 %v3024, 16
      %v3046 = vrot.slane %v3044, 3
      %v3047 = vshll.u32 %v3024, 16
      %v3049 = vrot.slane %v3047, 4
      %v3050 = vor.u32 %v3046, %v3049
      %v3052 = vshrl.u32 %v3025, 16
      %v3054 = vrot.slane %v3052, 3
      %v3055 = vshll.u32 %v3025, 16
      %v3057 = vrot.slane %v3055, 4
      %v3058 = vor.u32 %v3054, %v3057
      %v3059 = vsel %vm2217, %v3050, %v3058
      %v3061 = vshrl.u32 %v3026, 16
      %v3063 = vrot.slane %v3061, 3
      %v3064 = vshll.u32 %v3026, 16
      %v3066 = vrot.slane %v3064, 4
      %v3067 = vor.u32 %v3063, %v3066
      %v3068 = vsel %vm2217, %v3058, %v3067
      %v3070 = vshrl.u32 %v3027, 16
      %v3072 = vrot.slane %v3070, 3
      %v3073 = vshll.u32 %v3027, 16
      %v3075 = vrot.slane %v3073, 4
      %v3076 = vor.u32 %v3072, %v3075
      %v3077 = vsel %vm2217, %v3067, %v3076
      %v3079 = vshrl.u32 %v3028, 16
      %v3081 = vrot.slane %v3079, 3
      %v3082 = vshll.u32 %v3028, 16
      %v3084 = vrot.slane %v3082, 4
      %v3085 = vor.u32 %v3081, %v3084
      %v3086 = vsel %vm2217, %v3076, %v3085
      %v3088 = vshrl.u32 %v3029, 16
      %v3090 = vrot.slane %v3088, 3
      %v3091 = vshll.u32 %v3029, 16
      %v3093 = vrot.slane %v3091, 4
      %v3094 = vor.u32 %v3090, %v3093
      %v3095 = vsel %vm2217, %v3085, %v3094
      %v3097 = vshrl.u32 %v3030, 16
      %v3099 = vrot.slane %v3097, 3
      %v3100 = vshll.u32 %v3030, 16
      %v3102 = vrot.slane %v3100, 4
      %v3103 = vor.u32 %v3099, %v3102
      %v3104 = vsel %vm2217, %v3094, %v3103
      %v3106 = vshrl.u32 %v3031, 16
      %v3108 = vrot.slane %v3106, 3
      %v3109 = vshll.u32 %v3031, 16
      %v3111 = vrot.slane %v3109, 4
      %v3112 = vor.u32 %v3108, %v3111
      %v3113 = vsel %vm2217, %v3103, %v3112
      %v3115 = vshrl.u32 %v3032, 16
      %v3117 = vrot.slane %v3115, 3
      %v3118 = vshll.u32 %v3032, 16
      %v3120 = vrot.slane %v3118, 4
      %v3121 = vor.u32 %v3117, %v3120
      %v3122 = vsel %vm2217, %v3112, %v3121
      %v3124 = vshrl.u32 %v3033, 16
      %v3126 = vrot.slane %v3124, 3
      %v3127 = vshll.u32 %v3033, 16
      %v3129 = vrot.slane %v3127, 4
      %v3130 = vor.u32 %v3126, %v3129
      %v3131 = vsel %vm2217, %v3121, %v3130
      %v3133 = vshrl.u32 %v3034, 16
      %v3135 = vrot.slane %v3133, 3
      %v3136 = vshll.u32 %v3034, 16
      %v3138 = vrot.slane %v3136, 4
      %v3139 = vor.u32 %v3135, %v3138
      %v3140 = vsel %vm2217, %v3130, %v3139
      %v3142 = vshrl.u32 %v3035, 16
      %v3144 = vrot.slane %v3142, 3
      %v3145 = vshll.u32 %v3035, 16
      %v3147 = vrot.slane %v3145, 4
      %v3148 = vor.u32 %v3144, %v3147
      %v3149 = vsel %vm2217, %v3139, %v3148
      %v3151 = vshrl.u32 %v3036, 16
      %v3153 = vrot.slane %v3151, 3
      %v3154 = vshll.u32 %v3036, 16
      %v3156 = vrot.slane %v3154, 4
      %v3157 = vor.u32 %v3153, %v3156
      %v3158 = vsel %vm2217, %v3148, %v3157
      %v3160 = vshrl.u32 %v3037, 16
      %v3162 = vrot.slane %v3160, 3
      %v3163 = vshll.u32 %v3037, 16
      %v3165 = vrot.slane %v3163, 4
      %v3166 = vor.u32 %v3162, %v3165
      %v3167 = vsel %vm2217, %v3157, %v3166
      %v3169 = vshrl.u32 %v3038, 16
      %v3171 = vrot.slane %v3169, 3
      %v3172 = vshll.u32 %v3038, 16
      %v3174 = vrot.slane %v3172, 4
      %v3175 = vor.u32 %v3171, %v3174
      %v3176 = vsel %vm2217, %v3166, %v3175
      %v3178 = vshrl.u32 %v3039, 16
      %v3180 = vrot.slane %v3178, 3
      %v3181 = vshll.u32 %v3039, 16
      %v3183 = vrot.slane %v3181, 4
      %v3184 = vor.u32 %v3180, %v3183
      %v3185 = vsel %vm2217, %v3175, %v3184
      %v3187 = vshrl.u32 %v3040, 16
      %v3189 = vrot.slane %v3187, 3
      %v3190 = vshll.u32 %v3040, 16
      %v3192 = vrot.slane %v3190, 4
      %v3193 = vor.u32 %v3189, %v3192
      %v3194 = vsel %vm2217, %v3184, %v3193
      %v3196 = vshrl.u32 %v3041, 16
      %v3198 = vrot.slane %v3196, 3
      %v3199 = vshll.u32 %v3041, 16
      %v3201 = vrot.slane %v3199, 4
      %v3202 = vor.u32 %v3198, %v3201
      %v3203 = vsel %vm2217, %v3193, %v3202
      %v3205 = vshrl.u32 %v3042, 16
      %v3207 = vrot.slane %v3205, 3
      %v3208 = vshll.u32 %v3042, 16
      %v3210 = vrot.slane %v3208, 4
      %v3211 = vor.u32 %v3207, %v3210
      %v3212 = vsel %vm2217, %v3202, %v3211
      %v3247 = vunpack.c.l.b16 %v2656
      %v3248 = vunpack.c.l.b16 %v2657
      %v3249 = vunpack.c.l.b16 %v2658
      %v3250 = vunpack.c.l.b16 %v2659
      %v3251 = vunpack.c.l.b16 %v2660
      %v3252 = vunpack.c.l.b16 %v2661
      %v3253 = vunpack.c.l.b16 %v2662
      %v3254 = vunpack.c.l.b16 %v2663
      %v3255 = vunpack.c.l.b16 %v2664
      %v3256 = vunpack.c.l.b16 %v2665
      %v3257 = vunpack.c.l.b16 %v2666
      %v3258 = vunpack.c.l.b16 %v2667
      %v3259 = vunpack.c.l.b16 %v2668
      %v3260 = vunpack.c.l.b16 %v2669
      %v3261 = vunpack.c.l.b16 %v2670
      %v3262 = vunpack.c.l.b16 %v2671
      %v3263 = vpack.c.b16 %v3248, %v3247
      %v3264 = vpack.c.b16 %v3250, %v3249
      %v3265 = vpack.c.b16 %v3252, %v3251
      %v3266 = vpack.c.b16 %v3254, %v3253
      %v3267 = vpack.c.b16 %v3256, %v3255
      %v3268 = vpack.c.b16 %v3258, %v3257
      %v3269 = vpack.c.b16 %v3260, %v3259
      %v3270 = vpack.c.b16 %v3262, %v3261
      %3279 = vmatprep.subr.bf16.mxu0 0
      %3280 = vmatpush1.bf16.msra.mxu0 %v3263
      %3281 = vmatprep.subr.bf16.mxu0 0
      %3282 = vmatpush1.bf16.msra.mxu0 %v3264
      %3283 = vmatprep.subr.bf16.mxu0 0
      %3284 = vmatpush1.bf16.msra.mxu0 %v3265
      %3285 = vmatprep.subr.bf16.mxu0 0
      %3286 = vmatpush1.bf16.msra.mxu0 %v3266
      %3287 = vmatprep.subr.bf16.mxu0 0
      %3288 = vmatpush1.bf16.msra.mxu0 %v3267
      %3289 = vmatprep.subr.bf16.mxu0 0
      %3290 = vmatpush1.bf16.msra.mxu0 %v3268
      %3291 = vmatprep.subr.bf16.mxu0 0
      %3292 = vmatpush1.bf16.msra.mxu0 %v3269
      %3293 = vmatprep.subr.bf16.mxu0 0
      %3294 = vmatpush1.bf16.msra.mxu0 %v3270
      %3295 = vmatprep.subr.bf16.mxu0 0
      %3296 = vmatpush1.bf16.msra.mxu0 0
      %3297 = vmatprep.subr.bf16.mxu0 0
      %3298 = vmatpush1.bf16.msra.mxu0 0
      %3299 = vmatprep.subr.bf16.mxu0 0
      %3300 = vmatpush1.bf16.msra.mxu0 0
      %3301 = vmatprep.subr.bf16.mxu0 0
      %3302 = vmatpush1.bf16.msra.mxu0 0
      %3303 = vmatprep.subr.bf16.mxu0 0
      %3304 = vmatpush1.bf16.msra.mxu0 0
      %3305 = vmatprep.subr.bf16.mxu0 0
      %3306 = vmatpush1.bf16.msra.mxu0 0
      %3307 = vmatprep.subr.bf16.mxu0 0
      %3308 = vmatpush1.bf16.msra.mxu0 0
      %3309 = vmatprep.subr.bf16.mxu0 0
      %3310 = vmatpush1.bf16.msra.mxu0 0
      %3311 = vmatprep.mubr.bf16.mxu0 0
      %3312 = vmatmul.mubr.bf16.gmra.mrb[0].mxu0 %v3059
      %v3313 = vpop.f32.mrb[0].mxu0
      %v3314 = vadd.f32 %v2880, %v3313
      %v3315 = vpop.f32.mrb[0].mxu0
      %v3316 = vpop.f32.mrb[0].mxu0
      %v3317 = vadd.f32 %v2883, %v3316
      %v3318 = vpop.f32.mrb[0].mxu0
      %3319 = vmatprep.mubr.bf16.mxu0 0
      %3320 = vmatmul.mubr.bf16.gmra.mrb[0].mxu0 %v3068
      %v3321 = vpop.f32.mrb[0].mxu0
      %v3322 = vadd.f32 %v2888, %v3321
      %v3323 = vpop.f32.mrb[0].mxu0
      %v3324 = vpop.f32.mrb[0].mxu0
      %v3325 = vadd.f32 %v2891, %v3324
      %v3326 = vpop.f32.mrb[0].mxu0
      %3327 = vmatprep.mubr.bf16.mxu0 0
      %3328 = vmatmul.mubr.bf16.gmra.mrb[0].mxu0 %v3077
      %v3329 = vpop.f32.mrb[0].mxu0
      %v3330 = vadd.f32 %v2896, %v3329
      %v3331 = vpop.f32.mrb[0].mxu0
      %v3332 = vpop.f32.mrb[0].mxu0
      %v3333 = vadd.f32 %v2899, %v3332
      %v3334 = vpop.f32.mrb[0].mxu0
      %3335 = vmatprep.mubr.bf16.mxu0 0
      %3336 = vmatmul.mubr.bf16.gmra.mrb[0].mxu0 %v3086
      %v3337 = vpop.f32.mrb[0].mxu0
      %v3338 = vadd.f32 %v2904, %v3337
      %v3339 = vpop.f32.mrb[0].mxu0
      %v3340 = vpop.f32.mrb[0].mxu0
      %v3341 = vadd.f32 %v2907, %v3340
      %v3342 = vpop.f32.mrb[0].mxu0
      %3343 = vmatprep.mubr.bf16.mxu0 0
      %3344 = vmatmul.mubr.bf16.gmra.mrb[0].mxu0 %v3095
      %v3345 = vpop.f32.mrb[0].mxu0
      %v3346 = vadd.f32 %v2912, %v3345
      %v3347 = vpop.f32.mrb[0].mxu0
      %v3348 = vpop.f32.mrb[0].mxu0
      %v3349 = vadd.f32 %v2915, %v3348
      %v3350 = vpop.f32.mrb[0].mxu0
      %3351 = vmatprep.mubr.bf16.mxu0 0
      %3352 = vmatmul.mubr.bf16.gmra.mrb[0].mxu0 %v3104
      %v3353 = vpop.f32.mrb[0].mxu0
      %v3354 = vadd.f32 %v2920, %v3353
      %v3355 = vpop.f32.mrb[0].mxu0
      %v3356 = vpop.f32.mrb[0].mxu0
      %v3357 = vadd.f32 %v2923, %v3356
      %v3358 = vpop.f32.mrb[0].mxu0
      %3359 = vmatprep.mubr.bf16.mxu0 0
      %3360 = vmatmul.mubr.bf16.gmra.mrb[0].mxu0 %v3113
      %v3361 = vpop.f32.mrb[0].mxu0
      %v3362 = vadd.f32 %v2928, %v3361
      %v3363 = vpop.f32.mrb[0].mxu0
      %v3364 = vpop.f32.mrb[0].mxu0
      %v3365 = vadd.f32 %v2931, %v3364
      %v3366 = vpop.f32.mrb[0].mxu0
      %3367 = vmatprep.mubr.bf16.mxu0 0
      %3368 = vmatmul.mubr.bf16.gmra.mrb[0].mxu0 %v3122
      %v3369 = vpop.f32.mrb[0].mxu0
      %v3370 = vadd.f32 %v2936, %v3369
      %v3371 = vpop.f32.mrb[0].mxu0
      %v3372 = vpop.f32.mrb[0].mxu0
      %v3373 = vadd.f32 %v2939, %v3372
      %v3374 = vpop.f32.mrb[0].mxu0
      %3375 = vmatprep.mubr.bf16.mxu0 0
      %3376 = vmatmul.mubr.bf16.gmra.mrb[0].mxu0 %v3131
      %v3377 = vpop.f32.mrb[0].mxu0
      %v3378 = vadd.f32 %v2944, %v3377
      %v3379 = vpop.f32.mrb[0].mxu0
      %v3380 = vpop.f32.mrb[0].mxu0
      %v3381 = vadd.f32 %v2947, %v3380
      %v3382 = vpop.f32.mrb[0].mxu0
      %3383 = vmatprep.mubr.bf16.mxu0 0
      %3384 = vmatmul.mubr.bf16.gmra.mrb[0].mxu0 %v3140
      %v3385 = vpop.f32.mrb[0].mxu0
      %v3386 = vadd.f32 %v2952, %v3385
      %v3387 = vpop.f32.mrb[0].mxu0
      %v3388 = vpop.f32.mrb[0].mxu0
      %v3389 = vadd.f32 %v2955, %v3388
      %v3390 = vpop.f32.mrb[0].mxu0
      %3391 = vmatprep.mubr.bf16.mxu0 0
      %3392 = vmatmul.mubr.bf16.gmra.mrb[0].mxu0 %v3149
      %v3393 = vpop.f32.mrb[0].mxu0
      %v3394 = vadd.f32 %v2960, %v3393
      %v3395 = vpop.f32.mrb[0].mxu0
      %v3396 = vpop.f32.mrb[0].mxu0
      %v3397 = vadd.f32 %v2963, %v3396
      %v3398 = vpop.f32.mrb[0].mxu0
      %3399 = vmatprep.mubr.bf16.mxu0 0
      %3400 = vmatmul.mubr.bf16.gmra.mrb[0].mxu0 %v3158
      %v3401 = vpop.f32.mrb[0].mxu0
      %v3402 = vadd.f32 %v2968, %v3401
      %v3403 = vpop.f32.mrb[0].mxu0
      %v3404 = vpop.f32.mrb[0].mxu0
      %v3405 = vadd.f32 %v2971, %v3404
      %v3406 = vpop.f32.mrb[0].mxu0
      %3407 = vmatprep.mubr.bf16.mxu0 0
      %3408 = vmatmul.mubr.bf16.gmra.mrb[0].mxu0 %v3167
      %v3409 = vpop.f32.mrb[0].mxu0
      %v3410 = vadd.f32 %v2976, %v3409
      %v3411 = vpop.f32.mrb[0].mxu0
      %v3412 = vpop.f32.mrb[0].mxu0
      %v3413 = vadd.f32 %v2979, %v3412
      %v3414 = vpop.f32.mrb[0].mxu0
      %3415 = vmatprep.mubr.bf16.mxu0 0
      %3416 = vmatmul.mubr.bf16.gmra.mrb[0].mxu0 %v3176
      %v3417 = vpop.f32.mrb[0].mxu0
      %v3418 = vadd.f32 %v2984, %v3417
      %v3419 = vpop.f32.mrb[0].mxu0
      %v3420 = vpop.f32.mrb[0].mxu0
      %v3421 = vadd.f32 %v2987, %v3420
      %v3422 = vpop.f32.mrb[0].mxu0
      %3423 = vmatprep.mubr.bf16.mxu0 0
      %3424 = vmatmul.mubr.bf16.gmra.mrb[0].mxu0 %v3185
      %v3425 = vpop.f32.mrb[0].mxu0
      %v3426 = vadd.f32 %v2992, %v3425
      %v3427 = vpop.f32.mrb[0].mxu0
      %v3428 = vpop.f32.mrb[0].mxu0
      %v3429 = vadd.f32 %v2995, %v3428
      %v3430 = vpop.f32.mrb[0].mxu0
      %3431 = vmatprep.mubr.bf16.mxu0 0
      %3432 = vmatmul.mubr.bf16.gmra.mrb[0].mxu0 %v3194
      %v3433 = vpop.f32.mrb[0].mxu0
      %v3434 = vadd.f32 %v3000, %v3433
      %v3435 = vpop.f32.mrb[0].mxu0
      %v3436 = vpop.f32.mrb[0].mxu0
      %v3437 = vadd.f32 %v3003, %v3436
      %v3438 = vpop.f32.mrb[0].mxu0
      %3439 = vmatprep.mubr.bf16.mxu0 0
      %3440 = vmatmul.mubr.bf16.gmra.mrb[0].mxu0 %v3203
      %v3441 = vpop.f32.mrb[0].mxu0
      %v3442 = vadd.f32 %v3008, %v3441
      %v3443 = vpop.f32.mrb[0].mxu0
      %v3444 = vpop.f32.mrb[0].mxu0
      %v3445 = vadd.f32 %v3011, %v3444
      %v3446 = vpop.f32.mrb[0].mxu0
      %3447 = vmatprep.mubr.bf16.mxu0 0
      %3448 = vmatmul.mubr.bf16.gmra.mrb[0].mxu0 %v3212
      %v3449 = vpop.f32.mrb[0].mxu0
      %v3450 = vadd.f32 %v3016, %v3449
      %v3451 = vpop.f32.mrb[0].mxu0
      %v3452 = vpop.f32.mrb[0].mxu0
      %v3453 = vadd.f32 %v3019, %v3452
      %v3454 = vpop.f32.mrb[0].mxu0
      %3455 = vdwg.mxu0
      %v3456 = vld [vmem:[#allocation2 + $0x10] sm:$0xf]
      %v3457 = vld [vmem:[#allocation2 + $0x14] sm:$0xf]
      %v3458 = vld [vmem:[#allocation2 + $0x18] sm:$0xf]
      %v3459 = vld [vmem:[#allocation2 + $0x1c] sm:$0xf]
      %v3460 = vld [vmem:[#allocation2 + $0x20] sm:$0xf]
      %v3461 = vld [vmem:[#allocation2 + $0x24] sm:$0xf]
      %v3462 = vld [vmem:[#allocation2 + $0x28] sm:$0xf]
      %v3463 = vld [vmem:[#allocation2 + $0x2c] sm:$0xf]
      %v3464 = vld [vmem:[#allocation2 + $0x30] sm:$0xf]
      %v3465 = vld [vmem:[#allocation2 + $0x34] sm:$0xf]
      %v3466 = vld [vmem:[#allocation2 + $0x38] sm:$0xf]
      %v3467 = vld [vmem:[#allocation2 + $0x3c] sm:$0xf]
      %v3468 = vld [vmem:[#allocation2 + $0x40] sm:$0xf]
      %v3469 = vld [vmem:[#allocation2 + $0x44] sm:$0xf]
      %v3470 = vld [vmem:[#allocation2 + $0x48] sm:$0xf]
      %v3471 = vld [vmem:[#allocation2 + $0x4c] sm:$0xf]
      %v3472 = vld [vmem:[#allocation2 + $0x50] sm:$0xf]
      %v3473 = vld [vmem:[#allocation2 + $0x54] sm:$0xf]
      %v3474 = vld [vmem:[#allocation2 + $0x58] sm:$0xf]
      %v3475 = vld [vmem:[#allocation2 + $0x5c] sm:$0xf]
      %v3476 = vld [vmem:[#allocation2 + $0x60] sm:$0xf]
      %v3477 = vld [vmem:[#allocation2 + $0x64] sm:$0xf]
      %v3478 = vld [vmem:[#allocation2 + $0x68] sm:$0xf]
      %v3479 = vld [vmem:[#allocation2 + $0x6c] sm:$0xf]
      %v3480 = vld [vmem:[#allocation2 + $0x70] sm:$0xf]
      %v3481 = vld [vmem:[#allocation2 + $0x74] sm:$0xf]
      %v3482 = vld [vmem:[#allocation2 + $0x78] sm:$0xf]
      %v3483 = vld [vmem:[#allocation2 + $0x7c] sm:$0xf]
      %v3484 = vld [vmem:[#allocation2 + $0x80] sm:$0xf]
      %v3485 = vld [vmem:[#allocation2 + $0x84] sm:$0xf]
      %v3486 = vld [vmem:[#allocation2 + $0x88] sm:$0xf]
      %v3487 = vld [vmem:[#allocation2 + $0x8c] sm:$0xf]
      %v3488 = vld [vmem:[#allocation2 + $0x90] sm:$0xf]
      %v3489 = vld [vmem:[#allocation2 + $0x94] sm:$0xf]
      %v3490 = vld [vmem:[#allocation2 + $0x98] sm:$0xf]
      %v3491 = vld [vmem:[#allocation2 + $0x9c] sm:$0xf]
      %v3492 = vld [vmem:[#allocation2 + $0xa0] sm:$0x1]
      %s3493 = scalar_lea.vmem %s3, 320
      %v3494 = vld [vmem:[%s3493] sm:$0xf]
      %v3495 = vld [vmem:[%s3493 + $0x4] sm:$0xf]
      %v3496 = vld [vmem:[%s3493 + $0x8] sm:$0xf]
      %v3497 = vld [vmem:[%s3493 + $0xc] sm:$0xf]
      %v3498 = vld [vmem:[%s3493 + $0x10] sm:$0xf]
      %v3499 = vld [vmem:[%s3493 + $0x14] sm:$0xf]
      %v3500 = vld [vmem:[%s3493 + $0x18] sm:$0xf]
      %v3501 = vld [vmem:[%s3493 + $0x1c] sm:$0xf]
      %v3502 = vld [vmem:[%s3493 + $0x20] sm:$0xf]
      %v3503 = vld [vmem:[%s3493 + $0x24] sm:$0xf]
      %v3504 = vld [vmem:[%s3493 + $0x28] sm:$0xf]
      %v3505 = vld [vmem:[%s3493 + $0x2c] sm:$0xf]
      %v3506 = vld [vmem:[%s3493 + $0x30] sm:$0xf]
      %v3507 = vld [vmem:[%s3493 + $0x34] sm:$0xf]
      %v3508 = vld [vmem:[%s3493 + $0x38] sm:$0xf]
      %v3509 = vld [vmem:[%s3493 + $0x3c] sm:$0xf]
      %v3547 = vunpack.c.l.b16 %v3456
      %v3548 = vunpack.c.l.b16 %v3457
      %v3549 = vunpack.c.l.b16 %v3458
      %v3550 = vunpack.c.l.b16 %v3459
      %v3551 = vunpack.c.l.b16 %v3460
      %v3552 = vunpack.c.l.b16 %v3461
      %v3553 = vunpack.c.l.b16 %v3462
      %v3554 = vunpack.c.l.b16 %v3463
      %v3555 = vunpack.c.l.b16 %v3464
      %v3556 = vunpack.c.l.b16 %v3465
      %v3557 = vunpack.c.l.b16 %v3466
      %v3558 = vunpack.c.l.b16 %v3467
      %v3559 = vunpack.c.l.b16 %v3468
      %v3560 = vunpack.c.l.b16 %v3469
      %v3561 = vunpack.c.l.b16 %v3470
      %v3562 = vunpack.c.l.b16 %v3471
      %v3563 = vunpack.c.l.b16 %v3472
      %v3564 = vunpack.c.l.b16 %v3473
      %v3565 = vunpack.c.l.b16 %v3474
      %v3566 = vunpack.c.l.b16 %v3475
      %v3567 = vunpack.c.l.b16 %v3476
      %v3568 = vunpack.c.l.b16 %v3477
      %v3569 = vunpack.c.l.b16 %v3478
      %v3570 = vunpack.c.l.b16 %v3479
      %v3571 = vunpack.c.l.b16 %v3480
      %v3572 = vunpack.c.l.b16 %v3481
      %v3573 = vunpack.c.l.b16 %v3482
      %v3574 = vunpack.c.l.b16 %v3483
      %v3575 = vunpack.c.l.b16 %v3484
      %v3576 = vunpack.c.l.b16 %v3485
      %v3577 = vunpack.c.l.b16 %v3486
      %v3578 = vunpack.c.l.b16 %v3487
      %v3579 = vunpack.c.l.b16 %v3488
      %v3580 = vunpack.c.l.b16 %v3489
      %v3581 = vunpack.c.l.b16 %v3490
      %v3582 = vunpack.c.l.b16 %v3491
      %v3583 = vunpack.c.l.b16 %v3492
      %v3584 = vpack.c.b16 %v3548, %v3547
      %v3585 = vpack.c.b16 %v3550, %v3549
      %v3586 = vpack.c.b16 %v3552, %v3551
      %v3587 = vpack.c.b16 %v3554, %v3553
      %v3588 = vpack.c.b16 %v3556, %v3555
      %v3589 = vpack.c.b16 %v3558, %v3557
      %v3590 = vpack.c.b16 %v3560, %v3559
      %v3591 = vpack.c.b16 %v3562, %v3561
      %v3592 = vpack.c.b16 %v3564, %v3563
      %v3593 = vpack.c.b16 %v3566, %v3565
      %v3594 = vpack.c.b16 %v3568, %v3567
      %v3595 = vpack.c.b16 %v3570, %v3569
      %v3596 = vpack.c.b16 %v3572, %v3571
      %v3597 = vpack.c.b16 %v3574, %v3573
      %v3598 = vpack.c.b16 %v3576, %v3575
      %v3599 = vpack.c.b16 %v3578, %v3577
      %v3600 = vpack.c.b16 %v3580, %v3579
      %v3601 = vpack.c.b16 %v3582, %v3581
      %v3602 = vpack.c.b16 %v3583, %v3583
      %vm3603 = vsmask.f32 7424
      %v3605 = vshrl.u32 %v3584, 16
      %v3607 = vshll.u32 %v3584, 16
      %v3609 = vrot.slane %v3607, 1
      %v3610 = vor.u32 %v3605, %v3609
      %v3612 = vshll.u32 %v3585, 16
      %v3614 = vrot.slane %v3612, 1
      %v3615 = vsel %vm3603, %v3610, %v3614
      %v3616 = vshrl.u32 %v3585, 16
      %v3618 = vor.u32 %v3616, %v3614
      %v3620 = vshll.u32 %v3586, 16
      %v3622 = vrot.slane %v3620, 1
      %v3623 = vsel %vm3603, %v3618, %v3622
      %v3624 = vshrl.u32 %v3586, 16
      %v3626 = vor.u32 %v3624, %v3622
      %v3628 = vshll.u32 %v3587, 16
      %v3630 = vrot.slane %v3628, 1
      %v3631 = vsel %vm3603, %v3626, %v3630
      %v3632 = vshrl.u32 %v3587, 16
      %v3634 = vor.u32 %v3632, %v3630
      %v3636 = vshll.u32 %v3588, 16
      %v3638 = vrot.slane %v3636, 1
      %v3639 = vsel %vm3603, %v3634, %v3638
      %v3640 = vshrl.u32 %v3588, 16
      %v3642 = vor.u32 %v3640, %v3638
      %v3644 = vshll.u32 %v3589, 16
      %v3646 = vrot.slane %v3644, 1
      %v3647 = vsel %vm3603, %v3642, %v3646
      %v3648 = vshrl.u32 %v3589, 16
      %v3650 = vor.u32 %v3648, %v3646
      %v3652 = vshll.u32 %v3590, 16
      %v3654 = vrot.slane %v3652, 1
      %v3655 = vsel %vm3603, %v3650, %v3654
      %v3656 = vshrl.u32 %v3590, 16
      %v3658 = vor.u32 %v3656, %v3654
      %v3660 = vshll.u32 %v3591, 16
      %v3662 = vrot.slane %v3660, 1
      %v3663 = vsel %vm3603, %v3658, %v3662
      %v3664 = vshrl.u32 %v3591, 16
      %v3666 = vor.u32 %v3664, %v3662
      %v3668 = vshll.u32 %v3592, 16
      %v3670 = vrot.slane %v3668, 1
      %v3671 = vsel %vm3603, %v3666, %v3670
      %v3672 = vshrl.u32 %v3592, 16
      %v3674 = vor.u32 %v3672, %v3670
      %v3676 = vshll.u32 %v3593, 16
      %v3678 = vrot.slane %v3676, 1
      %v3679 = vsel %vm3603, %v3674, %v3678
      %v3680 = vshrl.u32 %v3593, 16
      %v3682 = vor.u32 %v3680, %v3678
      %v3684 = vshll.u32 %v3594, 16
      %v3686 = vrot.slane %v3684, 1
      %v3687 = vsel %vm3603, %v3682, %v3686
      %v3688 = vshrl.u32 %v3594, 16
      %v3690 = vor.u32 %v3688, %v3686
      %v3692 = vshll.u32 %v3595, 16
      %v3694 = vrot.slane %v3692, 1
      %v3695 = vsel %vm3603, %v3690, %v3694
      %v3696 = vshrl.u32 %v3595, 16
      %v3698 = vor.u32 %v3696, %v3694
      %v3700 = vshll.u32 %v3596, 16
      %v3702 = vrot.slane %v3700, 1
      %v3703 = vsel %vm3603, %v3698, %v3702
      %v3704 = vshrl.u32 %v3596, 16
      %v3706 = vor.u32 %v3704, %v3702
      %v3708 = vshll.u32 %v3597, 16
      %v3710 = vrot.slane %v3708, 1
      %v3711 = vsel %vm3603, %v3706, %v3710
      %v3712 = vshrl.u32 %v3597, 16
      %v3714 = vor.u32 %v3712, %v3710
      %v3716 = vshll.u32 %v3598, 16
      %v3718 = vrot.slane %v3716, 1
      %v3719 = vsel %vm3603, %v3714, %v3718
      %v3720 = vshrl.u32 %v3598, 16
      %v3722 = vor.u32 %v3720, %v3718
      %v3724 = vshll.u32 %v3599, 16
      %v3726 = vrot.slane %v3724, 1
      %v3727 = vsel %vm3603, %v3722, %v3726
      %v3728 = vshrl.u32 %v3599, 16
      %v3730 = vor.u32 %v3728, %v3726
      %v3732 = vshll.u32 %v3600, 16
      %v3734 = vrot.slane %v3732, 1
      %v3735 = vsel %vm3603, %v3730, %v3734
      %v3736 = vshrl.u32 %v3600, 16
      %v3738 = vor.u32 %v3736, %v3734
      %v3740 = vshll.u32 %v3601, 16
      %v3742 = vrot.slane %v3740, 1
      %v3743 = vsel %vm3603, %v3738, %v3742
      %v3744 = vshrl.u32 %v3601, 16
      %v3746 = vor.u32 %v3744, %v3742
      %v3748 = vshll.u32 %v3602, 16
      %v3750 = vrot.slane %v3748, 1
      %v3751 = vsel %vm3603, %v3746, %v3750
      %v3786 = vunpack.c.l.b16 %v3494
      %v3787 = vunpack.c.l.b16 %v3495
      %v3788 = vunpack.c.l.b16 %v3496
      %v3789 = vunpack.c.l.b16 %v3497
      %v3790 = vunpack.c.l.b16 %v3498
      %v3791 = vunpack.c.l.b16 %v3499
      %v3792 = vunpack.c.l.b16 %v3500
      %v3793 = vunpack.c.l.b16 %v3501
      %v3794 = vunpack.c.l.b16 %v3502
      %v3795 = vunpack.c.l.b16 %v3503
      %v3796 = vunpack.c.l.b16 %v3504
      %v3797 = vunpack.c.l.b16 %v3505
      %v3798 = vunpack.c.l.b16 %v3506
      %v3799 = vunpack.c.l.b16 %v3507
      %v3800 = vunpack.c.l.b16 %v3508
      %v3801 = vunpack.c.l.b16 %v3509
      %v3802 = vpack.c.b16 %v3787, %v3786
      %v3803 = vpack.c.b16 %v3789, %v3788
      %v3804 = vpack.c.b16 %v3791, %v3790
      %v3805 = vpack.c.b16 %v3793, %v3792
      %v3806 = vpack.c.b16 %v3795, %v3794
      %v3807 = vpack.c.b16 %v3797, %v3796
      %v3808 = vpack.c.b16 %v3799, %v3798
      %v3809 = vpack.c.b16 %v3801, %v3800
      %3818 = vmatprep.subr.bf16.mxu0 0
      %3819 = vmatpush1.bf16.msra.mxu0 %v3802
      %3820 = vmatprep.subr.bf16.mxu0 0
      %3821 = vmatpush1.bf16.msra.mxu0 %v3803
      %3822 = vmatprep.subr.bf16.mxu0 0
      %3823 = vmatpush1.bf16.msra.mxu0 %v3804
      %3824 = vmatprep.subr.bf16.mxu0 0
      %3825 = vmatpush1.bf16.msra.mxu0 %v3805
      %3826 = vmatprep.subr.bf16.mxu0 0
      %3827 = vmatpush1.bf16.msra.mxu0 %v3806
      %3828 = vmatprep.subr.bf16.mxu0 0
      %3829 = vmatpush1.bf16.msra.mxu0 %v3807
      %3830 = vmatprep.subr.bf16.mxu0 0
      %3831 = vmatpush1.bf16.msra.mxu0 %v3808
      %3832 = vmatprep.subr.bf16.mxu0 0
      %3833 = vmatpush1.bf16.msra.mxu0 %v3809
      %3834 = vmatprep.subr.bf16.mxu0 0
      %3835 = vmatpush1.bf16.msra.mxu0 0
      %3836 = vmatprep.subr.bf16.mxu0 0
      %3837 = vmatpush1.bf16.msra.mxu0 0
      %3838 = vmatprep.subr.bf16.mxu0 0
      %3839 = vmatpush1.bf16.msra.mxu0 0
      %3840 = vmatprep.subr.bf16.mxu0 0
      %3841 = vmatpush1.bf16.msra.mxu0 0
      %3842 = vmatprep.subr.bf16.mxu0 0
      %3843 = vmatpush1.bf16.msra.mxu0 0
      %3844 = vmatprep.subr.bf16.mxu0 0
      %3845 = vmatpush1.bf16.msra.mxu0 0
      %3846 = vmatprep.subr.bf16.mxu0 0
      %3847 = vmatpush1.bf16.msra.mxu0 0
      %3848 = vmatprep.subr.bf16.mxu0 0
      %3849 = vmatpush1.bf16.msra.mxu0 0
      %3850 = vmatprep.mubr.bf16.mxu0 0
      %3851 = vmatmul.mubr.bf16.gmra.mrb[0].mxu0 %v3615
      %v3852 = vpop.f32.mrb[0].mxu0
      %v3853 = vadd.f32 0.0, %v3852
      %v3854 = vpop.f32.mrb[0].mxu0
      %v3855 = vpop.f32.mrb[0].mxu0
      %v3856 = vadd.f32 0.0, %v3855
      %v3857 = vpop.f32.mrb[0].mxu0
      %3858 = vmatprep.mubr.bf16.mxu0 0
      %3859 = vmatmul.mubr.bf16.gmra.mrb[0].mxu0 %v3623
      %v3860 = vpop.f32.mrb[0].mxu0
      %v3861 = vadd.f32 0.0, %v3860
      %v3862 = vpop.f32.mrb[0].mxu0
      %v3863 = vpop.f32.mrb[0].mxu0
      %v3864 = vadd.f32 0.0, %v3863
      %v3865 = vpop.f32.mrb[0].mxu0
      %3866 = vmatprep.mubr.bf16.mxu0 0
      %3867 = vmatmul.mubr.bf16.gmra.mrb[0].mxu0 %v3631
      %v3868 = vpop.f32.mrb[0].mxu0
      %v3869 = vadd.f32 0.0, %v3868
      %v3870 = vpop.f32.mrb[0].mxu0
      %v3871 = vpop.f32.mrb[0].mxu0
      %v3872 = vadd.f32 0.0, %v3871
      %v3873 = vpop.f32.mrb[0].mxu0
      %3874 = vmatprep.mubr.bf16.mxu0 0
      %3875 = vmatmul.mubr.bf16.gmra.mrb[0].mxu0 %v3639
      %v3876 = vpop.f32.mrb[0].mxu0
      %v3877 = vadd.f32 0.0, %v3876
      %v3878 = vpop.f32.mrb[0].mxu0
      %v3879 = vpop.f32.mrb[0].mxu0
      %v3880 = vadd.f32 0.0, %v3879
      %v3881 = vpop.f32.mrb[0].mxu0
      %3882 = vmatprep.mubr.bf16.mxu0 0
      %3883 = vmatmul.mubr.bf16.gmra.mrb[0].mxu0 %v3647
      %v3884 = vpop.f32.mrb[0].mxu0
      %v3885 = vadd.f32 0.0, %v3884
      %v3886 = vpop.f32.mrb[0].mxu0
      %v3887 = vpop.f32.mrb[0].mxu0
      %v3888 = vadd.f32 0.0, %v3887
      %v3889 = vpop.f32.mrb[0].mxu0
      %3890 = vmatprep.mubr.bf16.mxu0 0
      %3891 = vmatmul.mubr.bf16.gmra.mrb[0].mxu0 %v3655
      %v3892 = vpop.f32.mrb[0].mxu0
      %v3893 = vadd.f32 0.0, %v3892
      %v3894 = vpop.f32.mrb[0].mxu0
      %v3895 = vpop.f32.mrb[0].mxu0
      %v3896 = vadd.f32 0.0, %v3895
      %v3897 = vpop.f32.mrb[0].mxu0
      %3898 = vmatprep.mubr.bf16.mxu0 0
      %3899 = vmatmul.mubr.bf16.gmra.mrb[0].mxu0 %v3663
      %v3900 = vpop.f32.mrb[0].mxu0
      %v3901 = vadd.f32 0.0, %v3900
      %v3902 = vpop.f32.mrb[0].mxu0
      %v3903 = vpop.f32.mrb[0].mxu0
      %v3904 = vadd.f32 0.0, %v3903
      %v3905 = vpop.f32.mrb[0].mxu0
      %3906 = vmatprep.mubr.bf16.mxu0 0
      %3907 = vmatmul.mubr.bf16.gmra.mrb[0].mxu0 %v3671
      %v3908 = vpop.f32.mrb[0].mxu0
      %v3909 = vadd.f32 0.0, %v3908
      %v3910 = vpop.f32.mrb[0].mxu0
      %v3911 = vpop.f32.mrb[0].mxu0
      %v3912 = vadd.f32 0.0, %v3911
      %v3913 = vpop.f32.mrb[0].mxu0
      %3914 = vmatprep.mubr.bf16.mxu0 0
      %3915 = vmatmul.mubr.bf16.gmra.mrb[0].mxu0 %v3679
      %v3916 = vpop.f32.mrb[0].mxu0
      %v3917 = vadd.f32 0.0, %v3916
      %v3918 = vpop.f32.mrb[0].mxu0
      %v3919 = vpop.f32.mrb[0].mxu0
      %v3920 = vadd.f32 0.0, %v3919
      %v3921 = vpop.f32.mrb[0].mxu0
      %3922 = vmatprep.mubr.bf16.mxu0 0
      %3923 = vmatmul.mubr.bf16.gmra.mrb[0].mxu0 %v3687
      %v3924 = vpop.f32.mrb[0].mxu0
      %v3925 = vadd.f32 0.0, %v3924
      %v3926 = vpop.f32.mrb[0].mxu0
      %v3927 = vpop.f32.mrb[0].mxu0
      %v3928 = vadd.f32 0.0, %v3927
      %v3929 = vpop.f32.mrb[0].mxu0
      %3930 = vmatprep.mubr.bf16.mxu0 0
      %3931 = vmatmul.mubr.bf16.gmra.mrb[0].mxu0 %v3695
      %v3932 = vpop.f32.mrb[0].mxu0
      %v3933 = vadd.f32 0.0, %v3932
      %v3934 = vpop.f32.mrb[0].mxu0
      %v3935 = vpop.f32.mrb[0].mxu0
      %v3936 = vadd.f32 0.0, %v3935
      %v3937 = vpop.f32.mrb[0].mxu0
      %3938 = vmatprep.mubr.bf16.mxu0 0
      %3939 = vmatmul.mubr.bf16.gmra.mrb[0].mxu0 %v3703
      %v3940 = vpop.f32.mrb[0].mxu0
      %v3941 = vadd.f32 0.0, %v3940
      %v3942 = vpop.f32.mrb[0].mxu0
      %v3943 = vpop.f32.mrb[0].mxu0
      %v3944 = vadd.f32 0.0, %v3943
      %v3945 = vpop.f32.mrb[0].mxu0
      %3946 = vmatprep.mubr.bf16.mxu0 0
      %3947 = vmatmul.mubr.bf16.gmra.mrb[0].mxu0 %v3711
      %v3948 = vpop.f32.mrb[0].mxu0
      %v3949 = vadd.f32 0.0, %v3948
      %v3950 = vpop.f32.mrb[0].mxu0
      %v3951 = vpop.f32.mrb[0].mxu0
      %v3952 = vadd.f32 0.0, %v3951
      %v3953 = vpop.f32.mrb[0].mxu0
      %3954 = vmatprep.mubr.bf16.mxu0 0
      %3955 = vmatmul.mubr.bf16.gmra.mrb[0].mxu0 %v3719
      %v3956 = vpop.f32.mrb[0].mxu0
      %v3957 = vadd.f32 0.0, %v3956
      %v3958 = vpop.f32.mrb[0].mxu0
      %v3959 = vpop.f32.mrb[0].mxu0
      %v3960 = vadd.f32 0.0, %v3959
      %v3961 = vpop.f32.mrb[0].mxu0
      %3962 = vmatprep.mubr.bf16.mxu0 0
      %3963 = vmatmul.mubr.bf16.gmra.mrb[0].mxu0 %v3727
      %v3964 = vpop.f32.mrb[0].mxu0
      %v3965 = vadd.f32 0.0, %v3964
      %v3966 = vpop.f32.mrb[0].mxu0
      %v3967 = vpop.f32.mrb[0].mxu0
      %v3968 = vadd.f32 0.0, %v3967
      %v3969 = vpop.f32.mrb[0].mxu0
      %3970 = vmatprep.mubr.bf16.mxu0 0
      %3971 = vmatmul.mubr.bf16.gmra.mrb[0].mxu0 %v3735
      %v3972 = vpop.f32.mrb[0].mxu0
      %v3973 = vadd.f32 0.0, %v3972
      %v3974 = vpop.f32.mrb[0].mxu0
      %v3975 = vpop.f32.mrb[0].mxu0
      %v3976 = vadd.f32 0.0, %v3975
      %v3977 = vpop.f32.mrb[0].mxu0
      %3978 = vmatprep.mubr.bf16.mxu0 0
      %3979 = vmatmul.mubr.bf16.gmra.mrb[0].mxu0 %v3743
      %v3980 = vpop.f32.mrb[0].mxu0
      %v3981 = vadd.f32 0.0, %v3980
      %v3982 = vpop.f32.mrb[0].mxu0
      %v3983 = vpop.f32.mrb[0].mxu0
      %v3984 = vadd.f32 0.0, %v3983
      %v3985 = vpop.f32.mrb[0].mxu0
      %3986 = vmatprep.mubr.bf16.mxu0 0
      %3987 = vmatmul.mubr.bf16.gmra.mrb[0].mxu0 %v3751
      %v3988 = vpop.f32.mrb[0].mxu0
      %v3989 = vadd.f32 0.0, %v3988
      %v3990 = vpop.f32.mrb[0].mxu0
      %v3991 = vpop.f32.mrb[0].mxu0
      %v3992 = vadd.f32 0.0, %v3991
      %v3993 = vpop.f32.mrb[0].mxu0
      %3994 = vdwg.mxu0
      %v3995 = vadd.f32 %v3314, %v3853
      %v3996 = vadd.f32 %v3317, %v3856
      %v3997 = vadd.f32 %v3322, %v3861
      %v3998 = vadd.f32 %v3325, %v3864
      %v3999 = vadd.f32 %v3330, %v3869
      %v4000 = vadd.f32 %v3333, %v3872
      %v4001 = vadd.f32 %v3338, %v3877
      %v4002 = vadd.f32 %v3341, %v3880
      %v4003 = vadd.f32 %v3346, %v3885
      %v4004 = vadd.f32 %v3349, %v3888
      %v4005 = vadd.f32 %v3354, %v3893
      %v4006 = vadd.f32 %v3357, %v3896
      %v4007 = vadd.f32 %v3362, %v3901
      %v4008 = vadd.f32 %v3365, %v3904
      %v4009 = vadd.f32 %v3370, %v3909
      %v4010 = vadd.f32 %v3373, %v3912
      %v4011 = vadd.f32 %v3378, %v3917
      %v4012 = vadd.f32 %v3381, %v3920
      %v4013 = vadd.f32 %v3386, %v3925
      %v4014 = vadd.f32 %v3389, %v3928
      %v4015 = vadd.f32 %v3394, %v3933
      %v4016 = vadd.f32 %v3397, %v3936
      %v4017 = vadd.f32 %v3402, %v3941
      %v4018 = vadd.f32 %v3405, %v3944
      %v4019 = vadd.f32 %v3410, %v3949
      %v4020 = vadd.f32 %v3413, %v3952
      %v4021 = vadd.f32 %v3418, %v3957
      %v4022 = vadd.f32 %v3421, %v3960
      %v4023 = vadd.f32 %v3426, %v3965
      %v4024 = vadd.f32 %v3429, %v3968
      %v4025 = vadd.f32 %v3434, %v3973
      %v4026 = vadd.f32 %v3437, %v3976
      %v4027 = vadd.f32 %v3442, %v3981
      %v4028 = vadd.f32 %v3445, %v3984
      %v4029 = vadd.f32 %v3450, %v3989
      %v4030 = vadd.f32 %v3453, %v3992
      %v4031 = vld [vmem:[#allocation3] sm:$0xff]
      %v4032 = vld [vmem:[#allocation3 + $0x8] sm:$0xff]
      %v4033 = vld [vmem:[#allocation3 + $0x10] sm:$0xff]
      %v4034 = vld [vmem:[#allocation3 + $0x18] sm:$0xff]
      %v4035 = vld [vmem:[#allocation3 + $0x20] sm:$0xff]
      %v4036 = vld [vmem:[#allocation3 + $0x28] sm:$0xff]
      %v4037 = vld [vmem:[#allocation3 + $0x30] sm:$0xff]
      %v4038 = vld [vmem:[#allocation3 + $0x38] sm:$0xff]
      %v4039 = vld [vmem:[#allocation3 + $0x40] sm:$0xff]
      %v4040 = vld [vmem:[#allocation3 + $0x48] sm:$0xff]
      %v4041 = vld [vmem:[#allocation3 + $0x50] sm:$0xff]
      %v4042 = vld [vmem:[#allocation3 + $0x58] sm:$0xff]
      %v4043 = vld [vmem:[#allocation3 + $0x60] sm:$0xff]
      %v4044 = vld [vmem:[#allocation3 + $0x68] sm:$0xff]
      %v4045 = vld [vmem:[#allocation3 + $0x70] sm:$0xff]
      %v4046 = vld [vmem:[#allocation3 + $0x78] sm:$0xff]
      %v4047 = vld [vmem:[#allocation3 + $0x80] sm:$0xff]
      %v4048 = vld [vmem:[#allocation3 + $0x88] sm:$0xff]
      %v4049 = vld [vmem:[#allocation3 + $0x90] sm:$0xff]
      %v4050 = vld [vmem:[#allocation3 + $0x98] sm:$0xff]
      %v4051 = vld [vmem:[#allocation3 + $0xa0] sm:$0xff]
      %v4052 = vld [vmem:[#allocation3 + $0xa8] sm:$0xff]
      %v4053 = vld [vmem:[#allocation3 + $0xb0] sm:$0xff]
      %v4054 = vld [vmem:[#allocation3 + $0xb8] sm:$0xff]
      %v4055 = vld [vmem:[#allocation3 + $0xc0] sm:$0xff]
      %v4056 = vld [vmem:[#allocation3 + $0xc8] sm:$0xff]
      %v4057 = vld [vmem:[#allocation3 + $0xd0] sm:$0xff]
      %v4058 = vld [vmem:[#allocation3 + $0xd8] sm:$0xff]
      %v4059 = vld [vmem:[#allocation3 + $0xe0] sm:$0xff]
      %v4060 = vld [vmem:[#allocation3 + $0xe8] sm:$0xff]
      %v4061 = vld [vmem:[#allocation3 + $0xf0] sm:$0xff]
      %v4062 = vld [vmem:[#allocation3 + $0xf8] sm:$0xff]
      %v4063 = vld [vmem:[#allocation3 + $0x100] sm:$0xff]
      %v4064 = vld [vmem:[#allocation3 + $0x108] sm:$0xff]
      %v4065 = vld [vmem:[#allocation3 + $0x110] sm:$0xff]
      %v4066 = vld [vmem:[#allocation3 + $0x118] sm:$0xff]
      %v4067 = vadd.f32 %v4031, %v3995
      %v4068 = vadd.f32 %v4032, %v3996
      %v4069 = vadd.f32 %v4033, %v3997
      %v4070 = vadd.f32 %v4034, %v3998
      %v4071 = vadd.f32 %v4035, %v3999
      %v4072 = vadd.f32 %v4036, %v4000
      %v4073 = vadd.f32 %v4037, %v4001
      %v4074 = vadd.f32 %v4038, %v4002
      %v4075 = vadd.f32 %v4039, %v4003
      %v4076 = vadd.f32 %v4040, %v4004
      %v4077 = vadd.f32 %v4041, %v4005
      %v4078 = vadd.f32 %v4042, %v4006
      %v4079 = vadd.f32 %v4043, %v4007
      %v4080 = vadd.f32 %v4044, %v4008
      %v4081 = vadd.f32 %v4045, %v4009
      %v4082 = vadd.f32 %v4046, %v4010
      %v4083 = vadd.f32 %v4047, %v4011
      %v4084 = vadd.f32 %v4048, %v4012
      %v4085 = vadd.f32 %v4049, %v4013
      %v4086 = vadd.f32 %v4050, %v4014
      %v4087 = vadd.f32 %v4051, %v4015
      %v4088 = vadd.f32 %v4052, %v4016
      %v4089 = vadd.f32 %v4053, %v4017
      %v4090 = vadd.f32 %v4054, %v4018
      %v4091 = vadd.f32 %v4055, %v4019
      %v4092 = vadd.f32 %v4056, %v4020
      %v4093 = vadd.f32 %v4057, %v4021
      %v4094 = vadd.f32 %v4058, %v4022
      %v4095 = vadd.f32 %v4059, %v4023
      %v4096 = vadd.f32 %v4060, %v4024
      %v4097 = vadd.f32 %v4061, %v4025
      %v4098 = vadd.f32 %v4062, %v4026
      %v4099 = vadd.f32 %v4063, %v4027
      %v4100 = vadd.f32 %v4064, %v4028
      %v4101 = vadd.f32 %v4065, %v4029
      %v4102 = vadd.f32 %v4066, %v4030
      %4103 = vst [vmem:[#allocation3] sm:$0xff] %v4067
      %4104 = vst [vmem:[#allocation3 + $0x8] sm:$0xff] %v4068
      %4105 = vst [vmem:[#allocation3 + $0x10] sm:$0xff] %v4069
      %4106 = vst [vmem:[#allocation3 + $0x18] sm:$0xff] %v4070
      %4107 = vst [vmem:[#allocation3 + $0x20] sm:$0xff] %v4071
      %4108 = vst [vmem:[#allocation3 + $0x28] sm:$0xff] %v4072
      %4109 = vst [vmem:[#allocation3 + $0x30] sm:$0xff] %v4073
      %4110 = vst [vmem:[#allocation3 + $0x38] sm:$0xff] %v4074
      %4111 = vst [vmem:[#allocation3 + $0x40] sm:$0xff] %v4075
      %4112 = vst [vmem:[#allocation3 + $0x48] sm:$0xff] %v4076
      %4113 = vst [vmem:[#allocation3 + $0x50] sm:$0xff] %v4077
      %4114 = vst [vmem:[#allocation3 + $0x58] sm:$0xff] %v4078
      %4115 = vst [vmem:[#allocation3 + $0x60] sm:$0xff] %v4079
      %4116 = vst [vmem:[#allocation3 + $0x68] sm:$0xff] %v4080
      %4117 = vst [vmem:[#allocation3 + $0x70] sm:$0xff] %v4081
      %4118 = vst [vmem:[#allocation3 + $0x78] sm:$0xff] %v4082
      %4119 = vst [vmem:[#allocation3 + $0x80] sm:$0xff] %v4083
      %4120 = vst [vmem:[#allocation3 + $0x88] sm:$0xff] %v4084
      %4121 = vst [vmem:[#allocation3 + $0x90] sm:$0xff] %v4085
      %4122 = vst [vmem:[#allocation3 + $0x98] sm:$0xff] %v4086
      %4123 = vst [vmem:[#allocation3 + $0xa0] sm:$0xff] %v4087
      %4124 = vst [vmem:[#allocation3 + $0xa8] sm:$0xff] %v4088
      %4125 = vst [vmem:[#allocation3 + $0xb0] sm:$0xff] %v4089
      %4126 = vst [vmem:[#allocation3 + $0xb8] sm:$0xff] %v4090
      %4127 = vst [vmem:[#allocation3 + $0xc0] sm:$0xff] %v4091
      %4128 = vst [vmem:[#allocation3 + $0xc8] sm:$0xff] %v4092
      %4129 = vst [vmem:[#allocation3 + $0xd0] sm:$0xff] %v4093
      %4130 = vst [vmem:[#allocation3 + $0xd8] sm:$0xff] %v4094
      %4131 = vst [vmem:[#allocation3 + $0xe0] sm:$0xff] %v4095
      %4132 = vst [vmem:[#allocation3 + $0xe8] sm:$0xff] %v4096
      %4133 = vst [vmem:[#allocation3 + $0xf0] sm:$0xff] %v4097
      %4134 = vst [vmem:[#allocation3 + $0xf8] sm:$0xff] %v4098
      %4135 = vst [vmem:[#allocation3 + $0x100] sm:$0xff] %v4099
      %4136 = vst [vmem:[#allocation3 + $0x108] sm:$0xff] %v4100
      %4137 = vst [vmem:[#allocation3 + $0x110] sm:$0xff] %v4101
      %4138 = vst [vmem:[#allocation3 + $0x118] sm:$0xff] %v4102
      %v4139 = vld [vmem:[#allocation2 + $0x18] sm:$0xf]
      %v4140 = vld [vmem:[#allocation2 + $0x1c] sm:$0xf]
      %v4141 = vld [vmem:[#allocation2 + $0x20] sm:$0xf]
      %v4142 = vld [vmem:[#allocation2 + $0x24] sm:$0xf]
      %v4143 = vld [vmem:[#allocation2 + $0x28] sm:$0xf]
      %v4144 = vld [vmem:[#allocation2 + $0x2c] sm:$0xf]
      %v4145 = vld [vmem:[#allocation2 + $0x30] sm:$0xf]
      %v4146 = vld [vmem:[#allocation2 + $0x34] sm:$0xf]
      %v4147 = vld [vmem:[#allocation2 + $0x38] sm:$0xf]
      %v4148 = vld [vmem:[#allocation2 + $0x3c] sm:$0xf]
      %v4149 = vld [vmem:[#allocation2 + $0x40] sm:$0xf]
      %v4150 = vld [vmem:[#allocation2 + $0x44] sm:$0xf]
      %v4151 = vld [vmem:[#allocation2 + $0x48] sm:$0xf]
      %v4152 = vld [vmem:[#allocation2 + $0x4c] sm:$0xf]
      %v4153 = vld [vmem:[#allocation2 + $0x50] sm:$0xf]
      %v4154 = vld [vmem:[#allocation2 + $0x54] sm:$0xf]
      %v4155 = vld [vmem:[#allocation2 + $0x58] sm:$0xf]
      %v4156 = vld [vmem:[#allocation2 + $0x5c] sm:$0xf]
      %v4157 = vld [vmem:[#allocation2 + $0x60] sm:$0xf]
      %v4158 = vld [vmem:[#allocation2 + $0x64] sm:$0xf]
      %v4159 = vld [vmem:[#allocation2 + $0x68] sm:$0xf]
      %v4160 = vld [vmem:[#allocation2 + $0x6c] sm:$0xf]
      %v4161 = vld [vmem:[#allocation2 + $0x70] sm:$0xf]
      %v4162 = vld [vmem:[#allocation2 + $0x74] sm:$0xf]
      %v4163 = vld [vmem:[#allocation2 + $0x78] sm:$0xf]
      %v4164 = vld [vmem:[#allocation2 + $0x7c] sm:$0xf]
      %v4165 = vld [vmem:[#allocation2 + $0x80] sm:$0xf]
      %v4166 = vld [vmem:[#allocation2 + $0x84] sm:$0xf]
      %v4167 = vld [vmem:[#allocation2 + $0x88] sm:$0xf]
      %v4168 = vld [vmem:[#allocation2 + $0x8c] sm:$0xf]
      %v4169 = vld [vmem:[#allocation2 + $0x90] sm:$0xf]
      %v4170 = vld [vmem:[#allocation2 + $0x94] sm:$0xf]
      %v4171 = vld [vmem:[#allocation2 + $0x98] sm:$0xf]
      %v4172 = vld [vmem:[#allocation2 + $0x9c] sm:$0xf]
      %v4173 = vld [vmem:[#allocation2 + $0xa0] sm:$0xf]
      %v4174 = vld [vmem:[#allocation2 + $0xa4] sm:$0xf]
      %v4175 = vld [vmem:[#allocation2 + $0xa8] sm:$0x1]
      %s4176 = scalar_lea.vmem %s3, 384
      %v4177 = vld [vmem:[%s4176] sm:$0xf]
      %v4178 = vld [vmem:[%s4176 + $0x4] sm:$0xf]
      %v4179 = vld [vmem:[%s4176 + $0x8] sm:$0xf]
      %v4180 = vld [vmem:[%s4176 + $0xc] sm:$0xf]
      %v4181 = vld [vmem:[%s4176 + $0x10] sm:$0xf]
      %v4182 = vld [vmem:[%s4176 + $0x14] sm:$0xf]
      %v4183 = vld [vmem:[%s4176 + $0x18] sm:$0xf]
      %v4184 = vld [vmem:[%s4176 + $0x1c] sm:$0xf]
      %v4185 = vld [vmem:[%s4176 + $0x20] sm:$0xf]
      %v4186 = vld [vmem:[%s4176 + $0x24] sm:$0xf]
      %v4187 = vld [vmem:[%s4176 + $0x28] sm:$0xf]
      %v4188 = vld [vmem:[%s4176 + $0x2c] sm:$0xf]
      %v4189 = vld [vmem:[%s4176 + $0x30] sm:$0xf]
      %v4190 = vld [vmem:[%s4176 + $0x34] sm:$0xf]
      %v4191 = vld [vmem:[%s4176 + $0x38] sm:$0xf]
      %v4192 = vld [vmem:[%s4176 + $0x3c] sm:$0xf]
      %v4193 = vld [vmem:[#allocation2 + $0x18] sm:$0xe]
      %s4194 = scalar_lea.vmem %s3, 448
      %v4195 = vld [vmem:[%s4194] sm:$0xf]
      %v4196 = vld [vmem:[%s4194 + $0x4] sm:$0xf]
      %v4197 = vld [vmem:[%s4194 + $0x8] sm:$0xf]
      %v4198 = vld [vmem:[%s4194 + $0xc] sm:$0xf]
      %v4199 = vld [vmem:[%s4194 + $0x10] sm:$0xf]
      %v4200 = vld [vmem:[%s4194 + $0x14] sm:$0xf]
      %v4201 = vld [vmem:[%s4194 + $0x18] sm:$0xf]
      %v4202 = vld [vmem:[%s4194 + $0x1c] sm:$0xf]
      %v4203 = vld [vmem:[%s4194 + $0x20] sm:$0xf]
      %v4204 = vld [vmem:[%s4194 + $0x24] sm:$0xf]
      %v4205 = vld [vmem:[%s4194 + $0x28] sm:$0xf]
      %v4206 = vld [vmem:[%s4194 + $0x2c] sm:$0xf]
      %v4207 = vld [vmem:[%s4194 + $0x30] sm:$0xf]
      %v4208 = vld [vmem:[%s4194 + $0x34] sm:$0xf]
      %v4209 = vld [vmem:[%s4194 + $0x38] sm:$0xf]
      %v4210 = vld [vmem:[%s4194 + $0x3c] sm:$0xf]
      %v4248 = vunpack.c.l.b16 %v4193
      %v4249 = vunpack.c.l.b16 %v4140
      %v4250 = vunpack.c.l.b16 %v4141
      %v4251 = vunpack.c.l.b16 %v4142
      %v4252 = vunpack.c.l.b16 %v4143
      %v4253 = vunpack.c.l.b16 %v4144
      %v4254 = vunpack.c.l.b16 %v4145
      %v4255 = vunpack.c.l.b16 %v4146
      %v4256 = vunpack.c.l.b16 %v4147
      %v4257 = vunpack.c.l.b16 %v4148
      %v4258 = vunpack.c.l.b16 %v4149
      %v4259 = vunpack.c.l.b16 %v4150
      %v4260 = vunpack.c.l.b16 %v4151
      %v4261 = vunpack.c.l.b16 %v4152
      %v4262 = vunpack.c.l.b16 %v4153
      %v4263 = vunpack.c.l.b16 %v4154
      %v4264 = vunpack.c.l.b16 %v4155
      %v4265 = vunpack.c.l.b16 %v4156
      %v4266 = vunpack.c.l.b16 %v4157
      %v4267 = vunpack.c.l.b16 %v4158
      %v4268 = vunpack.c.l.b16 %v4159
      %v4269 = vunpack.c.l.b16 %v4160
      %v4270 = vunpack.c.l.b16 %v4161
      %v4271 = vunpack.c.l.b16 %v4162
      %v4272 = vunpack.c.l.b16 %v4163
      %v4273 = vunpack.c.l.b16 %v4164
      %v4274 = vunpack.c.l.b16 %v4165
      %v4275 = vunpack.c.l.b16 %v4166
      %v4276 = vunpack.c.l.b16 %v4167
      %v4277 = vunpack.c.l.b16 %v4168
      %v4278 = vunpack.c.l.b16 %v4169
      %v4279 = vunpack.c.l.b16 %v4170
      %v4280 = vunpack.c.l.b16 %v4171
      %v4281 = vunpack.c.l.b16 %v4172
      %v4282 = vunpack.c.l.b16 %v4173
      %v4283 = vunpack.c.l.b16 %v4174
      %v4284 = vunpack.c.l.b16 %v4175
      %v4285 = vpack.c.b16 %v4249, %v4248
      %v4286 = vpack.c.b16 %v4251, %v4250
      %v4287 = vpack.c.b16 %v4253, %v4252
      %v4288 = vpack.c.b16 %v4255, %v4254
      %v4289 = vpack.c.b16 %v4257, %v4256
      %v4290 = vpack.c.b16 %v4259, %v4258
      %v4291 = vpack.c.b16 %v4261, %v4260
      %v4292 = vpack.c.b16 %v4263, %v4262
      %v4293 = vpack.c.b16 %v4265, %v4264
      %v4294 = vpack.c.b16 %v4267, %v4266
      %v4295 = vpack.c.b16 %v4269, %v4268
      %v4296 = vpack.c.b16 %v4271, %v4270
      %v4297 = vpack.c.b16 %v4273, %v4272
      %v4298 = vpack.c.b16 %v4275, %v4274
      %v4299 = vpack.c.b16 %v4277, %v4276
      %v4300 = vpack.c.b16 %v4279, %v4278
      %v4301 = vpack.c.b16 %v4281, %v4280
      %v4302 = vpack.c.b16 %v4283, %v4282
      %v4303 = vpack.c.b16 %v4284, %v4284
      %vm4304 = vcmask 1046528
      %v4305 = vrot.slane %v4285, 1
      %v4306 = vrot.slane %v4286, 1
      %v4307 = vsel %vm4304, %v4305, %v4306
      %v4308 = vrot.slane %v4287, 1
      %v4309 = vsel %vm4304, %v4306, %v4308
      %v4310 = vrot.slane %v4288, 1
      %v4311 = vsel %vm4304, %v4308, %v4310
      %v4312 = vrot.slane %v4289, 1
      %v4313 = vsel %vm4304, %v4310, %v4312
      %v4314 = vrot.slane %v4290, 1
      %v4315 = vsel %vm4304, %v4312, %v4314
      %v4316 = vrot.slane %v4291, 1
      %v4317 = vsel %vm4304, %v4314, %v4316
      %v4318 = vrot.slane %v4292, 1
      %v4319 = vsel %vm4304, %v4316, %v4318
      %v4320 = vrot.slane %v4293, 1
      %v4321 = vsel %vm4304, %v4318, %v4320
      %v4322 = vrot.slane %v4294, 1
      %v4323 = vsel %vm4304, %v4320, %v4322
      %v4324 = vrot.slane %v4295, 1
      %v4325 = vsel %vm4304, %v4322, %v4324
      %v4326 = vrot.slane %v4296, 1
      %v4327 = vsel %vm4304, %v4324, %v4326
      %v4328 = vrot.slane %v4297, 1
      %v4329 = vsel %vm4304, %v4326, %v4328
      %v4330 = vrot.slane %v4298, 1
      %v4331 = vsel %vm4304, %v4328, %v4330
      %v4332 = vrot.slane %v4299, 1
      %v4333 = vsel %vm4304, %v4330, %v4332
      %v4334 = vrot.slane %v4300, 1
      %v4335 = vsel %vm4304, %v4332, %v4334
      %v4336 = vrot.slane %v4301, 1
      %v4337 = vsel %vm4304, %v4334, %v4336
      %v4338 = vrot.slane %v4302, 1
      %v4339 = vsel %vm4304, %v4336, %v4338
      %v4340 = vrot.slane %v4303, 1
      %v4341 = vsel %vm4304, %v4338, %v4340
      %v4376 = vunpack.c.l.b16 %v4195
      %v4377 = vunpack.c.l.b16 %v4196
      %v4378 = vunpack.c.l.b16 %v4197
      %v4379 = vunpack.c.l.b16 %v4198
      %v4380 = vunpack.c.l.b16 %v4199
      %v4381 = vunpack.c.l.b16 %v4200
      %v4382 = vunpack.c.l.b16 %v4201
      %v4383 = vunpack.c.l.b16 %v4202
      %v4384 = vunpack.c.l.b16 %v4203
      %v4385 = vunpack.c.l.b16 %v4204
      %v4386 = vunpack.c.l.b16 %v4205
      %v4387 = vunpack.c.l.b16 %v4206
      %v4388 = vunpack.c.l.b16 %v4207
      %v4389 = vunpack.c.l.b16 %v4208
      %v4390 = vunpack.c.l.b16 %v4209
      %v4391 = vunpack.c.l.b16 %v4210
      %v4392 = vpack.c.b16 %v4377, %v4376
      %v4393 = vpack.c.b16 %v4379, %v4378
      %v4394 = vpack.c.b16 %v4381, %v4380
      %v4395 = vpack.c.b16 %v4383, %v4382
      %v4396 = vpack.c.b16 %v4385, %v4384
      %v4397 = vpack.c.b16 %v4387, %v4386
      %v4398 = vpack.c.b16 %v4389, %v4388
      %v4399 = vpack.c.b16 %v4391, %v4390
      %4408 = vmatprep.subr.bf16.mxu0 0
      %4409 = vmatpush1.bf16.msra.mxu0 %v4392
      %4410 = vmatprep.subr.bf16.mxu0 0
      %4411 = vmatpush1.bf16.msra.mxu0 %v4393
      %4412 = vmatprep.subr.bf16.mxu0 0
      %4413 = vmatpush1.bf16.msra.mxu0 %v4394
      %4414 = vmatprep.subr.bf16.mxu0 0
      %4415 = vmatpush1.bf16.msra.mxu0 %v4395
      %4416 = vmatprep.subr.bf16.mxu0 0
      %4417 = vmatpush1.bf16.msra.mxu0 %v4396
      %4418 = vmatprep.subr.bf16.mxu0 0
      %4419 = vmatpush1.bf16.msra.mxu0 %v4397
      %4420 = vmatprep.subr.bf16.mxu0 0
      %4421 = vmatpush1.bf16.msra.mxu0 %v4398
      %4422 = vmatprep.subr.bf16.mxu0 0
      %4423 = vmatpush1.bf16.msra.mxu0 %v4399
      %4424 = vmatprep.subr.bf16.mxu0 0
      %4425 = vmatpush1.bf16.msra.mxu0 0
      %4426 = vmatprep.subr.bf16.mxu0 0
      %4427 = vmatpush1.bf16.msra.mxu0 0
      %4428 = vmatprep.subr.bf16.mxu0 0
      %4429 = vmatpush1.bf16.msra.mxu0 0
      %4430 = vmatprep.subr.bf16.mxu0 0
      %4431 = vmatpush1.bf16.msra.mxu0 0
      %4432 = vmatprep.subr.bf16.mxu0 0
      %4433 = vmatpush1.bf16.msra.mxu0 0
      %4434 = vmatprep.subr.bf16.mxu0 0
      %4435 = vmatpush1.bf16.msra.mxu0 0
      %4436 = vmatprep.subr.bf16.mxu0 0
      %4437 = vmatpush1.bf16.msra.mxu0 0
      %4438 = vmatprep.subr.bf16.mxu0 0
      %4439 = vmatpush1.bf16.msra.mxu0 0
      %4440 = vmatprep.mubr.bf16.mxu0 0
      %4441 = vmatmul.mubr.bf16.gmra.mrb[0].mxu0 %v4307
      %v4442 = vpop.f32.mrb[0].mxu0
      %v4443 = vadd.f32 0.0, %v4442
      %v4444 = vpop.f32.mrb[0].mxu0
      %v4445 = vpop.f32.mrb[0].mxu0
      %v4446 = vadd.f32 0.0, %v4445
      %v4447 = vpop.f32.mrb[0].mxu0
      %4448 = vmatprep.mubr.bf16.mxu0 0
      %4449 = vmatmul.mubr.bf16.gmra.mrb[0].mxu0 %v4309
      %v4450 = vpop.f32.mrb[0].mxu0
      %v4451 = vadd.f32 0.0, %v4450
      %v4452 = vpop.f32.mrb[0].mxu0
      %v4453 = vpop.f32.mrb[0].mxu0
      %v4454 = vadd.f32 0.0, %v4453
      %v4455 = vpop.f32.mrb[0].mxu0
      %4456 = vmatprep.mubr.bf16.mxu0 0
      %4457 = vmatmul.mubr.bf16.gmra.mrb[0].mxu0 %v4311
      %v4458 = vpop.f32.mrb[0].mxu0
      %v4459 = vadd.f32 0.0, %v4458
      %v4460 = vpop.f32.mrb[0].mxu0
      %v4461 = vpop.f32.mrb[0].mxu0
      %v4462 = vadd.f32 0.0, %v4461
      %v4463 = vpop.f32.mrb[0].mxu0
      %4464 = vmatprep.mubr.bf16.mxu0 0
      %4465 = vmatmul.mubr.bf16.gmra.mrb[0].mxu0 %v4313
      %v4466 = vpop.f32.mrb[0].mxu0
      %v4467 = vadd.f32 0.0, %v4466
      %v4468 = vpop.f32.mrb[0].mxu0
      %v4469 = vpop.f32.mrb[0].mxu0
      %v4470 = vadd.f32 0.0, %v4469
      %v4471 = vpop.f32.mrb[0].mxu0
      %4472 = vmatprep.mubr.bf16.mxu0 0
      %4473 = vmatmul.mubr.bf16.gmra.mrb[0].mxu0 %v4315
      %v4474 = vpop.f32.mrb[0].mxu0
      %v4475 = vadd.f32 0.0, %v4474
      %v4476 = vpop.f32.mrb[0].mxu0
      %v4477 = vpop.f32.mrb[0].mxu0
      %v4478 = vadd.f32 0.0, %v4477
      %v4479 = vpop.f32.mrb[0].mxu0
      %4480 = vmatprep.mubr.bf16.mxu0 0
      %4481 = vmatmul.mubr.bf16.gmra.mrb[0].mxu0 %v4317
      %v4482 = vpop.f32.mrb[0].mxu0
      %v4483 = vadd.f32 0.0, %v4482
      %v4484 = vpop.f32.mrb[0].mxu0
      %v4485 = vpop.f32.mrb[0].mxu0
      %v4486 = vadd.f32 0.0, %v4485
      %v4487 = vpop.f32.mrb[0].mxu0
      %4488 = vmatprep.mubr.bf16.mxu0 0
      %4489 = vmatmul.mubr.bf16.gmra.mrb[0].mxu0 %v4319
      %v4490 = vpop.f32.mrb[0].mxu0
      %v4491 = vadd.f32 0.0, %v4490
      %v4492 = vpop.f32.mrb[0].mxu0
      %v4493 = vpop.f32.mrb[0].mxu0
      %v4494 = vadd.f32 0.0, %v4493
      %v4495 = vpop.f32.mrb[0].mxu0
      %4496 = vmatprep.mubr.bf16.mxu0 0
      %4497 = vmatmul.mubr.bf16.gmra.mrb[0].mxu0 %v4321
      %v4498 = vpop.f32.mrb[0].mxu0
      %v4499 = vadd.f32 0.0, %v4498
      %v4500 = vpop.f32.mrb[0].mxu0
      %v4501 = vpop.f32.mrb[0].mxu0
      %v4502 = vadd.f32 0.0, %v4501
      %v4503 = vpop.f32.mrb[0].mxu0
      %4504 = vmatprep.mubr.bf16.mxu0 0
      %4505 = vmatmul.mubr.bf16.gmra.mrb[0].mxu0 %v4323
      %v4506 = vpop.f32.mrb[0].mxu0
      %v4507 = vadd.f32 0.0, %v4506
      %v4508 = vpop.f32.mrb[0].mxu0
      %v4509 = vpop.f32.mrb[0].mxu0
      %v4510 = vadd.f32 0.0, %v4509
      %v4511 = vpop.f32.mrb[0].mxu0
      %4512 = vmatprep.mubr.bf16.mxu0 0
      %4513 = vmatmul.mubr.bf16.gmra.mrb[0].mxu0 %v4325
      %v4514 = vpop.f32.mrb[0].mxu0
      %v4515 = vadd.f32 0.0, %v4514
      %v4516 = vpop.f32.mrb[0].mxu0
      %v4517 = vpop.f32.mrb[0].mxu0
      %v4518 = vadd.f32 0.0, %v4517
      %v4519 = vpop.f32.mrb[0].mxu0
      %4520 = vmatprep.mubr.bf16.mxu0 0
      %4521 = vmatmul.mubr.bf16.gmra.mrb[0].mxu0 %v4327
      %v4522 = vpop.f32.mrb[0].mxu0
      %v4523 = vadd.f32 0.0, %v4522
      %v4524 = vpop.f32.mrb[0].mxu0
      %v4525 = vpop.f32.mrb[0].mxu0
      %v4526 = vadd.f32 0.0, %v4525
      %v4527 = vpop.f32.mrb[0].mxu0
      %4528 = vmatprep.mubr.bf16.mxu0 0
      %4529 = vmatmul.mubr.bf16.gmra.mrb[0].mxu0 %v4329
      %v4530 = vpop.f32.mrb[0].mxu0
      %v4531 = vadd.f32 0.0, %v4530
      %v4532 = vpop.f32.mrb[0].mxu0
      %v4533 = vpop.f32.mrb[0].mxu0
      %v4534 = vadd.f32 0.0, %v4533
      %v4535 = vpop.f32.mrb[0].mxu0
      %4536 = vmatprep.mubr.bf16.mxu0 0
      %4537 = vmatmul.mubr.bf16.gmra.mrb[0].mxu0 %v4331
      %v4538 = vpop.f32.mrb[0].mxu0
      %v4539 = vadd.f32 0.0, %v4538
      %v4540 = vpop.f32.mrb[0].mxu0
      %v4541 = vpop.f32.mrb[0].mxu0
      %v4542 = vadd.f32 0.0, %v4541
      %v4543 = vpop.f32.mrb[0].mxu0
      %4544 = vmatprep.mubr.bf16.mxu0 0
      %4545 = vmatmul.mubr.bf16.gmra.mrb[0].mxu0 %v4333
      %v4546 = vpop.f32.mrb[0].mxu0
      %v4547 = vadd.f32 0.0, %v4546
      %v4548 = vpop.f32.mrb[0].mxu0
      %v4549 = vpop.f32.mrb[0].mxu0
      %v4550 = vadd.f32 0.0, %v4549
      %v4551 = vpop.f32.mrb[0].mxu0
      %4552 = vmatprep.mubr.bf16.mxu0 0
      %4553 = vmatmul.mubr.bf16.gmra.mrb[0].mxu0 %v4335
      %v4554 = vpop.f32.mrb[0].mxu0
      %v4555 = vadd.f32 0.0, %v4554
      %v4556 = vpop.f32.mrb[0].mxu0
      %v4557 = vpop.f32.mrb[0].mxu0
      %v4558 = vadd.f32 0.0, %v4557
      %v4559 = vpop.f32.mrb[0].mxu0
      %4560 = vmatprep.mubr.bf16.mxu0 0
      %4561 = vmatmul.mubr.bf16.gmra.mrb[0].mxu0 %v4337
      %v4562 = vpop.f32.mrb[0].mxu0
      %v4563 = vadd.f32 0.0, %v4562
      %v4564 = vpop.f32.mrb[0].mxu0
      %v4565 = vpop.f32.mrb[0].mxu0
      %v4566 = vadd.f32 0.0, %v4565
      %v4567 = vpop.f32.mrb[0].mxu0
      %4568 = vmatprep.mubr.bf16.mxu0 0
      %4569 = vmatmul.mubr.bf16.gmra.mrb[0].mxu0 %v4339
      %v4570 = vpop.f32.mrb[0].mxu0
      %v4571 = vadd.f32 0.0, %v4570
      %v4572 = vpop.f32.mrb[0].mxu0
      %v4573 = vpop.f32.mrb[0].mxu0
      %v4574 = vadd.f32 0.0, %v4573
      %v4575 = vpop.f32.mrb[0].mxu0
      %4576 = vmatprep.mubr.bf16.mxu0 0
      %4577 = vmatmul.mubr.bf16.gmra.mrb[0].mxu0 %v4341
      %v4578 = vpop.f32.mrb[0].mxu0
      %v4579 = vadd.f32 0.0, %v4578
      %v4580 = vpop.f32.mrb[0].mxu0
      %v4581 = vpop.f32.mrb[0].mxu0
      %v4582 = vadd.f32 0.0, %v4581
      %v4583 = vpop.f32.mrb[0].mxu0
      %4584 = vdwg.mxu0
      %v4586 = vunpack.c.l.b16 %v4139
      %v4587 = vpack.c.b16 %v4249, %v4586
      %v4589 = vshrl.u32 %v4587, 16
      %v4591 = vshll.u32 %v4587, 16
      %v4593 = vrot.slane %v4591, 1
      %v4594 = vor.u32 %v4589, %v4593
      %v4596 = vshll.u32 %v4286, 16
      %v4598 = vrot.slane %v4596, 1
      %v4599 = vsel %vm3603, %v4594, %v4598
      %v4600 = vshrl.u32 %v4286, 16
      %v4602 = vor.u32 %v4600, %v4598
      %v4604 = vshll.u32 %v4287, 16
      %v4606 = vrot.slane %v4604, 1
      %v4607 = vsel %vm3603, %v4602, %v4606
      %v4608 = vshrl.u32 %v4287, 16
      %v4610 = vor.u32 %v4608, %v4606
      %v4612 = vshll.u32 %v4288, 16
      %v4614 = vrot.slane %v4612, 1
      %v4615 = vsel %vm3603, %v4610, %v4614
      %v4616 = vshrl.u32 %v4288, 16
      %v4618 = vor.u32 %v4616, %v4614
      %v4620 = vshll.u32 %v4289, 16
      %v4622 = vrot.slane %v4620, 1
      %v4623 = vsel %vm3603, %v4618, %v4622
      %v4624 = vshrl.u32 %v4289, 16
      %v4626 = vor.u32 %v4624, %v4622
      %v4628 = vshll.u32 %v4290, 16
      %v4630 = vrot.slane %v4628, 1
      %v4631 = vsel %vm3603, %v4626, %v4630
      %v4632 = vshrl.u32 %v4290, 16
      %v4634 = vor.u32 %v4632, %v4630
      %v4636 = vshll.u32 %v4291, 16
      %v4638 = vrot.slane %v4636, 1
      %v4639 = vsel %vm3603, %v4634, %v4638
      %v4640 = vshrl.u32 %v4291, 16
      %v4642 = vor.u32 %v4640, %v4638
      %v4644 = vshll.u32 %v4292, 16
      %v4646 = vrot.slane %v4644, 1
      %v4647 = vsel %vm3603, %v4642, %v4646
      %v4648 = vshrl.u32 %v4292, 16
      %v4650 = vor.u32 %v4648, %v4646
      %v4652 = vshll.u32 %v4293, 16
      %v4654 = vrot.slane %v4652, 1
      %v4655 = vsel %vm3603, %v4650, %v4654
      %v4656 = vshrl.u32 %v4293, 16
      %v4658 = vor.u32 %v4656, %v4654
      %v4660 = vshll.u32 %v4294, 16
      %v4662 = vrot.slane %v4660, 1
      %v4663 = vsel %vm3603, %v4658, %v4662
      %v4664 = vshrl.u32 %v4294, 16
      %v4666 = vor.u32 %v4664, %v4662
      %v4668 = vshll.u32 %v4295, 16
      %v4670 = vrot.slane %v4668, 1
      %v4671 = vsel %vm3603, %v4666, %v4670
      %v4672 = vshrl.u32 %v4295, 16
      %v4674 = vor.u32 %v4672, %v4670
      %v4676 = vshll.u32 %v4296, 16
      %v4678 = vrot.slane %v4676, 1
      %v4679 = vsel %vm3603, %v4674, %v4678
      %v4680 = vshrl.u32 %v4296, 16
      %v4682 = vor.u32 %v4680, %v4678
      %v4684 = vshll.u32 %v4297, 16
      %v4686 = vrot.slane %v4684, 1
      %v4687 = vsel %vm3603, %v4682, %v4686
      %v4688 = vshrl.u32 %v4297, 16
      %v4690 = vor.u32 %v4688, %v4686
      %v4692 = vshll.u32 %v4298, 16
      %v4694 = vrot.slane %v4692, 1
      %v4695 = vsel %vm3603, %v4690, %v4694
      %v4696 = vshrl.u32 %v4298, 16
      %v4698 = vor.u32 %v4696, %v4694
      %v4700 = vshll.u32 %v4299, 16
      %v4702 = vrot.slane %v4700, 1
      %v4703 = vsel %vm3603, %v4698, %v4702
      %v4704 = vshrl.u32 %v4299, 16
      %v4706 = vor.u32 %v4704, %v4702
      %v4708 = vshll.u32 %v4300, 16
      %v4710 = vrot.slane %v4708, 1
      %v4711 = vsel %vm3603, %v4706, %v4710
      %v4712 = vshrl.u32 %v4300, 16
      %v4714 = vor.u32 %v4712, %v4710
      %v4716 = vshll.u32 %v4301, 16
      %v4718 = vrot.slane %v4716, 1
      %v4719 = vsel %vm3603, %v4714, %v4718
      %v4720 = vshrl.u32 %v4301, 16
      %v4722 = vor.u32 %v4720, %v4718
      %v4724 = vshll.u32 %v4302, 16
      %v4726 = vrot.slane %v4724, 1
      %v4727 = vsel %vm3603, %v4722, %v4726
      %v4728 = vshrl.u32 %v4302, 16
      %v4730 = vor.u32 %v4728, %v4726
      %v4732 = vshll.u32 %v4303, 16
      %v4734 = vrot.slane %v4732, 1
      %v4735 = vsel %vm3603, %v4730, %v4734
      %v4770 = vunpack.c.l.b16 %v4177
      %v4771 = vunpack.c.l.b16 %v4178
      %v4772 = vunpack.c.l.b16 %v4179
      %v4773 = vunpack.c.l.b16 %v4180
      %v4774 = vunpack.c.l.b16 %v4181
      %v4775 = vunpack.c.l.b16 %v4182
      %v4776 = vunpack.c.l.b16 %v4183
      %v4777 = vunpack.c.l.b16 %v4184
      %v4778 = vunpack.c.l.b16 %v4185
      %v4779 = vunpack.c.l.b16 %v4186
      %v4780 = vunpack.c.l.b16 %v4187
      %v4781 = vunpack.c.l.b16 %v4188
      %v4782 = vunpack.c.l.b16 %v4189
      %v4783 = vunpack.c.l.b16 %v4190
      %v4784 = vunpack.c.l.b16 %v4191
      %v4785 = vunpack.c.l.b16 %v4192
      %v4786 = vpack.c.b16 %v4771, %v4770
      %v4787 = vpack.c.b16 %v4773, %v4772
      %v4788 = vpack.c.b16 %v4775, %v4774
      %v4789 = vpack.c.b16 %v4777, %v4776
      %v4790 = vpack.c.b16 %v4779, %v4778
      %v4791 = vpack.c.b16 %v4781, %v4780
      %v4792 = vpack.c.b16 %v4783, %v4782
      %v4793 = vpack.c.b16 %v4785, %v4784
      %4802 = vmatprep.subr.bf16.mxu0 0
      %4803 = vmatpush1.bf16.msra.mxu0 %v4786
      %4804 = vmatprep.subr.bf16.mxu0 0
      %4805 = vmatpush1.bf16.msra.mxu0 %v4787
      %4806 = vmatprep.subr.bf16.mxu0 0
      %4807 = vmatpush1.bf16.msra.mxu0 %v4788
      %4808 = vmatprep.subr.bf16.mxu0 0
      %4809 = vmatpush1.bf16.msra.mxu0 %v4789
      %4810 = vmatprep.subr.bf16.mxu0 0
      %4811 = vmatpush1.bf16.msra.mxu0 %v4790
      %4812 = vmatprep.subr.bf16.mxu0 0
      %4813 = vmatpush1.bf16.msra.mxu0 %v4791
      %4814 = vmatprep.subr.bf16.mxu0 0
      %4815 = vmatpush1.bf16.msra.mxu0 %v4792
      %4816 = vmatprep.subr.bf16.mxu0 0
      %4817 = vmatpush1.bf16.msra.mxu0 %v4793
      %4818 = vmatprep.subr.bf16.mxu0 0
      %4819 = vmatpush1.bf16.msra.mxu0 0
      %4820 = vmatprep.subr.bf16.mxu0 0
      %4821 = vmatpush1.bf16.msra.mxu0 0
      %4822 = vmatprep.subr.bf16.mxu0 0
      %4823 = vmatpush1.bf16.msra.mxu0 0
      %4824 = vmatprep.subr.bf16.mxu0 0
      %4825 = vmatpush1.bf16.msra.mxu0 0
      %4826 = vmatprep.subr.bf16.mxu0 0
      %4827 = vmatpush1.bf16.msra.mxu0 0
      %4828 = vmatprep.subr.bf16.mxu0 0
      %4829 = vmatpush1.bf16.msra.mxu0 0
      %4830 = vmatprep.subr.bf16.mxu0 0
      %4831 = vmatpush1.bf16.msra.mxu0 0
      %4832 = vmatprep.subr.bf16.mxu0 0
      %4833 = vmatpush1.bf16.msra.mxu0 0
      %4834 = vmatprep.mubr.bf16.mxu0 0
      %4835 = vmatmul.mubr.bf16.gmra.mrb[0].mxu0 %v4599
      %v4836 = vpop.f32.mrb[0].mxu0
      %v4837 = vadd.f32 %v4443, %v4836
      %v4838 = vpop.f32.mrb[0].mxu0
      %v4839 = vpop.f32.mrb[0].mxu0
      %v4840 = vadd.f32 %v4446, %v4839
      %v4841 = vpop.f32.mrb[0].mxu0
      %4842 = vmatprep.mubr.bf16.mxu0 0
      %4843 = vmatmul.mubr.bf16.gmra.mrb[0].mxu0 %v4607
      %v4844 = vpop.f32.mrb[0].mxu0
      %v4845 = vadd.f32 %v4451, %v4844
      %v4846 = vpop.f32.mrb[0].mxu0
      %v4847 = vpop.f32.mrb[0].mxu0
      %v4848 = vadd.f32 %v4454, %v4847
      %v4849 = vpop.f32.mrb[0].mxu0
      %4850 = vmatprep.mubr.bf16.mxu0 0
      %4851 = vmatmul.mubr.bf16.gmra.mrb[0].mxu0 %v4615
      %v4852 = vpop.f32.mrb[0].mxu0
      %v4853 = vadd.f32 %v4459, %v4852
      %v4854 = vpop.f32.mrb[0].mxu0
      %v4855 = vpop.f32.mrb[0].mxu0
      %v4856 = vadd.f32 %v4462, %v4855
      %v4857 = vpop.f32.mrb[0].mxu0
      %4858 = vmatprep.mubr.bf16.mxu0 0
      %4859 = vmatmul.mubr.bf16.gmra.mrb[0].mxu0 %v4623
      %v4860 = vpop.f32.mrb[0].mxu0
      %v4861 = vadd.f32 %v4467, %v4860
      %v4862 = vpop.f32.mrb[0].mxu0
      %v4863 = vpop.f32.mrb[0].mxu0
      %v4864 = vadd.f32 %v4470, %v4863
      %v4865 = vpop.f32.mrb[0].mxu0
      %4866 = vmatprep.mubr.bf16.mxu0 0
      %4867 = vmatmul.mubr.bf16.gmra.mrb[0].mxu0 %v4631
      %v4868 = vpop.f32.mrb[0].mxu0
      %v4869 = vadd.f32 %v4475, %v4868
      %v4870 = vpop.f32.mrb[0].mxu0
      %v4871 = vpop.f32.mrb[0].mxu0
      %v4872 = vadd.f32 %v4478, %v4871
      %v4873 = vpop.f32.mrb[0].mxu0
      %4874 = vmatprep.mubr.bf16.mxu0 0
      %4875 = vmatmul.mubr.bf16.gmra.mrb[0].mxu0 %v4639
      %v4876 = vpop.f32.mrb[0].mxu0
      %v4877 = vadd.f32 %v4483, %v4876
      %v4878 = vpop.f32.mrb[0].mxu0
      %v4879 = vpop.f32.mrb[0].mxu0
      %v4880 = vadd.f32 %v4486, %v4879
      %v4881 = vpop.f32.mrb[0].mxu0
      %4882 = vmatprep.mubr.bf16.mxu0 0
      %4883 = vmatmul.mubr.bf16.gmra.mrb[0].mxu0 %v4647
      %v4884 = vpop.f32.mrb[0].mxu0
      %v4885 = vadd.f32 %v4491, %v4884
      %v4886 = vpop.f32.mrb[0].mxu0
      %v4887 = vpop.f32.mrb[0].mxu0
      %v4888 = vadd.f32 %v4494, %v4887
      %v4889 = vpop.f32.mrb[0].mxu0
      %4890 = vmatprep.mubr.bf16.mxu0 0
      %4891 = vmatmul.mubr.bf16.gmra.mrb[0].mxu0 %v4655
      %v4892 = vpop.f32.mrb[0].mxu0
      %v4893 = vadd.f32 %v4499, %v4892
      %v4894 = vpop.f32.mrb[0].mxu0
      %v4895 = vpop.f32.mrb[0].mxu0
      %v4896 = vadd.f32 %v4502, %v4895
      %v4897 = vpop.f32.mrb[0].mxu0
      %4898 = vmatprep.mubr.bf16.mxu0 0
      %4899 = vmatmul.mubr.bf16.gmra.mrb[0].mxu0 %v4663
      %v4900 = vpop.f32.mrb[0].mxu0
      %v4901 = vadd.f32 %v4507, %v4900
      %v4902 = vpop.f32.mrb[0].mxu0
      %v4903 = vpop.f32.mrb[0].mxu0
      %v4904 = vadd.f32 %v4510, %v4903
      %v4905 = vpop.f32.mrb[0].mxu0
      %4906 = vmatprep.mubr.bf16.mxu0 0
      %4907 = vmatmul.mubr.bf16.gmra.mrb[0].mxu0 %v4671
      %v4908 = vpop.f32.mrb[0].mxu0
      %v4909 = vadd.f32 %v4515, %v4908
      %v4910 = vpop.f32.mrb[0].mxu0
      %v4911 = vpop.f32.mrb[0].mxu0
      %v4912 = vadd.f32 %v4518, %v4911
      %v4913 = vpop.f32.mrb[0].mxu0
      %4914 = vmatprep.mubr.bf16.mxu0 0
      %4915 = vmatmul.mubr.bf16.gmra.mrb[0].mxu0 %v4679
      %v4916 = vpop.f32.mrb[0].mxu0
      %v4917 = vadd.f32 %v4523, %v4916
      %v4918 = vpop.f32.mrb[0].mxu0
      %v4919 = vpop.f32.mrb[0].mxu0
      %v4920 = vadd.f32 %v4526, %v4919
      %v4921 = vpop.f32.mrb[0].mxu0
      %4922 = vmatprep.mubr.bf16.mxu0 0
      %4923 = vmatmul.mubr.bf16.gmra.mrb[0].mxu0 %v4687
      %v4924 = vpop.f32.mrb[0].mxu0
      %v4925 = vadd.f32 %v4531, %v4924
      %v4926 = vpop.f32.mrb[0].mxu0
      %v4927 = vpop.f32.mrb[0].mxu0
      %v4928 = vadd.f32 %v4534, %v4927
      %v4929 = vpop.f32.mrb[0].mxu0
      %4930 = vmatprep.mubr.bf16.mxu0 0
      %4931 = vmatmul.mubr.bf16.gmra.mrb[0].mxu0 %v4695
      %v4932 = vpop.f32.mrb[0].mxu0
      %v4933 = vadd.f32 %v4539, %v4932
      %v4934 = vpop.f32.mrb[0].mxu0
      %v4935 = vpop.f32.mrb[0].mxu0
      %v4936 = vadd.f32 %v4542, %v4935
      %v4937 = vpop.f32.mrb[0].mxu0
      %4938 = vmatprep.mubr.bf16.mxu0 0
      %4939 = vmatmul.mubr.bf16.gmra.mrb[0].mxu0 %v4703
      %v4940 = vpop.f32.mrb[0].mxu0
      %v4941 = vadd.f32 %v4547, %v4940
      %v4942 = vpop.f32.mrb[0].mxu0
      %v4943 = vpop.f32.mrb[0].mxu0
      %v4944 = vadd.f32 %v4550, %v4943
      %v4945 = vpop.f32.mrb[0].mxu0
      %4946 = vmatprep.mubr.bf16.mxu0 0
      %4947 = vmatmul.mubr.bf16.gmra.mrb[0].mxu0 %v4711
      %v4948 = vpop.f32.mrb[0].mxu0
      %v4949 = vadd.f32 %v4555, %v4948
      %v4950 = vpop.f32.mrb[0].mxu0
      %v4951 = vpop.f32.mrb[0].mxu0
      %v4952 = vadd.f32 %v4558, %v4951
      %v4953 = vpop.f32.mrb[0].mxu0
      %4954 = vmatprep.mubr.bf16.mxu0 0
      %4955 = vmatmul.mubr.bf16.gmra.mrb[0].mxu0 %v4719
      %v4956 = vpop.f32.mrb[0].mxu0
      %v4957 = vadd.f32 %v4563, %v4956
      %v4958 = vpop.f32.mrb[0].mxu0
      %v4959 = vpop.f32.mrb[0].mxu0
      %v4960 = vadd.f32 %v4566, %v4959
      %v4961 = vpop.f32.mrb[0].mxu0
      %4962 = vmatprep.mubr.bf16.mxu0 0
      %4963 = vmatmul.mubr.bf16.gmra.mrb[0].mxu0 %v4727
      %v4964 = vpop.f32.mrb[0].mxu0
      %v4965 = vadd.f32 %v4571, %v4964
      %v4966 = vpop.f32.mrb[0].mxu0
      %v4967 = vpop.f32.mrb[0].mxu0
      %v4968 = vadd.f32 %v4574, %v4967
      %v4969 = vpop.f32.mrb[0].mxu0
      %4970 = vmatprep.mubr.bf16.mxu0 0
      %4971 = vmatmul.mubr.bf16.gmra.mrb[0].mxu0 %v4735
      %v4972 = vpop.f32.mrb[0].mxu0
      %v4973 = vadd.f32 %v4579, %v4972
      %v4974 = vpop.f32.mrb[0].mxu0
      %v4975 = vpop.f32.mrb[0].mxu0
      %v4976 = vadd.f32 %v4582, %v4975
      %v4977 = vpop.f32.mrb[0].mxu0
      %4978 = vdwg.mxu0
      %v4979 = vld [vmem:[#allocation2 + $0xa8] sm:$0x3]
      %s4980 = scalar_lea.vmem %s3, 512
      %v4981 = vld [vmem:[%s4980] sm:$0xf]
      %v4982 = vld [vmem:[%s4980 + $0x4] sm:$0xf]
      %v4983 = vld [vmem:[%s4980 + $0x8] sm:$0xf]
      %v4984 = vld [vmem:[%s4980 + $0xc] sm:$0xf]
      %v4985 = vld [vmem:[%s4980 + $0x10] sm:$0xf]
      %v4986 = vld [vmem:[%s4980 + $0x14] sm:$0xf]
      %v4987 = vld [vmem:[%s4980 + $0x18] sm:$0xf]
      %v4988 = vld [vmem:[%s4980 + $0x1c] sm:$0xf]
      %v4989 = vld [vmem:[%s4980 + $0x20] sm:$0xf]
      %v4990 = vld [vmem:[%s4980 + $0x24] sm:$0xf]
      %v4991 = vld [vmem:[%s4980 + $0x28] sm:$0xf]
      %v4992 = vld [vmem:[%s4980 + $0x2c] sm:$0xf]
      %v4993 = vld [vmem:[%s4980 + $0x30] sm:$0xf]
      %v4994 = vld [vmem:[%s4980 + $0x34] sm:$0xf]
      %v4995 = vld [vmem:[%s4980 + $0x38] sm:$0xf]
      %v4996 = vld [vmem:[%s4980 + $0x3c] sm:$0xf]
      %v4998 = vunpack.c.l.b16 %v4979
      %v4999 = vpack.c.b16 %v4998, %v4998
      %vm5000 = vsmask.f32 6400
      %v5002 = vshrl.u32 %v4285, 16
      %v5004 = vrot.slane %v5002, 1
      %v5005 = vshll.u32 %v4285, 16
      %v5007 = vrot.slane %v5005, 2
      %v5008 = vor.u32 %v5004, %v5007
      %v5009 = vrot.slane %v4600, 1
      %v5010 = vrot.slane %v4596, 2
      %v5011 = vor.u32 %v5009, %v5010
      %v5012 = vsel %vm5000, %v5008, %v5011
      %v5013 = vrot.slane %v4608, 1
      %v5014 = vrot.slane %v4604, 2
      %v5015 = vor.u32 %v5013, %v5014
      %v5016 = vsel %vm5000, %v5011, %v5015
      %v5017 = vrot.slane %v4616, 1
      %v5018 = vrot.slane %v4612, 2
      %v5019 = vor.u32 %v5017, %v5018
      %v5020 = vsel %vm5000, %v5015, %v5019
      %v5021 = vrot.slane %v4624, 1
      %v5022 = vrot.slane %v4620, 2
      %v5023 = vor.u32 %v5021, %v5022
      %v5024 = vsel %vm5000, %v5019, %v5023
      %v5025 = vrot.slane %v4632, 1
      %v5026 = vrot.slane %v4628, 2
      %v5027 = vor.u32 %v5025, %v5026
      %v5028 = vsel %vm5000, %v5023, %v5027
      %v5029 = vrot.slane %v4640, 1
      %v5030 = vrot.slane %v4636, 2
      %v5031 = vor.u32 %v5029, %v5030
      %v5032 = vsel %vm5000, %v5027, %v5031
      %v5033 = vrot.slane %v4648, 1
      %v5034 = vrot.slane %v4644, 2
      %v5035 = vor.u32 %v5033, %v5034
      %v5036 = vsel %vm5000, %v5031, %v5035
      %v5037 = vrot.slane %v4656, 1
      %v5038 = vrot.slane %v4652, 2
      %v5039 = vor.u32 %v5037, %v5038
      %v5040 = vsel %vm5000, %v5035, %v5039
      %v5041 = vrot.slane %v4664, 1
      %v5042 = vrot.slane %v4660, 2
      %v5043 = vor.u32 %v5041, %v5042
      %v5044 = vsel %vm5000, %v5039, %v5043
      %v5045 = vrot.slane %v4672, 1
      %v5046 = vrot.slane %v4668, 2
      %v5047 = vor.u32 %v5045, %v5046
      %v5048 = vsel %vm5000, %v5043, %v5047
      %v5049 = vrot.slane %v4680, 1
      %v5050 = vrot.slane %v4676, 2
      %v5051 = vor.u32 %v5049, %v5050
      %v5052 = vsel %vm5000, %v5047, %v5051
      %v5053 = vrot.slane %v4688, 1
      %v5054 = vrot.slane %v4684, 2
      %v5055 = vor.u32 %v5053, %v5054
      %v5056 = vsel %vm5000, %v5051, %v5055
      %v5057 = vrot.slane %v4696, 1
      %v5058 = vrot.slane %v4692, 2
      %v5059 = vor.u32 %v5057, %v5058
      %v5060 = vsel %vm5000, %v5055, %v5059
      %v5061 = vrot.slane %v4704, 1
      %v5062 = vrot.slane %v4700, 2
      %v5063 = vor.u32 %v5061, %v5062
      %v5064 = vsel %vm5000, %v5059, %v5063
      %v5065 = vrot.slane %v4712, 1
      %v5066 = vrot.slane %v4708, 2
      %v5067 = vor.u32 %v5065, %v5066
      %v5068 = vsel %vm5000, %v5063, %v5067
      %v5069 = vrot.slane %v4720, 1
      %v5070 = vrot.slane %v4716, 2
      %v5071 = vor.u32 %v5069, %v5070
      %v5072 = vsel %vm5000, %v5067, %v5071
      %v5073 = vrot.slane %v4728, 1
      %v5074 = vrot.slane %v4724, 2
      %v5075 = vor.u32 %v5073, %v5074
      %v5076 = vsel %vm5000, %v5071, %v5075
      %v5078 = vshrl.u32 %v4999, 16
      %v5080 = vrot.slane %v5078, 1
      %v5081 = vshll.u32 %v4999, 16
      %v5083 = vrot.slane %v5081, 2
      %v5084 = vor.u32 %v5080, %v5083
      %v5085 = vsel %vm5000, %v5075, %v5084
      %v5120 = vunpack.c.l.b16 %v4981
      %v5121 = vunpack.c.l.b16 %v4982
      %v5122 = vunpack.c.l.b16 %v4983
      %v5123 = vunpack.c.l.b16 %v4984
      %v5124 = vunpack.c.l.b16 %v4985
      %v5125 = vunpack.c.l.b16 %v4986
      %v5126 = vunpack.c.l.b16 %v4987
      %v5127 = vunpack.c.l.b16 %v4988
      %v5128 = vunpack.c.l.b16 %v4989
      %v5129 = vunpack.c.l.b16 %v4990
      %v5130 = vunpack.c.l.b16 %v4991
      %v5131 = vunpack.c.l.b16 %v4992
      %v5132 = vunpack.c.l.b16 %v4993
      %v5133 = vunpack.c.l.b16 %v4994
      %v5134 = vunpack.c.l.b16 %v4995
      %v5135 = vunpack.c.l.b16 %v4996
      %v5136 = vpack.c.b16 %v5121, %v5120
      %v5137 = vpack.c.b16 %v5123, %v5122
      %v5138 = vpack.c.b16 %v5125, %v5124
      %v5139 = vpack.c.b16 %v5127, %v5126
      %v5140 = vpack.c.b16 %v5129, %v5128
      %v5141 = vpack.c.b16 %v5131, %v5130
      %v5142 = vpack.c.b16 %v5133, %v5132
      %v5143 = vpack.c.b16 %v5135, %v5134
      %5152 = vmatprep.subr.bf16.mxu0 0
      %5153 = vmatpush1.bf16.msra.mxu0 %v5136
      %5154 = vmatprep.subr.bf16.mxu0 0
      %5155 = vmatpush1.bf16.msra.mxu0 %v5137
      %5156 = vmatprep.subr.bf16.mxu0 0
      %5157 = vmatpush1.bf16.msra.mxu0 %v5138
      %5158 = vmatprep.subr.bf16.mxu0 0
      %5159 = vmatpush1.bf16.msra.mxu0 %v5139
      %5160 = vmatprep.subr.bf16.mxu0 0
      %5161 = vmatpush1.bf16.msra.mxu0 %v5140
      %5162 = vmatprep.subr.bf16.mxu0 0
      %5163 = vmatpush1.bf16.msra.mxu0 %v5141
      %5164 = vmatprep.subr.bf16.mxu0 0
      %5165 = vmatpush1.bf16.msra.mxu0 %v5142
      %5166 = vmatprep.subr.bf16.mxu0 0
      %5167 = vmatpush1.bf16.msra.mxu0 %v5143
      %5168 = vmatprep.subr.bf16.mxu0 0
      %5169 = vmatpush1.bf16.msra.mxu0 0
      %5170 = vmatprep.subr.bf16.mxu0 0
      %5171 = vmatpush1.bf16.msra.mxu0 0
      %5172 = vmatprep.subr.bf16.mxu0 0
      %5173 = vmatpush1.bf16.msra.mxu0 0
      %5174 = vmatprep.subr.bf16.mxu0 0
      %5175 = vmatpush1.bf16.msra.mxu0 0
      %5176 = vmatprep.subr.bf16.mxu0 0
      %5177 = vmatpush1.bf16.msra.mxu0 0
      %5178 = vmatprep.subr.bf16.mxu0 0
      %5179 = vmatpush1.bf16.msra.mxu0 0
      %5180 = vmatprep.subr.bf16.mxu0 0
      %5181 = vmatpush1.bf16.msra.mxu0 0
      %5182 = vmatprep.subr.bf16.mxu0 0
      %5183 = vmatpush1.bf16.msra.mxu0 0
      %5184 = vmatprep.mubr.bf16.mxu0 0
      %5185 = vmatmul.mubr.bf16.gmra.mrb[0].mxu0 %v5012
      %v5186 = vpop.f32.mrb[0].mxu0
      %v5187 = vadd.f32 0.0, %v5186
      %v5188 = vpop.f32.mrb[0].mxu0
      %v5189 = vpop.f32.mrb[0].mxu0
      %v5190 = vadd.f32 0.0, %v5189
      %v5191 = vpop.f32.mrb[0].mxu0
      %5192 = vmatprep.mubr.bf16.mxu0 0
      %5193 = vmatmul.mubr.bf16.gmra.mrb[0].mxu0 %v5016
      %v5194 = vpop.f32.mrb[0].mxu0
      %v5195 = vadd.f32 0.0, %v5194
      %v5196 = vpop.f32.mrb[0].mxu0
      %v5197 = vpop.f32.mrb[0].mxu0
      %v5198 = vadd.f32 0.0, %v5197
      %v5199 = vpop.f32.mrb[0].mxu0
      %5200 = vmatprep.mubr.bf16.mxu0 0
      %5201 = vmatmul.mubr.bf16.gmra.mrb[0].mxu0 %v5020
      %v5202 = vpop.f32.mrb[0].mxu0
      %v5203 = vadd.f32 0.0, %v5202
      %v5204 = vpop.f32.mrb[0].mxu0
      %v5205 = vpop.f32.mrb[0].mxu0
      %v5206 = vadd.f32 0.0, %v5205
      %v5207 = vpop.f32.mrb[0].mxu0
      %5208 = vmatprep.mubr.bf16.mxu0 0
      %5209 = vmatmul.mubr.bf16.gmra.mrb[0].mxu0 %v5024
      %v5210 = vpop.f32.mrb[0].mxu0
      %v5211 = vadd.f32 0.0, %v5210
      %v5212 = vpop.f32.mrb[0].mxu0
      %v5213 = vpop.f32.mrb[0].mxu0
      %v5214 = vadd.f32 0.0, %v5213
      %v5215 = vpop.f32.mrb[0].mxu0
      %5216 = vmatprep.mubr.bf16.mxu0 0
      %5217 = vmatmul.mubr.bf16.gmra.mrb[0].mxu0 %v5028
      %v5218 = vpop.f32.mrb[0].mxu0
      %v5219 = vadd.f32 0.0, %v5218
      %v5220 = vpop.f32.mrb[0].mxu0
      %v5221 = vpop.f32.mrb[0].mxu0
      %v5222 = vadd.f32 0.0, %v5221
      %v5223 = vpop.f32.mrb[0].mxu0
      %5224 = vmatprep.mubr.bf16.mxu0 0
      %5225 = vmatmul.mubr.bf16.gmra.mrb[0].mxu0 %v5032
      %v5226 = vpop.f32.mrb[0].mxu0
      %v5227 = vadd.f32 0.0, %v5226
      %v5228 = vpop.f32.mrb[0].mxu0
      %v5229 = vpop.f32.mrb[0].mxu0
      %v5230 = vadd.f32 0.0, %v5229
      %v5231 = vpop.f32.mrb[0].mxu0
      %5232 = vmatprep.mubr.bf16.mxu0 0
      %5233 = vmatmul.mubr.bf16.gmra.mrb[0].mxu0 %v5036
      %v5234 = vpop.f32.mrb[0].mxu0
      %v5235 = vadd.f32 0.0, %v5234
      %v5236 = vpop.f32.mrb[0].mxu0
      %v5237 = vpop.f32.mrb[0].mxu0
      %v5238 = vadd.f32 0.0, %v5237
      %v5239 = vpop.f32.mrb[0].mxu0
      %5240 = vmatprep.mubr.bf16.mxu0 0
      %5241 = vmatmul.mubr.bf16.gmra.mrb[0].mxu0 %v5040
      %v5242 = vpop.f32.mrb[0].mxu0
      %v5243 = vadd.f32 0.0, %v5242
      %v5244 = vpop.f32.mrb[0].mxu0
      %v5245 = vpop.f32.mrb[0].mxu0
      %v5246 = vadd.f32 0.0, %v5245
      %v5247 = vpop.f32.mrb[0].mxu0
      %5248 = vmatprep.mubr.bf16.mxu0 0
      %5249 = vmatmul.mubr.bf16.gmra.mrb[0].mxu0 %v5044
      %v5250 = vpop.f32.mrb[0].mxu0
      %v5251 = vadd.f32 0.0, %v5250
      %v5252 = vpop.f32.mrb[0].mxu0
      %v5253 = vpop.f32.mrb[0].mxu0
      %v5254 = vadd.f32 0.0, %v5253
      %v5255 = vpop.f32.mrb[0].mxu0
      %5256 = vmatprep.mubr.bf16.mxu0 0
      %5257 = vmatmul.mubr.bf16.gmra.mrb[0].mxu0 %v5048
      %v5258 = vpop.f32.mrb[0].mxu0
      %v5259 = vadd.f32 0.0, %v5258
      %v5260 = vpop.f32.mrb[0].mxu0
      %v5261 = vpop.f32.mrb[0].mxu0
      %v5262 = vadd.f32 0.0, %v5261
      %v5263 = vpop.f32.mrb[0].mxu0
      %5264 = vmatprep.mubr.bf16.mxu0 0
      %5265 = vmatmul.mubr.bf16.gmra.mrb[0].mxu0 %v5052
      %v5266 = vpop.f32.mrb[0].mxu0
      %v5267 = vadd.f32 0.0, %v5266
      %v5268 = vpop.f32.mrb[0].mxu0
      %v5269 = vpop.f32.mrb[0].mxu0
      %v5270 = vadd.f32 0.0, %v5269
      %v5271 = vpop.f32.mrb[0].mxu0
      %5272 = vmatprep.mubr.bf16.mxu0 0
      %5273 = vmatmul.mubr.bf16.gmra.mrb[0].mxu0 %v5056
      %v5274 = vpop.f32.mrb[0].mxu0
      %v5275 = vadd.f32 0.0, %v5274
      %v5276 = vpop.f32.mrb[0].mxu0
      %v5277 = vpop.f32.mrb[0].mxu0
      %v5278 = vadd.f32 0.0, %v5277
      %v5279 = vpop.f32.mrb[0].mxu0
      %5280 = vmatprep.mubr.bf16.mxu0 0
      %5281 = vmatmul.mubr.bf16.gmra.mrb[0].mxu0 %v5060
      %v5282 = vpop.f32.mrb[0].mxu0
      %v5283 = vadd.f32 0.0, %v5282
      %v5284 = vpop.f32.mrb[0].mxu0
      %v5285 = vpop.f32.mrb[0].mxu0
      %v5286 = vadd.f32 0.0, %v5285
      %v5287 = vpop.f32.mrb[0].mxu0
      %5288 = vmatprep.mubr.bf16.mxu0 0
      %5289 = vmatmul.mubr.bf16.gmra.mrb[0].mxu0 %v5064
      %v5290 = vpop.f32.mrb[0].mxu0
      %v5291 = vadd.f32 0.0, %v5290
      %v5292 = vpop.f32.mrb[0].mxu0
      %v5293 = vpop.f32.mrb[0].mxu0
      %v5294 = vadd.f32 0.0, %v5293
      %v5295 = vpop.f32.mrb[0].mxu0
      %5296 = vmatprep.mubr.bf16.mxu0 0
      %5297 = vmatmul.mubr.bf16.gmra.mrb[0].mxu0 %v5068
      %v5298 = vpop.f32.mrb[0].mxu0
      %v5299 = vadd.f32 0.0, %v5298
      %v5300 = vpop.f32.mrb[0].mxu0
      %v5301 = vpop.f32.mrb[0].mxu0
      %v5302 = vadd.f32 0.0, %v5301
      %v5303 = vpop.f32.mrb[0].mxu0
      %5304 = vmatprep.mubr.bf16.mxu0 0
      %5305 = vmatmul.mubr.bf16.gmra.mrb[0].mxu0 %v5072
      %v5306 = vpop.f32.mrb[0].mxu0
      %v5307 = vadd.f32 0.0, %v5306
      %v5308 = vpop.f32.mrb[0].mxu0
      %v5309 = vpop.f32.mrb[0].mxu0
      %v5310 = vadd.f32 0.0, %v5309
      %v5311 = vpop.f32.mrb[0].mxu0
      %5312 = vmatprep.mubr.bf16.mxu0 0
      %5313 = vmatmul.mubr.bf16.gmra.mrb[0].mxu0 %v5076
      %v5314 = vpop.f32.mrb[0].mxu0
      %v5315 = vadd.f32 0.0, %v5314
      %v5316 = vpop.f32.mrb[0].mxu0
      %v5317 = vpop.f32.mrb[0].mxu0
      %v5318 = vadd.f32 0.0, %v5317
      %v5319 = vpop.f32.mrb[0].mxu0
      %5320 = vmatprep.mubr.bf16.mxu0 0
      %5321 = vmatmul.mubr.bf16.gmra.mrb[0].mxu0 %v5085
      %v5322 = vpop.f32.mrb[0].mxu0
      %v5323 = vadd.f32 0.0, %v5322
      %v5324 = vpop.f32.mrb[0].mxu0
      %v5325 = vpop.f32.mrb[0].mxu0
      %v5326 = vadd.f32 0.0, %v5325
      %v5327 = vpop.f32.mrb[0].mxu0
      %5328 = vdwg.mxu0
      %v5329 = vadd.f32 %v4837, %v5187
      %v5330 = vadd.f32 %v4840, %v5190
      %v5331 = vadd.f32 %v4845, %v5195
      %v5332 = vadd.f32 %v4848, %v5198
      %v5333 = vadd.f32 %v4853, %v5203
      %v5334 = vadd.f32 %v4856, %v5206
      %v5335 = vadd.f32 %v4861, %v5211
      %v5336 = vadd.f32 %v4864, %v5214
      %v5337 = vadd.f32 %v4869, %v5219
      %v5338 = vadd.f32 %v4872, %v5222
      %v5339 = vadd.f32 %v4877, %v5227
      %v5340 = vadd.f32 %v4880, %v5230
      %v5341 = vadd.f32 %v4885, %v5235
      %v5342 = vadd.f32 %v4888, %v5238
      %v5343 = vadd.f32 %v4893, %v5243
      %v5344 = vadd.f32 %v4896, %v5246
      %v5345 = vadd.f32 %v4901, %v5251
      %v5346 = vadd.f32 %v4904, %v5254
      %v5347 = vadd.f32 %v4909, %v5259
      %v5348 = vadd.f32 %v4912, %v5262
      %v5349 = vadd.f32 %v4917, %v5267
      %v5350 = vadd.f32 %v4920, %v5270
      %v5351 = vadd.f32 %v4925, %v5275
      %v5352 = vadd.f32 %v4928, %v5278
      %v5353 = vadd.f32 %v4933, %v5283
      %v5354 = vadd.f32 %v4936, %v5286
      %v5355 = vadd.f32 %v4941, %v5291
      %v5356 = vadd.f32 %v4944, %v5294
      %v5357 = vadd.f32 %v4949, %v5299
      %v5358 = vadd.f32 %v4952, %v5302
      %v5359 = vadd.f32 %v4957, %v5307
      %v5360 = vadd.f32 %v4960, %v5310
      %v5361 = vadd.f32 %v4965, %v5315
      %v5362 = vadd.f32 %v4968, %v5318
      %v5363 = vadd.f32 %v4973, %v5323
      %v5364 = vadd.f32 %v4976, %v5326
      %v5365 = vld [vmem:[#allocation3] sm:$0xff]
      %v5366 = vld [vmem:[#allocation3 + $0x8] sm:$0xff]
      %v5367 = vld [vmem:[#allocation3 + $0x10] sm:$0xff]
      %v5368 = vld [vmem:[#allocation3 + $0x18] sm:$0xff]
      %v5369 = vld [vmem:[#allocation3 + $0x20] sm:$0xff]
      %v5370 = vld [vmem:[#allocation3 + $0x28] sm:$0xff]
      %v5371 = vld [vmem:[#allocation3 + $0x30] sm:$0xff]
      %v5372 = vld [vmem:[#allocation3 + $0x38] sm:$0xff]
      %v5373 = vld [vmem:[#allocation3 + $0x40] sm:$0xff]
      %v5374 = vld [vmem:[#allocation3 + $0x48] sm:$0xff]
      %v5375 = vld [vmem:[#allocation3 + $0x50] sm:$0xff]
      %v5376 = vld [vmem:[#allocation3 + $0x58] sm:$0xff]
      %v5377 = vld [vmem:[#allocation3 + $0x60] sm:$0xff]
      %v5378 = vld [vmem:[#allocation3 + $0x68] sm:$0xff]
      %v5379 = vld [vmem:[#allocation3 + $0x70] sm:$0xff]
      %v5380 = vld [vmem:[#allocation3 + $0x78] sm:$0xff]
      %v5381 = vld [vmem:[#allocation3 + $0x80] sm:$0xff]
      %v5382 = vld [vmem:[#allocation3 + $0x88] sm:$0xff]
      %v5383 = vld [vmem:[#allocation3 + $0x90] sm:$0xff]
      %v5384 = vld [vmem:[#allocation3 + $0x98] sm:$0xff]
      %v5385 = vld [vmem:[#allocation3 + $0xa0] sm:$0xff]
      %v5386 = vld [vmem:[#allocation3 + $0xa8] sm:$0xff]
      %v5387 = vld [vmem:[#allocation3 + $0xb0] sm:$0xff]
      %v5388 = vld [vmem:[#allocation3 + $0xb8] sm:$0xff]
      %v5389 = vld [vmem:[#allocation3 + $0xc0] sm:$0xff]
      %v5390 = vld [vmem:[#allocation3 + $0xc8] sm:$0xff]
      %v5391 = vld [vmem:[#allocation3 + $0xd0] sm:$0xff]
      %v5392 = vld [vmem:[#allocation3 + $0xd8] sm:$0xff]
      %v5393 = vld [vmem:[#allocation3 + $0xe0] sm:$0xff]
      %v5394 = vld [vmem:[#allocation3 + $0xe8] sm:$0xff]
      %v5395 = vld [vmem:[#allocation3 + $0xf0] sm:$0xff]
      %v5396 = vld [vmem:[#allocation3 + $0xf8] sm:$0xff]
      %v5397 = vld [vmem:[#allocation3 + $0x100] sm:$0xff]
      %v5398 = vld [vmem:[#allocation3 + $0x108] sm:$0xff]
      %v5399 = vld [vmem:[#allocation3 + $0x110] sm:$0xff]
      %v5400 = vld [vmem:[#allocation3 + $0x118] sm:$0xff]
      %v5401 = vadd.f32 %v5365, %v5329
      %v5402 = vadd.f32 %v5366, %v5330
      %v5403 = vadd.f32 %v5367, %v5331
      %v5404 = vadd.f32 %v5368, %v5332
      %v5405 = vadd.f32 %v5369, %v5333
      %v5406 = vadd.f32 %v5370, %v5334
      %v5407 = vadd.f32 %v5371, %v5335
      %v5408 = vadd.f32 %v5372, %v5336
      %v5409 = vadd.f32 %v5373, %v5337
      %v5410 = vadd.f32 %v5374, %v5338
      %v5411 = vadd.f32 %v5375, %v5339
      %v5412 = vadd.f32 %v5376, %v5340
      %v5413 = vadd.f32 %v5377, %v5341
      %v5414 = vadd.f32 %v5378, %v5342
      %v5415 = vadd.f32 %v5379, %v5343
      %v5416 = vadd.f32 %v5380, %v5344
      %v5417 = vadd.f32 %v5381, %v5345
      %v5418 = vadd.f32 %v5382, %v5346
      %v5419 = vadd.f32 %v5383, %v5347
      %v5420 = vadd.f32 %v5384, %v5348
      %v5421 = vadd.f32 %v5385, %v5349
      %v5422 = vadd.f32 %v5386, %v5350
      %v5423 = vadd.f32 %v5387, %v5351
      %v5424 = vadd.f32 %v5388, %v5352
      %v5425 = vadd.f32 %v5389, %v5353
      %v5426 = vadd.f32 %v5390, %v5354
      %v5427 = vadd.f32 %v5391, %v5355
      %v5428 = vadd.f32 %v5392, %v5356
      %v5429 = vadd.f32 %v5393, %v5357
      %v5430 = vadd.f32 %v5394, %v5358
      %v5431 = vadd.f32 %v5395, %v5359
      %v5432 = vadd.f32 %v5396, %v5360
      %v5433 = vadd.f32 %v5397, %v5361
      %v5434 = vadd.f32 %v5398, %v5362
      %v5435 = vadd.f32 %v5399, %v5363
      %v5436 = vadd.f32 %v5400, %v5364
      %5437 = vst [vmem:[#allocation3] sm:$0xff] %v5401
      %5438 = vst [vmem:[#allocation3 + $0x8] sm:$0xff] %v5402
      %5439 = vst [vmem:[#allocation3 + $0x10] sm:$0xff] %v5403
      %5440 = vst [vmem:[#allocation3 + $0x18] sm:$0xff] %v5404
      %5441 = vst [vmem:[#allocation3 + $0x20] sm:$0xff] %v5405
      %5442 = vst [vmem:[#allocation3 + $0x28] sm:$0xff] %v5406
      %5443 = vst [vmem:[#allocation3 + $0x30] sm:$0xff] %v5407
      %5444 = vst [vmem:[#allocation3 + $0x38] sm:$0xff] %v5408
      %5445 = vst [vmem:[#allocation3 + $0x40] sm:$0xff] %v5409
      %5446 = vst [vmem:[#allocation3 + $0x48] sm:$0xff] %v5410
      %5447 = vst [vmem:[#allocation3 + $0x50] sm:$0xff] %v5411
      %5448 = vst [vmem:[#allocation3 + $0x58] sm:$0xff] %v5412
      %5449 = vst [vmem:[#allocation3 + $0x60] sm:$0xff] %v5413
      %5450 = vst [vmem:[#allocation3 + $0x68] sm:$0xff] %v5414
      %5451 = vst [vmem:[#allocation3 + $0x70] sm:$0xff] %v5415
      %5452 = vst [vmem:[#allocation3 + $0x78] sm:$0xff] %v5416
      %5453 = vst [vmem:[#allocation3 + $0x80] sm:$0xff] %v5417
      %5454 = vst [vmem:[#allocation3 + $0x88] sm:$0xff] %v5418
      %5455 = vst [vmem:[#allocation3 + $0x90] sm:$0xff] %v5419
      %5456 = vst [vmem:[#allocation3 + $0x98] sm:$0xff] %v5420
      %5457 = vst [vmem:[#allocation3 + $0xa0] sm:$0xff] %v5421
      %5458 = vst [vmem:[#allocation3 + $0xa8] sm:$0xff] %v5422
      %5459 = vst [vmem:[#allocation3 + $0xb0] sm:$0xff] %v5423
      %5460 = vst [vmem:[#allocation3 + $0xb8] sm:$0xff] %v5424
      %5461 = vst [vmem:[#allocation3 + $0xc0] sm:$0xff] %v5425
      %5462 = vst [vmem:[#allocation3 + $0xc8] sm:$0xff] %v5426
      %5463 = vst [vmem:[#allocation3 + $0xd0] sm:$0xff] %v5427
      %5464 = vst [vmem:[#allocation3 + $0xd8] sm:$0xff] %v5428
      %5465 = vst [vmem:[#allocation3 + $0xe0] sm:$0xff] %v5429
      %5466 = vst [vmem:[#allocation3 + $0xe8] sm:$0xff] %v5430
      %5467 = vst [vmem:[#allocation3 + $0xf0] sm:$0xff] %v5431
      %5468 = vst [vmem:[#allocation3 + $0xf8] sm:$0xff] %v5432
      %5469 = vst [vmem:[#allocation3 + $0x100] sm:$0xff] %v5433
      %5470 = vst [vmem:[#allocation3 + $0x108] sm:$0xff] %v5434
      %5471 = vst [vmem:[#allocation3 + $0x110] sm:$0xff] %v5435
      %5472 = vst [vmem:[#allocation3 + $0x118] sm:$0xff] %v5436
      %v5473 = vld [vmem:[#allocation3] sm:$0xff]
      %v5474 = vld [vmem:[#allocation3 + $0x8] sm:$0xff]
      %v5475 = vld [vmem:[#allocation3 + $0x10] sm:$0xff]
      %v5476 = vld [vmem:[#allocation3 + $0x18] sm:$0xff]
      %v5477 = vld [vmem:[#allocation3 + $0x20] sm:$0xff]
      %v5478 = vld [vmem:[#allocation3 + $0x28] sm:$0xff]
      %v5479 = vld [vmem:[#allocation3 + $0x30] sm:$0xff]
      %v5480 = vld [vmem:[#allocation3 + $0x38] sm:$0xff]
      %v5481 = vld [vmem:[#allocation3 + $0x40] sm:$0xff]
      %v5482 = vld [vmem:[#allocation3 + $0x48] sm:$0xff]
      %v5483 = vld [vmem:[#allocation3 + $0x50] sm:$0xff]
      %v5484 = vld [vmem:[#allocation3 + $0x58] sm:$0xff]
      %v5485 = vld [vmem:[#allocation3 + $0x60] sm:$0xff]
      %v5486 = vld [vmem:[#allocation3 + $0x68] sm:$0xff]
      %v5487 = vld [vmem:[#allocation3 + $0x70] sm:$0xff]
      %v5488 = vld [vmem:[#allocation3 + $0x78] sm:$0xff]
      %v5489 = vld [vmem:[#allocation3 + $0x80] sm:$0xff]
      %v5490 = vld [vmem:[#allocation3 + $0x88] sm:$0xff]
      %v5491 = vld [vmem:[#allocation3 + $0x90] sm:$0xff]
      %v5492 = vld [vmem:[#allocation3 + $0x98] sm:$0xff]
      %v5493 = vld [vmem:[#allocation3 + $0xa0] sm:$0xff]
      %v5494 = vld [vmem:[#allocation3 + $0xa8] sm:$0xff]
      %v5495 = vld [vmem:[#allocation3 + $0xb0] sm:$0xff]
      %v5496 = vld [vmem:[#allocation3 + $0xb8] sm:$0xff]
      %v5497 = vld [vmem:[#allocation3 + $0xc0] sm:$0xff]
      %v5498 = vld [vmem:[#allocation3 + $0xc8] sm:$0xff]
      %v5499 = vld [vmem:[#allocation3 + $0xd0] sm:$0xff]
      %v5500 = vld [vmem:[#allocation3 + $0xd8] sm:$0xff]
      %v5501 = vld [vmem:[#allocation3 + $0xe0] sm:$0xff]
      %v5502 = vld [vmem:[#allocation3 + $0xe8] sm:$0xff]
      %v5503 = vld [vmem:[#allocation3 + $0xf0] sm:$0xff]
      %v5504 = vld [vmem:[#allocation3 + $0xf8] sm:$0xff]
      %v5505 = vld [vmem:[#allocation3 + $0x100] sm:$0xff]
      %v5506 = vld [vmem:[#allocation3 + $0x108] sm:$0xff]
      %v5507 = vld [vmem:[#allocation3 + $0x110] sm:$0xff]
      %v5508 = vld [vmem:[#allocation3 + $0x118] sm:$0xff]
      %v5509 = vld [vmem:[%s7] sm:$0x1]
      %v5511 = vlaneseq
      %v5512 = vshrl.u32 %v5511, 7
      %v5513 = vsub.s32 0, %v5512
      %v5514 = vrot.slane %v5509, %v5513
      %v5516 = vmul.f32 %v5473, %v5514
      %v5517 = vmul.f32 %v5474, %v5514
      %v5518 = vmul.f32 %v5475, %v5514
      %v5519 = vmul.f32 %v5476, %v5514
      %v5520 = vmul.f32 %v5477, %v5514
      %v5521 = vmul.f32 %v5478, %v5514
      %v5522 = vmul.f32 %v5479, %v5514
      %v5523 = vmul.f32 %v5480, %v5514
      %v5524 = vmul.f32 %v5481, %v5514
      %v5525 = vmul.f32 %v5482, %v5514
      %v5526 = vmul.f32 %v5483, %v5514
      %v5527 = vmul.f32 %v5484, %v5514
      %v5528 = vmul.f32 %v5485, %v5514
      %v5529 = vmul.f32 %v5486, %v5514
      %v5530 = vmul.f32 %v5487, %v5514
      %v5531 = vmul.f32 %v5488, %v5514
      %v5532 = vmul.f32 %v5489, %v5514
      %v5533 = vmul.f32 %v5490, %v5514
      %v5534 = vmul.f32 %v5491, %v5514
      %v5535 = vmul.f32 %v5492, %v5514
      %v5536 = vmul.f32 %v5493, %v5514
      %v5537 = vmul.f32 %v5494, %v5514
      %v5538 = vmul.f32 %v5495, %v5514
      %v5539 = vmul.f32 %v5496, %v5514
      %v5540 = vmul.f32 %v5497, %v5514
      %v5541 = vmul.f32 %v5498, %v5514
      %v5542 = vmul.f32 %v5499, %v5514
      %v5543 = vmul.f32 %v5500, %v5514
      %v5544 = vmul.f32 %v5501, %v5514
      %v5545 = vmul.f32 %v5502, %v5514
      %v5546 = vmul.f32 %v5503, %v5514
      %v5547 = vmul.f32 %v5504, %v5514
      %v5548 = vmul.f32 %v5505, %v5514
      %v5549 = vmul.f32 %v5506, %v5514
      %v5550 = vmul.f32 %v5507, %v5514
      %v5551 = vmul.f32 %v5508, %v5514
      %v5552 = vld [vmem:[%s8] sm:$0x1]
      %v5554 = vlaneseq
      %v5555 = vshrl.u32 %v5554, 7
      %v5556 = vsub.s32 0, %v5555
      %v5557 = vrot.slane %v5552, %v5556
      %v5559 = vadd.f32 %v5516, %v5557
      %v5560 = vadd.f32 %v5517, %v5557
      %v5561 = vadd.f32 %v5518, %v5557
      %v5562 = vadd.f32 %v5519, %v5557
      %v5563 = vadd.f32 %v5520, %v5557
      %v5564 = vadd.f32 %v5521, %v5557
      %v5565 = vadd.f32 %v5522, %v5557
      %v5566 = vadd.f32 %v5523, %v5557
      %v5567 = vadd.f32 %v5524, %v5557
      %v5568 = vadd.f32 %v5525, %v5557
      %v5569 = vadd.f32 %v5526, %v5557
      %v5570 = vadd.f32 %v5527, %v5557
      %v5571 = vadd.f32 %v5528, %v5557
      %v5572 = vadd.f32 %v5529, %v5557
      %v5573 = vadd.f32 %v5530, %v5557
      %v5574 = vadd.f32 %v5531, %v5557
      %v5575 = vadd.f32 %v5532, %v5557
      %v5576 = vadd.f32 %v5533, %v5557
      %v5577 = vadd.f32 %v5534, %v5557
      %v5578 = vadd.f32 %v5535, %v5557
      %v5579 = vadd.f32 %v5536, %v5557
      %v5580 = vadd.f32 %v5537, %v5557
      %v5581 = vadd.f32 %v5538, %v5557
      %v5582 = vadd.f32 %v5539, %v5557
      %v5583 = vadd.f32 %v5540, %v5557
      %v5584 = vadd.f32 %v5541, %v5557
      %v5585 = vadd.f32 %v5542, %v5557
      %v5586 = vadd.f32 %v5543, %v5557
      %v5587 = vadd.f32 %v5544, %v5557
      %v5588 = vadd.f32 %v5545, %v5557
      %v5589 = vadd.f32 %v5546, %v5557
      %v5590 = vadd.f32 %v5547, %v5557
      %v5591 = vadd.f32 %v5548, %v5557
      %v5592 = vadd.f32 %v5549, %v5557
      %v5593 = vadd.f32 %v5550, %v5557
      %v5594 = vadd.f32 %v5551, %v5557
      %v5595 = vmax.f32 %v5559, 0.0
      %v5596 = vmax.f32 %v5560, 0.0
      %v5597 = vmax.f32 %v5561, 0.0
      %v5598 = vmax.f32 %v5562, 0.0
      %v5599 = vmax.f32 %v5563, 0.0
      %v5600 = vmax.f32 %v5564, 0.0
      %v5601 = vmax.f32 %v5565, 0.0
      %v5602 = vmax.f32 %v5566, 0.0
      %v5603 = vmax.f32 %v5567, 0.0
      %v5604 = vmax.f32 %v5568, 0.0
      %v5605 = vmax.f32 %v5569, 0.0
      %v5606 = vmax.f32 %v5570, 0.0
      %v5607 = vmax.f32 %v5571, 0.0
      %v5608 = vmax.f32 %v5572, 0.0
      %v5609 = vmax.f32 %v5573, 0.0
      %v5610 = vmax.f32 %v5574, 0.0
      %v5611 = vmax.f32 %v5575, 0.0
      %v5612 = vmax.f32 %v5576, 0.0
      %v5613 = vmax.f32 %v5577, 0.0
      %v5614 = vmax.f32 %v5578, 0.0
      %v5615 = vmax.f32 %v5579, 0.0
      %v5616 = vmax.f32 %v5580, 0.0
      %v5617 = vmax.f32 %v5581, 0.0
      %v5618 = vmax.f32 %v5582, 0.0
      %v5619 = vmax.f32 %v5583, 0.0
      %v5620 = vmax.f32 %v5584, 0.0
      %v5621 = vmax.f32 %v5585, 0.0
      %v5622 = vmax.f32 %v5586, 0.0
      %v5623 = vmax.f32 %v5587, 0.0
      %v5624 = vmax.f32 %v5588, 0.0
      %v5625 = vmax.f32 %v5589, 0.0
      %v5626 = vmax.f32 %v5590, 0.0
      %v5627 = vmax.f32 %v5591, 0.0
      %v5628 = vmax.f32 %v5592, 0.0
      %v5629 = vmax.f32 %v5593, 0.0
      %v5630 = vmax.f32 %v5594, 0.0
      %v5631 = vpack.c.bf16 %v5596, %v5595
      %v5632 = vpack.c.bf16 %v5598, %v5597
      %v5633 = vpack.c.bf16 %v5600, %v5599
      %v5634 = vpack.c.bf16 %v5602, %v5601
      %v5635 = vpack.c.bf16 %v5604, %v5603
      %v5636 = vpack.c.bf16 %v5606, %v5605
      %v5637 = vpack.c.bf16 %v5608, %v5607
      %v5638 = vpack.c.bf16 %v5610, %v5609
      %v5639 = vpack.c.bf16 %v5612, %v5611
      %v5640 = vpack.c.bf16 %v5614, %v5613
      %v5641 = vpack.c.bf16 %v5616, %v5615
      %v5642 = vpack.c.bf16 %v5618, %v5617
      %v5643 = vpack.c.bf16 %v5620, %v5619
      %v5644 = vpack.c.bf16 %v5622, %v5621
      %v5645 = vpack.c.bf16 %v5624, %v5623
      %v5646 = vpack.c.bf16 %v5626, %v5625
      %v5647 = vpack.c.bf16 %v5628, %v5627
      %v5648 = vpack.c.bf16 %v5630, %v5629
      %v5649 = vld [vmem:[%s4] sm:$0xf]
      %v5650 = vld [vmem:[%s4 + $0x4] sm:$0xf]
      %v5651 = vld [vmem:[%s4 + $0x8] sm:$0xf]
      %v5652 = vld [vmem:[%s4 + $0xc] sm:$0xf]
      %v5653 = vld [vmem:[%s4 + $0x10] sm:$0xf]
      %v5654 = vld [vmem:[%s4 + $0x14] sm:$0xf]
      %v5655 = vld [vmem:[%s4 + $0x18] sm:$0xf]
      %v5656 = vld [vmem:[%s4 + $0x1c] sm:$0xf]
      %v5657 = vld [vmem:[%s4 + $0x20] sm:$0xf]
      %v5658 = vld [vmem:[%s4 + $0x24] sm:$0xf]
      %v5659 = vld [vmem:[%s4 + $0x28] sm:$0xf]
      %v5660 = vld [vmem:[%s4 + $0x2c] sm:$0xf]
      %v5661 = vld [vmem:[%s4 + $0x30] sm:$0xf]
      %v5662 = vld [vmem:[%s4 + $0x34] sm:$0xf]
      %v5663 = vld [vmem:[%s4 + $0x38] sm:$0xf]
      %v5664 = vld [vmem:[%s4 + $0x3c] sm:$0xf]
      %v5681 = vunpack.c.l.b16 %v5649
      %v5682 = vunpack.c.l.b16 %v5650
      %v5683 = vunpack.c.l.b16 %v5651
      %v5684 = vunpack.c.l.b16 %v5652
      %v5685 = vunpack.c.l.b16 %v5653
      %v5686 = vunpack.c.l.b16 %v5654
      %v5687 = vunpack.c.l.b16 %v5655
      %v5688 = vunpack.c.l.b16 %v5656
      %v5689 = vunpack.c.l.b16 %v5657
      %v5690 = vunpack.c.l.b16 %v5658
      %v5691 = vunpack.c.l.b16 %v5659
      %v5692 = vunpack.c.l.b16 %v5660
      %v5693 = vunpack.c.l.b16 %v5661
      %v5694 = vunpack.c.l.b16 %v5662
      %v5695 = vunpack.c.l.b16 %v5663
      %v5696 = vunpack.c.l.b16 %v5664
      %v5697 = vpack.c.b16 %v5682, %v5681
      %v5698 = vpack.c.b16 %v5684, %v5683
      %v5699 = vpack.c.b16 %v5686, %v5685
      %v5700 = vpack.c.b16 %v5688, %v5687
      %v5701 = vpack.c.b16 %v5690, %v5689
      %v5702 = vpack.c.b16 %v5692, %v5691
      %v5703 = vpack.c.b16 %v5694, %v5693
      %v5704 = vpack.c.b16 %v5696, %v5695
      %5713 = vmatprep.subr.bf16.mxu0 0
      %5714 = vmatpush1.bf16.msra.mxu0 %v5697
      %5715 = vmatprep.subr.bf16.mxu0 0
      %5716 = vmatpush1.bf16.msra.mxu0 %v5698
      %5717 = vmatprep.subr.bf16.mxu0 0
      %5718 = vmatpush1.bf16.msra.mxu0 %v5699
      %5719 = vmatprep.subr.bf16.mxu0 0
      %5720 = vmatpush1.bf16.msra.mxu0 %v5700
      %5721 = vmatprep.subr.bf16.mxu0 0
      %5722 = vmatpush1.bf16.msra.mxu0 %v5701
      %5723 = vmatprep.subr.bf16.mxu0 0
      %5724 = vmatpush1.bf16.msra.mxu0 %v5702
      %5725 = vmatprep.subr.bf16.mxu0 0
      %5726 = vmatpush1.bf16.msra.mxu0 %v5703
      %5727 = vmatprep.subr.bf16.mxu0 0
      %5728 = vmatpush1.bf16.msra.mxu0 %v5704
      %5729 = vmatprep.subr.bf16.mxu0 0
      %5730 = vmatpush1.bf16.msra.mxu0 0
      %5731 = vmatprep.subr.bf16.mxu0 0
      %5732 = vmatpush1.bf16.msra.mxu0 0
      %5733 = vmatprep.subr.bf16.mxu0 0
      %5734 = vmatpush1.bf16.msra.mxu0 0
      %5735 = vmatprep.subr.bf16.mxu0 0
      %5736 = vmatpush1.bf16.msra.mxu0 0
      %5737 = vmatprep.subr.bf16.mxu0 0
      %5738 = vmatpush1.bf16.msra.mxu0 0
      %5739 = vmatprep.subr.bf16.mxu0 0
      %5740 = vmatpush1.bf16.msra.mxu0 0
      %5741 = vmatprep.subr.bf16.mxu0 0
      %5742 = vmatpush1.bf16.msra.mxu0 0
      %5743 = vmatprep.subr.bf16.mxu0 0
      %5744 = vmatpush1.bf16.msra.mxu0 0
      %5745 = vmatprep.mubr.bf16.mxu0 0
      %5746 = vmatmul.mubr.bf16.gmra.mrb[0].mxu0 %v5631
      %v5747 = vpop.f32.mrb[0].mxu0
      %v5748 = vadd.f32 0.0, %v5747
      %v5749 = vpop.f32.mrb[0].mxu0
      %v5750 = vpop.f32.mrb[0].mxu0
      %v5751 = vadd.f32 0.0, %v5750
      %v5752 = vpop.f32.mrb[0].mxu0
      %5753 = vmatprep.mubr.bf16.mxu0 0
      %5754 = vmatmul.mubr.bf16.gmra.mrb[0].mxu0 %v5632
      %v5755 = vpop.f32.mrb[0].mxu0
      %v5756 = vadd.f32 0.0, %v5755
      %v5757 = vpop.f32.mrb[0].mxu0
      %v5758 = vpop.f32.mrb[0].mxu0
      %v5759 = vadd.f32 0.0, %v5758
      %v5760 = vpop.f32.mrb[0].mxu0
      %5761 = vmatprep.mubr.bf16.mxu0 0
      %5762 = vmatmul.mubr.bf16.gmra.mrb[0].mxu0 %v5633
      %v5763 = vpop.f32.mrb[0].mxu0
      %v5764 = vadd.f32 0.0, %v5763
      %v5765 = vpop.f32.mrb[0].mxu0
      %v5766 = vpop.f32.mrb[0].mxu0
      %v5767 = vadd.f32 0.0, %v5766
      %v5768 = vpop.f32.mrb[0].mxu0
      %5769 = vmatprep.mubr.bf16.mxu0 0
      %5770 = vmatmul.mubr.bf16.gmra.mrb[0].mxu0 %v5634
      %v5771 = vpop.f32.mrb[0].mxu0
      %v5772 = vadd.f32 0.0, %v5771
      %v5773 = vpop.f32.mrb[0].mxu0
      %v5774 = vpop.f32.mrb[0].mxu0
      %v5775 = vadd.f32 0.0, %v5774
      %v5776 = vpop.f32.mrb[0].mxu0
      %5777 = vmatprep.mubr.bf16.mxu0 0
      %5778 = vmatmul.mubr.bf16.gmra.mrb[0].mxu0 %v5635
      %v5779 = vpop.f32.mrb[0].mxu0
      %v5780 = vadd.f32 0.0, %v5779
      %v5781 = vpop.f32.mrb[0].mxu0
      %v5782 = vpop.f32.mrb[0].mxu0
      %v5783 = vadd.f32 0.0, %v5782
      %v5784 = vpop.f32.mrb[0].mxu0
      %5785 = vmatprep.mubr.bf16.mxu0 0
      %5786 = vmatmul.mubr.bf16.gmra.mrb[0].mxu0 %v5636
      %v5787 = vpop.f32.mrb[0].mxu0
      %v5788 = vadd.f32 0.0, %v5787
      %v5789 = vpop.f32.mrb[0].mxu0
      %v5790 = vpop.f32.mrb[0].mxu0
      %v5791 = vadd.f32 0.0, %v5790
      %v5792 = vpop.f32.mrb[0].mxu0
      %5793 = vmatprep.mubr.bf16.mxu0 0
      %5794 = vmatmul.mubr.bf16.gmra.mrb[0].mxu0 %v5637
      %v5795 = vpop.f32.mrb[0].mxu0
      %v5796 = vadd.f32 0.0, %v5795
      %v5797 = vpop.f32.mrb[0].mxu0
      %v5798 = vpop.f32.mrb[0].mxu0
      %v5799 = vadd.f32 0.0, %v5798
      %v5800 = vpop.f32.mrb[0].mxu0
      %5801 = vmatprep.mubr.bf16.mxu0 0
      %5802 = vmatmul.mubr.bf16.gmra.mrb[0].mxu0 %v5638
      %v5803 = vpop.f32.mrb[0].mxu0
      %v5804 = vadd.f32 0.0, %v5803
      %v5805 = vpop.f32.mrb[0].mxu0
      %v5806 = vpop.f32.mrb[0].mxu0
      %v5807 = vadd.f32 0.0, %v5806
      %v5808 = vpop.f32.mrb[0].mxu0
      %5809 = vmatprep.mubr.bf16.mxu0 0
      %5810 = vmatmul.mubr.bf16.gmra.mrb[0].mxu0 %v5639
      %v5811 = vpop.f32.mrb[0].mxu0
      %v5812 = vadd.f32 0.0, %v5811
      %v5813 = vpop.f32.mrb[0].mxu0
      %v5814 = vpop.f32.mrb[0].mxu0
      %v5815 = vadd.f32 0.0, %v5814
      %v5816 = vpop.f32.mrb[0].mxu0
      %5817 = vmatprep.mubr.bf16.mxu0 0
      %5818 = vmatmul.mubr.bf16.gmra.mrb[0].mxu0 %v5640
      %v5819 = vpop.f32.mrb[0].mxu0
      %v5820 = vadd.f32 0.0, %v5819
      %v5821 = vpop.f32.mrb[0].mxu0
      %v5822 = vpop.f32.mrb[0].mxu0
      %v5823 = vadd.f32 0.0, %v5822
      %v5824 = vpop.f32.mrb[0].mxu0
      %5825 = vmatprep.mubr.bf16.mxu0 0
      %5826 = vmatmul.mubr.bf16.gmra.mrb[0].mxu0 %v5641
      %v5827 = vpop.f32.mrb[0].mxu0
      %v5828 = vadd.f32 0.0, %v5827
      %v5829 = vpop.f32.mrb[0].mxu0
      %v5830 = vpop.f32.mrb[0].mxu0
      %v5831 = vadd.f32 0.0, %v5830
      %v5832 = vpop.f32.mrb[0].mxu0
      %5833 = vmatprep.mubr.bf16.mxu0 0
      %5834 = vmatmul.mubr.bf16.gmra.mrb[0].mxu0 %v5642
      %v5835 = vpop.f32.mrb[0].mxu0
      %v5836 = vadd.f32 0.0, %v5835
      %v5837 = vpop.f32.mrb[0].mxu0
      %v5838 = vpop.f32.mrb[0].mxu0
      %v5839 = vadd.f32 0.0, %v5838
      %v5840 = vpop.f32.mrb[0].mxu0
      %5841 = vmatprep.mubr.bf16.mxu0 0
      %5842 = vmatmul.mubr.bf16.gmra.mrb[0].mxu0 %v5643
      %v5843 = vpop.f32.mrb[0].mxu0
      %v5844 = vadd.f32 0.0, %v5843
      %v5845 = vpop.f32.mrb[0].mxu0
      %v5846 = vpop.f32.mrb[0].mxu0
      %v5847 = vadd.f32 0.0, %v5846
      %v5848 = vpop.f32.mrb[0].mxu0
      %5849 = vmatprep.mubr.bf16.mxu0 0
      %5850 = vmatmul.mubr.bf16.gmra.mrb[0].mxu0 %v5644
      %v5851 = vpop.f32.mrb[0].mxu0
      %v5852 = vadd.f32 0.0, %v5851
      %v5853 = vpop.f32.mrb[0].mxu0
      %v5854 = vpop.f32.mrb[0].mxu0
      %v5855 = vadd.f32 0.0, %v5854
      %v5856 = vpop.f32.mrb[0].mxu0
      %5857 = vmatprep.mubr.bf16.mxu0 0
      %5858 = vmatmul.mubr.bf16.gmra.mrb[0].mxu0 %v5645
      %v5859 = vpop.f32.mrb[0].mxu0
      %v5860 = vadd.f32 0.0, %v5859
      %v5861 = vpop.f32.mrb[0].mxu0
      %v5862 = vpop.f32.mrb[0].mxu0
      %v5863 = vadd.f32 0.0, %v5862
      %v5864 = vpop.f32.mrb[0].mxu0
      %5865 = vmatprep.mubr.bf16.mxu0 0
      %5866 = vmatmul.mubr.bf16.gmra.mrb[0].mxu0 %v5646
      %v5867 = vpop.f32.mrb[0].mxu0
      %v5868 = vadd.f32 0.0, %v5867
      %v5869 = vpop.f32.mrb[0].mxu0
      %v5870 = vpop.f32.mrb[0].mxu0
      %v5871 = vadd.f32 0.0, %v5870
      %v5872 = vpop.f32.mrb[0].mxu0
      %5873 = vmatprep.mubr.bf16.mxu0 0
      %5874 = vmatmul.mubr.bf16.gmra.mrb[0].mxu0 %v5647
      %v5875 = vpop.f32.mrb[0].mxu0
      %v5876 = vadd.f32 0.0, %v5875
      %v5877 = vpop.f32.mrb[0].mxu0
      %v5878 = vpop.f32.mrb[0].mxu0
      %v5879 = vadd.f32 0.0, %v5878
      %v5880 = vpop.f32.mrb[0].mxu0
      %5881 = vmatprep.mubr.bf16.mxu0 0
      %5882 = vmatmul.mubr.bf16.gmra.mrb[0].mxu0 %v5648
      %v5883 = vpop.f32.mrb[0].mxu0
      %v5884 = vadd.f32 0.0, %v5883
      %v5885 = vpop.f32.mrb[0].mxu0
      %v5886 = vpop.f32.mrb[0].mxu0
      %v5887 = vadd.f32 0.0, %v5886
      %v5888 = vpop.f32.mrb[0].mxu0
      %5889 = vdwg.mxu0
      %v5890 = vld [vmem:[%s9] sm:$0x1]
      %v5892 = vlaneseq
      %v5893 = vshrl.u32 %v5892, 7
      %v5894 = vsub.s32 0, %v5893
      %v5895 = vrot.slane %v5890, %v5894
      %v5897 = vmul.f32 %v5748, %v5895
      %v5898 = vmul.f32 %v5751, %v5895
      %v5899 = vmul.f32 %v5756, %v5895
      %v5900 = vmul.f32 %v5759, %v5895
      %v5901 = vmul.f32 %v5764, %v5895
      %v5902 = vmul.f32 %v5767, %v5895
      %v5903 = vmul.f32 %v5772, %v5895
      %v5904 = vmul.f32 %v5775, %v5895
      %v5905 = vmul.f32 %v5780, %v5895
      %v5906 = vmul.f32 %v5783, %v5895
      %v5907 = vmul.f32 %v5788, %v5895
      %v5908 = vmul.f32 %v5791, %v5895
      %v5909 = vmul.f32 %v5796, %v5895
      %v5910 = vmul.f32 %v5799, %v5895
      %v5911 = vmul.f32 %v5804, %v5895
      %v5912 = vmul.f32 %v5807, %v5895
      %v5913 = vmul.f32 %v5812, %v5895
      %v5914 = vmul.f32 %v5815, %v5895
      %v5915 = vmul.f32 %v5820, %v5895
      %v5916 = vmul.f32 %v5823, %v5895
      %v5917 = vmul.f32 %v5828, %v5895
      %v5918 = vmul.f32 %v5831, %v5895
      %v5919 = vmul.f32 %v5836, %v5895
      %v5920 = vmul.f32 %v5839, %v5895
      %v5921 = vmul.f32 %v5844, %v5895
      %v5922 = vmul.f32 %v5847, %v5895
      %v5923 = vmul.f32 %v5852, %v5895
      %v5924 = vmul.f32 %v5855, %v5895
      %v5925 = vmul.f32 %v5860, %v5895
      %v5926 = vmul.f32 %v5863, %v5895
      %v5927 = vmul.f32 %v5868, %v5895
      %v5928 = vmul.f32 %v5871, %v5895
      %v5929 = vmul.f32 %v5876, %v5895
      %v5930 = vmul.f32 %v5879, %v5895
      %v5931 = vmul.f32 %v5884, %v5895
      %v5932 = vmul.f32 %v5887, %v5895
      %v5933 = vld [vmem:[%s10] sm:$0x1]
      %v5935 = vlaneseq
      %v5936 = vshrl.u32 %v5935, 7
      %v5937 = vsub.s32 0, %v5936
      %v5938 = vrot.slane %v5933, %v5937
      %v5940 = vadd.f32 %v5897, %v5938
      %v5941 = vadd.f32 %v5898, %v5938
      %v5942 = vadd.f32 %v5899, %v5938
      %v5943 = vadd.f32 %v5900, %v5938
      %v5944 = vadd.f32 %v5901, %v5938
      %v5945 = vadd.f32 %v5902, %v5938
      %v5946 = vadd.f32 %v5903, %v5938
      %v5947 = vadd.f32 %v5904, %v5938
      %v5948 = vadd.f32 %v5905, %v5938
      %v5949 = vadd.f32 %v5906, %v5938
      %v5950 = vadd.f32 %v5907, %v5938
      %v5951 = vadd.f32 %v5908, %v5938
      %v5952 = vadd.f32 %v5909, %v5938
      %v5953 = vadd.f32 %v5910, %v5938
      %v5954 = vadd.f32 %v5911, %v5938
      %v5955 = vadd.f32 %v5912, %v5938
      %v5956 = vadd.f32 %v5913, %v5938
      %v5957 = vadd.f32 %v5914, %v5938
      %v5958 = vadd.f32 %v5915, %v5938
      %v5959 = vadd.f32 %v5916, %v5938
      %v5960 = vadd.f32 %v5917, %v5938
      %v5961 = vadd.f32 %v5918, %v5938
      %v5962 = vadd.f32 %v5919, %v5938
      %v5963 = vadd.f32 %v5920, %v5938
      %v5964 = vadd.f32 %v5921, %v5938
      %v5965 = vadd.f32 %v5922, %v5938
      %v5966 = vadd.f32 %v5923, %v5938
      %v5967 = vadd.f32 %v5924, %v5938
      %v5968 = vadd.f32 %v5925, %v5938
      %v5969 = vadd.f32 %v5926, %v5938
      %v5970 = vadd.f32 %v5927, %v5938
      %v5971 = vadd.f32 %v5928, %v5938
      %v5972 = vadd.f32 %v5929, %v5938
      %v5973 = vadd.f32 %v5930, %v5938
      %v5974 = vadd.f32 %v5931, %v5938
      %v5975 = vadd.f32 %v5932, %v5938
      %v5976 = vld [vmem:[%s381] sm:$0xf]
      %v5977 = vld [vmem:[%s381 + $0x4] sm:$0xf]
      %v5978 = vld [vmem:[%s381 + $0x8] sm:$0xf]
      %v5979 = vld [vmem:[%s381 + $0xc] sm:$0xf]
      %v5980 = vld [vmem:[%s381 + $0x10] sm:$0xf]
      %v5981 = vld [vmem:[%s381 + $0x14] sm:$0xf]
      %v5982 = vld [vmem:[%s381 + $0x18] sm:$0xf]
      %v5983 = vld [vmem:[%s381 + $0x1c] sm:$0xf]
      %v5984 = vld [vmem:[%s381 + $0x20] sm:$0xf]
      %v5985 = vld [vmem:[%s381 + $0x24] sm:$0xf]
      %v5986 = vld [vmem:[%s381 + $0x28] sm:$0xf]
      %v5987 = vld [vmem:[%s381 + $0x2c] sm:$0xf]
      %v5988 = vld [vmem:[%s381 + $0x30] sm:$0xf]
      %v5989 = vld [vmem:[%s381 + $0x34] sm:$0xf]
      %v5990 = vld [vmem:[%s381 + $0x38] sm:$0xf]
      %v5991 = vld [vmem:[%s381 + $0x3c] sm:$0xf]
      %v5992 = vld [vmem:[%s381 + $0x40] sm:$0xf]
      %v5993 = vld [vmem:[%s381 + $0x44] sm:$0xf]
      %v5994 = vld [vmem:[%s381 + $0x48] sm:$0xf]
      %v5995 = vld [vmem:[%s381 + $0x4c] sm:$0xf]
      %v5996 = vld [vmem:[%s381 + $0x50] sm:$0xf]
      %v5997 = vld [vmem:[%s381 + $0x54] sm:$0xf]
      %v5998 = vld [vmem:[%s381 + $0x58] sm:$0xf]
      %v5999 = vld [vmem:[%s381 + $0x5c] sm:$0xf]
      %v6000 = vld [vmem:[%s381 + $0x60] sm:$0xf]
      %v6001 = vld [vmem:[%s381 + $0x64] sm:$0xf]
      %v6002 = vld [vmem:[%s381 + $0x68] sm:$0xf]
      %v6003 = vld [vmem:[%s381 + $0x6c] sm:$0xf]
      %v6004 = vld [vmem:[%s381 + $0x70] sm:$0xf]
      %v6005 = vld [vmem:[%s381 + $0x74] sm:$0xf]
      %v6006 = vld [vmem:[%s381 + $0x78] sm:$0xf]
      %v6007 = vld [vmem:[%s381 + $0x7c] sm:$0xf]
      %v6008 = vld [vmem:[%s381 + $0x80] sm:$0xf]
      %v6009 = vld [vmem:[%s381 + $0x84] sm:$0xf]
      %v6010 = vld [vmem:[%s381 + $0x88] sm:$0xf]
      %v6011 = vld [vmem:[%s381 + $0x8c] sm:$0xf]
      %v6012 = vunpack.c.l.bf16 %v5976
      %v6013 = vunpack.c.l.bf16 %v5977
      %v6014 = vunpack.c.l.bf16 %v5978
      %v6015 = vunpack.c.l.bf16 %v5979
      %v6016 = vunpack.c.l.bf16 %v5980
      %v6017 = vunpack.c.l.bf16 %v5981
      %v6018 = vunpack.c.l.bf16 %v5982
      %v6019 = vunpack.c.l.bf16 %v5983
      %v6020 = vunpack.c.l.bf16 %v5984
      %v6021 = vunpack.c.l.bf16 %v5985
      %v6022 = vunpack.c.l.bf16 %v5986
      %v6023 = vunpack.c.l.bf16 %v5987
      %v6024 = vunpack.c.l.bf16 %v5988
      %v6025 = vunpack.c.l.bf16 %v5989
      %v6026 = vunpack.c.l.bf16 %v5990
      %v6027 = vunpack.c.l.bf16 %v5991
      %v6028 = vunpack.c.l.bf16 %v5992
      %v6029 = vunpack.c.l.bf16 %v5993
      %v6030 = vunpack.c.l.bf16 %v5994
      %v6031 = vunpack.c.l.bf16 %v5995
      %v6032 = vunpack.c.l.bf16 %v5996
      %v6033 = vunpack.c.l.bf16 %v5997
      %v6034 = vunpack.c.l.bf16 %v5998
      %v6035 = vunpack.c.l.bf16 %v5999
      %v6036 = vunpack.c.l.bf16 %v6000
      %v6037 = vunpack.c.l.bf16 %v6001
      %v6038 = vunpack.c.l.bf16 %v6002
      %v6039 = vunpack.c.l.bf16 %v6003
      %v6040 = vunpack.c.l.bf16 %v6004
      %v6041 = vunpack.c.l.bf16 %v6005
      %v6042 = vunpack.c.l.bf16 %v6006
      %v6043 = vunpack.c.l.bf16 %v6007
      %v6044 = vunpack.c.l.bf16 %v6008
      %v6045 = vunpack.c.l.bf16 %v6009
      %v6046 = vunpack.c.l.bf16 %v6010
      %v6047 = vunpack.c.l.bf16 %v6011
      %v6048 = vadd.f32 %v5940, %v6012
      %v6049 = vadd.f32 %v5941, %v6013
      %v6050 = vadd.f32 %v5942, %v6014
      %v6051 = vadd.f32 %v5943, %v6015
      %v6052 = vadd.f32 %v5944, %v6016
      %v6053 = vadd.f32 %v5945, %v6017
      %v6054 = vadd.f32 %v5946, %v6018
      %v6055 = vadd.f32 %v5947, %v6019
      %v6056 = vadd.f32 %v5948, %v6020
      %v6057 = vadd.f32 %v5949, %v6021
      %v6058 = vadd.f32 %v5950, %v6022
      %v6059 = vadd.f32 %v5951, %v6023
      %v6060 = vadd.f32 %v5952, %v6024
      %v6061 = vadd.f32 %v5953, %v6025
      %v6062 = vadd.f32 %v5954, %v6026
      %v6063 = vadd.f32 %v5955, %v6027
      %v6064 = vadd.f32 %v5956, %v6028
      %v6065 = vadd.f32 %v5957, %v6029
      %v6066 = vadd.f32 %v5958, %v6030
      %v6067 = vadd.f32 %v5959, %v6031
      %v6068 = vadd.f32 %v5960, %v6032
      %v6069 = vadd.f32 %v5961, %v6033
      %v6070 = vadd.f32 %v5962, %v6034
      %v6071 = vadd.f32 %v5963, %v6035
      %v6072 = vadd.f32 %v5964, %v6036
      %v6073 = vadd.f32 %v5965, %v6037
      %v6074 = vadd.f32 %v5966, %v6038
      %v6075 = vadd.f32 %v5967, %v6039
      %v6076 = vadd.f32 %v5968, %v6040
      %v6077 = vadd.f32 %v5969, %v6041
      %v6078 = vadd.f32 %v5970, %v6042
      %v6079 = vadd.f32 %v5971, %v6043
      %v6080 = vadd.f32 %v5972, %v6044
      %v6081 = vadd.f32 %v5973, %v6045
      %v6082 = vadd.f32 %v5974, %v6046
      %v6083 = vadd.f32 %v5975, %v6047
      %v6084 = vmax.f32 %v6048, 0.0
      %v6085 = vmax.f32 %v6049, 0.0
      %v6086 = vmax.f32 %v6050, 0.0
      %v6087 = vmax.f32 %v6051, 0.0
      %v6088 = vmax.f32 %v6052, 0.0
      %v6089 = vmax.f32 %v6053, 0.0
      %v6090 = vmax.f32 %v6054, 0.0
      %v6091 = vmax.f32 %v6055, 0.0
      %v6092 = vmax.f32 %v6056, 0.0
      %v6093 = vmax.f32 %v6057, 0.0
      %v6094 = vmax.f32 %v6058, 0.0
      %v6095 = vmax.f32 %v6059, 0.0
      %v6096 = vmax.f32 %v6060, 0.0
      %v6097 = vmax.f32 %v6061, 0.0
      %v6098 = vmax.f32 %v6062, 0.0
      %v6099 = vmax.f32 %v6063, 0.0
      %v6100 = vmax.f32 %v6064, 0.0
      %v6101 = vmax.f32 %v6065, 0.0
      %v6102 = vmax.f32 %v6066, 0.0
      %v6103 = vmax.f32 %v6067, 0.0
      %v6104 = vmax.f32 %v6068, 0.0
      %v6105 = vmax.f32 %v6069, 0.0
      %v6106 = vmax.f32 %v6070, 0.0
      %v6107 = vmax.f32 %v6071, 0.0
      %v6108 = vmax.f32 %v6072, 0.0
      %v6109 = vmax.f32 %v6073, 0.0
      %v6110 = vmax.f32 %v6074, 0.0
      %v6111 = vmax.f32 %v6075, 0.0
      %v6112 = vmax.f32 %v6076, 0.0
      %v6113 = vmax.f32 %v6077, 0.0
      %v6114 = vmax.f32 %v6078, 0.0
      %v6115 = vmax.f32 %v6079, 0.0
      %v6116 = vmax.f32 %v6080, 0.0
      %v6117 = vmax.f32 %v6081, 0.0
      %v6118 = vmax.f32 %v6082, 0.0
      %v6119 = vmax.f32 %v6083, 0.0
      %v6120 = vpack.c.bf16 %v6085, %v6084
      %v6121 = vpack.c.bf16 %v6087, %v6086
      %v6122 = vpack.c.bf16 %v6089, %v6088
      %v6123 = vpack.c.bf16 %v6091, %v6090
      %v6124 = vpack.c.bf16 %v6093, %v6092
      %v6125 = vpack.c.bf16 %v6095, %v6094
      %v6126 = vpack.c.bf16 %v6097, %v6096
      %v6127 = vpack.c.bf16 %v6099, %v6098
      %v6128 = vpack.c.bf16 %v6101, %v6100
      %v6129 = vpack.c.bf16 %v6103, %v6102
      %v6130 = vpack.c.bf16 %v6105, %v6104
      %v6131 = vpack.c.bf16 %v6107, %v6106
      %v6132 = vpack.c.bf16 %v6109, %v6108
      %v6133 = vpack.c.bf16 %v6111, %v6110
      %v6134 = vpack.c.bf16 %v6113, %v6112
      %v6135 = vpack.c.bf16 %v6115, %v6114
      %v6136 = vpack.c.bf16 %v6117, %v6116
      %v6137 = vpack.c.bf16 %v6119, %v6118
      %v6156 = vunpack.c.l.b16 %v6120
      %v6157 = vunpack.c.h.b16 %v6120
      %v6158 = vunpack.c.l.b16 %v6121
      %v6159 = vunpack.c.h.b16 %v6121
      %v6160 = vunpack.c.l.b16 %v6122
      %v6161 = vunpack.c.h.b16 %v6122
      %v6162 = vunpack.c.l.b16 %v6123
      %v6163 = vunpack.c.h.b16 %v6123
      %v6164 = vunpack.c.l.b16 %v6124
      %v6165 = vunpack.c.h.b16 %v6124
      %v6166 = vunpack.c.l.b16 %v6125
      %v6167 = vunpack.c.h.b16 %v6125
      %v6168 = vunpack.c.l.b16 %v6126
      %v6169 = vunpack.c.h.b16 %v6126
      %v6170 = vunpack.c.l.b16 %v6127
      %v6171 = vunpack.c.h.b16 %v6127
      %v6172 = vunpack.c.l.b16 %v6128
      %v6173 = vunpack.c.h.b16 %v6128
      %v6174 = vunpack.c.l.b16 %v6129
      %v6175 = vunpack.c.h.b16 %v6129
      %v6176 = vunpack.c.l.b16 %v6130
      %v6177 = vunpack.c.h.b16 %v6130
      %v6178 = vunpack.c.l.b16 %v6131
      %v6179 = vunpack.c.h.b16 %v6131
      %v6180 = vunpack.c.l.b16 %v6132
      %v6181 = vunpack.c.h.b16 %v6132
      %v6182 = vunpack.c.l.b16 %v6133
      %v6183 = vunpack.c.h.b16 %v6133
      %v6184 = vunpack.c.l.b16 %v6134
      %v6185 = vunpack.c.h.b16 %v6134
      %v6186 = vunpack.c.l.b16 %v6135
      %v6187 = vunpack.c.h.b16 %v6135
      %v6188 = vunpack.c.l.b16 %v6136
      %v6189 = vunpack.c.h.b16 %v6136
      %v6190 = vunpack.c.l.b16 %v6137
      %v6191 = vunpack.c.h.b16 %v6137
      %v6192 = vpack.c.b16 %v6156, %v6156
      %v6193 = vpack.c.b16 %v6157, %v6157
      %v6194 = vpack.c.b16 %v6158, %v6158
      %v6195 = vpack.c.b16 %v6159, %v6159
      %v6196 = vpack.c.b16 %v6160, %v6160
      %v6197 = vpack.c.b16 %v6161, %v6161
      %v6198 = vpack.c.b16 %v6162, %v6162
      %v6199 = vpack.c.b16 %v6163, %v6163
      %v6200 = vpack.c.b16 %v6164, %v6164
      %v6201 = vpack.c.b16 %v6165, %v6165
      %v6202 = vpack.c.b16 %v6166, %v6166
      %v6203 = vpack.c.b16 %v6167, %v6167
      %v6204 = vpack.c.b16 %v6168, %v6168
      %v6205 = vpack.c.b16 %v6169, %v6169
      %v6206 = vpack.c.b16 %v6170, %v6170
      %v6207 = vpack.c.b16 %v6171, %v6171
      %v6208 = vpack.c.b16 %v6172, %v6172
      %v6209 = vpack.c.b16 %v6173, %v6173
      %v6210 = vpack.c.b16 %v6174, %v6174
      %v6211 = vpack.c.b16 %v6175, %v6175
      %v6212 = vpack.c.b16 %v6176, %v6176
      %v6213 = vpack.c.b16 %v6177, %v6177
      %v6214 = vpack.c.b16 %v6178, %v6178
      %v6215 = vpack.c.b16 %v6179, %v6179
      %v6216 = vpack.c.b16 %v6180, %v6180
      %v6217 = vpack.c.b16 %v6181, %v6181
      %v6218 = vpack.c.b16 %v6182, %v6182
      %v6219 = vpack.c.b16 %v6183, %v6183
      %v6220 = vpack.c.b16 %v6184, %v6184
      %v6221 = vpack.c.b16 %v6185, %v6185
      %v6222 = vpack.c.b16 %v6186, %v6186
      %v6223 = vpack.c.b16 %v6187, %v6187
      %v6224 = vpack.c.b16 %v6188, %v6188
      %v6225 = vpack.c.b16 %v6189, %v6189
      %v6226 = vpack.c.b16 %v6190, %v6190
      %v6227 = vpack.c.b16 %v6191, %v6191
      %6264 = vst [vmem:[%s386] sm:$0xf] %v6192
      %6265 = vst [vmem:[%s386 + $0x4] sm:$0xf] %v6193
      %6266 = vst [vmem:[%s386 + $0x8] sm:$0xf] %v6194
      %6267 = vst [vmem:[%s386 + $0xc] sm:$0xf] %v6195
      %6268 = vst [vmem:[%s386 + $0x10] sm:$0xf] %v6196
      %6269 = vst [vmem:[%s386 + $0x14] sm:$0xf] %v6197
      %6270 = vst [vmem:[%s386 + $0x18] sm:$0xf] %v6198
      %6271 = vst [vmem:[%s386 + $0x1c] sm:$0xf] %v6199
      %6272 = vst [vmem:[%s386 + $0x20] sm:$0xf] %v6200
      %6273 = vst [vmem:[%s386 + $0x24] sm:$0xf] %v6201
      %6274 = vst [vmem:[%s386 + $0x28] sm:$0xf] %v6202
      %6275 = vst [vmem:[%s386 + $0x2c] sm:$0xf] %v6203
      %6276 = vst [vmem:[%s386 + $0x30] sm:$0xf] %v6204
      %6277 = vst [vmem:[%s386 + $0x34] sm:$0xf] %v6205
      %6278 = vst [vmem:[%s386 + $0x38] sm:$0xf] %v6206
      %6279 = vst [vmem:[%s386 + $0x3c] sm:$0xf] %v6207
      %6280 = vst [vmem:[%s386 + $0x40] sm:$0xf] %v6208
      %6281 = vst [vmem:[%s386 + $0x44] sm:$0xf] %v6209
      %6282 = vst [vmem:[%s386 + $0x48] sm:$0xf] %v6210
      %6283 = vst [vmem:[%s386 + $0x4c] sm:$0xf] %v6211
      %6284 = vst [vmem:[%s386 + $0x50] sm:$0xf] %v6212
      %6285 = vst [vmem:[%s386 + $0x54] sm:$0xf] %v6213
      %6286 = vst [vmem:[%s386 + $0x58] sm:$0xf] %v6214
      %6287 = vst [vmem:[%s386 + $0x5c] sm:$0xf] %v6215
      %6288 = vst [vmem:[%s386 + $0x60] sm:$0xf] %v6216
      %6289 = vst [vmem:[%s386 + $0x64] sm:$0xf] %v6217
      %6290 = vst [vmem:[%s386 + $0x68] sm:$0xf] %v6218
      %6291 = vst [vmem:[%s386 + $0x6c] sm:$0xf] %v6219
      %6292 = vst [vmem:[%s386 + $0x70] sm:$0xf] %v6220
      %6293 = vst [vmem:[%s386 + $0x74] sm:$0xf] %v6221
      %6294 = vst [vmem:[%s386 + $0x78] sm:$0xf] %v6222
      %6295 = vst [vmem:[%s386 + $0x7c] sm:$0xf] %v6223
      %6296 = vst [vmem:[%s386 + $0x80] sm:$0xf] %v6224
      %6297 = vst [vmem:[%s386 + $0x84] sm:$0xf] %v6225
      %6298 = vst [vmem:[%s386 + $0x88] sm:$0xf] %v6226
      %6299 = vst [vmem:[%s386 + $0x8c] sm:$0xf] %v6227
      %p6300 = scmp.lt.s32.totalorder %s22, 1
      %s6301 = scalar_select %p6300, %s22, 1
      %s6302 = smul.addr %s6301, 36
      %s6303 = smul.addr %s6302, 4
      %s6304 = scalar_lea.vmem %s11, %s6303
      // Predicated region
      $region65: #{bottleneck_forward_nhwc.1} parent=63 // pred_check
        %p6305 = pneg %p276
      $region66: #{bottleneck_forward_nhwc.1} parent=63 // pred_check_branch
        %6307 = sbr.rel (%p6305) target = $region68
      $region67: #{bottleneck_forward_nhwc.1} parent=63 // pred_region
        _
      $region68: #{bottleneck_forward_nhwc.1} parent=63 // pred_fallthru
        _
    $region64: #{bottleneck_forward_nhwc.1} parent=5 // pred_fallthru
      _
    %p6308 = scmp.le.s32.totalorder 2, %s17
    // Predicated region
    $region69: #{bottleneck_forward_nhwc.1} parent=5 // pred_check
      %p6309 = pneg %p6308
    $region70: #{bottleneck_forward_nhwc.1} parent=5 // pred_check_branch
      %6311 = sbr.rel (%p6309) target = $region72
    $region71: #{bottleneck_forward_nhwc.1} parent=5 // pred_region
      %s6312 = ssub.s32 %s17, 2
      // Predicated region
      $region73: #{bottleneck_forward_nhwc.1} parent=71 // pred_check
        %p6313 = pneg %p282
      $region74: #{bottleneck_forward_nhwc.1} parent=71 // pred_check_branch
        %6315 = sbr.rel (%p6313) target = $region76
      $region75: #{bottleneck_forward_nhwc.1} parent=71 // pred_region
        %p6316 = scmp.lt.s32.totalorder %s23, 1
        %s6317 = scalar_select %p6316, %s23, 1
        %s6318 = smul.addr %s6317, 36
        %s6319 = smul.addr %s6318, 4
        %s6320 = scalar_lea.vmem %s11, %s6319
      $region76: #{bottleneck_forward_nhwc.1} parent=71 // pred_fallthru
        _
    $region72: #{bottleneck_forward_nhwc.1} parent=5 // pred_fallthru
      _
  $region6: #{bottleneck_forward_nhwc.1} parent=0 // loop_footer
    %s21 = sadd.s32 1, %s17
  $region7: #{bottleneck_forward_nhwc.1} parent=0 // loop_footer_branch
    %16 = sbr.rel target = $region3
  $region8: #{bottleneck_forward_nhwc.1} parent=0 // loop_exit
    _

</llo_original>
